<compile_context>
chip_gen: v6e
topology: v6e:2x2x1
jax: 0.10.0
libtpu: 0.0.40
codegen_flags: <defaults>
</compile_context>

<pallas_src>
import math
import functools

import jax
import jax.numpy as jnp
from jax.experimental import pallas as pl
from jax.experimental.pallas import tpu as pltpu

NEG_INF = -1e30  # additive mask value (numerically equivalent to -inf after softmax)


# ------------------------------------------------------------------
# generation-aware tiling configuration
# ------------------------------------------------------------------

def _detect_vmem_bytes():
    try:
        return int(pltpu.get_tpu_info().vmem_capacity_bytes)
    except Exception:
        return 64 * 1024 * 1024  # conservative (v7x-sized) fallback


_VMEM_BYTES = _detect_vmem_bytes()
if _VMEM_BYTES >= 96 * 1024 * 1024:      # v5e / v6e: 128 MiB VMEM per TensorCore
    _TM_CAP, _TN_CAP, _TK_CAP = 512, 512, 1024
    _VMEM_LIMIT = 96 * 1024 * 1024
else:                                    # v7x: 64 MiB physical VMEM -> keep smaller tiles
    _TM_CAP, _TN_CAP, _TK_CAP = 256, 256, 512
    _VMEM_LIMIT = None


def _compiler_params(dim_sem):
    kwargs = {"dimension_semantics": dim_sem}
    if _VMEM_LIMIT is not None:
        kwargs["vmem_limit_bytes"] = _VMEM_LIMIT
    return pltpu.CompilerParams(**kwargs)


def _pick_tile(dim, cap, align):
    """Largest tile <= cap that divides dim and is a multiple of align; full dim otherwise."""
    if dim <= cap:
        return dim
    t = (cap // align) * align
    while t >= align:
        if dim % t == 0:
            return t
        t -= align
    return dim


# ------------------------------------------------------------------
# Pallas kernels
# ------------------------------------------------------------------

def _linear_kernel(x_ref, w_ref, b_ref, o_ref, acc_ref, *, relu):
    # x: (tm, tk) bf16, w: (tk, tn) bf16, b: (1, tn) f32, acc: (tm, tn) f32
    @pl.when(pl.program_id(2) == 0)
    def _():
        acc_ref[...] = jnp.zeros_like(acc_ref)

    acc_ref[...] += jnp.dot(x_ref[...], w_ref[...], preferred_element_type=jnp.float32)

    @pl.when(pl.program_id(2) == pl.num_programs(2) - 1)
    def _():
        y = acc_ref[...] + b_ref[...]
        if relu:
            y = jnp.maximum(y, 0.0)
        o_ref[...] = y.astype(o_ref.dtype)


def pallas_linear(x, w, b, relu=False, out_dtype=jnp.bfloat16):
    """x: (M, K), w: (K, N) bf16 pre-transposed, b: (N,) f32 -> (M, N) out_dtype."""
    M, K = x.shape
    N = w.shape[1]
    tm = _pick_tile(M, _TM_CAP, 8)
    tn = _pick_tile(N, _TN_CAP, 128)
    tk = _pick_tile(K, _TK_CAP, 128)
    grid = (M // tm, N // tn, K // tk)
    return pl.pallas_call(
        functools.partial(_linear_kernel, relu=relu),
        grid=grid,
        in_specs=[
            pl.BlockSpec((tm, tk), lambda i, j, k: (i, k)),
            pl.BlockSpec((tk, tn), lambda i, j, k: (k, j)),
            pl.BlockSpec((1, tn), lambda i, j, k: (0, j)),
        ],
        out_specs=pl.BlockSpec((tm, tn), lambda i, j, k: (i, j)),
        out_shape=jax.ShapeDtypeStruct((M, N), out_dtype),
        scratch_shapes=[pltpu.VMEM((tm, tn), jnp.float32)],
        compiler_params=_compiler_params(("parallel", "parallel", "arbitrary")),
    )(x.astype(jnp.bfloat16), w.astype(jnp.bfloat16), b.reshape(1, N).astype(jnp.float32))


def _linear_add_ln_kernel(x_ref, w_ref, b_ref, r_ref, g_ref, beta_ref, o_ref, acc_ref, *, eps):
    # Fused: (x @ w + b + residual) -> LayerNorm over the full row (tn == N).
    k = pl.program_id(1)

    @pl.when(k == 0)
    def _():
        acc_ref[...] = jnp.zeros_like(acc_ref)

    acc_ref[...] += jnp.dot(x_ref[...], w_ref[...], preferred_element_type=jnp.float32)

    @pl.when(k == pl.num_programs(1) - 1)
    def _():
        y = acc_ref[...] + b_ref[...] + r_ref[...].astype(jnp.float32)
        mu = jnp.mean(y, axis=-1, keepdims=True)
        yc = y - mu
        var = jnp.mean(yc * yc, axis=-1, keepdims=True)
        o_ref[...] = (yc * jax.lax.rsqrt(var + eps) * g_ref[...] + beta_ref[...]).astype(o_ref.dtype)


def pallas_linear_add_ln(x, w, b, res, gamma, beta, eps=1e-5, out_dtype=jnp.bfloat16):
    """LayerNorm(x @ w + b + res): x (M, K), w (K, N), res (M, N). Output block covers full N."""
    M, K = x.shape
    N = w.shape[1]
    tm = _pick_tile(M, _TM_CAP, 8)
    tk = _pick_tile(K, _TK_CAP, 128)
    grid = (M // tm, K // tk)
    return pl.pallas_call(
        functools.partial(_linear_add_ln_kernel, eps=eps),
        grid=grid,
        in_specs=[
            pl.BlockSpec((tm, tk), lambda i, k: (i, k)),
            pl.BlockSpec((tk, N), lambda i, k: (k, 0)),
            pl.BlockSpec((1, N), lambda i, k: (0, 0)),
            pl.BlockSpec((tm, N), lambda i, k: (i, 0)),   # residual (index constant across k)
            pl.BlockSpec((1, N), lambda i, k: (0, 0)),
            pl.BlockSpec((1, N), lambda i, k: (0, 0)),
        ],
        out_specs=pl.BlockSpec((tm, N), lambda i, k: (i, 0)),
        out_shape=jax.ShapeDtypeStruct((M, N), out_dtype),
        scratch_shapes=[pltpu.VMEM((tm, N), jnp.float32)],
        compiler_params=_compiler_params(("parallel", "arbitrary")),
    )(x.astype(jnp.bfloat16), w.astype(jnp.bfloat16), b.reshape(1, N).astype(jnp.float32),
      res.astype(jnp.bfloat16), gamma.reshape(1, N).astype(jnp.float32),
      beta.reshape(1, N).astype(jnp.float32))


def _ln_kernel(x_ref, g_ref, b_ref, o_ref, *, eps):
    x = x_ref[...].astype(jnp.float32)
    mu = jnp.mean(x, axis=-1, keepdims=True)
    xc = x - mu
    var = jnp.mean(xc * xc, axis=-1, keepdims=True)
    o_ref[...] = (xc * jax.lax.rsqrt(var + eps) * g_ref[...] + b_ref[...]).astype(o_ref.dtype)


def pallas_layernorm(x, g, b, eps=1e-5, out_dtype=jnp.bfloat16):
    """x: (M, D) -> LayerNorm over last dim (compute in f32, emit out_dtype)."""
    M, D = x.shape
    tm = _pick_tile(M, 512, 8)
    return pl.pallas_call(
        functools.partial(_ln_kernel, eps=eps),
        grid=(M // tm,),
        in_specs=[pl.BlockSpec((tm, D), lambda i: (i, 0)),
                  pl.BlockSpec((1, D), lambda i: (0, 0)),
                  pl.BlockSpec((1, D), lambda i: (0, 0))],
        out_specs=pl.BlockSpec((tm, D), lambda i: (i, 0)),
        out_shape=jax.ShapeDtypeStruct((M, D), out_dtype),
        compiler_params=_compiler_params(("parallel",)),
    )(x.astype(jnp.bfloat16), g.reshape(1, D).astype(jnp.float32),
      b.reshape(1, D).astype(jnp.float32))


def _attn_core(q, k, v, am, kpm, o_ref, *, nhead, scale):
    """q: (L, D) bf16, k/v: (S, D) bf16, am: (L, S) f32, kpm: (1, S) f32.
       Heads are processed one at a time (per-head (L, S) scores) and the result is written
       as one lane-dense (L, D) row block."""
    L, D = q.shape
    Dh = D // nhead
    outs = []
    for h in range(nhead):
        qh = q[:, h * Dh:(h + 1) * Dh]
        kh = k[:, h * Dh:(h + 1) * Dh]
        vh = v[:, h * Dh:(h + 1) * Dh]
        s = jax.lax.dot_general(qh, kh, (((1,), (1,)), ((), ())),
                                preferred_element_type=jnp.float32) * scale   # (L, S) f32
        s = s + am + kpm
        s = s - jnp.max(s, axis=-1, keepdims=True)
        p = jnp.exp(s)
        denom = jnp.sum(p, axis=-1, keepdims=True)
        oh = jnp.dot(p.astype(jnp.bfloat16), vh, preferred_element_type=jnp.float32)
        outs.append(oh / denom)                                               # exact division
    o = jnp.concatenate(outs, axis=-1)                                        # (L, D) f32
    o_ref[...] = o[None, :, :].astype(o_ref.dtype)


def _self_attn_kernel(qkv_ref, am_ref, kpm_ref, o_ref, *, nhead, scale):
    qkv = qkv_ref[...]            # (1, L, 3, D) bf16
    q = qkv[0, :, 0, :]
    k = qkv[0, :, 1, :]
    v = qkv[0, :, 2, :]
    _attn_core(q, k, v, am_ref[...], kpm_ref[0], o_ref, nhead=nhead, scale=scale)


def _cross_attn_kernel(q_ref, kv_ref, am_ref, kpm_ref, o_ref, *, nhead, scale):
    q = q_ref[0]                  # (L, D) bf16
    kv = kv_ref[...]              # (1, S, 2, D) bf16
    k = kv[0, :, 0, :]
    v = kv[0, :, 1, :]
    _attn_core(q, k, v, am_ref[...], kpm_ref[0], o_ref, nhead=nhead, scale=scale)


def pallas_self_attention(qkv, am, kpm, nhead, scale):
    """qkv: (B, L, 3, D) bf16, am: (L, S) f32, kpm: (B, 1, S) f32 -> (B, L, D) bf16."""
    B, L, _, D = qkv.shape
    S = L
    return pl.pallas_call(
        functools.partial(_self_attn_kernel, nhead=nhead, scale=scale),
        grid=(B,),
        in_specs=[
            pl.BlockSpec((1, L, 3, D), lambda b: (b, 0, 0, 0)),
            pl.BlockSpec((L, S), lambda b: (0, 0)),
            pl.BlockSpec((1, 1, S), lambda b: (b, 0, 0)),
        ],
        out_specs=pl.BlockSpec((1, L, D), lambda b: (b, 0, 0)),
        out_shape=jax.ShapeDtypeStruct((B, L, D), jnp.bfloat16),
        compiler_params=_compiler_params(("parallel",)),
    )(qkv, am, kpm)


def pallas_cross_attention(q, kv, am, kpm, nhead, scale):
    """q: (B, L, D) bf16, kv: (B, S, 2, D) bf16 -> (B, L, D) bf16."""
    B, L, D = q.shape
    S = kv.shape[1]
    return pl.pallas_call(
        functools.partial(_cross_attn_kernel, nhead=nhead, scale=scale),
        grid=(B,),
        in_specs=[
            pl.BlockSpec((1, L, D), lambda b: (b, 0, 0)),
            pl.BlockSpec((1, S, 2, D), lambda b: (b, 0, 0, 0)),
            pl.BlockSpec((L, S), lambda b: (0, 0)),
            pl.BlockSpec((1, 1, S), lambda b: (b, 0, 0)),
        ],
        out_specs=pl.BlockSpec((1, L, D), lambda b: (b, 0, 0)),
        out_shape=jax.ShapeDtypeStruct((B, L, D), jnp.bfloat16),
        compiler_params=_compiler_params(("parallel",)),
    )(q, kv, am, kpm)


# ------------------------------------------------------------------
# Model pieces (glue in plain JAX, compute in Pallas kernels above).
# Internal activation layout is batch-first (B, L, D) -> no HBM transposes around attention.
# ------------------------------------------------------------------

def positional_encoding_table(maxlen, d):
    pos = jnp.arange(maxlen, dtype=jnp.float32)[:, None]
    den = jnp.exp(-jnp.arange(0, d, 2, dtype=jnp.float32) * (math.log(10000.0) / d))
    pe = jnp.zeros((maxlen, d), jnp.float32)
    pe = pe.at[:, 0::2].set(jnp.sin(pos * den))
    pe = pe.at[:, 1::2].set(jnp.cos(pos * den))
    return pe  # (maxlen, d)


def embed_tokens_batch_first(tokens_lb, emb_table, pe_table, d):
    """tokens: (L, B) int32 -> (B, L, d) bf16 with PE added (dropout omitted)."""
    tokens_bl = tokens_lb.T                                     # (B, L), tiny transpose
    x = jnp.take(emb_table, tokens_bl, axis=0) * math.sqrt(d)   # (B, L, d) f32
    L = tokens_bl.shape[1]
    x = x + pe_table[:L][None, :, :]
    return x.astype(jnp.bfloat16)


def _additive_attn_mask(attn_mask, L, S):
    if attn_mask is None:
        return jnp.zeros((L, S), jnp.float32)
    if attn_mask.dtype == jnp.bool_:
        return jnp.where(attn_mask, NEG_INF, 0.0).astype(jnp.float32)
    return attn_mask.astype(jnp.float32)


def _additive_kpm(key_padding_mask, B, S):
    if key_padding_mask is None:
        return jnp.zeros((B, 1, S), jnp.float32)
    return jnp.where(key_padding_mask, NEG_INF, 0.0).astype(jnp.float32).reshape(B, 1, S)


def self_mha(p, x, nhead, attn_mask, key_padding_mask):
    """Fused-QKV self-attention. x: (B, L, D) bf16 -> (B, L, D) bf16 (pre out-projection)."""
    B, L, D = x.shape
    Dh = D // nhead
    qkv = pallas_linear(x.reshape(B * L, D), p["w_qkv"], p["b_qkv"])     # (B*L, 3D) bf16
    qkv = qkv.reshape(B, L, 3, D)                                        # free reshape
    am = _additive_attn_mask(attn_mask, L, L)
    kpm = _additive_kpm(key_padding_mask, B, L)
    return pallas_self_attention(qkv, am, kpm, nhead, 1.0 / math.sqrt(Dh))


def cross_mha(p, x, memory, nhead, attn_mask, key_padding_mask):
    """Cross-attention: q from x, fused KV from memory. Returns (B, L, D) bf16."""
    B, L, D = x.shape
    S = memory.shape[1]
    Dh = D // nhead
    q = pallas_linear(x.reshape(B * L, D), p["w_q"], p["b_q"]).reshape(B, L, D)
    kv = pallas_linear(memory.reshape(B * S, D), p["w_kv"], p["b_kv"]).reshape(B, S, 2, D)
    am = _additive_attn_mask(attn_mask, L, S)
    kpm = _additive_kpm(key_padding_mask, B, S)
    return pallas_cross_attention(q, kv, am, kpm, nhead, 1.0 / math.sqrt(Dh))


def encoder_layer_forward(p, x, nhead, src_mask, src_kpm):
    B, L, D = x.shape
    sa = self_mha(p["self_attn"], x, nhead, src_mask, src_kpm)                     # (B, L, D)
    # out-projection + residual + LayerNorm (norm1), fused:
    x1 = pallas_linear_add_ln(sa.reshape(B * L, D), p["self_attn"]["w_out"],
                              p["self_attn"]["b_out"], x.reshape(B * L, D),
                              p["norm1_w"], p["norm1_b"])                          # (B*L, D) bf16
    h = pallas_linear(x1, p["lin1_w"], p["lin1_b"], relu=True)                     # (B*L, dff) bf16
    # FFN lin2 + residual + LayerNorm (norm2), fused:
    x2 = pallas_linear_add_ln(h, p["lin2_w"], p["lin2_b"], x1,
                              p["norm2_w"], p["norm2_b"])
    return x2.reshape(B, L, D)


def decoder_layer_forward(p, x, memory, nhead, tgt_mask, tgt_kpm, mem_kpm):
    B, L, D = x.shape
    sa = self_mha(p["self_attn"], x, nhead, tgt_mask, tgt_kpm)
    x1 = pallas_linear_add_ln(sa.reshape(B * L, D), p["self_attn"]["w_out"],
                              p["self_attn"]["b_out"], x.reshape(B * L, D),
                              p["norm1_w"], p["norm1_b"])
    ca = cross_mha(p["cross_attn"], x1.reshape(B, L, D), memory, nhead, None, mem_kpm)
    x2 = pallas_linear_add_ln(ca.reshape(B * L, D), p["cross_attn"]["w_out"],
                              p["cross_attn"]["b_out"], x1,
                              p["norm2_w"], p["norm2_b"])
    h = pallas_linear(x2, p["lin1_w"], p["lin1_b"], relu=True)
    x3 = pallas_linear_add_ln(h, p["lin2_w"], p["lin2_b"], x2,
                              p["norm3_w"], p["norm3_b"])
    return x3.reshape(B, L, D)


def seq2seq_transformer_forward(params, src, trg, src_mask, tgt_mask,
                                src_padding_mask, tgt_padding_mask,
                                memory_key_padding_mask, *, nhead, emb_size):
    pe = params["pe_table"]
    src_emb = embed_tokens_batch_first(src, params["src_tok_emb"], pe, emb_size)   # (B, Ls, D)
    tgt_emb = embed_tokens_batch_first(trg, params["tgt_tok_emb"], pe, emb_size)   # (B, Lt, D)

    # encoder
    x = src_emb
    for p in params["encoder_layers"]:
        x = encoder_layer_forward(p, x, nhead, src_mask, src_padding_mask)
    B, Ls, D = x.shape
    memory = pallas_layernorm(x.reshape(B * Ls, D),
                              params["enc_norm_w"], params["enc_norm_b"]).reshape(B, Ls, D)

    # decoder
    y = tgt_emb
    for p in params["decoder_layers"]:
        y = decoder_layer_forward(p, y, memory, nhead, tgt_mask,
                                  tgt_padding_mask, memory_key_padding_mask)
    Lt = y.shape[1]
    y = pallas_layernorm(y.reshape(B * Lt, D), params["dec_norm_w"], params["dec_norm_b"])

    # generator (final logits kept f32 = module output dtype)
    logits = pallas_linear(y, params["gen_w"], params["gen_b"], out_dtype=jnp.float32)
    V = logits.shape[-1]
    return jnp.transpose(logits.reshape(B, Lt, V), (1, 0, 2))   # (Lt, B, V) like PyTorch


# ------------------------------------------------------------------
# Deterministic parameter init (weights pre-transposed (in, out), bf16; biases/LN params f32)
# ------------------------------------------------------------------

def init_params(key, num_enc, num_dec, d, nhead, src_vocab, tgt_vocab, d_ff, maxlen=64):
    keys = iter(jax.random.split(key, 1024))

    def dense_w(shape):
        return (jax.random.normal(next(keys), shape, jnp.float32) * 0.02).astype(jnp.bfloat16)

    def dense_b(shape):
        return jax.random.normal(next(keys), shape, jnp.float32) * 0.02

    def self_attn_params():
        return {"w_qkv": dense_w((d, 3 * d)), "b_qkv": dense_b((3 * d,)),
                "w_out": dense_w((d, d)), "b_out": dense_b((d,))}

    def cross_attn_params():
        return {"w_q": dense_w((d, d)), "b_q": dense_b((d,)),
                "w_kv": dense_w((d, 2 * d)), "b_kv": dense_b((2 * d,)),
                "w_out": dense_w((d, d)), "b_out": dense_b((d,))}

    def ffn_and_norms(extra_norm=False):
        p = {"lin1_w": dense_w((d, d_ff)), "lin1_b": dense_b((d_ff,)),
             "lin2_w": dense_w((d_ff, d)), "lin2_b": dense_b((d,)),
             "norm1_w": jnp.ones((d,), jnp.float32), "norm1_b": jnp.zeros((d,), jnp.float32),
             "norm2_w": jnp.ones((d,), jnp.float32), "norm2_b": jnp.zeros((d,), jnp.float32)}
        if extra_norm:
            p["norm3_w"] = jnp.ones((d,), jnp.float32)
            p["norm3_b"] = jnp.zeros((d,), jnp.float32)
        return p

    def enc_layer():
        p = {"self_attn": self_attn_params()}
        p.update(ffn_and_norms())
        return p

    def dec_layer():
        p = {"self_attn": self_attn_params(), "cross_attn": cross_attn_params()}
        p.update(ffn_and_norms(extra_norm=True))
        return p

    return {
        "src_tok_emb": jax.random.normal(next(keys), (src_vocab, d), jnp.float32) * 0.02,
        "tgt_tok_emb": jax.random.normal(next(keys), (tgt_vocab, d), jnp.float32) * 0.02,
        "pe_table": positional_encoding_table(maxlen, d),
        "encoder_layers": [enc_layer() for _ in range(num_enc)],
        "decoder_layers": [dec_layer() for _ in range(num_dec)],
        "enc_norm_w": jnp.ones((d,), jnp.float32), "enc_norm_b": jnp.zeros((d,), jnp.float32),
        "dec_norm_w": jnp.ones((d,), jnp.float32), "dec_norm_b": jnp.zeros((d,), jnp.float32),
        "gen_w": dense_w((d, tgt_vocab)), "gen_b": dense_b((tgt_vocab,)),
    }


# ------------------------------------------------------------------
# Example
# ------------------------------------------------------------------

if __name__ == "__main__":
    NUM_ENC, NUM_DEC = 2, 2
    EMB, NHEAD, DFF = 32, 4, 64
    SRC_VOCAB, TGT_VOCAB = 50, 48
    SRC_LEN, TGT_LEN, B = 10, 8, 2

    key = jax.random.PRNGKey(0)
    kp, ks, kt = jax.random.split(key, 3)
    params = init_params(kp, NUM_ENC, NUM_DEC, EMB, NHEAD, SRC_VOCAB, TGT_VOCAB, DFF)

    src = jax.random.randint(ks, (SRC_LEN, B), 0, SRC_VOCAB, dtype=jnp.int32)
    trg = jax.random.randint(kt, (TGT_LEN, B), 0, TGT_VOCAB, dtype=jnp.int32)

    src_mask = jnp.zeros((SRC_LEN, SRC_LEN), jnp.float32)
    causal = jnp.arange(TGT_LEN)[None, :] > jnp.arange(TGT_LEN)[:, None]
    tgt_mask = jnp.where(causal, NEG_INF, 0.0).astype(jnp.float32)

    # pad the last source position of batch 1 and the last target position of batch 0
    src_padding_mask = jnp.zeros((B, SRC_LEN), bool).at[1, -1].set(True)
    tgt_padding_mask = jnp.zeros((B, TGT_LEN), bool).at[0, -1].set(True)
    memory_key_padding_mask = src_padding_mask

    fwd = jax.jit(functools.partial(seq2seq_transformer_forward, nhead=NHEAD, emb_size=EMB))
    out = fwd(params, src, trg, src_mask, tgt_mask,
              src_padding_mask, tgt_padding_mask, memory_key_padding_mask)
    out = jax.block_until_ready(out)

    assert out.shape == (TGT_LEN, B, TGT_VOCAB), out.shape
    assert bool(jnp.all(jnp.isfinite(out)))
    print("KERNEL_OK")
</pallas_src>

<mosaic_0001>
module attributes {stable_mosaic.version = 11 : i64} {
  func.func @_linear_kernel(%arg0: i32, %arg1: i32, %arg2: i32, %arg3: memref<20x32xbf16, #tpu.memory_space<vmem>>, %arg4: memref<32x96xbf16, #tpu.memory_space<vmem>>, %arg5: memref<1x96xf32, #tpu.memory_space<vmem>>, %arg6: memref<20x96xbf16, #tpu.memory_space<vmem>>, %arg7: memref<20x96xf32, #tpu.memory_space<vmem>>) attributes {dimension_semantics = [#tpu.dimension_semantics<parallel>, #tpu.dimension_semantics<parallel>, #tpu.dimension_semantics<arbitrary>], iteration_bounds = array<i64: 1, 1, 1>, scalar_prefetch = 0 : i64, scratch_operands = 1 : i64, tpu.core_type = #tpu.core_type<tc>, window_params = [{transform_indices = @transform_0, window_bounds = array<i64: 20, 32>}, {transform_indices = @transform_1, window_bounds = array<i64: 32, 96>}, {transform_indices = @transform_2, window_bounds = array<i64: 1, 96>}, {transform_indices = @transform_3, window_bounds = array<i64: 20, 96>}]} {
    %c0_i32 = arith.constant 0 : i32
    %0 = arith.cmpi eq, %arg2, %c0_i32 : i32
    %1 = arith.extui %0 : i1 to i32
    %c0_i32_0 = arith.constant 0 : i32
    %2 = arith.cmpi ne, %1, %c0_i32_0 : i32
    scf.if %2 {
      %cst_10 = arith.constant 0.000000e+00 : f32
      %12 = vector.broadcast %cst_10 : f32 to vector<20x96xf32>
      %c0_11 = arith.constant 0 : index
      %c0_12 = arith.constant 0 : index
      %13 = vector.load %arg7[%c0_11, %c0_12] : memref<20x96xf32, #tpu.memory_space<vmem>>, vector<20x96xf32>
      tpu.vector_store %arg7[%c0_11, %c0_12], %12 {strides = array<i32>} : memref<20x96xf32, #tpu.memory_space<vmem>>, vector<20x96xf32>,
    } else {
    }
    %c0 = arith.constant 0 : index
    %c0_1 = arith.constant 0 : index
    %3 = vector.load %arg7[%c0, %c0_1] : memref<20x96xf32, #tpu.memory_space<vmem>>, vector<20x96xf32>
    %c0_2 = arith.constant 0 : index
    %c0_3 = arith.constant 0 : index
    %4 = vector.load %arg3[%c0_2, %c0_3] : memref<20x32xbf16, #tpu.memory_space<vmem>>, vector<20x32xbf16>
    %c0_4 = arith.constant 0 : index
    %c0_5 = arith.constant 0 : index
    %5 = vector.load %arg4[%c0_4, %c0_5] : memref<32x96xbf16, #tpu.memory_space<vmem>>, vector<32x96xbf16>
    %cst = arith.constant dense<0.000000e+00> : vector<20x96xf32>
    %6 = tpu.matmul %4, %5, %cst {dimension_numbers = #tpu.dot_dimension_numbers<[1], [0], [0], [1], [0, 0, 1, 1], [], []>} : vector<20x32xbf16>, vector<32x96xbf16>, vector<20x96xf32> -> vector<20x96xf32>
    %7 = arith.addf %3, %6 : vector<20x96xf32>
    %c0_6 = arith.constant 0 : index
    %c0_7 = arith.constant 0 : index
    %8 = vector.load %arg7[%c0_6, %c0_7] : memref<20x96xf32, #tpu.memory_space<vmem>>, vector<20x96xf32>
    tpu.vector_store %arg7[%c0_6, %c0_7], %7 {strides = array<i32>} : memref<20x96xf32, #tpu.memory_space<vmem>>, vector<20x96xf32>,
    %c0_i32_8 = arith.constant 0 : i32
    %9 = arith.cmpi eq, %arg2, %c0_i32_8 : i32
    %10 = arith.extui %9 : i1 to i32
    %c0_i32_9 = arith.constant 0 : i32
    %11 = arith.cmpi ne, %10, %c0_i32_9 : i32
    scf.if %11 {
      %c0_10 = arith.constant 0 : index
      %c0_11 = arith.constant 0 : index
      %12 = vector.load %arg7[%c0_10, %c0_11] : memref<20x96xf32, #tpu.memory_space<vmem>>, vector<20x96xf32>
      %c0_12 = arith.constant 0 : index
      %c0_13 = arith.constant 0 : index
      %13 = vector.load %arg5[%c0_12, %c0_13] : memref<1x96xf32, #tpu.memory_space<vmem>>, vector<1x96xf32>
      %14 = vector.broadcast %13 : vector<1x96xf32> to vector<20x96xf32>
      %15 = arith.addf %12, %14 : vector<20x96xf32>
      %16 = arith.truncf %15 : vector<20x96xf32> to vector<20x96xbf16>
      %c0_14 = arith.constant 0 : index
      %c0_15 = arith.constant 0 : index
      %17 = vector.load %arg6[%c0_14, %c0_15] : memref<20x96xbf16, #tpu.memory_space<vmem>>, vector<20x96xbf16>
      tpu.vector_store %arg6[%c0_14, %c0_15], %16 {strides = array<i32>} : memref<20x96xbf16, #tpu.memory_space<vmem>>, vector<20x96xbf16>,
    } else {
    }
    return
  }
  func.func @transform_0(%arg0: i32, %arg1: i32, %arg2: i32) -> (i32, i32) {
    %c0_i32 = arith.constant 0 : i32
    return %arg0, %arg2 : i32, i32
  }
  func.func @transform_1(%arg0: i32, %arg1: i32, %arg2: i32) -> (i32, i32) {
    %c0_i32 = arith.constant 0 : i32
    return %arg2, %arg1 : i32, i32
  }
  func.func @transform_2(%arg0: i32, %arg1: i32, %arg2: i32) -> (i32, i32) {
    %c0_i32 = arith.constant 0 : i32
    %c0_i32_0 = arith.constant 0 : i32
    return %c0_i32, %arg1 : i32, i32
  }
  func.func @transform_3(%arg0: i32, %arg1: i32, %arg2: i32) -> (i32, i32) {
    %c0_i32 = arith.constant 0 : i32
    return %arg0, %arg1 : i32, i32
  }
}

module attributes {stable_mosaic.version = 11 : i64} {
  func.func @_self_attn_kernel(%arg0: i32, %arg1: memref<1x10x3x32xbf16, #tpu.memory_space<vmem>>, %arg2: memref<10x10xf32, #tpu.memory_space<vmem>>, %arg3: memref<1x1x10xf32, #tpu.memory_space<vmem>>, %arg4: memref<1x10x32xbf16, #tpu.memory_space<vmem>>) attributes {dimension_semantics = [#tpu.dimension_semantics<parallel>], iteration_bounds = array<i64: 2>, scalar_prefetch = 0 : i64, scratch_operands = 0 : i64, tpu.core_type = #tpu.core_type<tc>, window_params = [{transform_indices = @transform_0, window_bounds = array<i64: 1, 10, 3, 32>}, {pipeline_mode = #tpu.pipeline_mode<synchronous>, transform_indices = @transform_1, window_bounds = array<i64: 10, 10>}, {transform_indices = @transform_2, window_bounds = array<i64: 1, 1, 10>}, {transform_indices = @transform_3, window_bounds = array<i64: 1, 10, 32>}]} {
    %c0 = arith.constant 0 : index
    %c0_0 = arith.constant 0 : index
    %c0_1 = arith.constant 0 : index
    %c0_2 = arith.constant 0 : index
    %0 = vector.load %arg1[%c0, %c0_0, %c0_1, %c0_2] : memref<1x10x3x32xbf16, #tpu.memory_space<vmem>>, vector<1x10x3x32xbf16>
    %1 = vector.extract_strided_slice %0 {offsets = [0, 0, 0, 0], sizes = [1, 10, 1, 32], strides = [1, 1, 1, 1]} : vector<1x10x3x32xbf16> to vector<1x10x1x32xbf16>
    %2 = vector.shape_cast %1 : vector<1x10x1x32xbf16> to vector<10x32xbf16>
    %3 = vector.extract_strided_slice %0 {offsets = [0, 0, 1, 0], sizes = [1, 10, 1, 32], strides = [1, 1, 1, 1]} : vector<1x10x3x32xbf16> to vector<1x10x1x32xbf16>
    %4 = vector.shape_cast %3 : vector<1x10x1x32xbf16> to vector<10x32xbf16>
    %5 = vector.extract_strided_slice %0 {offsets = [0, 0, 2, 0], sizes = [1, 10, 1, 32], strides = [1, 1, 1, 1]} : vector<1x10x3x32xbf16> to vector<1x10x1x32xbf16>
    %6 = vector.shape_cast %5 : vector<1x10x1x32xbf16> to vector<10x32xbf16>
    %c0_3 = arith.constant 0 : index
    %c0_4 = arith.constant 0 : index
    %7 = vector.load %arg2[%c0_3, %c0_4] : memref<10x10xf32, #tpu.memory_space<vmem>>, vector<10x10xf32>
    %c0_5 = arith.constant 0 : index
    %c0_6 = arith.constant 0 : index
    %c0_7 = arith.constant 0 : index
    %8 = vector.load %arg3[%c0_5, %c0_6, %c0_7] : memref<1x1x10xf32, #tpu.memory_space<vmem>>, vector<1x1x10xf32>
    %9 = vector.shape_cast %8 : vector<1x1x10xf32> to vector<1x10xf32>
    %10 = vector.extract_strided_slice %2 {offsets = [0, 0], sizes = [10, 8], strides = [1, 1]} : vector<10x32xbf16> to vector<10x8xbf16>
    %11 = vector.extract_strided_slice %4 {offsets = [0, 0], sizes = [10, 8], strides = [1, 1]} : vector<10x32xbf16> to vector<10x8xbf16>
    %12 = vector.extract_strided_slice %6 {offsets = [0, 0], sizes = [10, 8], strides = [1, 1]} : vector<10x32xbf16> to vector<10x8xbf16>
    %cst = arith.constant dense<0.000000e+00> : vector<10x10xf32>
    %13 = tpu.matmul %10, %11, %cst {dimension_numbers = #tpu.dot_dimension_numbers<[1], [1], [0], [0], [0, 0, 1, 0], [], []>} : vector<10x8xbf16>, vector<10x8xbf16>, vector<10x10xf32> -> vector<10x10xf32>
    %cst_8 = arith.constant 0.353553385 : f32
    %14 = vector.broadcast %cst_8 : f32 to vector<10x10xf32>
    %15 = arith.mulf %13, %14 : vector<10x10xf32>
    %16 = arith.addf %15, %7 : vector<10x10xf32>
    %17 = vector.broadcast %9 : vector<1x10xf32> to vector<10x10xf32>
    %18 = arith.addf %16, %17 : vector<10x10xf32>
    %cst_9 = arith.constant dense<0xFF800000> : vector<10xf32>
    %19 = vector.multi_reduction <maximumf>, %18, %cst_9 [1] : vector<10x10xf32> to vector<10xf32>
    %20 = vector.shape_cast %19 : vector<10xf32> to vector<10x1xf32>
    %21 = vector.broadcast %20 : vector<10x1xf32> to vector<10x10xf32>
    %22 = arith.subf %18, %21 : vector<10x10xf32>
    %23 = math.exp %22 : vector<10x10xf32>
    %cst_10 = arith.constant dense<0.000000e+00> : vector<10xf32>
    %24 = vector.multi_reduction <add>, %23, %cst_10 [1] : vector<10x10xf32> to vector<10xf32>
    %25 = vector.shape_cast %24 : vector<10xf32> to vector<10x1xf32>
    %26 = arith.truncf %23 : vector<10x10xf32> to vector<10x10xbf16>
    %cst_11 = arith.constant dense<0.000000e+00> : vector<10x8xf32>
    %27 = tpu.matmul %26, %12, %cst_11 {dimension_numbers = #tpu.dot_dimension_numbers<[1], [0], [0], [1], [0, 0, 1, 1], [], []>} : vector<10x10xbf16>, vector<10x8xbf16>, vector<10x8xf32> -> vector<10x8xf32>
    %28 = vector.broadcast %25 : vector<10x1xf32> to vector<10x8xf32>
    %29 = arith.divf %27, %28 : vector<10x8xf32>
    %30 = vector.extract_strided_slice %2 {offsets = [0, 8], sizes = [10, 8], strides = [1, 1]} : vector<10x32xbf16> to vector<10x8xbf16>
    %31 = vector.extract_strided_slice %4 {offsets = [0, 8], sizes = [10, 8], strides = [1, 1]} : vector<10x32xbf16> to vector<10x8xbf16>
    %32 = vector.extract_strided_slice %6 {offsets = [0, 8], sizes = [10, 8], strides = [1, 1]} : vector<10x32xbf16> to vector<10x8xbf16>
    %cst_12 = arith.constant dense<0.000000e+00> : vector<10x10xf32>
    %33 = tpu.matmul %30, %31, %cst_12 {dimension_numbers = #tpu.dot_dimension_numbers<[1], [1], [0], [0], [0, 0, 1, 0], [], []>} : vector<10x8xbf16>, vector<10x8xbf16>, vector<10x10xf32> -> vector<10x10xf32>
    %cst_13 = arith.constant 0.353553385 : f32
    %34 = vector.broadcast %cst_13 : f32 to vector<10x10xf32>
    %35 = arith.mulf %33, %34 : vector<10x10xf32>
    %36 = arith.addf %35, %7 : vector<10x10xf32>
    %37 = vector.broadcast %9 : vector<1x10xf32> to vector<10x10xf32>
    %38 = arith.addf %36, %37 : vector<10x10xf32>
    %cst_14 = arith.constant dense<0xFF800000> : vector<10xf32>
    %39 = vector.multi_reduction <maximumf>, %38, %cst_14 [1] : vector<10x10xf32> to vector<10xf32>
    %40 = vector.shape_cast %39 : vector<10xf32> to vector<10x1xf32>
    %41 = vector.broadcast %40 : vector<10x1xf32> to vector<10x10xf32>
    %42 = arith.subf %38, %41 : vector<10x10xf32>
    %43 = math.exp %42 : vector<10x10xf32>
    %cst_15 = arith.constant dense<0.000000e+00> : vector<10xf32>
    %44 = vector.multi_reduction <add>, %43, %cst_15 [1] : vector<10x10xf32> to vector<10xf32>
    %45 = vector.shape_cast %44 : vector<10xf32> to vector<10x1xf32>
    %46 = arith.truncf %43 : vector<10x10xf32> to vector<10x10xbf16>
    %cst_16 = arith.constant dense<0.000000e+00> : vector<10x8xf32>
    %47 = tpu.matmul %46, %32, %cst_16 {dimension_numbers = #tpu.dot_dimension_numbers<[1], [0], [0], [1], [0, 0, 1, 1], [], []>} : vector<10x10xbf16>, vector<10x8xbf16>, vector<10x8xf32> -> vector<10x8xf32>
    %48 = vector.broadcast %45 : vector<10x1xf32> to vector<10x8xf32>
    %49 = arith.divf %47, %48 : vector<10x8xf32>
    %50 = vector.extract_strided_slice %2 {offsets = [0, 16], sizes = [10, 8], strides = [1, 1]} : vector<10x32xbf16> to vector<10x8xbf16>
    %51 = vector.extract_strided_slice %4 {offsets = [0, 16], sizes = [10, 8], strides = [1, 1]} : vector<10x32xbf16> to vector<10x8xbf16>
    %52 = vector.extract_strided_slice %6 {offsets = [0, 16], sizes = [10, 8], strides = [1, 1]} : vector<10x32xbf16> to vector<10x8xbf16>
    %cst_17 = arith.constant dense<0.000000e+00> : vector<10x10xf32>
    %53 = tpu.matmul %50, %51, %cst_17 {dimension_numbers = #tpu.dot_dimension_numbers<[1], [1], [0], [0], [0, 0, 1, 0], [], []>} : vector<10x8xbf16>, vector<10x8xbf16>, vector<10x10xf32> -> vector<10x10xf32>
    %cst_18 = arith.constant 0.353553385 : f32
    %54 = vector.broadcast %cst_18 : f32 to vector<10x10xf32>
    %55 = arith.mulf %53, %54 : vector<10x10xf32>
    %56 = arith.addf %55, %7 : vector<10x10xf32>
    %57 = vector.broadcast %9 : vector<1x10xf32> to vector<10x10xf32>
    %58 = arith.addf %56, %57 : vector<10x10xf32>
    %cst_19 = arith.constant dense<0xFF800000> : vector<10xf32>
    %59 = vector.multi_reduction <maximumf>, %58, %cst_19 [1] : vector<10x10xf32> to vector<10xf32>
    %60 = vector.shape_cast %59 : vector<10xf32> to vector<10x1xf32>
    %61 = vector.broadcast %60 : vector<10x1xf32> to vector<10x10xf32>
    %62 = arith.subf %58, %61 : vector<10x10xf32>
    %63 = math.exp %62 : vector<10x10xf32>
    %cst_20 = arith.constant dense<0.000000e+00> : vector<10xf32>
    %64 = vector.multi_reduction <add>, %63, %cst_20 [1] : vector<10x10xf32> to vector<10xf32>
    %65 = vector.shape_cast %64 : vector<10xf32> to vector<10x1xf32>
    %66 = arith.truncf %63 : vector<10x10xf32> to vector<10x10xbf16>
    %cst_21 = arith.constant dense<0.000000e+00> : vector<10x8xf32>
    %67 = tpu.matmul %66, %52, %cst_21 {dimension_numbers = #tpu.dot_dimension_numbers<[1], [0], [0], [1], [0, 0, 1, 1], [], []>} : vector<10x10xbf16>, vector<10x8xbf16>, vector<10x8xf32> -> vector<10x8xf32>
    %68 = vector.broadcast %65 : vector<10x1xf32> to vector<10x8xf32>
    %69 = arith.divf %67, %68 : vector<10x8xf32>
    %70 = vector.extract_strided_slice %2 {offsets = [0, 24], sizes = [10, 8], strides = [1, 1]} : vector<10x32xbf16> to vector<10x8xbf16>
    %71 = vector.extract_strided_slice %4 {offsets = [0, 24], sizes = [10, 8], strides = [1, 1]} : vector<10x32xbf16> to vector<10x8xbf16>
    %72 = vector.extract_strided_slice %6 {offsets = [0, 24], sizes = [10, 8], strides = [1, 1]} : vector<10x32xbf16> to vector<10x8xbf16>
    %cst_22 = arith.constant dense<0.000000e+00> : vector<10x10xf32>
    %73 = tpu.matmul %70, %71, %cst_22 {dimension_numbers = #tpu.dot_dimension_numbers<[1], [1], [0], [0], [0, 0, 1, 0], [], []>} : vector<10x8xbf16>, vector<10x8xbf16>, vector<10x10xf32> -> vector<10x10xf32>
    %cst_23 = arith.constant 0.353553385 : f32
    %74 = vector.broadcast %cst_23 : f32 to vector<10x10xf32>
    %75 = arith.mulf %73, %74 : vector<10x10xf32>
    %76 = arith.addf %75, %7 : vector<10x10xf32>
    %77 = vector.broadcast %9 : vector<1x10xf32> to vector<10x10xf32>
    %78 = arith.addf %76, %77 : vector<10x10xf32>
    %cst_24 = arith.constant dense<0xFF800000> : vector<10xf32>
    %79 = vector.multi_reduction <maximumf>, %78, %cst_24 [1] : vector<10x10xf32> to vector<10xf32>
    %80 = vector.shape_cast %79 : vector<10xf32> to vector<10x1xf32>
    %81 = vector.broadcast %80 : vector<10x1xf32> to vector<10x10xf32>
    %82 = arith.subf %78, %81 : vector<10x10xf32>
    %83 = math.exp %82 : vector<10x10xf32>
    %cst_25 = arith.constant dense<0.000000e+00> : vector<10xf32>
    %84 = vector.multi_reduction <add>, %83, %cst_25 [1] : vector<10x10xf32> to vector<10xf32>
    %85 = vector.shape_cast %84 : vector<10xf32> to vector<10x1xf32>
    %86 = arith.truncf %83 : vector<10x10xf32> to vector<10x10xbf16>
    %cst_26 = arith.constant dense<0.000000e+00> : vector<10x8xf32>
    %87 = tpu.matmul %86, %72, %cst_26 {dimension_numbers = #tpu.dot_dimension_numbers<[1], [0], [0], [1], [0, 0, 1, 1], [], []>} : vector<10x10xbf16>, vector<10x8xbf16>, vector<10x8xf32> -> vector<10x8xf32>
    %88 = vector.broadcast %85 : vector<10x1xf32> to vector<10x8xf32>
    %89 = arith.divf %87, %88 : vector<10x8xf32>
    %90 = tpu.concatenate %29, %49, %69, %89 in 1 : vector<10x8xf32>, vector<10x8xf32>, vector<10x8xf32>, vector<10x8xf32> -> vector<10x32xf32>
    %91 = vector.shape_cast %90 : vector<10x32xf32> to vector<1x10x32xf32>
    %92 = arith.truncf %91 : vector<1x10x32xf32> to vector<1x10x32xbf16>
    %c0_27 = arith.constant 0 : index
    %c0_28 = arith.constant 0 : index
    %c0_29 = arith.constant 0 : index
    %93 = vector.load %arg4[%c0_27, %c0_28, %c0_29] : memref<1x10x32xbf16, #tpu.memory_space<vmem>>, vector<1x10x32xbf16>
    tpu.vector_store %arg4[%c0_27, %c0_28, %c0_29], %92 {strides = array<i32>} : memref<1x10x32xbf16, #tpu.memory_space<vmem>>, vector<1x10x32xbf16>,
    return
  }
  func.func @transform_0(%arg0: i32) -> (i32, i32, i32, i32) {
    %c0_i32 = arith.constant 0 : i32
    %c0_i32_0 = arith.constant 0 : i32
    %c0_i32_1 = arith.constant 0 : i32
    %c0_i32_2 = arith.constant 0 : i32
    return %arg0, %c0_i32, %c0_i32_0, %c0_i32_1 : i32, i32, i32, i32
  }
  func.func @transform_1(%arg0: i32) -> (i32, i32) {
    %c0_i32 = arith.constant 0 : i32
    %c0_i32_0 = arith.constant 0 : i32
    %c0_i32_1 = arith.constant 0 : i32
    return %c0_i32, %c0_i32_0 : i32, i32
  }
  func.func @transform_2(%arg0: i32) -> (i32, i32, i32) {
    %c0_i32 = arith.constant 0 : i32
    %c0_i32_0 = arith.constant 0 : i32
    %c0_i32_1 = arith.constant 0 : i32
    return %arg0, %c0_i32, %c0_i32_0 : i32, i32, i32
  }
  func.func @transform_3(%arg0: i32) -> (i32, i32, i32) {
    %c0_i32 = arith.constant 0 : i32
    %c0_i32_0 = arith.constant 0 : i32
    %c0_i32_1 = arith.constant 0 : i32
    return %arg0, %c0_i32, %c0_i32_0 : i32, i32, i32
  }
}

module attributes {stable_mosaic.version = 11 : i64} {
  func.func @_linear_kernel(%arg0: i32, %arg1: i32, %arg2: i32, %arg3: memref<20x32xbf16, #tpu.memory_space<vmem>>, %arg4: memref<32x64xbf16, #tpu.memory_space<vmem>>, %arg5: memref<1x64xf32, #tpu.memory_space<vmem>>, %arg6: memref<20x64xbf16, #tpu.memory_space<vmem>>, %arg7: memref<20x64xf32, #tpu.memory_space<vmem>>) attributes {dimension_semantics = [#tpu.dimension_semantics<parallel>, #tpu.dimension_semantics<parallel>, #tpu.dimension_semantics<arbitrary>], iteration_bounds = array<i64: 1, 1, 1>, scalar_prefetch = 0 : i64, scratch_operands = 1 : i64, tpu.core_type = #tpu.core_type<tc>, window_params = [{transform_indices = @transform_0, window_bounds = array<i64: 20, 32>}, {transform_indices = @transform_1, window_bounds = array<i64: 32, 64>}, {transform_indices = @transform_2, window_bounds = array<i64: 1, 64>}, {transform_indices = @transform_3, window_bounds = array<i64: 20, 64>}]} {
    %c0_i32 = arith.constant 0 : i32
    %0 = arith.cmpi eq, %arg2, %c0_i32 : i32
    %1 = arith.extui %0 : i1 to i32
    %c0_i32_0 = arith.constant 0 : i32
    %2 = arith.cmpi ne, %1, %c0_i32_0 : i32
    scf.if %2 {
      %cst_10 = arith.constant 0.000000e+00 : f32
      %12 = vector.broadcast %cst_10 : f32 to vector<20x64xf32>
      %c0_11 = arith.constant 0 : index
      %c0_12 = arith.constant 0 : index
      %13 = vector.load %arg7[%c0_11, %c0_12] : memref<20x64xf32, #tpu.memory_space<vmem>>, vector<20x64xf32>
      tpu.vector_store %arg7[%c0_11, %c0_12], %12 {strides = array<i32>} : memref<20x64xf32, #tpu.memory_space<vmem>>, vector<20x64xf32>,
    } else {
    }
    %c0 = arith.constant 0 : index
    %c0_1 = arith.constant 0 : index
    %3 = vector.load %arg7[%c0, %c0_1] : memref<20x64xf32, #tpu.memory_space<vmem>>, vector<20x64xf32>
    %c0_2 = arith.constant 0 : index
    %c0_3 = arith.constant 0 : index
    %4 = vector.load %arg3[%c0_2, %c0_3] : memref<20x32xbf16, #tpu.memory_space<vmem>>, vector<20x32xbf16>
    %c0_4 = arith.constant 0 : index
    %c0_5 = arith.constant 0 : index
    %5 = vector.load %arg4[%c0_4, %c0_5] : memref<32x64xbf16, #tpu.memory_space<vmem>>, vector<32x64xbf16>
    %cst = arith.constant dense<0.000000e+00> : vector<20x64xf32>
    %6 = tpu.matmul %4, %5, %cst {dimension_numbers = #tpu.dot_dimension_numbers<[1], [0], [0], [1], [0, 0, 1, 1], [], []>} : vector<20x32xbf16>, vector<32x64xbf16>, vector<20x64xf32> -> vector<20x64xf32>
    %7 = arith.addf %3, %6 : vector<20x64xf32>
    %c0_6 = arith.constant 0 : index
    %c0_7 = arith.constant 0 : index
    %8 = vector.load %arg7[%c0_6, %c0_7] : memref<20x64xf32, #tpu.memory_space<vmem>>, vector<20x64xf32>
    tpu.vector_store %arg7[%c0_6, %c0_7], %7 {strides = array<i32>} : memref<20x64xf32, #tpu.memory_space<vmem>>, vector<20x64xf32>,
    %c0_i32_8 = arith.constant 0 : i32
    %9 = arith.cmpi eq, %arg2, %c0_i32_8 : i32
    %10 = arith.extui %9 : i1 to i32
    %c0_i32_9 = arith.constant 0 : i32
    %11 = arith.cmpi ne, %10, %c0_i32_9 : i32
    scf.if %11 {
      %c0_10 = arith.constant 0 : index
      %c0_11 = arith.constant 0 : index
      %12 = vector.load %arg7[%c0_10, %c0_11] : memref<20x64xf32, #tpu.memory_space<vmem>>, vector<20x64xf32>
      %c0_12 = arith.constant 0 : index
      %c0_13 = arith.constant 0 : index
      %13 = vector.load %arg5[%c0_12, %c0_13] : memref<1x64xf32, #tpu.memory_space<vmem>>, vector<1x64xf32>
      %14 = vector.broadcast %13 : vector<1x64xf32> to vector<20x64xf32>
      %15 = arith.addf %12, %14 : vector<20x64xf32>
      %cst_14 = arith.constant 0.000000e+00 : f32
      %16 = vector.broadcast %cst_14 : f32 to vector<20x64xf32>
      %17 = arith.maximumf %15, %16 : vector<20x64xf32>
      %18 = arith.truncf %17 : vector<20x64xf32> to vector<20x64xbf16>
      %c0_15 = arith.constant 0 : index
      %c0_16 = arith.constant 0 : index
      %19 = vector.load %arg6[%c0_15, %c0_16] : memref<20x64xbf16, #tpu.memory_space<vmem>>, vector<20x64xbf16>
      tpu.vector_store %arg6[%c0_15, %c0_16], %18 {strides = array<i32>} : memref<20x64xbf16, #tpu.memory_space<vmem>>, vector<20x64xbf16>,
    } else {
    }
    return
  }
  func.func @transform_0(%arg0: i32, %arg1: i32, %arg2: i32) -> (i32, i32) {
    %c0_i32 = arith.constant 0 : i32
    return %arg0, %arg2 : i32, i32
  }
  func.func @transform_1(%arg0: i32, %arg1: i32, %arg2: i32) -> (i32, i32) {
    %c0_i32 = arith.constant 0 : i32
    return %arg2, %arg1 : i32, i32
  }
  func.func @transform_2(%arg0: i32, %arg1: i32, %arg2: i32) -> (i32, i32) {
    %c0_i32 = arith.constant 0 : i32
    %c0_i32_0 = arith.constant 0 : i32
    return %c0_i32, %arg1 : i32, i32
  }
  func.func @transform_3(%arg0: i32, %arg1: i32, %arg2: i32) -> (i32, i32) {
    %c0_i32 = arith.constant 0 : i32
    return %arg0, %arg1 : i32, i32
  }
}

module attributes {stable_mosaic.version = 11 : i64} {
  func.func @_linear_add_ln_kernel(%arg0: i32, %arg1: i32, %arg2: memref<20x32xbf16, #tpu.memory_space<vmem>>, %arg3: memref<32x32xbf16, #tpu.memory_space<vmem>>, %arg4: memref<1x32xf32, #tpu.memory_space<vmem>>, %arg5: memref<20x32xbf16, #tpu.memory_space<vmem>>, %arg6: memref<1x32xf32, #tpu.memory_space<vmem>>, %arg7: memref<1x32xf32, #tpu.memory_space<vmem>>, %arg8: memref<20x32xbf16, #tpu.memory_space<vmem>>, %arg9: memref<20x32xf32, #tpu.memory_space<vmem>>) attributes {dimension_semantics = [#tpu.dimension_semantics<parallel>, #tpu.dimension_semantics<arbitrary>], iteration_bounds = array<i64: 1, 1>, scalar_prefetch = 0 : i64, scratch_operands = 1 : i64, tpu.core_type = #tpu.core_type<tc>, window_params = [{transform_indices = @transform_0, window_bounds = array<i64: 20, 32>}, {transform_indices = @transform_1, window_bounds = array<i64: 32, 32>}, {pipeline_mode = #tpu.pipeline_mode<synchronous>, transform_indices = @transform_2, window_bounds = array<i64: 1, 32>}, {transform_indices = @transform_3, window_bounds = array<i64: 20, 32>}, {pipeline_mode = #tpu.pipeline_mode<synchronous>, transform_indices = @transform_4, window_bounds = array<i64: 1, 32>}, {pipeline_mode = #tpu.pipeline_mode<synchronous>, transform_indices = @transform_5, window_bounds = array<i64: 1, 32>}, {transform_indices = @transform_6, window_bounds = array<i64: 20, 32>}]} {
    %c0_i32 = arith.constant 0 : i32
    %0 = arith.cmpi eq, %arg1, %c0_i32 : i32
    %1 = arith.extui %0 : i1 to i32
    %c0_i32_0 = arith.constant 0 : i32
    %2 = arith.cmpi ne, %1, %c0_i32_0 : i32
    scf.if %2 {
      %cst_10 = arith.constant 0.000000e+00 : f32
      %12 = vector.broadcast %cst_10 : f32 to vector<20x32xf32>
      %c0_11 = arith.constant 0 : index
      %c0_12 = arith.constant 0 : index
      %13 = vector.load %arg9[%c0_11, %c0_12] : memref<20x32xf32, #tpu.memory_space<vmem>>, vector<20x32xf32>
      tpu.vector_store %arg9[%c0_11, %c0_12], %12 {strides = array<i32>} : memref<20x32xf32, #tpu.memory_space<vmem>>, vector<20x32xf32>,
    } else {
    }
    %c0 = arith.constant 0 : index
    %c0_1 = arith.constant 0 : index
    %3 = vector.load %arg9[%c0, %c0_1] : memref<20x32xf32, #tpu.memory_space<vmem>>, vector<20x32xf32>
    %c0_2 = arith.constant 0 : index
    %c0_3 = arith.constant 0 : index
    %4 = vector.load %arg2[%c0_2, %c0_3] : memref<20x32xbf16, #tpu.memory_space<vmem>>, vector<20x32xbf16>
    %c0_4 = arith.constant 0 : index
    %c0_5 = arith.constant 0 : index
    %5 = vector.load %arg3[%c0_4, %c0_5] : memref<32x32xbf16, #tpu.memory_space<vmem>>, vector<32x32xbf16>
    %cst = arith.constant dense<0.000000e+00> : vector<20x32xf32>
    %6 = tpu.matmul %4, %5, %cst {dimension_numbers = #tpu.dot_dimension_numbers<[1], [0], [0], [1], [0, 0, 1, 1], [], []>} : vector<20x32xbf16>, vector<32x32xbf16>, vector<20x32xf32> -> vector<20x32xf32>
    %7 = arith.addf %3, %6 : vector<20x32xf32>
    %c0_6 = arith.constant 0 : index
    %c0_7 = arith.constant 0 : index
    %8 = vector.load %arg9[%c0_6, %c0_7] : memref<20x32xf32, #tpu.memory_space<vmem>>, vector<20x32xf32>
    tpu.vector_store %arg9[%c0_6, %c0_7], %7 {strides = array<i32>} : memref<20x32xf32, #tpu.memory_space<vmem>>, vector<20x32xf32>,
    %c0_i32_8 = arith.constant 0 : i32
    %9 = arith.cmpi eq, %arg1, %c0_i32_8 : i32
    %10 = arith.extui %9 : i1 to i32
    %c0_i32_9 = arith.constant 0 : i32
    %11 = arith.cmpi ne, %10, %c0_i32_9 : i32
    scf.if %11 {
      %c0_10 = arith.constant 0 : index
      %c0_11 = arith.constant 0 : index
      %12 = vector.load %arg9[%c0_10, %c0_11] : memref<20x32xf32, #tpu.memory_space<vmem>>, vector<20x32xf32>
      %c0_12 = arith.constant 0 : index
      %c0_13 = arith.constant 0 : index
      %13 = vector.load %arg4[%c0_12, %c0_13] : memref<1x32xf32, #tpu.memory_space<vmem>>, vector<1x32xf32>
      %14 = vector.broadcast %13 : vector<1x32xf32> to vector<20x32xf32>
      %15 = arith.addf %12, %14 : vector<20x32xf32>
      %c0_14 = arith.constant 0 : index
      %c0_15 = arith.constant 0 : index
      %16 = vector.load %arg5[%c0_14, %c0_15] : memref<20x32xbf16, #tpu.memory_space<vmem>>, vector<20x32xbf16>
      %17 = arith.extf %16 : vector<20x32xbf16> to vector<20x32xf32>
      %18 = arith.addf %15, %17 : vector<20x32xf32>
      %cst_16 = arith.constant dense<0.000000e+00> : vector<20xf32>
      %19 = vector.multi_reduction <add>, %18, %cst_16 [1] : vector<20x32xf32> to vector<20xf32>
      %20 = vector.shape_cast %19 : vector<20xf32> to vector<20x1xf32>
      %cst_17 = arith.constant 3.200000e+01 : f32
      %21 = vector.broadcast %cst_17 : f32 to vector<20x1xf32>
      %22 = arith.divf %20, %21 : vector<20x1xf32>
      %23 = vector.broadcast %22 : vector<20x1xf32> to vector<20x32xf32>
      %24 = arith.subf %18, %23 : vector<20x32xf32>
      %25 = arith.mulf %24, %24 : vector<20x32xf32>
      %cst_18 = arith.constant dense<0.000000e+00> : vector<20xf32>
      %26 = vector.multi_reduction <add>, %25, %cst_18 [1] : vector<20x32xf32> to vector<20xf32>
      %27 = vector.shape_cast %26 : vector<20xf32> to vector<20x1xf32>
      %cst_19 = arith.constant 3.200000e+01 : f32
      %28 = vector.broadcast %cst_19 : f32 to vector<20x1xf32>
      %29 = arith.divf %27, %28 : vector<20x1xf32>
      %cst_20 = arith.constant 9.99999974E-6 : f32
      %30 = vector.broadcast %cst_20 : f32 to vector<20x1xf32>
      %31 = arith.addf %29, %30 : vector<20x1xf32>
      %32 = math.rsqrt %31 : vector<20x1xf32>
      %33 = vector.broadcast %32 : vector<20x1xf32> to vector<20x32xf32>
      %34 = arith.mulf %24, %33 : vector<20x32xf32>
      %c0_21 = arith.constant 0 : index
      %c0_22 = arith.constant 0 : index
      %35 = vector.load %arg6[%c0_21, %c0_22] : memref<1x32xf32, #tpu.memory_space<vmem>>, vector<1x32xf32>
      %36 = vector.broadcast %35 : vector<1x32xf32> to vector<20x32xf32>
      %37 = arith.mulf %34, %36 : vector<20x32xf32>
      %c0_23 = arith.constant 0 : index
      %c0_24 = arith.constant 0 : index
      %38 = vector.load %arg7[%c0_23, %c0_24] : memref<1x32xf32, #tpu.memory_space<vmem>>, vector<1x32xf32>
      %39 = vector.broadcast %38 : vector<1x32xf32> to vector<20x32xf32>
      %40 = arith.addf %37, %39 : vector<20x32xf32>
      %41 = arith.truncf %40 : vector<20x32xf32> to vector<20x32xbf16>
      %c0_25 = arith.constant 0 : index
      %c0_26 = arith.constant 0 : index
      %42 = vector.load %arg8[%c0_25, %c0_26] : memref<20x32xbf16, #tpu.memory_space<vmem>>, vector<20x32xbf16>
      tpu.vector_store %arg8[%c0_25, %c0_26], %41 {strides = array<i32>} : memref<20x32xbf16, #tpu.memory_space<vmem>>, vector<20x32xbf16>,
    } else {
    }
    return
  }
  func.func @transform_0(%arg0: i32, %arg1: i32) -> (i32, i32) {
    %c0_i32 = arith.constant 0 : i32
    return %arg0, %arg1 : i32, i32
  }
  func.func @transform_1(%arg0: i32, %arg1: i32) -> (i32, i32) {
    %c0_i32 = arith.constant 0 : i32
    %c0_i32_0 = arith.constant 0 : i32
    return %arg1, %c0_i32 : i32, i32
  }
  func.func @transform_2(%arg0: i32, %arg1: i32) -> (i32, i32) {
    %c0_i32 = arith.constant 0 : i32
    %c0_i32_0 = arith.constant 0 : i32
    %c0_i32_1 = arith.constant 0 : i32
    return %c0_i32, %c0_i32_0 : i32, i32
  }
  func.func @transform_3(%arg0: i32, %arg1: i32) -> (i32, i32) {
    %c0_i32 = arith.constant 0 : i32
    %c0_i32_0 = arith.constant 0 : i32
    return %arg0, %c0_i32 : i32, i32
  }
  func.func @transform_4(%arg0: i32, %arg1: i32) -> (i32, i32) {
    %c0_i32 = arith.constant 0 : i32
    %c0_i32_0 = arith.constant 0 : i32
    %c0_i32_1 = arith.constant 0 : i32
    return %c0_i32, %c0_i32_0 : i32, i32
  }
  func.func @transform_5(%arg0: i32, %arg1: i32) -> (i32, i32) {
    %c0_i32 = arith.constant 0 : i32
    %c0_i32_0 = arith.constant 0 : i32
    %c0_i32_1 = arith.constant 0 : i32
    return %c0_i32, %c0_i32_0 : i32, i32
  }
  func.func @transform_6(%arg0: i32, %arg1: i32) -> (i32, i32) {
    %c0_i32 = arith.constant 0 : i32
    %c0_i32_0 = arith.constant 0 : i32
    return %arg0, %c0_i32 : i32, i32
  }
}

module attributes {stable_mosaic.version = 11 : i64} {
  func.func @_ln_kernel(%arg0: i32, %arg1: memref<20x32xbf16, #tpu.memory_space<vmem>>, %arg2: memref<1x32xf32, #tpu.memory_space<vmem>>, %arg3: memref<1x32xf32, #tpu.memory_space<vmem>>, %arg4: memref<20x32xbf16, #tpu.memory_space<vmem>>) attributes {dimension_semantics = [#tpu.dimension_semantics<parallel>], iteration_bounds = array<i64: 1>, scalar_prefetch = 0 : i64, scratch_operands = 0 : i64, tpu.core_type = #tpu.core_type<tc>, window_params = [{transform_indices = @transform_0, window_bounds = array<i64: 20, 32>}, {pipeline_mode = #tpu.pipeline_mode<synchronous>, transform_indices = @transform_1, window_bounds = array<i64: 1, 32>}, {pipeline_mode = #tpu.pipeline_mode<synchronous>, transform_indices = @transform_2, window_bounds = array<i64: 1, 32>}, {transform_indices = @transform_3, window_bounds = array<i64: 20, 32>}]} {
    %c0 = arith.constant 0 : index
    %c0_0 = arith.constant 0 : index
    %0 = vector.load %arg1[%c0, %c0_0] : memref<20x32xbf16, #tpu.memory_space<vmem>>, vector<20x32xbf16>
    %1 = arith.extf %0 : vector<20x32xbf16> to vector<20x32xf32>
    %cst = arith.constant dense<0.000000e+00> : vector<20xf32>
    %2 = vector.multi_reduction <add>, %1, %cst [1] : vector<20x32xf32> to vector<20xf32>
    %3 = vector.shape_cast %2 : vector<20xf32> to vector<20x1xf32>
    %cst_1 = arith.constant 3.200000e+01 : f32
    %4 = vector.broadcast %cst_1 : f32 to vector<20x1xf32>
    %5 = arith.divf %3, %4 : vector<20x1xf32>
    %6 = vector.broadcast %5 : vector<20x1xf32> to vector<20x32xf32>
    %7 = arith.subf %1, %6 : vector<20x32xf32>
    %8 = arith.mulf %7, %7 : vector<20x32xf32>
    %cst_2 = arith.constant dense<0.000000e+00> : vector<20xf32>
    %9 = vector.multi_reduction <add>, %8, %cst_2 [1] : vector<20x32xf32> to vector<20xf32>
    %10 = vector.shape_cast %9 : vector<20xf32> to vector<20x1xf32>
    %cst_3 = arith.constant 3.200000e+01 : f32
    %11 = vector.broadcast %cst_3 : f32 to vector<20x1xf32>
    %12 = arith.divf %10, %11 : vector<20x1xf32>
    %cst_4 = arith.constant 9.99999974E-6 : f32
    %13 = vector.broadcast %cst_4 : f32 to vector<20x1xf32>
    %14 = arith.addf %12, %13 : vector<20x1xf32>
    %15 = math.rsqrt %14 : vector<20x1xf32>
    %16 = vector.broadcast %15 : vector<20x1xf32> to vector<20x32xf32>
    %17 = arith.mulf %7, %16 : vector<20x32xf32>
    %c0_5 = arith.constant 0 : index
    %c0_6 = arith.constant 0 : index
    %18 = vector.load %arg2[%c0_5, %c0_6] : memref<1x32xf32, #tpu.memory_space<vmem>>, vector<1x32xf32>
    %19 = vector.broadcast %18 : vector<1x32xf32> to vector<20x32xf32>
    %20 = arith.mulf %17, %19 : vector<20x32xf32>
    %c0_7 = arith.constant 0 : index
    %c0_8 = arith.constant 0 : index
    %21 = vector.load %arg3[%c0_7, %c0_8] : memref<1x32xf32, #tpu.memory_space<vmem>>, vector<1x32xf32>
    %22 = vector.broadcast %21 : vector<1x32xf32> to vector<20x32xf32>
    %23 = arith.addf %20, %22 : vector<20x32xf32>
    %24 = arith.truncf %23 : vector<20x32xf32> to vector<20x32xbf16>
    %c0_9 = arith.constant 0 : index
    %c0_10 = arith.constant 0 : index
    %25 = vector.load %arg4[%c0_9, %c0_10] : memref<20x32xbf16, #tpu.memory_space<vmem>>, vector<20x32xbf16>
    tpu.vector_store %arg4[%c0_9, %c0_10], %24 {strides = array<i32>} : memref<20x32xbf16, #tpu.memory_space<vmem>>, vector<20x32xbf16>,
    return
  }
  func.func @transform_0(%arg0: i32) -> (i32, i32) {
    %c0_i32 = arith.constant 0 : i32
    %c0_i32_0 = arith.constant 0 : i32
    return %arg0, %c0_i32 : i32, i32
  }
  func.func @transform_1(%arg0: i32) -> (i32, i32) {
    %c0_i32 = arith.constant 0 : i32
    %c0_i32_0 = arith.constant 0 : i32
    %c0_i32_1 = arith.constant 0 : i32
    return %c0_i32, %c0_i32_0 : i32, i32
  }
  func.func @transform_2(%arg0: i32) -> (i32, i32) {
    %c0_i32 = arith.constant 0 : i32
    %c0_i32_0 = arith.constant 0 : i32
    %c0_i32_1 = arith.constant 0 : i32
    return %c0_i32, %c0_i32_0 : i32, i32
  }
  func.func @transform_3(%arg0: i32) -> (i32, i32) {
    %c0_i32 = arith.constant 0 : i32
    %c0_i32_0 = arith.constant 0 : i32
    return %arg0, %c0_i32 : i32, i32
  }
}

module attributes {stable_mosaic.version = 11 : i64} {
  func.func @_linear_add_ln_kernel(%arg0: i32, %arg1: i32, %arg2: memref<20x64xbf16, #tpu.memory_space<vmem>>, %arg3: memref<64x32xbf16, #tpu.memory_space<vmem>>, %arg4: memref<1x32xf32, #tpu.memory_space<vmem>>, %arg5: memref<20x32xbf16, #tpu.memory_space<vmem>>, %arg6: memref<1x32xf32, #tpu.memory_space<vmem>>, %arg7: memref<1x32xf32, #tpu.memory_space<vmem>>, %arg8: memref<20x32xbf16, #tpu.memory_space<vmem>>, %arg9: memref<20x32xf32, #tpu.memory_space<vmem>>) attributes {dimension_semantics = [#tpu.dimension_semantics<parallel>, #tpu.dimension_semantics<arbitrary>], iteration_bounds = array<i64: 1, 1>, scalar_prefetch = 0 : i64, scratch_operands = 1 : i64, tpu.core_type = #tpu.core_type<tc>, window_params = [{transform_indices = @transform_0, window_bounds = array<i64: 20, 64>}, {transform_indices = @transform_1, window_bounds = array<i64: 64, 32>}, {pipeline_mode = #tpu.pipeline_mode<synchronous>, transform_indices = @transform_2, window_bounds = array<i64: 1, 32>}, {transform_indices = @transform_3, window_bounds = array<i64: 20, 32>}, {pipeline_mode = #tpu.pipeline_mode<synchronous>, transform_indices = @transform_4, window_bounds = array<i64: 1, 32>}, {pipeline_mode = #tpu.pipeline_mode<synchronous>, transform_indices = @transform_5, window_bounds = array<i64: 1, 32>}, {transform_indices = @transform_6, window_bounds = array<i64: 20, 32>}]} {
    %c0_i32 = arith.constant 0 : i32
    %0 = arith.cmpi eq, %arg1, %c0_i32 : i32
    %1 = arith.extui %0 : i1 to i32
    %c0_i32_0 = arith.constant 0 : i32
    %2 = arith.cmpi ne, %1, %c0_i32_0 : i32
    scf.if %2 {
      %cst_10 = arith.constant 0.000000e+00 : f32
      %12 = vector.broadcast %cst_10 : f32 to vector<20x32xf32>
      %c0_11 = arith.constant 0 : index
      %c0_12 = arith.constant 0 : index
      %13 = vector.load %arg9[%c0_11, %c0_12] : memref<20x32xf32, #tpu.memory_space<vmem>>, vector<20x32xf32>
      tpu.vector_store %arg9[%c0_11, %c0_12], %12 {strides = array<i32>} : memref<20x32xf32, #tpu.memory_space<vmem>>, vector<20x32xf32>,
    } else {
    }
    %c0 = arith.constant 0 : index
    %c0_1 = arith.constant 0 : index
    %3 = vector.load %arg9[%c0, %c0_1] : memref<20x32xf32, #tpu.memory_space<vmem>>, vector<20x32xf32>
    %c0_2 = arith.constant 0 : index
    %c0_3 = arith.constant 0 : index
    %4 = vector.load %arg2[%c0_2, %c0_3] : memref<20x64xbf16, #tpu.memory_space<vmem>>, vector<20x64xbf16>
    %c0_4 = arith.constant 0 : index
    %c0_5 = arith.constant 0 : index
    %5 = vector.load %arg3[%c0_4, %c0_5] : memref<64x32xbf16, #tpu.memory_space<vmem>>, vector<64x32xbf16>
    %cst = arith.constant dense<0.000000e+00> : vector<20x32xf32>
    %6 = tpu.matmul %4, %5, %cst {dimension_numbers = #tpu.dot_dimension_numbers<[1], [0], [0], [1], [0, 0, 1, 1], [], []>} : vector<20x64xbf16>, vector<64x32xbf16>, vector<20x32xf32> -> vector<20x32xf32>
    %7 = arith.addf %3, %6 : vector<20x32xf32>
    %c0_6 = arith.constant 0 : index
    %c0_7 = arith.constant 0 : index
    %8 = vector.load %arg9[%c0_6, %c0_7] : memref<20x32xf32, #tpu.memory_space<vmem>>, vector<20x32xf32>
    tpu.vector_store %arg9[%c0_6, %c0_7], %7 {strides = array<i32>} : memref<20x32xf32, #tpu.memory_space<vmem>>, vector<20x32xf32>,
    %c0_i32_8 = arith.constant 0 : i32
    %9 = arith.cmpi eq, %arg1, %c0_i32_8 : i32
    %10 = arith.extui %9 : i1 to i32
    %c0_i32_9 = arith.constant 0 : i32
    %11 = arith.cmpi ne, %10, %c0_i32_9 : i32
    scf.if %11 {
      %c0_10 = arith.constant 0 : index
      %c0_11 = arith.constant 0 : index
      %12 = vector.load %arg9[%c0_10, %c0_11] : memref<20x32xf32, #tpu.memory_space<vmem>>, vector<20x32xf32>
      %c0_12 = arith.constant 0 : index
      %c0_13 = arith.constant 0 : index
      %13 = vector.load %arg4[%c0_12, %c0_13] : memref<1x32xf32, #tpu.memory_space<vmem>>, vector<1x32xf32>
      %14 = vector.broadcast %13 : vector<1x32xf32> to vector<20x32xf32>
      %15 = arith.addf %12, %14 : vector<20x32xf32>
      %c0_14 = arith.constant 0 : index
      %c0_15 = arith.constant 0 : index
      %16 = vector.load %arg5[%c0_14, %c0_15] : memref<20x32xbf16, #tpu.memory_space<vmem>>, vector<20x32xbf16>
      %17 = arith.extf %16 : vector<20x32xbf16> to vector<20x32xf32>
      %18 = arith.addf %15, %17 : vector<20x32xf32>
      %cst_16 = arith.constant dense<0.000000e+00> : vector<20xf32>
      %19 = vector.multi_reduction <add>, %18, %cst_16 [1] : vector<20x32xf32> to vector<20xf32>
      %20 = vector.shape_cast %19 : vector<20xf32> to vector<20x1xf32>
      %cst_17 = arith.constant 3.200000e+01 : f32
      %21 = vector.broadcast %cst_17 : f32 to vector<20x1xf32>
      %22 = arith.divf %20, %21 : vector<20x1xf32>
      %23 = vector.broadcast %22 : vector<20x1xf32> to vector<20x32xf32>
      %24 = arith.subf %18, %23 : vector<20x32xf32>
      %25 = arith.mulf %24, %24 : vector<20x32xf32>
      %cst_18 = arith.constant dense<0.000000e+00> : vector<20xf32>
      %26 = vector.multi_reduction <add>, %25, %cst_18 [1] : vector<20x32xf32> to vector<20xf32>
      %27 = vector.shape_cast %26 : vector<20xf32> to vector<20x1xf32>
      %cst_19 = arith.constant 3.200000e+01 : f32
      %28 = vector.broadcast %cst_19 : f32 to vector<20x1xf32>
      %29 = arith.divf %27, %28 : vector<20x1xf32>
      %cst_20 = arith.constant 9.99999974E-6 : f32
      %30 = vector.broadcast %cst_20 : f32 to vector<20x1xf32>
      %31 = arith.addf %29, %30 : vector<20x1xf32>
      %32 = math.rsqrt %31 : vector<20x1xf32>
      %33 = vector.broadcast %32 : vector<20x1xf32> to vector<20x32xf32>
      %34 = arith.mulf %24, %33 : vector<20x32xf32>
      %c0_21 = arith.constant 0 : index
      %c0_22 = arith.constant 0 : index
      %35 = vector.load %arg6[%c0_21, %c0_22] : memref<1x32xf32, #tpu.memory_space<vmem>>, vector<1x32xf32>
      %36 = vector.broadcast %35 : vector<1x32xf32> to vector<20x32xf32>
      %37 = arith.mulf %34, %36 : vector<20x32xf32>
      %c0_23 = arith.constant 0 : index
      %c0_24 = arith.constant 0 : index
      %38 = vector.load %arg7[%c0_23, %c0_24] : memref<1x32xf32, #tpu.memory_space<vmem>>, vector<1x32xf32>
      %39 = vector.broadcast %38 : vector<1x32xf32> to vector<20x32xf32>
      %40 = arith.addf %37, %39 : vector<20x32xf32>
      %41 = arith.truncf %40 : vector<20x32xf32> to vector<20x32xbf16>
      %c0_25 = arith.constant 0 : index
      %c0_26 = arith.constant 0 : index
      %42 = vector.load %arg8[%c0_25, %c0_26] : memref<20x32xbf16, #tpu.memory_space<vmem>>, vector<20x32xbf16>
      tpu.vector_store %arg8[%c0_25, %c0_26], %41 {strides = array<i32>} : memref<20x32xbf16, #tpu.memory_space<vmem>>, vector<20x32xbf16>,
    } else {
    }
    return
  }
  func.func @transform_0(%arg0: i32, %arg1: i32) -> (i32, i32) {
    %c0_i32 = arith.constant 0 : i32
    return %arg0, %arg1 : i32, i32
  }
  func.func @transform_1(%arg0: i32, %arg1: i32) -> (i32, i32) {
    %c0_i32 = arith.constant 0 : i32
    %c0_i32_0 = arith.constant 0 : i32
    return %arg1, %c0_i32 : i32, i32
  }
  func.func @transform_2(%arg0: i32, %arg1: i32) -> (i32, i32) {
    %c0_i32 = arith.constant 0 : i32
    %c0_i32_0 = arith.constant 0 : i32
    %c0_i32_1 = arith.constant 0 : i32
    return %c0_i32, %c0_i32_0 : i32, i32
  }
  func.func @transform_3(%arg0: i32, %arg1: i32) -> (i32, i32) {
    %c0_i32 = arith.constant 0 : i32
    %c0_i32_0 = arith.constant 0 : i32
    return %arg0, %c0_i32 : i32, i32
  }
  func.func @transform_4(%arg0: i32, %arg1: i32) -> (i32, i32) {
    %c0_i32 = arith.constant 0 : i32
    %c0_i32_0 = arith.constant 0 : i32
    %c0_i32_1 = arith.constant 0 : i32
    return %c0_i32, %c0_i32_0 : i32, i32
  }
  func.func @transform_5(%arg0: i32, %arg1: i32) -> (i32, i32) {
    %c0_i32 = arith.constant 0 : i32
    %c0_i32_0 = arith.constant 0 : i32
    %c0_i32_1 = arith.constant 0 : i32
    return %c0_i32, %c0_i32_0 : i32, i32
  }
  func.func @transform_6(%arg0: i32, %arg1: i32) -> (i32, i32) {
    %c0_i32 = arith.constant 0 : i32
    %c0_i32_0 = arith.constant 0 : i32
    return %arg0, %c0_i32 : i32, i32
  }
}

module attributes {stable_mosaic.version = 11 : i64} {
  func.func @_linear_kernel(%arg0: i32, %arg1: i32, %arg2: i32, %arg3: memref<20x32xbf16, #tpu.memory_space<vmem>>, %arg4: memref<32x64xbf16, #tpu.memory_space<vmem>>, %arg5: memref<1x64xf32, #tpu.memory_space<vmem>>, %arg6: memref<20x64xbf16, #tpu.memory_space<vmem>>, %arg7: memref<20x64xf32, #tpu.memory_space<vmem>>) attributes {dimension_semantics = [#tpu.dimension_semantics<parallel>, #tpu.dimension_semantics<parallel>, #tpu.dimension_semantics<arbitrary>], iteration_bounds = array<i64: 1, 1, 1>, scalar_prefetch = 0 : i64, scratch_operands = 1 : i64, tpu.core_type = #tpu.core_type<tc>, window_params = [{transform_indices = @transform_0, window_bounds = array<i64: 20, 32>}, {transform_indices = @transform_1, window_bounds = array<i64: 32, 64>}, {transform_indices = @transform_2, window_bounds = array<i64: 1, 64>}, {transform_indices = @transform_3, window_bounds = array<i64: 20, 64>}]} {
    %c0_i32 = arith.constant 0 : i32
    %0 = arith.cmpi eq, %arg2, %c0_i32 : i32
    %1 = arith.extui %0 : i1 to i32
    %c0_i32_0 = arith.constant 0 : i32
    %2 = arith.cmpi ne, %1, %c0_i32_0 : i32
    scf.if %2 {
      %cst_10 = arith.constant 0.000000e+00 : f32
      %12 = vector.broadcast %cst_10 : f32 to vector<20x64xf32>
      %c0_11 = arith.constant 0 : index
      %c0_12 = arith.constant 0 : index
      %13 = vector.load %arg7[%c0_11, %c0_12] : memref<20x64xf32, #tpu.memory_space<vmem>>, vector<20x64xf32>
      tpu.vector_store %arg7[%c0_11, %c0_12], %12 {strides = array<i32>} : memref<20x64xf32, #tpu.memory_space<vmem>>, vector<20x64xf32>,
    } else {
    }
    %c0 = arith.constant 0 : index
    %c0_1 = arith.constant 0 : index
    %3 = vector.load %arg7[%c0, %c0_1] : memref<20x64xf32, #tpu.memory_space<vmem>>, vector<20x64xf32>
    %c0_2 = arith.constant 0 : index
    %c0_3 = arith.constant 0 : index
    %4 = vector.load %arg3[%c0_2, %c0_3] : memref<20x32xbf16, #tpu.memory_space<vmem>>, vector<20x32xbf16>
    %c0_4 = arith.constant 0 : index
    %c0_5 = arith.constant 0 : index
    %5 = vector.load %arg4[%c0_4, %c0_5] : memref<32x64xbf16, #tpu.memory_space<vmem>>, vector<32x64xbf16>
    %cst = arith.constant dense<0.000000e+00> : vector<20x64xf32>
    %6 = tpu.matmul %4, %5, %cst {dimension_numbers = #tpu.dot_dimension_numbers<[1], [0], [0], [1], [0, 0, 1, 1], [], []>} : vector<20x32xbf16>, vector<32x64xbf16>, vector<20x64xf32> -> vector<20x64xf32>
    %7 = arith.addf %3, %6 : vector<20x64xf32>
    %c0_6 = arith.constant 0 : index
    %c0_7 = arith.constant 0 : index
    %8 = vector.load %arg7[%c0_6, %c0_7] : memref<20x64xf32, #tpu.memory_space<vmem>>, vector<20x64xf32>
    tpu.vector_store %arg7[%c0_6, %c0_7], %7 {strides = array<i32>} : memref<20x64xf32, #tpu.memory_space<vmem>>, vector<20x64xf32>,
    %c0_i32_8 = arith.constant 0 : i32
    %9 = arith.cmpi eq, %arg2, %c0_i32_8 : i32
    %10 = arith.extui %9 : i1 to i32
    %c0_i32_9 = arith.constant 0 : i32
    %11 = arith.cmpi ne, %10, %c0_i32_9 : i32
    scf.if %11 {
      %c0_10 = arith.constant 0 : index
      %c0_11 = arith.constant 0 : index
      %12 = vector.load %arg7[%c0_10, %c0_11] : memref<20x64xf32, #tpu.memory_space<vmem>>, vector<20x64xf32>
      %c0_12 = arith.constant 0 : index
      %c0_13 = arith.constant 0 : index
      %13 = vector.load %arg5[%c0_12, %c0_13] : memref<1x64xf32, #tpu.memory_space<vmem>>, vector<1x64xf32>
      %14 = vector.broadcast %13 : vector<1x64xf32> to vector<20x64xf32>
      %15 = arith.addf %12, %14 : vector<20x64xf32>
      %16 = arith.truncf %15 : vector<20x64xf32> to vector<20x64xbf16>
      %c0_14 = arith.constant 0 : index
      %c0_15 = arith.constant 0 : index
      %17 = vector.load %arg6[%c0_14, %c0_15] : memref<20x64xbf16, #tpu.memory_space<vmem>>, vector<20x64xbf16>
      tpu.vector_store %arg6[%c0_14, %c0_15], %16 {strides = array<i32>} : memref<20x64xbf16, #tpu.memory_space<vmem>>, vector<20x64xbf16>,
    } else {
    }
    return
  }
  func.func @transform_0(%arg0: i32, %arg1: i32, %arg2: i32) -> (i32, i32) {
    %c0_i32 = arith.constant 0 : i32
    return %arg0, %arg2 : i32, i32
  }
  func.func @transform_1(%arg0: i32, %arg1: i32, %arg2: i32) -> (i32, i32) {
    %c0_i32 = arith.constant 0 : i32
    return %arg2, %arg1 : i32, i32
  }
  func.func @transform_2(%arg0: i32, %arg1: i32, %arg2: i32) -> (i32, i32) {
    %c0_i32 = arith.constant 0 : i32
    %c0_i32_0 = arith.constant 0 : i32
    return %c0_i32, %arg1 : i32, i32
  }
  func.func @transform_3(%arg0: i32, %arg1: i32, %arg2: i32) -> (i32, i32) {
    %c0_i32 = arith.constant 0 : i32
    return %arg0, %arg1 : i32, i32
  }
}

module attributes {stable_mosaic.version = 11 : i64} {
  func.func @_linear_kernel(%arg0: i32, %arg1: i32, %arg2: i32, %arg3: memref<16x32xbf16, #tpu.memory_space<vmem>>, %arg4: memref<32x96xbf16, #tpu.memory_space<vmem>>, %arg5: memref<1x96xf32, #tpu.memory_space<vmem>>, %arg6: memref<16x96xbf16, #tpu.memory_space<vmem>>, %arg7: memref<16x96xf32, #tpu.memory_space<vmem>>) attributes {dimension_semantics = [#tpu.dimension_semantics<parallel>, #tpu.dimension_semantics<parallel>, #tpu.dimension_semantics<arbitrary>], iteration_bounds = array<i64: 1, 1, 1>, scalar_prefetch = 0 : i64, scratch_operands = 1 : i64, tpu.core_type = #tpu.core_type<tc>, window_params = [{transform_indices = @transform_0, window_bounds = array<i64: 16, 32>}, {transform_indices = @transform_1, window_bounds = array<i64: 32, 96>}, {transform_indices = @transform_2, window_bounds = array<i64: 1, 96>}, {transform_indices = @transform_3, window_bounds = array<i64: 16, 96>}]} {
    %c0_i32 = arith.constant 0 : i32
    %0 = arith.cmpi eq, %arg2, %c0_i32 : i32
    %1 = arith.extui %0 : i1 to i32
    %c0_i32_0 = arith.constant 0 : i32
    %2 = arith.cmpi ne, %1, %c0_i32_0 : i32
    scf.if %2 {
      %cst_10 = arith.constant 0.000000e+00 : f32
      %12 = vector.broadcast %cst_10 : f32 to vector<16x96xf32>
      %c0_11 = arith.constant 0 : index
      %c0_12 = arith.constant 0 : index
      %13 = vector.load %arg7[%c0_11, %c0_12] : memref<16x96xf32, #tpu.memory_space<vmem>>, vector<16x96xf32>
      tpu.vector_store %arg7[%c0_11, %c0_12], %12 {strides = array<i32>} : memref<16x96xf32, #tpu.memory_space<vmem>>, vector<16x96xf32>,
    } else {
    }
    %c0 = arith.constant 0 : index
    %c0_1 = arith.constant 0 : index
    %3 = vector.load %arg7[%c0, %c0_1] : memref<16x96xf32, #tpu.memory_space<vmem>>, vector<16x96xf32>
    %c0_2 = arith.constant 0 : index
    %c0_3 = arith.constant 0 : index
    %4 = vector.load %arg3[%c0_2, %c0_3] : memref<16x32xbf16, #tpu.memory_space<vmem>>, vector<16x32xbf16>
    %c0_4 = arith.constant 0 : index
    %c0_5 = arith.constant 0 : index
    %5 = vector.load %arg4[%c0_4, %c0_5] : memref<32x96xbf16, #tpu.memory_space<vmem>>, vector<32x96xbf16>
    %cst = arith.constant dense<0.000000e+00> : vector<16x96xf32>
    %6 = tpu.matmul %4, %5, %cst {dimension_numbers = #tpu.dot_dimension_numbers<[1], [0], [0], [1], [0, 0, 1, 1], [], []>} : vector<16x32xbf16>, vector<32x96xbf16>, vector<16x96xf32> -> vector<16x96xf32>
    %7 = arith.addf %3, %6 : vector<16x96xf32>
    %c0_6 = arith.constant 0 : index
    %c0_7 = arith.constant 0 : index
    %8 = vector.load %arg7[%c0_6, %c0_7] : memref<16x96xf32, #tpu.memory_space<vmem>>, vector<16x96xf32>
    tpu.vector_store %arg7[%c0_6, %c0_7], %7 {strides = array<i32>} : memref<16x96xf32, #tpu.memory_space<vmem>>, vector<16x96xf32>,
    %c0_i32_8 = arith.constant 0 : i32
    %9 = arith.cmpi eq, %arg2, %c0_i32_8 : i32
    %10 = arith.extui %9 : i1 to i32
    %c0_i32_9 = arith.constant 0 : i32
    %11 = arith.cmpi ne, %10, %c0_i32_9 : i32
    scf.if %11 {
      %c0_10 = arith.constant 0 : index
      %c0_11 = arith.constant 0 : index
      %12 = vector.load %arg7[%c0_10, %c0_11] : memref<16x96xf32, #tpu.memory_space<vmem>>, vector<16x96xf32>
      %c0_12 = arith.constant 0 : index
      %c0_13 = arith.constant 0 : index
      %13 = vector.load %arg5[%c0_12, %c0_13] : memref<1x96xf32, #tpu.memory_space<vmem>>, vector<1x96xf32>
      %14 = vector.broadcast %13 : vector<1x96xf32> to vector<16x96xf32>
      %15 = arith.addf %12, %14 : vector<16x96xf32>
      %16 = arith.truncf %15 : vector<16x96xf32> to vector<16x96xbf16>
      %c0_14 = arith.constant 0 : index
      %c0_15 = arith.constant 0 : index
      %17 = vector.load %arg6[%c0_14, %c0_15] : memref<16x96xbf16, #tpu.memory_space<vmem>>, vector<16x96xbf16>
      tpu.vector_store %arg6[%c0_14, %c0_15], %16 {strides = array<i32>} : memref<16x96xbf16, #tpu.memory_space<vmem>>, vector<16x96xbf16>,
    } else {
    }
    return
  }
  func.func @transform_0(%arg0: i32, %arg1: i32, %arg2: i32) -> (i32, i32) {
    %c0_i32 = arith.constant 0 : i32
    return %arg0, %arg2 : i32, i32
  }
  func.func @transform_1(%arg0: i32, %arg1: i32, %arg2: i32) -> (i32, i32) {
    %c0_i32 = arith.constant 0 : i32
    return %arg2, %arg1 : i32, i32
  }
  func.func @transform_2(%arg0: i32, %arg1: i32, %arg2: i32) -> (i32, i32) {
    %c0_i32 = arith.constant 0 : i32
    %c0_i32_0 = arith.constant 0 : i32
    return %c0_i32, %arg1 : i32, i32
  }
  func.func @transform_3(%arg0: i32, %arg1: i32, %arg2: i32) -> (i32, i32) {
    %c0_i32 = arith.constant 0 : i32
    return %arg0, %arg1 : i32, i32
  }
}

module attributes {stable_mosaic.version = 11 : i64} {
  func.func @_self_attn_kernel(%arg0: i32, %arg1: memref<1x8x3x32xbf16, #tpu.memory_space<vmem>>, %arg2: memref<8x8xf32, #tpu.memory_space<vmem>>, %arg3: memref<1x1x8xf32, #tpu.memory_space<vmem>>, %arg4: memref<1x8x32xbf16, #tpu.memory_space<vmem>>) attributes {dimension_semantics = [#tpu.dimension_semantics<parallel>], iteration_bounds = array<i64: 2>, scalar_prefetch = 0 : i64, scratch_operands = 0 : i64, tpu.core_type = #tpu.core_type<tc>, window_params = [{transform_indices = @transform_0, window_bounds = array<i64: 1, 8, 3, 32>}, {pipeline_mode = #tpu.pipeline_mode<synchronous>, transform_indices = @transform_1, window_bounds = array<i64: 8, 8>}, {transform_indices = @transform_2, window_bounds = array<i64: 1, 1, 8>}, {transform_indices = @transform_3, window_bounds = array<i64: 1, 8, 32>}]} {
    %c0 = arith.constant 0 : index
    %c0_0 = arith.constant 0 : index
    %c0_1 = arith.constant 0 : index
    %c0_2 = arith.constant 0 : index
    %0 = vector.load %arg1[%c0, %c0_0, %c0_1, %c0_2] : memref<1x8x3x32xbf16, #tpu.memory_space<vmem>>, vector<1x8x3x32xbf16>
    %1 = vector.extract_strided_slice %0 {offsets = [0, 0, 0, 0], sizes = [1, 8, 1, 32], strides = [1, 1, 1, 1]} : vector<1x8x3x32xbf16> to vector<1x8x1x32xbf16>
    %2 = vector.shape_cast %1 : vector<1x8x1x32xbf16> to vector<8x32xbf16>
    %3 = vector.extract_strided_slice %0 {offsets = [0, 0, 1, 0], sizes = [1, 8, 1, 32], strides = [1, 1, 1, 1]} : vector<1x8x3x32xbf16> to vector<1x8x1x32xbf16>
    %4 = vector.shape_cast %3 : vector<1x8x1x32xbf16> to vector<8x32xbf16>
    %5 = vector.extract_strided_slice %0 {offsets = [0, 0, 2, 0], sizes = [1, 8, 1, 32], strides = [1, 1, 1, 1]} : vector<1x8x3x32xbf16> to vector<1x8x1x32xbf16>
    %6 = vector.shape_cast %5 : vector<1x8x1x32xbf16> to vector<8x32xbf16>
    %c0_3 = arith.constant 0 : index
    %c0_4 = arith.constant 0 : index
    %7 = vector.load %arg2[%c0_3, %c0_4] : memref<8x8xf32, #tpu.memory_space<vmem>>, vector<8x8xf32>
    %c0_5 = arith.constant 0 : index
    %c0_6 = arith.constant 0 : index
    %c0_7 = arith.constant 0 : index
    %8 = vector.load %arg3[%c0_5, %c0_6, %c0_7] : memref<1x1x8xf32, #tpu.memory_space<vmem>>, vector<1x1x8xf32>
    %9 = vector.shape_cast %8 : vector<1x1x8xf32> to vector<1x8xf32>
    %10 = vector.extract_strided_slice %2 {offsets = [0, 0], sizes = [8, 8], strides = [1, 1]} : vector<8x32xbf16> to vector<8x8xbf16>
    %11 = vector.extract_strided_slice %4 {offsets = [0, 0], sizes = [8, 8], strides = [1, 1]} : vector<8x32xbf16> to vector<8x8xbf16>
    %12 = vector.extract_strided_slice %6 {offsets = [0, 0], sizes = [8, 8], strides = [1, 1]} : vector<8x32xbf16> to vector<8x8xbf16>
    %cst = arith.constant dense<0.000000e+00> : vector<8x8xf32>
    %13 = tpu.matmul %10, %11, %cst {dimension_numbers = #tpu.dot_dimension_numbers<[1], [1], [0], [0], [0, 0, 1, 0], [], []>} : vector<8x8xbf16>, vector<8x8xbf16>, vector<8x8xf32> -> vector<8x8xf32>
    %cst_8 = arith.constant 0.353553385 : f32
    %14 = vector.broadcast %cst_8 : f32 to vector<8x8xf32>
    %15 = arith.mulf %13, %14 : vector<8x8xf32>
    %16 = arith.addf %15, %7 : vector<8x8xf32>
    %17 = vector.broadcast %9 : vector<1x8xf32> to vector<8x8xf32>
    %18 = arith.addf %16, %17 : vector<8x8xf32>
    %cst_9 = arith.constant dense<0xFF800000> : vector<8xf32>
    %19 = vector.multi_reduction <maximumf>, %18, %cst_9 [1] : vector<8x8xf32> to vector<8xf32>
    %20 = vector.shape_cast %19 : vector<8xf32> to vector<8x1xf32>
    %21 = vector.broadcast %20 : vector<8x1xf32> to vector<8x8xf32>
    %22 = arith.subf %18, %21 : vector<8x8xf32>
    %23 = math.exp %22 : vector<8x8xf32>
    %cst_10 = arith.constant dense<0.000000e+00> : vector<8xf32>
    %24 = vector.multi_reduction <add>, %23, %cst_10 [1] : vector<8x8xf32> to vector<8xf32>
    %25 = vector.shape_cast %24 : vector<8xf32> to vector<8x1xf32>
    %26 = arith.truncf %23 : vector<8x8xf32> to vector<8x8xbf16>
    %cst_11 = arith.constant dense<0.000000e+00> : vector<8x8xf32>
    %27 = tpu.matmul %26, %12, %cst_11 {dimension_numbers = #tpu.dot_dimension_numbers<[1], [0], [0], [1], [0, 0, 1, 1], [], []>} : vector<8x8xbf16>, vector<8x8xbf16>, vector<8x8xf32> -> vector<8x8xf32>
    %28 = vector.broadcast %25 : vector<8x1xf32> to vector<8x8xf32>
    %29 = arith.divf %27, %28 : vector<8x8xf32>
    %30 = vector.extract_strided_slice %2 {offsets = [0, 8], sizes = [8, 8], strides = [1, 1]} : vector<8x32xbf16> to vector<8x8xbf16>
    %31 = vector.extract_strided_slice %4 {offsets = [0, 8], sizes = [8, 8], strides = [1, 1]} : vector<8x32xbf16> to vector<8x8xbf16>
    %32 = vector.extract_strided_slice %6 {offsets = [0, 8], sizes = [8, 8], strides = [1, 1]} : vector<8x32xbf16> to vector<8x8xbf16>
    %cst_12 = arith.constant dense<0.000000e+00> : vector<8x8xf32>
    %33 = tpu.matmul %30, %31, %cst_12 {dimension_numbers = #tpu.dot_dimension_numbers<[1], [1], [0], [0], [0, 0, 1, 0], [], []>} : vector<8x8xbf16>, vector<8x8xbf16>, vector<8x8xf32> -> vector<8x8xf32>
    %cst_13 = arith.constant 0.353553385 : f32
    %34 = vector.broadcast %cst_13 : f32 to vector<8x8xf32>
    %35 = arith.mulf %33, %34 : vector<8x8xf32>
    %36 = arith.addf %35, %7 : vector<8x8xf32>
    %37 = vector.broadcast %9 : vector<1x8xf32> to vector<8x8xf32>
    %38 = arith.addf %36, %37 : vector<8x8xf32>
    %cst_14 = arith.constant dense<0xFF800000> : vector<8xf32>
    %39 = vector.multi_reduction <maximumf>, %38, %cst_14 [1] : vector<8x8xf32> to vector<8xf32>
    %40 = vector.shape_cast %39 : vector<8xf32> to vector<8x1xf32>
    %41 = vector.broadcast %40 : vector<8x1xf32> to vector<8x8xf32>
    %42 = arith.subf %38, %41 : vector<8x8xf32>
    %43 = math.exp %42 : vector<8x8xf32>
    %cst_15 = arith.constant dense<0.000000e+00> : vector<8xf32>
    %44 = vector.multi_reduction <add>, %43, %cst_15 [1] : vector<8x8xf32> to vector<8xf32>
    %45 = vector.shape_cast %44 : vector<8xf32> to vector<8x1xf32>
    %46 = arith.truncf %43 : vector<8x8xf32> to vector<8x8xbf16>
    %cst_16 = arith.constant dense<0.000000e+00> : vector<8x8xf32>
    %47 = tpu.matmul %46, %32, %cst_16 {dimension_numbers = #tpu.dot_dimension_numbers<[1], [0], [0], [1], [0, 0, 1, 1], [], []>} : vector<8x8xbf16>, vector<8x8xbf16>, vector<8x8xf32> -> vector<8x8xf32>
    %48 = vector.broadcast %45 : vector<8x1xf32> to vector<8x8xf32>
    %49 = arith.divf %47, %48 : vector<8x8xf32>
    %50 = vector.extract_strided_slice %2 {offsets = [0, 16], sizes = [8, 8], strides = [1, 1]} : vector<8x32xbf16> to vector<8x8xbf16>
    %51 = vector.extract_strided_slice %4 {offsets = [0, 16], sizes = [8, 8], strides = [1, 1]} : vector<8x32xbf16> to vector<8x8xbf16>
    %52 = vector.extract_strided_slice %6 {offsets = [0, 16], sizes = [8, 8], strides = [1, 1]} : vector<8x32xbf16> to vector<8x8xbf16>
    %cst_17 = arith.constant dense<0.000000e+00> : vector<8x8xf32>
    %53 = tpu.matmul %50, %51, %cst_17 {dimension_numbers = #tpu.dot_dimension_numbers<[1], [1], [0], [0], [0, 0, 1, 0], [], []>} : vector<8x8xbf16>, vector<8x8xbf16>, vector<8x8xf32> -> vector<8x8xf32>
    %cst_18 = arith.constant 0.353553385 : f32
    %54 = vector.broadcast %cst_18 : f32 to vector<8x8xf32>
    %55 = arith.mulf %53, %54 : vector<8x8xf32>
    %56 = arith.addf %55, %7 : vector<8x8xf32>
    %57 = vector.broadcast %9 : vector<1x8xf32> to vector<8x8xf32>
    %58 = arith.addf %56, %57 : vector<8x8xf32>
    %cst_19 = arith.constant dense<0xFF800000> : vector<8xf32>
    %59 = vector.multi_reduction <maximumf>, %58, %cst_19 [1] : vector<8x8xf32> to vector<8xf32>
    %60 = vector.shape_cast %59 : vector<8xf32> to vector<8x1xf32>
    %61 = vector.broadcast %60 : vector<8x1xf32> to vector<8x8xf32>
    %62 = arith.subf %58, %61 : vector<8x8xf32>
    %63 = math.exp %62 : vector<8x8xf32>
    %cst_20 = arith.constant dense<0.000000e+00> : vector<8xf32>
    %64 = vector.multi_reduction <add>, %63, %cst_20 [1] : vector<8x8xf32> to vector<8xf32>
    %65 = vector.shape_cast %64 : vector<8xf32> to vector<8x1xf32>
    %66 = arith.truncf %63 : vector<8x8xf32> to vector<8x8xbf16>
    %cst_21 = arith.constant dense<0.000000e+00> : vector<8x8xf32>
    %67 = tpu.matmul %66, %52, %cst_21 {dimension_numbers = #tpu.dot_dimension_numbers<[1], [0], [0], [1], [0, 0, 1, 1], [], []>} : vector<8x8xbf16>, vector<8x8xbf16>, vector<8x8xf32> -> vector<8x8xf32>
    %68 = vector.broadcast %65 : vector<8x1xf32> to vector<8x8xf32>
    %69 = arith.divf %67, %68 : vector<8x8xf32>
    %70 = vector.extract_strided_slice %2 {offsets = [0, 24], sizes = [8, 8], strides = [1, 1]} : vector<8x32xbf16> to vector<8x8xbf16>
    %71 = vector.extract_strided_slice %4 {offsets = [0, 24], sizes = [8, 8], strides = [1, 1]} : vector<8x32xbf16> to vector<8x8xbf16>
    %72 = vector.extract_strided_slice %6 {offsets = [0, 24], sizes = [8, 8], strides = [1, 1]} : vector<8x32xbf16> to vector<8x8xbf16>
    %cst_22 = arith.constant dense<0.000000e+00> : vector<8x8xf32>
    %73 = tpu.matmul %70, %71, %cst_22 {dimension_numbers = #tpu.dot_dimension_numbers<[1], [1], [0], [0], [0, 0, 1, 0], [], []>} : vector<8x8xbf16>, vector<8x8xbf16>, vector<8x8xf32> -> vector<8x8xf32>
    %cst_23 = arith.constant 0.353553385 : f32
    %74 = vector.broadcast %cst_23 : f32 to vector<8x8xf32>
    %75 = arith.mulf %73, %74 : vector<8x8xf32>
    %76 = arith.addf %75, %7 : vector<8x8xf32>
    %77 = vector.broadcast %9 : vector<1x8xf32> to vector<8x8xf32>
    %78 = arith.addf %76, %77 : vector<8x8xf32>
    %cst_24 = arith.constant dense<0xFF800000> : vector<8xf32>
    %79 = vector.multi_reduction <maximumf>, %78, %cst_24 [1] : vector<8x8xf32> to vector<8xf32>
    %80 = vector.shape_cast %79 : vector<8xf32> to vector<8x1xf32>
    %81 = vector.broadcast %80 : vector<8x1xf32> to vector<8x8xf32>
    %82 = arith.subf %78, %81 : vector<8x8xf32>
    %83 = math.exp %82 : vector<8x8xf32>
    %cst_25 = arith.constant dense<0.000000e+00> : vector<8xf32>
    %84 = vector.multi_reduction <add>, %83, %cst_25 [1] : vector<8x8xf32> to vector<8xf32>
    %85 = vector.shape_cast %84 : vector<8xf32> to vector<8x1xf32>
    %86 = arith.truncf %83 : vector<8x8xf32> to vector<8x8xbf16>
    %cst_26 = arith.constant dense<0.000000e+00> : vector<8x8xf32>
    %87 = tpu.matmul %86, %72, %cst_26 {dimension_numbers = #tpu.dot_dimension_numbers<[1], [0], [0], [1], [0, 0, 1, 1], [], []>} : vector<8x8xbf16>, vector<8x8xbf16>, vector<8x8xf32> -> vector<8x8xf32>
    %88 = vector.broadcast %85 : vector<8x1xf32> to vector<8x8xf32>
    %89 = arith.divf %87, %88 : vector<8x8xf32>
    %90 = tpu.concatenate %29, %49, %69, %89 in 1 : vector<8x8xf32>, vector<8x8xf32>, vector<8x8xf32>, vector<8x8xf32> -> vector<8x32xf32>
    %91 = vector.shape_cast %90 : vector<8x32xf32> to vector<1x8x32xf32>
    %92 = arith.truncf %91 : vector<1x8x32xf32> to vector<1x8x32xbf16>
    %c0_27 = arith.constant 0 : index
    %c0_28 = arith.constant 0 : index
    %c0_29 = arith.constant 0 : index
    %93 = vector.load %arg4[%c0_27, %c0_28, %c0_29] : memref<1x8x32xbf16, #tpu.memory_space<vmem>>, vector<1x8x32xbf16>
    tpu.vector_store %arg4[%c0_27, %c0_28, %c0_29], %92 {strides = array<i32>} : memref<1x8x32xbf16, #tpu.memory_space<vmem>>, vector<1x8x32xbf16>,
    return
  }
  func.func @transform_0(%arg0: i32) -> (i32, i32, i32, i32) {
    %c0_i32 = arith.constant 0 : i32
    %c0_i32_0 = arith.constant 0 : i32
    %c0_i32_1 = arith.constant 0 : i32
    %c0_i32_2 = arith.constant 0 : i32
    return %arg0, %c0_i32, %c0_i32_0, %c0_i32_1 : i32, i32, i32, i32
  }
  func.func @transform_1(%arg0: i32) -> (i32, i32) {
    %c0_i32 = arith.constant 0 : i32
    %c0_i32_0 = arith.constant 0 : i32
    %c0_i32_1 = arith.constant 0 : i32
    return %c0_i32, %c0_i32_0 : i32, i32
  }
  func.func @transform_2(%arg0: i32) -> (i32, i32, i32) {
    %c0_i32 = arith.constant 0 : i32
    %c0_i32_0 = arith.constant 0 : i32
    %c0_i32_1 = arith.constant 0 : i32
    return %arg0, %c0_i32, %c0_i32_0 : i32, i32, i32
  }
  func.func @transform_3(%arg0: i32) -> (i32, i32, i32) {
    %c0_i32 = arith.constant 0 : i32
    %c0_i32_0 = arith.constant 0 : i32
    %c0_i32_1 = arith.constant 0 : i32
    return %arg0, %c0_i32, %c0_i32_0 : i32, i32, i32
  }
}

module attributes {stable_mosaic.version = 11 : i64} {
  func.func @_linear_add_ln_kernel(%arg0: i32, %arg1: i32, %arg2: memref<16x32xbf16, #tpu.memory_space<vmem>>, %arg3: memref<32x32xbf16, #tpu.memory_space<vmem>>, %arg4: memref<1x32xf32, #tpu.memory_space<vmem>>, %arg5: memref<16x32xbf16, #tpu.memory_space<vmem>>, %arg6: memref<1x32xf32, #tpu.memory_space<vmem>>, %arg7: memref<1x32xf32, #tpu.memory_space<vmem>>, %arg8: memref<16x32xbf16, #tpu.memory_space<vmem>>, %arg9: memref<16x32xf32, #tpu.memory_space<vmem>>) attributes {dimension_semantics = [#tpu.dimension_semantics<parallel>, #tpu.dimension_semantics<arbitrary>], iteration_bounds = array<i64: 1, 1>, scalar_prefetch = 0 : i64, scratch_operands = 1 : i64, tpu.core_type = #tpu.core_type<tc>, window_params = [{transform_indices = @transform_0, window_bounds = array<i64: 16, 32>}, {transform_indices = @transform_1, window_bounds = array<i64: 32, 32>}, {pipeline_mode = #tpu.pipeline_mode<synchronous>, transform_indices = @transform_2, window_bounds = array<i64: 1, 32>}, {transform_indices = @transform_3, window_bounds = array<i64: 16, 32>}, {pipeline_mode = #tpu.pipeline_mode<synchronous>, transform_indices = @transform_4, window_bounds = array<i64: 1, 32>}, {pipeline_mode = #tpu.pipeline_mode<synchronous>, transform_indices = @transform_5, window_bounds = array<i64: 1, 32>}, {transform_indices = @transform_6, window_bounds = array<i64: 16, 32>}]} {
    %c0_i32 = arith.constant 0 : i32
    %0 = arith.cmpi eq, %arg1, %c0_i32 : i32
    %1 = arith.extui %0 : i1 to i32
    %c0_i32_0 = arith.constant 0 : i32
    %2 = arith.cmpi ne, %1, %c0_i32_0 : i32
    scf.if %2 {
      %cst_10 = arith.constant 0.000000e+00 : f32
      %12 = vector.broadcast %cst_10 : f32 to vector<16x32xf32>
      %c0_11 = arith.constant 0 : index
      %c0_12 = arith.constant 0 : index
      %13 = vector.load %arg9[%c0_11, %c0_12] : memref<16x32xf32, #tpu.memory_space<vmem>>, vector<16x32xf32>
      tpu.vector_store %arg9[%c0_11, %c0_12], %12 {strides = array<i32>} : memref<16x32xf32, #tpu.memory_space<vmem>>, vector<16x32xf32>,
    } else {
    }
    %c0 = arith.constant 0 : index
    %c0_1 = arith.constant 0 : index
    %3 = vector.load %arg9[%c0, %c0_1] : memref<16x32xf32, #tpu.memory_space<vmem>>, vector<16x32xf32>
    %c0_2 = arith.constant 0 : index
    %c0_3 = arith.constant 0 : index
    %4 = vector.load %arg2[%c0_2, %c0_3] : memref<16x32xbf16, #tpu.memory_space<vmem>>, vector<16x32xbf16>
    %c0_4 = arith.constant 0 : index
    %c0_5 = arith.constant 0 : index
    %5 = vector.load %arg3[%c0_4, %c0_5] : memref<32x32xbf16, #tpu.memory_space<vmem>>, vector<32x32xbf16>
    %cst = arith.constant dense<0.000000e+00> : vector<16x32xf32>
    %6 = tpu.matmul %4, %5, %cst {dimension_numbers = #tpu.dot_dimension_numbers<[1], [0], [0], [1], [0, 0, 1, 1], [], []>} : vector<16x32xbf16>, vector<32x32xbf16>, vector<16x32xf32> -> vector<16x32xf32>
    %7 = arith.addf %3, %6 : vector<16x32xf32>
    %c0_6 = arith.constant 0 : index
    %c0_7 = arith.constant 0 : index
    %8 = vector.load %arg9[%c0_6, %c0_7] : memref<16x32xf32, #tpu.memory_space<vmem>>, vector<16x32xf32>
    tpu.vector_store %arg9[%c0_6, %c0_7], %7 {strides = array<i32>} : memref<16x32xf32, #tpu.memory_space<vmem>>, vector<16x32xf32>,
    %c0_i32_8 = arith.constant 0 : i32
    %9 = arith.cmpi eq, %arg1, %c0_i32_8 : i32
    %10 = arith.extui %9 : i1 to i32
    %c0_i32_9 = arith.constant 0 : i32
    %11 = arith.cmpi ne, %10, %c0_i32_9 : i32
    scf.if %11 {
      %c0_10 = arith.constant 0 : index
      %c0_11 = arith.constant 0 : index
      %12 = vector.load %arg9[%c0_10, %c0_11] : memref<16x32xf32, #tpu.memory_space<vmem>>, vector<16x32xf32>
      %c0_12 = arith.constant 0 : index
      %c0_13 = arith.constant 0 : index
      %13 = vector.load %arg4[%c0_12, %c0_13] : memref<1x32xf32, #tpu.memory_space<vmem>>, vector<1x32xf32>
      %14 = vector.broadcast %13 : vector<1x32xf32> to vector<16x32xf32>
      %15 = arith.addf %12, %14 : vector<16x32xf32>
      %c0_14 = arith.constant 0 : index
      %c0_15 = arith.constant 0 : index
      %16 = vector.load %arg5[%c0_14, %c0_15] : memref<16x32xbf16, #tpu.memory_space<vmem>>, vector<16x32xbf16>
      %17 = arith.extf %16 : vector<16x32xbf16> to vector<16x32xf32>
      %18 = arith.addf %15, %17 : vector<16x32xf32>
      %cst_16 = arith.constant dense<0.000000e+00> : vector<16xf32>
      %19 = vector.multi_reduction <add>, %18, %cst_16 [1] : vector<16x32xf32> to vector<16xf32>
      %20 = vector.shape_cast %19 : vector<16xf32> to vector<16x1xf32>
      %cst_17 = arith.constant 3.200000e+01 : f32
      %21 = vector.broadcast %cst_17 : f32 to vector<16x1xf32>
      %22 = arith.divf %20, %21 : vector<16x1xf32>
      %23 = vector.broadcast %22 : vector<16x1xf32> to vector<16x32xf32>
      %24 = arith.subf %18, %23 : vector<16x32xf32>
      %25 = arith.mulf %24, %24 : vector<16x32xf32>
      %cst_18 = arith.constant dense<0.000000e+00> : vector<16xf32>
      %26 = vector.multi_reduction <add>, %25, %cst_18 [1] : vector<16x32xf32> to vector<16xf32>
      %27 = vector.shape_cast %26 : vector<16xf32> to vector<16x1xf32>
      %cst_19 = arith.constant 3.200000e+01 : f32
      %28 = vector.broadcast %cst_19 : f32 to vector<16x1xf32>
      %29 = arith.divf %27, %28 : vector<16x1xf32>
      %cst_20 = arith.constant 9.99999974E-6 : f32
      %30 = vector.broadcast %cst_20 : f32 to vector<16x1xf32>
      %31 = arith.addf %29, %30 : vector<16x1xf32>
      %32 = math.rsqrt %31 : vector<16x1xf32>
      %33 = vector.broadcast %32 : vector<16x1xf32> to vector<16x32xf32>
      %34 = arith.mulf %24, %33 : vector<16x32xf32>
      %c0_21 = arith.constant 0 : index
      %c0_22 = arith.constant 0 : index
      %35 = vector.load %arg6[%c0_21, %c0_22] : memref<1x32xf32, #tpu.memory_space<vmem>>, vector<1x32xf32>
      %36 = vector.broadcast %35 : vector<1x32xf32> to vector<16x32xf32>
      %37 = arith.mulf %34, %36 : vector<16x32xf32>
      %c0_23 = arith.constant 0 : index
      %c0_24 = arith.constant 0 : index
      %38 = vector.load %arg7[%c0_23, %c0_24] : memref<1x32xf32, #tpu.memory_space<vmem>>, vector<1x32xf32>
      %39 = vector.broadcast %38 : vector<1x32xf32> to vector<16x32xf32>
      %40 = arith.addf %37, %39 : vector<16x32xf32>
      %41 = arith.truncf %40 : vector<16x32xf32> to vector<16x32xbf16>
      %c0_25 = arith.constant 0 : index
      %c0_26 = arith.constant 0 : index
      %42 = vector.load %arg8[%c0_25, %c0_26] : memref<16x32xbf16, #tpu.memory_space<vmem>>, vector<16x32xbf16>
      tpu.vector_store %arg8[%c0_25, %c0_26], %41 {strides = array<i32>} : memref<16x32xbf16, #tpu.memory_space<vmem>>, vector<16x32xbf16>,
    } else {
    }
    return
  }
  func.func @transform_0(%arg0: i32, %arg1: i32) -> (i32, i32) {
    %c0_i32 = arith.constant 0 : i32
    return %arg0, %arg1 : i32, i32
  }
  func.func @transform_1(%arg0: i32, %arg1: i32) -> (i32, i32) {
    %c0_i32 = arith.constant 0 : i32
    %c0_i32_0 = arith.constant 0 : i32
    return %arg1, %c0_i32 : i32, i32
  }
  func.func @transform_2(%arg0: i32, %arg1: i32) -> (i32, i32) {
    %c0_i32 = arith.constant 0 : i32
    %c0_i32_0 = arith.constant 0 : i32
    %c0_i32_1 = arith.constant 0 : i32
    return %c0_i32, %c0_i32_0 : i32, i32
  }
  func.func @transform_3(%arg0: i32, %arg1: i32) -> (i32, i32) {
    %c0_i32 = arith.constant 0 : i32
    %c0_i32_0 = arith.constant 0 : i32
    return %arg0, %c0_i32 : i32, i32
  }
  func.func @transform_4(%arg0: i32, %arg1: i32) -> (i32, i32) {
    %c0_i32 = arith.constant 0 : i32
    %c0_i32_0 = arith.constant 0 : i32
    %c0_i32_1 = arith.constant 0 : i32
    return %c0_i32, %c0_i32_0 : i32, i32
  }
  func.func @transform_5(%arg0: i32, %arg1: i32) -> (i32, i32) {
    %c0_i32 = arith.constant 0 : i32
    %c0_i32_0 = arith.constant 0 : i32
    %c0_i32_1 = arith.constant 0 : i32
    return %c0_i32, %c0_i32_0 : i32, i32
  }
  func.func @transform_6(%arg0: i32, %arg1: i32) -> (i32, i32) {
    %c0_i32 = arith.constant 0 : i32
    %c0_i32_0 = arith.constant 0 : i32
    return %arg0, %c0_i32 : i32, i32
  }
}

module attributes {stable_mosaic.version = 11 : i64} {
  func.func @_linear_kernel(%arg0: i32, %arg1: i32, %arg2: i32, %arg3: memref<16x32xbf16, #tpu.memory_space<vmem>>, %arg4: memref<32x32xbf16, #tpu.memory_space<vmem>>, %arg5: memref<1x32xf32, #tpu.memory_space<vmem>>, %arg6: memref<16x32xbf16, #tpu.memory_space<vmem>>, %arg7: memref<16x32xf32, #tpu.memory_space<vmem>>) attributes {dimension_semantics = [#tpu.dimension_semantics<parallel>, #tpu.dimension_semantics<parallel>, #tpu.dimension_semantics<arbitrary>], iteration_bounds = array<i64: 1, 1, 1>, scalar_prefetch = 0 : i64, scratch_operands = 1 : i64, tpu.core_type = #tpu.core_type<tc>, window_params = [{transform_indices = @transform_0, window_bounds = array<i64: 16, 32>}, {transform_indices = @transform_1, window_bounds = array<i64: 32, 32>}, {transform_indices = @transform_2, window_bounds = array<i64: 1, 32>}, {transform_indices = @transform_3, window_bounds = array<i64: 16, 32>}]} {
    %c0_i32 = arith.constant 0 : i32
    %0 = arith.cmpi eq, %arg2, %c0_i32 : i32
    %1 = arith.extui %0 : i1 to i32
    %c0_i32_0 = arith.constant 0 : i32
    %2 = arith.cmpi ne, %1, %c0_i32_0 : i32
    scf.if %2 {
      %cst_10 = arith.constant 0.000000e+00 : f32
      %12 = vector.broadcast %cst_10 : f32 to vector<16x32xf32>
      %c0_11 = arith.constant 0 : index
      %c0_12 = arith.constant 0 : index
      %13 = vector.load %arg7[%c0_11, %c0_12] : memref<16x32xf32, #tpu.memory_space<vmem>>, vector<16x32xf32>
      tpu.vector_store %arg7[%c0_11, %c0_12], %12 {strides = array<i32>} : memref<16x32xf32, #tpu.memory_space<vmem>>, vector<16x32xf32>,
    } else {
    }
    %c0 = arith.constant 0 : index
    %c0_1 = arith.constant 0 : index
    %3 = vector.load %arg7[%c0, %c0_1] : memref<16x32xf32, #tpu.memory_space<vmem>>, vector<16x32xf32>
    %c0_2 = arith.constant 0 : index
    %c0_3 = arith.constant 0 : index
    %4 = vector.load %arg3[%c0_2, %c0_3] : memref<16x32xbf16, #tpu.memory_space<vmem>>, vector<16x32xbf16>
    %c0_4 = arith.constant 0 : index
    %c0_5 = arith.constant 0 : index
    %5 = vector.load %arg4[%c0_4, %c0_5] : memref<32x32xbf16, #tpu.memory_space<vmem>>, vector<32x32xbf16>
    %cst = arith.constant dense<0.000000e+00> : vector<16x32xf32>
    %6 = tpu.matmul %4, %5, %cst {dimension_numbers = #tpu.dot_dimension_numbers<[1], [0], [0], [1], [0, 0, 1, 1], [], []>} : vector<16x32xbf16>, vector<32x32xbf16>, vector<16x32xf32> -> vector<16x32xf32>
    %7 = arith.addf %3, %6 : vector<16x32xf32>
    %c0_6 = arith.constant 0 : index
    %c0_7 = arith.constant 0 : index
    %8 = vector.load %arg7[%c0_6, %c0_7] : memref<16x32xf32, #tpu.memory_space<vmem>>, vector<16x32xf32>
    tpu.vector_store %arg7[%c0_6, %c0_7], %7 {strides = array<i32>} : memref<16x32xf32, #tpu.memory_space<vmem>>, vector<16x32xf32>,
    %c0_i32_8 = arith.constant 0 : i32
    %9 = arith.cmpi eq, %arg2, %c0_i32_8 : i32
    %10 = arith.extui %9 : i1 to i32
    %c0_i32_9 = arith.constant 0 : i32
    %11 = arith.cmpi ne, %10, %c0_i32_9 : i32
    scf.if %11 {
      %c0_10 = arith.constant 0 : index
      %c0_11 = arith.constant 0 : index
      %12 = vector.load %arg7[%c0_10, %c0_11] : memref<16x32xf32, #tpu.memory_space<vmem>>, vector<16x32xf32>
      %c0_12 = arith.constant 0 : index
      %c0_13 = arith.constant 0 : index
      %13 = vector.load %arg5[%c0_12, %c0_13] : memref<1x32xf32, #tpu.memory_space<vmem>>, vector<1x32xf32>
      %14 = vector.broadcast %13 : vector<1x32xf32> to vector<16x32xf32>
      %15 = arith.addf %12, %14 : vector<16x32xf32>
      %16 = arith.truncf %15 : vector<16x32xf32> to vector<16x32xbf16>
      %c0_14 = arith.constant 0 : index
      %c0_15 = arith.constant 0 : index
      %17 = vector.load %arg6[%c0_14, %c0_15] : memref<16x32xbf16, #tpu.memory_space<vmem>>, vector<16x32xbf16>
      tpu.vector_store %arg6[%c0_14, %c0_15], %16 {strides = array<i32>} : memref<16x32xbf16, #tpu.memory_space<vmem>>, vector<16x32xbf16>,
    } else {
    }
    return
  }
  func.func @transform_0(%arg0: i32, %arg1: i32, %arg2: i32) -> (i32, i32) {
    %c0_i32 = arith.constant 0 : i32
    return %arg0, %arg2 : i32, i32
  }
  func.func @transform_1(%arg0: i32, %arg1: i32, %arg2: i32) -> (i32, i32) {
    %c0_i32 = arith.constant 0 : i32
    return %arg2, %arg1 : i32, i32
  }
  func.func @transform_2(%arg0: i32, %arg1: i32, %arg2: i32) -> (i32, i32) {
    %c0_i32 = arith.constant 0 : i32
    %c0_i32_0 = arith.constant 0 : i32
    return %c0_i32, %arg1 : i32, i32
  }
  func.func @transform_3(%arg0: i32, %arg1: i32, %arg2: i32) -> (i32, i32) {
    %c0_i32 = arith.constant 0 : i32
    return %arg0, %arg1 : i32, i32
  }
}

module attributes {stable_mosaic.version = 11 : i64} {
  func.func @_cross_attn_kernel(%arg0: i32, %arg1: memref<1x8x32xbf16, #tpu.memory_space<vmem>>, %arg2: memref<1x10x2x32xbf16, #tpu.memory_space<vmem>>, %arg3: memref<8x10xf32, #tpu.memory_space<vmem>>, %arg4: memref<1x1x10xf32, #tpu.memory_space<vmem>>, %arg5: memref<1x8x32xbf16, #tpu.memory_space<vmem>>) attributes {dimension_semantics = [#tpu.dimension_semantics<parallel>], iteration_bounds = array<i64: 2>, scalar_prefetch = 0 : i64, scratch_operands = 0 : i64, tpu.core_type = #tpu.core_type<tc>, window_params = [{transform_indices = @transform_0, window_bounds = array<i64: 1, 8, 32>}, {transform_indices = @transform_1, window_bounds = array<i64: 1, 10, 2, 32>}, {pipeline_mode = #tpu.pipeline_mode<synchronous>, transform_indices = @transform_2, window_bounds = array<i64: 8, 10>}, {transform_indices = @transform_3, window_bounds = array<i64: 1, 1, 10>}, {transform_indices = @transform_4, window_bounds = array<i64: 1, 8, 32>}]} {
    %c0 = arith.constant 0 : index
    %c0_0 = arith.constant 0 : index
    %c0_1 = arith.constant 0 : index
    %0 = vector.load %arg1[%c0, %c0_0, %c0_1] : memref<1x8x32xbf16, #tpu.memory_space<vmem>>, vector<1x8x32xbf16>
    %1 = vector.shape_cast %0 : vector<1x8x32xbf16> to vector<8x32xbf16>
    %c0_2 = arith.constant 0 : index
    %c0_3 = arith.constant 0 : index
    %c0_4 = arith.constant 0 : index
    %c0_5 = arith.constant 0 : index
    %2 = vector.load %arg2[%c0_2, %c0_3, %c0_4, %c0_5] : memref<1x10x2x32xbf16, #tpu.memory_space<vmem>>, vector<1x10x2x32xbf16>
    %3 = vector.extract_strided_slice %2 {offsets = [0, 0, 0, 0], sizes = [1, 10, 1, 32], strides = [1, 1, 1, 1]} : vector<1x10x2x32xbf16> to vector<1x10x1x32xbf16>
    %4 = vector.shape_cast %3 : vector<1x10x1x32xbf16> to vector<10x32xbf16>
    %5 = vector.extract_strided_slice %2 {offsets = [0, 0, 1, 0], sizes = [1, 10, 1, 32], strides = [1, 1, 1, 1]} : vector<1x10x2x32xbf16> to vector<1x10x1x32xbf16>
    %6 = vector.shape_cast %5 : vector<1x10x1x32xbf16> to vector<10x32xbf16>
    %c0_6 = arith.constant 0 : index
    %c0_7 = arith.constant 0 : index
    %7 = vector.load %arg3[%c0_6, %c0_7] : memref<8x10xf32, #tpu.memory_space<vmem>>, vector<8x10xf32>
    %c0_8 = arith.constant 0 : index
    %c0_9 = arith.constant 0 : index
    %c0_10 = arith.constant 0 : index
    %8 = vector.load %arg4[%c0_8, %c0_9, %c0_10] : memref<1x1x10xf32, #tpu.memory_space<vmem>>, vector<1x1x10xf32>
    %9 = vector.shape_cast %8 : vector<1x1x10xf32> to vector<1x10xf32>
    %10 = vector.extract_strided_slice %1 {offsets = [0, 0], sizes = [8, 8], strides = [1, 1]} : vector<8x32xbf16> to vector<8x8xbf16>
    %11 = vector.extract_strided_slice %4 {offsets = [0, 0], sizes = [10, 8], strides = [1, 1]} : vector<10x32xbf16> to vector<10x8xbf16>
    %12 = vector.extract_strided_slice %6 {offsets = [0, 0], sizes = [10, 8], strides = [1, 1]} : vector<10x32xbf16> to vector<10x8xbf16>
    %cst = arith.constant dense<0.000000e+00> : vector<8x10xf32>
    %13 = tpu.matmul %10, %11, %cst {dimension_numbers = #tpu.dot_dimension_numbers<[1], [1], [0], [0], [0, 0, 1, 0], [], []>} : vector<8x8xbf16>, vector<10x8xbf16>, vector<8x10xf32> -> vector<8x10xf32>
    %cst_11 = arith.constant 0.353553385 : f32
    %14 = vector.broadcast %cst_11 : f32 to vector<8x10xf32>
    %15 = arith.mulf %13, %14 : vector<8x10xf32>
    %16 = arith.addf %15, %7 : vector<8x10xf32>
    %17 = vector.broadcast %9 : vector<1x10xf32> to vector<8x10xf32>
    %18 = arith.addf %16, %17 : vector<8x10xf32>
    %cst_12 = arith.constant dense<0xFF800000> : vector<8xf32>
    %19 = vector.multi_reduction <maximumf>, %18, %cst_12 [1] : vector<8x10xf32> to vector<8xf32>
    %20 = vector.shape_cast %19 : vector<8xf32> to vector<8x1xf32>
    %21 = vector.broadcast %20 : vector<8x1xf32> to vector<8x10xf32>
    %22 = arith.subf %18, %21 : vector<8x10xf32>
    %23 = math.exp %22 : vector<8x10xf32>
    %cst_13 = arith.constant dense<0.000000e+00> : vector<8xf32>
    %24 = vector.multi_reduction <add>, %23, %cst_13 [1] : vector<8x10xf32> to vector<8xf32>
    %25 = vector.shape_cast %24 : vector<8xf32> to vector<8x1xf32>
    %26 = arith.truncf %23 : vector<8x10xf32> to vector<8x10xbf16>
    %cst_14 = arith.constant dense<0.000000e+00> : vector<8x8xf32>
    %27 = tpu.matmul %26, %12, %cst_14 {dimension_numbers = #tpu.dot_dimension_numbers<[1], [0], [0], [1], [0, 0, 1, 1], [], []>} : vector<8x10xbf16>, vector<10x8xbf16>, vector<8x8xf32> -> vector<8x8xf32>
    %28 = vector.broadcast %25 : vector<8x1xf32> to vector<8x8xf32>
    %29 = arith.divf %27, %28 : vector<8x8xf32>
    %30 = vector.extract_strided_slice %1 {offsets = [0, 8], sizes = [8, 8], strides = [1, 1]} : vector<8x32xbf16> to vector<8x8xbf16>
    %31 = vector.extract_strided_slice %4 {offsets = [0, 8], sizes = [10, 8], strides = [1, 1]} : vector<10x32xbf16> to vector<10x8xbf16>
    %32 = vector.extract_strided_slice %6 {offsets = [0, 8], sizes = [10, 8], strides = [1, 1]} : vector<10x32xbf16> to vector<10x8xbf16>
    %cst_15 = arith.constant dense<0.000000e+00> : vector<8x10xf32>
    %33 = tpu.matmul %30, %31, %cst_15 {dimension_numbers = #tpu.dot_dimension_numbers<[1], [1], [0], [0], [0, 0, 1, 0], [], []>} : vector<8x8xbf16>, vector<10x8xbf16>, vector<8x10xf32> -> vector<8x10xf32>
    %cst_16 = arith.constant 0.353553385 : f32
    %34 = vector.broadcast %cst_16 : f32 to vector<8x10xf32>
    %35 = arith.mulf %33, %34 : vector<8x10xf32>
    %36 = arith.addf %35, %7 : vector<8x10xf32>
    %37 = vector.broadcast %9 : vector<1x10xf32> to vector<8x10xf32>
    %38 = arith.addf %36, %37 : vector<8x10xf32>
    %cst_17 = arith.constant dense<0xFF800000> : vector<8xf32>
    %39 = vector.multi_reduction <maximumf>, %38, %cst_17 [1] : vector<8x10xf32> to vector<8xf32>
    %40 = vector.shape_cast %39 : vector<8xf32> to vector<8x1xf32>
    %41 = vector.broadcast %40 : vector<8x1xf32> to vector<8x10xf32>
    %42 = arith.subf %38, %41 : vector<8x10xf32>
    %43 = math.exp %42 : vector<8x10xf32>
    %cst_18 = arith.constant dense<0.000000e+00> : vector<8xf32>
    %44 = vector.multi_reduction <add>, %43, %cst_18 [1] : vector<8x10xf32> to vector<8xf32>
    %45 = vector.shape_cast %44 : vector<8xf32> to vector<8x1xf32>
    %46 = arith.truncf %43 : vector<8x10xf32> to vector<8x10xbf16>
    %cst_19 = arith.constant dense<0.000000e+00> : vector<8x8xf32>
    %47 = tpu.matmul %46, %32, %cst_19 {dimension_numbers = #tpu.dot_dimension_numbers<[1], [0], [0], [1], [0, 0, 1, 1], [], []>} : vector<8x10xbf16>, vector<10x8xbf16>, vector<8x8xf32> -> vector<8x8xf32>
    %48 = vector.broadcast %45 : vector<8x1xf32> to vector<8x8xf32>
    %49 = arith.divf %47, %48 : vector<8x8xf32>
    %50 = vector.extract_strided_slice %1 {offsets = [0, 16], sizes = [8, 8], strides = [1, 1]} : vector<8x32xbf16> to vector<8x8xbf16>
    %51 = vector.extract_strided_slice %4 {offsets = [0, 16], sizes = [10, 8], strides = [1, 1]} : vector<10x32xbf16> to vector<10x8xbf16>
    %52 = vector.extract_strided_slice %6 {offsets = [0, 16], sizes = [10, 8], strides = [1, 1]} : vector<10x32xbf16> to vector<10x8xbf16>
    %cst_20 = arith.constant dense<0.000000e+00> : vector<8x10xf32>
    %53 = tpu.matmul %50, %51, %cst_20 {dimension_numbers = #tpu.dot_dimension_numbers<[1], [1], [0], [0], [0, 0, 1, 0], [], []>} : vector<8x8xbf16>, vector<10x8xbf16>, vector<8x10xf32> -> vector<8x10xf32>
    %cst_21 = arith.constant 0.353553385 : f32
    %54 = vector.broadcast %cst_21 : f32 to vector<8x10xf32>
    %55 = arith.mulf %53, %54 : vector<8x10xf32>
    %56 = arith.addf %55, %7 : vector<8x10xf32>
    %57 = vector.broadcast %9 : vector<1x10xf32> to vector<8x10xf32>
    %58 = arith.addf %56, %57 : vector<8x10xf32>
    %cst_22 = arith.constant dense<0xFF800000> : vector<8xf32>
    %59 = vector.multi_reduction <maximumf>, %58, %cst_22 [1] : vector<8x10xf32> to vector<8xf32>
    %60 = vector.shape_cast %59 : vector<8xf32> to vector<8x1xf32>
    %61 = vector.broadcast %60 : vector<8x1xf32> to vector<8x10xf32>
    %62 = arith.subf %58, %61 : vector<8x10xf32>
    %63 = math.exp %62 : vector<8x10xf32>
    %cst_23 = arith.constant dense<0.000000e+00> : vector<8xf32>
    %64 = vector.multi_reduction <add>, %63, %cst_23 [1] : vector<8x10xf32> to vector<8xf32>
    %65 = vector.shape_cast %64 : vector<8xf32> to vector<8x1xf32>
    %66 = arith.truncf %63 : vector<8x10xf32> to vector<8x10xbf16>
    %cst_24 = arith.constant dense<0.000000e+00> : vector<8x8xf32>
    %67 = tpu.matmul %66, %52, %cst_24 {dimension_numbers = #tpu.dot_dimension_numbers<[1], [0], [0], [1], [0, 0, 1, 1], [], []>} : vector<8x10xbf16>, vector<10x8xbf16>, vector<8x8xf32> -> vector<8x8xf32>
    %68 = vector.broadcast %65 : vector<8x1xf32> to vector<8x8xf32>
    %69 = arith.divf %67, %68 : vector<8x8xf32>
    %70 = vector.extract_strided_slice %1 {offsets = [0, 24], sizes = [8, 8], strides = [1, 1]} : vector<8x32xbf16> to vector<8x8xbf16>
    %71 = vector.extract_strided_slice %4 {offsets = [0, 24], sizes = [10, 8], strides = [1, 1]} : vector<10x32xbf16> to vector<10x8xbf16>
    %72 = vector.extract_strided_slice %6 {offsets = [0, 24], sizes = [10, 8], strides = [1, 1]} : vector<10x32xbf16> to vector<10x8xbf16>
    %cst_25 = arith.constant dense<0.000000e+00> : vector<8x10xf32>
    %73 = tpu.matmul %70, %71, %cst_25 {dimension_numbers = #tpu.dot_dimension_numbers<[1], [1], [0], [0], [0, 0, 1, 0], [], []>} : vector<8x8xbf16>, vector<10x8xbf16>, vector<8x10xf32> -> vector<8x10xf32>
    %cst_26 = arith.constant 0.353553385 : f32
    %74 = vector.broadcast %cst_26 : f32 to vector<8x10xf32>
    %75 = arith.mulf %73, %74 : vector<8x10xf32>
    %76 = arith.addf %75, %7 : vector<8x10xf32>
    %77 = vector.broadcast %9 : vector<1x10xf32> to vector<8x10xf32>
    %78 = arith.addf %76, %77 : vector<8x10xf32>
    %cst_27 = arith.constant dense<0xFF800000> : vector<8xf32>
    %79 = vector.multi_reduction <maximumf>, %78, %cst_27 [1] : vector<8x10xf32> to vector<8xf32>
    %80 = vector.shape_cast %79 : vector<8xf32> to vector<8x1xf32>
    %81 = vector.broadcast %80 : vector<8x1xf32> to vector<8x10xf32>
    %82 = arith.subf %78, %81 : vector<8x10xf32>
    %83 = math.exp %82 : vector<8x10xf32>
    %cst_28 = arith.constant dense<0.000000e+00> : vector<8xf32>
    %84 = vector.multi_reduction <add>, %83, %cst_28 [1] : vector<8x10xf32> to vector<8xf32>
    %85 = vector.shape_cast %84 : vector<8xf32> to vector<8x1xf32>
    %86 = arith.truncf %83 : vector<8x10xf32> to vector<8x10xbf16>
    %cst_29 = arith.constant dense<0.000000e+00> : vector<8x8xf32>
    %87 = tpu.matmul %86, %72, %cst_29 {dimension_numbers = #tpu.dot_dimension_numbers<[1], [0], [0], [1], [0, 0, 1, 1], [], []>} : vector<8x10xbf16>, vector<10x8xbf16>, vector<8x8xf32> -> vector<8x8xf32>
    %88 = vector.broadcast %85 : vector<8x1xf32> to vector<8x8xf32>
    %89 = arith.divf %87, %88 : vector<8x8xf32>
    %90 = tpu.concatenate %29, %49, %69, %89 in 1 : vector<8x8xf32>, vector<8x8xf32>, vector<8x8xf32>, vector<8x8xf32> -> vector<8x32xf32>
    %91 = vector.shape_cast %90 : vector<8x32xf32> to vector<1x8x32xf32>
    %92 = arith.truncf %91 : vector<1x8x32xf32> to vector<1x8x32xbf16>
    %c0_30 = arith.constant 0 : index
    %c0_31 = arith.constant 0 : index
    %c0_32 = arith.constant 0 : index
    %93 = vector.load %arg5[%c0_30, %c0_31, %c0_32] : memref<1x8x32xbf16, #tpu.memory_space<vmem>>, vector<1x8x32xbf16>
    tpu.vector_store %arg5[%c0_30, %c0_31, %c0_32], %92 {strides = array<i32>} : memref<1x8x32xbf16, #tpu.memory_space<vmem>>, vector<1x8x32xbf16>,
    return
  }
  func.func @transform_0(%arg0: i32) -> (i32, i32, i32) {
    %c0_i32 = arith.constant 0 : i32
    %c0_i32_0 = arith.constant 0 : i32
    %c0_i32_1 = arith.constant 0 : i32
    return %arg0, %c0_i32, %c0_i32_0 : i32, i32, i32
  }
  func.func @transform_1(%arg0: i32) -> (i32, i32, i32, i32) {
    %c0_i32 = arith.constant 0 : i32
    %c0_i32_0 = arith.constant 0 : i32
    %c0_i32_1 = arith.constant 0 : i32
    %c0_i32_2 = arith.constant 0 : i32
    return %arg0, %c0_i32, %c0_i32_0, %c0_i32_1 : i32, i32, i32, i32
  }
  func.func @transform_2(%arg0: i32) -> (i32, i32) {
    %c0_i32 = arith.constant 0 : i32
    %c0_i32_0 = arith.constant 0 : i32
    %c0_i32_1 = arith.constant 0 : i32
    return %c0_i32, %c0_i32_0 : i32, i32
  }
  func.func @transform_3(%arg0: i32) -> (i32, i32, i32) {
    %c0_i32 = arith.constant 0 : i32
    %c0_i32_0 = arith.constant 0 : i32
    %c0_i32_1 = arith.constant 0 : i32
    return %arg0, %c0_i32, %c0_i32_0 : i32, i32, i32
  }
  func.func @transform_4(%arg0: i32) -> (i32, i32, i32) {
    %c0_i32 = arith.constant 0 : i32
    %c0_i32_0 = arith.constant 0 : i32
    %c0_i32_1 = arith.constant 0 : i32
    return %arg0, %c0_i32, %c0_i32_0 : i32, i32, i32
  }
}

module attributes {stable_mosaic.version = 11 : i64} {
  func.func @_linear_kernel(%arg0: i32, %arg1: i32, %arg2: i32, %arg3: memref<16x32xbf16, #tpu.memory_space<vmem>>, %arg4: memref<32x64xbf16, #tpu.memory_space<vmem>>, %arg5: memref<1x64xf32, #tpu.memory_space<vmem>>, %arg6: memref<16x64xbf16, #tpu.memory_space<vmem>>, %arg7: memref<16x64xf32, #tpu.memory_space<vmem>>) attributes {dimension_semantics = [#tpu.dimension_semantics<parallel>, #tpu.dimension_semantics<parallel>, #tpu.dimension_semantics<arbitrary>], iteration_bounds = array<i64: 1, 1, 1>, scalar_prefetch = 0 : i64, scratch_operands = 1 : i64, tpu.core_type = #tpu.core_type<tc>, window_params = [{transform_indices = @transform_0, window_bounds = array<i64: 16, 32>}, {transform_indices = @transform_1, window_bounds = array<i64: 32, 64>}, {transform_indices = @transform_2, window_bounds = array<i64: 1, 64>}, {transform_indices = @transform_3, window_bounds = array<i64: 16, 64>}]} {
    %c0_i32 = arith.constant 0 : i32
    %0 = arith.cmpi eq, %arg2, %c0_i32 : i32
    %1 = arith.extui %0 : i1 to i32
    %c0_i32_0 = arith.constant 0 : i32
    %2 = arith.cmpi ne, %1, %c0_i32_0 : i32
    scf.if %2 {
      %cst_10 = arith.constant 0.000000e+00 : f32
      %12 = vector.broadcast %cst_10 : f32 to vector<16x64xf32>
      %c0_11 = arith.constant 0 : index
      %c0_12 = arith.constant 0 : index
      %13 = vector.load %arg7[%c0_11, %c0_12] : memref<16x64xf32, #tpu.memory_space<vmem>>, vector<16x64xf32>
      tpu.vector_store %arg7[%c0_11, %c0_12], %12 {strides = array<i32>} : memref<16x64xf32, #tpu.memory_space<vmem>>, vector<16x64xf32>,
    } else {
    }
    %c0 = arith.constant 0 : index
    %c0_1 = arith.constant 0 : index
    %3 = vector.load %arg7[%c0, %c0_1] : memref<16x64xf32, #tpu.memory_space<vmem>>, vector<16x64xf32>
    %c0_2 = arith.constant 0 : index
    %c0_3 = arith.constant 0 : index
    %4 = vector.load %arg3[%c0_2, %c0_3] : memref<16x32xbf16, #tpu.memory_space<vmem>>, vector<16x32xbf16>
    %c0_4 = arith.constant 0 : index
    %c0_5 = arith.constant 0 : index
    %5 = vector.load %arg4[%c0_4, %c0_5] : memref<32x64xbf16, #tpu.memory_space<vmem>>, vector<32x64xbf16>
    %cst = arith.constant dense<0.000000e+00> : vector<16x64xf32>
    %6 = tpu.matmul %4, %5, %cst {dimension_numbers = #tpu.dot_dimension_numbers<[1], [0], [0], [1], [0, 0, 1, 1], [], []>} : vector<16x32xbf16>, vector<32x64xbf16>, vector<16x64xf32> -> vector<16x64xf32>
    %7 = arith.addf %3, %6 : vector<16x64xf32>
    %c0_6 = arith.constant 0 : index
    %c0_7 = arith.constant 0 : index
    %8 = vector.load %arg7[%c0_6, %c0_7] : memref<16x64xf32, #tpu.memory_space<vmem>>, vector<16x64xf32>
    tpu.vector_store %arg7[%c0_6, %c0_7], %7 {strides = array<i32>} : memref<16x64xf32, #tpu.memory_space<vmem>>, vector<16x64xf32>,
    %c0_i32_8 = arith.constant 0 : i32
    %9 = arith.cmpi eq, %arg2, %c0_i32_8 : i32
    %10 = arith.extui %9 : i1 to i32
    %c0_i32_9 = arith.constant 0 : i32
    %11 = arith.cmpi ne, %10, %c0_i32_9 : i32
    scf.if %11 {
      %c0_10 = arith.constant 0 : index
      %c0_11 = arith.constant 0 : index
      %12 = vector.load %arg7[%c0_10, %c0_11] : memref<16x64xf32, #tpu.memory_space<vmem>>, vector<16x64xf32>
      %c0_12 = arith.constant 0 : index
      %c0_13 = arith.constant 0 : index
      %13 = vector.load %arg5[%c0_12, %c0_13] : memref<1x64xf32, #tpu.memory_space<vmem>>, vector<1x64xf32>
      %14 = vector.broadcast %13 : vector<1x64xf32> to vector<16x64xf32>
      %15 = arith.addf %12, %14 : vector<16x64xf32>
      %cst_14 = arith.constant 0.000000e+00 : f32
      %16 = vector.broadcast %cst_14 : f32 to vector<16x64xf32>
      %17 = arith.maximumf %15, %16 : vector<16x64xf32>
      %18 = arith.truncf %17 : vector<16x64xf32> to vector<16x64xbf16>
      %c0_15 = arith.constant 0 : index
      %c0_16 = arith.constant 0 : index
      %19 = vector.load %arg6[%c0_15, %c0_16] : memref<16x64xbf16, #tpu.memory_space<vmem>>, vector<16x64xbf16>
      tpu.vector_store %arg6[%c0_15, %c0_16], %18 {strides = array<i32>} : memref<16x64xbf16, #tpu.memory_space<vmem>>, vector<16x64xbf16>,
    } else {
    }
    return
  }
  func.func @transform_0(%arg0: i32, %arg1: i32, %arg2: i32) -> (i32, i32) {
    %c0_i32 = arith.constant 0 : i32
    return %arg0, %arg2 : i32, i32
  }
  func.func @transform_1(%arg0: i32, %arg1: i32, %arg2: i32) -> (i32, i32) {
    %c0_i32 = arith.constant 0 : i32
    return %arg2, %arg1 : i32, i32
  }
  func.func @transform_2(%arg0: i32, %arg1: i32, %arg2: i32) -> (i32, i32) {
    %c0_i32 = arith.constant 0 : i32
    %c0_i32_0 = arith.constant 0 : i32
    return %c0_i32, %arg1 : i32, i32
  }
  func.func @transform_3(%arg0: i32, %arg1: i32, %arg2: i32) -> (i32, i32) {
    %c0_i32 = arith.constant 0 : i32
    return %arg0, %arg1 : i32, i32
  }
}

module attributes {stable_mosaic.version = 11 : i64} {
  func.func @_linear_add_ln_kernel(%arg0: i32, %arg1: i32, %arg2: memref<16x64xbf16, #tpu.memory_space<vmem>>, %arg3: memref<64x32xbf16, #tpu.memory_space<vmem>>, %arg4: memref<1x32xf32, #tpu.memory_space<vmem>>, %arg5: memref<16x32xbf16, #tpu.memory_space<vmem>>, %arg6: memref<1x32xf32, #tpu.memory_space<vmem>>, %arg7: memref<1x32xf32, #tpu.memory_space<vmem>>, %arg8: memref<16x32xbf16, #tpu.memory_space<vmem>>, %arg9: memref<16x32xf32, #tpu.memory_space<vmem>>) attributes {dimension_semantics = [#tpu.dimension_semantics<parallel>, #tpu.dimension_semantics<arbitrary>], iteration_bounds = array<i64: 1, 1>, scalar_prefetch = 0 : i64, scratch_operands = 1 : i64, tpu.core_type = #tpu.core_type<tc>, window_params = [{transform_indices = @transform_0, window_bounds = array<i64: 16, 64>}, {transform_indices = @transform_1, window_bounds = array<i64: 64, 32>}, {pipeline_mode = #tpu.pipeline_mode<synchronous>, transform_indices = @transform_2, window_bounds = array<i64: 1, 32>}, {transform_indices = @transform_3, window_bounds = array<i64: 16, 32>}, {pipeline_mode = #tpu.pipeline_mode<synchronous>, transform_indices = @transform_4, window_bounds = array<i64: 1, 32>}, {pipeline_mode = #tpu.pipeline_mode<synchronous>, transform_indices = @transform_5, window_bounds = array<i64: 1, 32>}, {transform_indices = @transform_6, window_bounds = array<i64: 16, 32>}]} {
    %c0_i32 = arith.constant 0 : i32
    %0 = arith.cmpi eq, %arg1, %c0_i32 : i32
    %1 = arith.extui %0 : i1 to i32
    %c0_i32_0 = arith.constant 0 : i32
    %2 = arith.cmpi ne, %1, %c0_i32_0 : i32
    scf.if %2 {
      %cst_10 = arith.constant 0.000000e+00 : f32
      %12 = vector.broadcast %cst_10 : f32 to vector<16x32xf32>
      %c0_11 = arith.constant 0 : index
      %c0_12 = arith.constant 0 : index
      %13 = vector.load %arg9[%c0_11, %c0_12] : memref<16x32xf32, #tpu.memory_space<vmem>>, vector<16x32xf32>
      tpu.vector_store %arg9[%c0_11, %c0_12], %12 {strides = array<i32>} : memref<16x32xf32, #tpu.memory_space<vmem>>, vector<16x32xf32>,
    } else {
    }
    %c0 = arith.constant 0 : index
    %c0_1 = arith.constant 0 : index
    %3 = vector.load %arg9[%c0, %c0_1] : memref<16x32xf32, #tpu.memory_space<vmem>>, vector<16x32xf32>
    %c0_2 = arith.constant 0 : index
    %c0_3 = arith.constant 0 : index
    %4 = vector.load %arg2[%c0_2, %c0_3] : memref<16x64xbf16, #tpu.memory_space<vmem>>, vector<16x64xbf16>
    %c0_4 = arith.constant 0 : index
    %c0_5 = arith.constant 0 : index
    %5 = vector.load %arg3[%c0_4, %c0_5] : memref<64x32xbf16, #tpu.memory_space<vmem>>, vector<64x32xbf16>
    %cst = arith.constant dense<0.000000e+00> : vector<16x32xf32>
    %6 = tpu.matmul %4, %5, %cst {dimension_numbers = #tpu.dot_dimension_numbers<[1], [0], [0], [1], [0, 0, 1, 1], [], []>} : vector<16x64xbf16>, vector<64x32xbf16>, vector<16x32xf32> -> vector<16x32xf32>
    %7 = arith.addf %3, %6 : vector<16x32xf32>
    %c0_6 = arith.constant 0 : index
    %c0_7 = arith.constant 0 : index
    %8 = vector.load %arg9[%c0_6, %c0_7] : memref<16x32xf32, #tpu.memory_space<vmem>>, vector<16x32xf32>
    tpu.vector_store %arg9[%c0_6, %c0_7], %7 {strides = array<i32>} : memref<16x32xf32, #tpu.memory_space<vmem>>, vector<16x32xf32>,
    %c0_i32_8 = arith.constant 0 : i32
    %9 = arith.cmpi eq, %arg1, %c0_i32_8 : i32
    %10 = arith.extui %9 : i1 to i32
    %c0_i32_9 = arith.constant 0 : i32
    %11 = arith.cmpi ne, %10, %c0_i32_9 : i32
    scf.if %11 {
      %c0_10 = arith.constant 0 : index
      %c0_11 = arith.constant 0 : index
      %12 = vector.load %arg9[%c0_10, %c0_11] : memref<16x32xf32, #tpu.memory_space<vmem>>, vector<16x32xf32>
      %c0_12 = arith.constant 0 : index
      %c0_13 = arith.constant 0 : index
      %13 = vector.load %arg4[%c0_12, %c0_13] : memref<1x32xf32, #tpu.memory_space<vmem>>, vector<1x32xf32>
      %14 = vector.broadcast %13 : vector<1x32xf32> to vector<16x32xf32>
      %15 = arith.addf %12, %14 : vector<16x32xf32>
      %c0_14 = arith.constant 0 : index
      %c0_15 = arith.constant 0 : index
      %16 = vector.load %arg5[%c0_14, %c0_15] : memref<16x32xbf16, #tpu.memory_space<vmem>>, vector<16x32xbf16>
      %17 = arith.extf %16 : vector<16x32xbf16> to vector<16x32xf32>
      %18 = arith.addf %15, %17 : vector<16x32xf32>
      %cst_16 = arith.constant dense<0.000000e+00> : vector<16xf32>
      %19 = vector.multi_reduction <add>, %18, %cst_16 [1] : vector<16x32xf32> to vector<16xf32>
      %20 = vector.shape_cast %19 : vector<16xf32> to vector<16x1xf32>
      %cst_17 = arith.constant 3.200000e+01 : f32
      %21 = vector.broadcast %cst_17 : f32 to vector<16x1xf32>
      %22 = arith.divf %20, %21 : vector<16x1xf32>
      %23 = vector.broadcast %22 : vector<16x1xf32> to vector<16x32xf32>
      %24 = arith.subf %18, %23 : vector<16x32xf32>
      %25 = arith.mulf %24, %24 : vector<16x32xf32>
      %cst_18 = arith.constant dense<0.000000e+00> : vector<16xf32>
      %26 = vector.multi_reduction <add>, %25, %cst_18 [1] : vector<16x32xf32> to vector<16xf32>
      %27 = vector.shape_cast %26 : vector<16xf32> to vector<16x1xf32>
      %cst_19 = arith.constant 3.200000e+01 : f32
      %28 = vector.broadcast %cst_19 : f32 to vector<16x1xf32>
      %29 = arith.divf %27, %28 : vector<16x1xf32>
      %cst_20 = arith.constant 9.99999974E-6 : f32
      %30 = vector.broadcast %cst_20 : f32 to vector<16x1xf32>
      %31 = arith.addf %29, %30 : vector<16x1xf32>
      %32 = math.rsqrt %31 : vector<16x1xf32>
      %33 = vector.broadcast %32 : vector<16x1xf32> to vector<16x32xf32>
      %34 = arith.mulf %24, %33 : vector<16x32xf32>
      %c0_21 = arith.constant 0 : index
      %c0_22 = arith.constant 0 : index
      %35 = vector.load %arg6[%c0_21, %c0_22] : memref<1x32xf32, #tpu.memory_space<vmem>>, vector<1x32xf32>
      %36 = vector.broadcast %35 : vector<1x32xf32> to vector<16x32xf32>
      %37 = arith.mulf %34, %36 : vector<16x32xf32>
      %c0_23 = arith.constant 0 : index
      %c0_24 = arith.constant 0 : index
      %38 = vector.load %arg7[%c0_23, %c0_24] : memref<1x32xf32, #tpu.memory_space<vmem>>, vector<1x32xf32>
      %39 = vector.broadcast %38 : vector<1x32xf32> to vector<16x32xf32>
      %40 = arith.addf %37, %39 : vector<16x32xf32>
      %41 = arith.truncf %40 : vector<16x32xf32> to vector<16x32xbf16>
      %c0_25 = arith.constant 0 : index
      %c0_26 = arith.constant 0 : index
      %42 = vector.load %arg8[%c0_25, %c0_26] : memref<16x32xbf16, #tpu.memory_space<vmem>>, vector<16x32xbf16>
      tpu.vector_store %arg8[%c0_25, %c0_26], %41 {strides = array<i32>} : memref<16x32xbf16, #tpu.memory_space<vmem>>, vector<16x32xbf16>,
    } else {
    }
    return
  }
  func.func @transform_0(%arg0: i32, %arg1: i32) -> (i32, i32) {
    %c0_i32 = arith.constant 0 : i32
    return %arg0, %arg1 : i32, i32
  }
  func.func @transform_1(%arg0: i32, %arg1: i32) -> (i32, i32) {
    %c0_i32 = arith.constant 0 : i32
    %c0_i32_0 = arith.constant 0 : i32
    return %arg1, %c0_i32 : i32, i32
  }
  func.func @transform_2(%arg0: i32, %arg1: i32) -> (i32, i32) {
    %c0_i32 = arith.constant 0 : i32
    %c0_i32_0 = arith.constant 0 : i32
    %c0_i32_1 = arith.constant 0 : i32
    return %c0_i32, %c0_i32_0 : i32, i32
  }
  func.func @transform_3(%arg0: i32, %arg1: i32) -> (i32, i32) {
    %c0_i32 = arith.constant 0 : i32
    %c0_i32_0 = arith.constant 0 : i32
    return %arg0, %c0_i32 : i32, i32
  }
  func.func @transform_4(%arg0: i32, %arg1: i32) -> (i32, i32) {
    %c0_i32 = arith.constant 0 : i32
    %c0_i32_0 = arith.constant 0 : i32
    %c0_i32_1 = arith.constant 0 : i32
    return %c0_i32, %c0_i32_0 : i32, i32
  }
  func.func @transform_5(%arg0: i32, %arg1: i32) -> (i32, i32) {
    %c0_i32 = arith.constant 0 : i32
    %c0_i32_0 = arith.constant 0 : i32
    %c0_i32_1 = arith.constant 0 : i32
    return %c0_i32, %c0_i32_0 : i32, i32
  }
  func.func @transform_6(%arg0: i32, %arg1: i32) -> (i32, i32) {
    %c0_i32 = arith.constant 0 : i32
    %c0_i32_0 = arith.constant 0 : i32
    return %arg0, %c0_i32 : i32, i32
  }
}

module attributes {stable_mosaic.version = 11 : i64} {
  func.func @_ln_kernel(%arg0: i32, %arg1: memref<16x32xbf16, #tpu.memory_space<vmem>>, %arg2: memref<1x32xf32, #tpu.memory_space<vmem>>, %arg3: memref<1x32xf32, #tpu.memory_space<vmem>>, %arg4: memref<16x32xbf16, #tpu.memory_space<vmem>>) attributes {dimension_semantics = [#tpu.dimension_semantics<parallel>], iteration_bounds = array<i64: 1>, scalar_prefetch = 0 : i64, scratch_operands = 0 : i64, tpu.core_type = #tpu.core_type<tc>, window_params = [{transform_indices = @transform_0, window_bounds = array<i64: 16, 32>}, {pipeline_mode = #tpu.pipeline_mode<synchronous>, transform_indices = @transform_1, window_bounds = array<i64: 1, 32>}, {pipeline_mode = #tpu.pipeline_mode<synchronous>, transform_indices = @transform_2, window_bounds = array<i64: 1, 32>}, {transform_indices = @transform_3, window_bounds = array<i64: 16, 32>}]} {
    %c0 = arith.constant 0 : index
    %c0_0 = arith.constant 0 : index
    %0 = vector.load %arg1[%c0, %c0_0] : memref<16x32xbf16, #tpu.memory_space<vmem>>, vector<16x32xbf16>
    %1 = arith.extf %0 : vector<16x32xbf16> to vector<16x32xf32>
    %cst = arith.constant dense<0.000000e+00> : vector<16xf32>
    %2 = vector.multi_reduction <add>, %1, %cst [1] : vector<16x32xf32> to vector<16xf32>
    %3 = vector.shape_cast %2 : vector<16xf32> to vector<16x1xf32>
    %cst_1 = arith.constant 3.200000e+01 : f32
    %4 = vector.broadcast %cst_1 : f32 to vector<16x1xf32>
    %5 = arith.divf %3, %4 : vector<16x1xf32>
    %6 = vector.broadcast %5 : vector<16x1xf32> to vector<16x32xf32>
    %7 = arith.subf %1, %6 : vector<16x32xf32>
    %8 = arith.mulf %7, %7 : vector<16x32xf32>
    %cst_2 = arith.constant dense<0.000000e+00> : vector<16xf32>
    %9 = vector.multi_reduction <add>, %8, %cst_2 [1] : vector<16x32xf32> to vector<16xf32>
    %10 = vector.shape_cast %9 : vector<16xf32> to vector<16x1xf32>
    %cst_3 = arith.constant 3.200000e+01 : f32
    %11 = vector.broadcast %cst_3 : f32 to vector<16x1xf32>
    %12 = arith.divf %10, %11 : vector<16x1xf32>
    %cst_4 = arith.constant 9.99999974E-6 : f32
    %13 = vector.broadcast %cst_4 : f32 to vector<16x1xf32>
    %14 = arith.addf %12, %13 : vector<16x1xf32>
    %15 = math.rsqrt %14 : vector<16x1xf32>
    %16 = vector.broadcast %15 : vector<16x1xf32> to vector<16x32xf32>
    %17 = arith.mulf %7, %16 : vector<16x32xf32>
    %c0_5 = arith.constant 0 : index
    %c0_6 = arith.constant 0 : index
    %18 = vector.load %arg2[%c0_5, %c0_6] : memref<1x32xf32, #tpu.memory_space<vmem>>, vector<1x32xf32>
    %19 = vector.broadcast %18 : vector<1x32xf32> to vector<16x32xf32>
    %20 = arith.mulf %17, %19 : vector<16x32xf32>
    %c0_7 = arith.constant 0 : index
    %c0_8 = arith.constant 0 : index
    %21 = vector.load %arg3[%c0_7, %c0_8] : memref<1x32xf32, #tpu.memory_space<vmem>>, vector<1x32xf32>
    %22 = vector.broadcast %21 : vector<1x32xf32> to vector<16x32xf32>
    %23 = arith.addf %20, %22 : vector<16x32xf32>
    %24 = arith.truncf %23 : vector<16x32xf32> to vector<16x32xbf16>
    %c0_9 = arith.constant 0 : index
    %c0_10 = arith.constant 0 : index
    %25 = vector.load %arg4[%c0_9, %c0_10] : memref<16x32xbf16, #tpu.memory_space<vmem>>, vector<16x32xbf16>
    tpu.vector_store %arg4[%c0_9, %c0_10], %24 {strides = array<i32>} : memref<16x32xbf16, #tpu.memory_space<vmem>>, vector<16x32xbf16>,
    return
  }
  func.func @transform_0(%arg0: i32) -> (i32, i32) {
    %c0_i32 = arith.constant 0 : i32
    %c0_i32_0 = arith.constant 0 : i32
    return %arg0, %c0_i32 : i32, i32
  }
  func.func @transform_1(%arg0: i32) -> (i32, i32) {
    %c0_i32 = arith.constant 0 : i32
    %c0_i32_0 = arith.constant 0 : i32
    %c0_i32_1 = arith.constant 0 : i32
    return %c0_i32, %c0_i32_0 : i32, i32
  }
  func.func @transform_2(%arg0: i32) -> (i32, i32) {
    %c0_i32 = arith.constant 0 : i32
    %c0_i32_0 = arith.constant 0 : i32
    %c0_i32_1 = arith.constant 0 : i32
    return %c0_i32, %c0_i32_0 : i32, i32
  }
  func.func @transform_3(%arg0: i32) -> (i32, i32) {
    %c0_i32 = arith.constant 0 : i32
    %c0_i32_0 = arith.constant 0 : i32
    return %arg0, %c0_i32 : i32, i32
  }
}

module attributes {stable_mosaic.version = 11 : i64} {
  func.func @_linear_kernel(%arg0: i32, %arg1: i32, %arg2: i32, %arg3: memref<16x32xbf16, #tpu.memory_space<vmem>>, %arg4: memref<32x48xbf16, #tpu.memory_space<vmem>>, %arg5: memref<1x48xf32, #tpu.memory_space<vmem>>, %arg6: memref<16x48xf32, #tpu.memory_space<vmem>>, %arg7: memref<16x48xf32, #tpu.memory_space<vmem>>) attributes {dimension_semantics = [#tpu.dimension_semantics<parallel>, #tpu.dimension_semantics<parallel>, #tpu.dimension_semantics<arbitrary>], iteration_bounds = array<i64: 1, 1, 1>, scalar_prefetch = 0 : i64, scratch_operands = 1 : i64, tpu.core_type = #tpu.core_type<tc>, window_params = [{transform_indices = @transform_0, window_bounds = array<i64: 16, 32>}, {transform_indices = @transform_1, window_bounds = array<i64: 32, 48>}, {transform_indices = @transform_2, window_bounds = array<i64: 1, 48>}, {transform_indices = @transform_3, window_bounds = array<i64: 16, 48>}]} {
    %c0_i32 = arith.constant 0 : i32
    %0 = arith.cmpi eq, %arg2, %c0_i32 : i32
    %1 = arith.extui %0 : i1 to i32
    %c0_i32_0 = arith.constant 0 : i32
    %2 = arith.cmpi ne, %1, %c0_i32_0 : i32
    scf.if %2 {
      %cst_10 = arith.constant 0.000000e+00 : f32
      %12 = vector.broadcast %cst_10 : f32 to vector<16x48xf32>
      %c0_11 = arith.constant 0 : index
      %c0_12 = arith.constant 0 : index
      %13 = vector.load %arg7[%c0_11, %c0_12] : memref<16x48xf32, #tpu.memory_space<vmem>>, vector<16x48xf32>
      tpu.vector_store %arg7[%c0_11, %c0_12], %12 {strides = array<i32>} : memref<16x48xf32, #tpu.memory_space<vmem>>, vector<16x48xf32>,
    } else {
    }
    %c0 = arith.constant 0 : index
    %c0_1 = arith.constant 0 : index
    %3 = vector.load %arg7[%c0, %c0_1] : memref<16x48xf32, #tpu.memory_space<vmem>>, vector<16x48xf32>
    %c0_2 = arith.constant 0 : index
    %c0_3 = arith.constant 0 : index
    %4 = vector.load %arg3[%c0_2, %c0_3] : memref<16x32xbf16, #tpu.memory_space<vmem>>, vector<16x32xbf16>
    %c0_4 = arith.constant 0 : index
    %c0_5 = arith.constant 0 : index
    %5 = vector.load %arg4[%c0_4, %c0_5] : memref<32x48xbf16, #tpu.memory_space<vmem>>, vector<32x48xbf16>
    %cst = arith.constant dense<0.000000e+00> : vector<16x48xf32>
    %6 = tpu.matmul %4, %5, %cst {dimension_numbers = #tpu.dot_dimension_numbers<[1], [0], [0], [1], [0, 0, 1, 1], [], []>} : vector<16x32xbf16>, vector<32x48xbf16>, vector<16x48xf32> -> vector<16x48xf32>
    %7 = arith.addf %3, %6 : vector<16x48xf32>
    %c0_6 = arith.constant 0 : index
    %c0_7 = arith.constant 0 : index
    %8 = vector.load %arg7[%c0_6, %c0_7] : memref<16x48xf32, #tpu.memory_space<vmem>>, vector<16x48xf32>
    tpu.vector_store %arg7[%c0_6, %c0_7], %7 {strides = array<i32>} : memref<16x48xf32, #tpu.memory_space<vmem>>, vector<16x48xf32>,
    %c0_i32_8 = arith.constant 0 : i32
    %9 = arith.cmpi eq, %arg2, %c0_i32_8 : i32
    %10 = arith.extui %9 : i1 to i32
    %c0_i32_9 = arith.constant 0 : i32
    %11 = arith.cmpi ne, %10, %c0_i32_9 : i32
    scf.if %11 {
      %c0_10 = arith.constant 0 : index
      %c0_11 = arith.constant 0 : index
      %12 = vector.load %arg7[%c0_10, %c0_11] : memref<16x48xf32, #tpu.memory_space<vmem>>, vector<16x48xf32>
      %c0_12 = arith.constant 0 : index
      %c0_13 = arith.constant 0 : index
      %13 = vector.load %arg5[%c0_12, %c0_13] : memref<1x48xf32, #tpu.memory_space<vmem>>, vector<1x48xf32>
      %14 = vector.broadcast %13 : vector<1x48xf32> to vector<16x48xf32>
      %15 = arith.addf %12, %14 : vector<16x48xf32>
      %c0_14 = arith.constant 0 : index
      %c0_15 = arith.constant 0 : index
      %16 = vector.load %arg6[%c0_14, %c0_15] : memref<16x48xf32, #tpu.memory_space<vmem>>, vector<16x48xf32>
      tpu.vector_store %arg6[%c0_14, %c0_15], %15 {strides = array<i32>} : memref<16x48xf32, #tpu.memory_space<vmem>>, vector<16x48xf32>,
    } else {
    }
    return
  }
  func.func @transform_0(%arg0: i32, %arg1: i32, %arg2: i32) -> (i32, i32) {
    %c0_i32 = arith.constant 0 : i32
    return %arg0, %arg2 : i32, i32
  }
  func.func @transform_1(%arg0: i32, %arg1: i32, %arg2: i32) -> (i32, i32) {
    %c0_i32 = arith.constant 0 : i32
    return %arg2, %arg1 : i32, i32
  }
  func.func @transform_2(%arg0: i32, %arg1: i32, %arg2: i32) -> (i32, i32) {
    %c0_i32 = arith.constant 0 : i32
    %c0_i32_0 = arith.constant 0 : i32
    return %c0_i32, %arg1 : i32, i32
  }
  func.func @transform_3(%arg0: i32, %arg1: i32, %arg2: i32) -> (i32, i32) {
    %c0_i32 = arith.constant 0 : i32
    return %arg0, %arg1 : i32, i32
  }
}

</mosaic_0001>

<llo_original>
// kernel: seq2seq_transformer_forward.34
$region0: #{seq2seq_transformer_forward.34}
  #allocation0 [shape = 'u32[]', space=smem, size = 0x4, offset = 0x4, fixed_abs, tag = 'smem constant byte address 0x4 - core index']
  #allocation1 [shape = 'u32[144,128]{1,0:T(1,128)}', space=vmem, size = 0x12000, scoped, tag = 'internal scratch']
  #allocation2 [shape = 'f32[20,64]{1,0:T(8,128)}', space=vmem, size = 0x3000, scoped, tag = 'scratch operand']
  %s0 = inlined_call_operand.vmem [shape: bf16[20,32], index: 0, kind: input, shape index: {}]
  %s1 = inlined_call_operand.vmem [shape: bf16[32,64], index: 1, kind: input, shape index: {}]
  %s2 = inlined_call_operand.vmem [shape: f32[1,64], index: 2, kind: input, shape index: {}]
  %s3 = inlined_call_operand.vmem [shape: bf16[20,64], index: 3, kind: output, shape index: {}]
  %s4 = sld [smem:[#allocation0]]
  $region30: #{seq2seq_transformer_forward.34} parent=0
    _
  %s6 = ssub.s32 1, %s4
  %s7 = scalar_select 0, %s6, %s4
  // Predicated region
  $region2: #{seq2seq_transformer_forward.34} parent=0 // pred_check
    _
  $region3: #{seq2seq_transformer_forward.34} parent=0 // pred_check_branch
    %9 = sbr.rel (0) target = $region5
  $region4: #{seq2seq_transformer_forward.34} parent=0 // pred_region
    _
  $region5: #{seq2seq_transformer_forward.34} parent=0 // pred_fallthru
    _
  // Predicated region
  $region6: #{seq2seq_transformer_forward.34} parent=0 // pred_check
    _
  $region7: #{seq2seq_transformer_forward.34} parent=0 // pred_check_branch
    %11 = sbr.rel (0) target = $region9
  $region8: #{seq2seq_transformer_forward.34} parent=0 // pred_region
    _
  $region9: #{seq2seq_transformer_forward.34} parent=0 // pred_fallthru
    _
  // Predicated region
  $region10: #{seq2seq_transformer_forward.34} parent=0 // pred_check
    _
  $region11: #{seq2seq_transformer_forward.34} parent=0 // pred_check_branch
    %13 = sbr.rel (0) target = $region13
  $region12: #{seq2seq_transformer_forward.34} parent=0 // pred_region
    _
  $region13: #{seq2seq_transformer_forward.34} parent=0 // pred_fallthru
    _
  %p15 = scmp.eq.s32.totalorder 0, 0
  // Predicated region
  $region14: #{seq2seq_transformer_forward.34} parent=0 // pred_check
    %p16 = pneg %p15
  $region15: #{seq2seq_transformer_forward.34} parent=0 // pred_check_branch
    %18 = sbr.rel (%p16) target = $region17
  $region16: #{seq2seq_transformer_forward.34} parent=0 // pred_region
    %vm19 = vcmask 523264
    %20 = vst.msk [vmem:[#allocation2] sm:$0xff] %vm19, 0.0
    %21 = vst.msk [vmem:[#allocation2 + $0x8] sm:$0xff] %vm19, 0.0
    %vm22 = vcmask 519168
    %23 = vst.msk [vmem:[#allocation2 + $0x10] sm:$0xf] %vm22, 0.0
  $region17: #{seq2seq_transformer_forward.34} parent=0 // pred_fallthru
    _
  %v24 = vld [vmem:[#allocation2] sm:$0xff]
  %v25 = vld [vmem:[#allocation2 + $0x8] sm:$0xff]
  %v26 = vld [vmem:[#allocation2 + $0x10] sm:$0xf]
  %v27 = vld [vmem:[%s0] sm:$0xf]
  %v28 = vld [vmem:[%s0 + $0x4] sm:$0xf]
  %v29 = vld [vmem:[%s0 + $0x8] sm:$0x3]
  %v30 = vld [vmem:[%s1] sm:$0xf]
  %v31 = vld [vmem:[%s1 + $0x4] sm:$0xf]
  %v32 = vld [vmem:[%s1 + $0x8] sm:$0xf]
  %v33 = vld [vmem:[%s1 + $0xc] sm:$0xf]
  %v37 = vunpack.c.l.b16 %v27
  %v38 = vunpack.c.l.b16 %v28
  %v39 = vunpack.c.l.b16 %v29
  %v40 = vpack.c.b16 %v38, %v37
  %v41 = vpack.c.b16 %v39, %v39
  %v46 = vunpack.c.l.b16 %v30
  %v47 = vunpack.c.l.b16 %v31
  %v48 = vunpack.c.l.b16 %v32
  %v49 = vunpack.c.l.b16 %v33
  %v50 = vpack.c.b16 %v47, %v46
  %v51 = vpack.c.b16 %v49, %v48
  %vm54 = vcmask 261120
  %v56 = vsel %vm54, %v40, 0
  %v59 = vsel %vm54, %v41, 0
  %61 = vmatprep.subr.bf16.mxu0 0
  %62 = vmatpush1.bf16.msra.mxu0 0
  %63 = vmatprep.subr.bf16.mxu0 0
  %64 = vmatpush1.bf16.msra.mxu0 0
  %65 = vmatprep.subr.bf16.mxu0 0
  %66 = vmatpush1.bf16.msra.mxu0 0
  %67 = vmatprep.subr.bf16.mxu0 0
  %68 = vmatpush1.bf16.msra.mxu0 0
  %69 = vmatprep.subr.bf16.mxu0 0
  %70 = vmatpush1.bf16.msra.mxu0 0
  %71 = vmatprep.subr.bf16.mxu0 0
  %72 = vmatpush1.bf16.msra.mxu0 0
  %73 = vmatprep.subr.bf16.mxu0 0
  %74 = vmatpush1.bf16.msra.mxu0 %v51
  %75 = vmatprep.subr.bf16.mxu0 0
  %76 = vmatpush1.bf16.msra.mxu0 %v50
  %77 = vmatprep.subr.bf16.mxu0 0
  %78 = vmatpush2.bf16.msra.mxu0 0
  %79 = vmatprep.subr.bf16.mxu0 0
  %80 = vmatpush2.bf16.msra.mxu0 0
  %81 = vmatprep.subr.bf16.mxu0 0
  %82 = vmatpush2.bf16.msra.mxu0 0
  %83 = vmatprep.subr.bf16.mxu0 0
  %84 = vmatpush2.bf16.msra.mxu0 0
  %85 = vmatprep.subr.bf16.mxu0 0
  %86 = vmatpush2.bf16.msra.mxu0 0
  %87 = vmatprep.subr.bf16.mxu0 0
  %88 = vmatpush2.bf16.msra.mxu0 0
  %89 = vmatprep.subr.bf16.mxu0 0
  %90 = vmatpush2.bf16.msra.mxu0 0
  %91 = vmatprep.subr.bf16.mxu0 0
  %92 = vmatpush2.bf16.msra.mxu0 0
  %93 = vmatprep.mubr.bf16.mxu0 0
  %94 = vmatmul.mubr.bf16.gmra.mxu0 %v56
  %v95 = vpop.f32.mrf.mxu0
  %v96 = vadd.f32 0.0, %v95
  %v97 = vpop.f32.mrf.mxu0
  %v98 = vpop.f32.mrf.mxu0
  %v99 = vadd.f32 0.0, %v98
  %v100 = vpop.f32.mrf.mxu0
  %101 = vmatprep.mubr.bf16.mxu0 0
  %102 = vmatmul.mubr.bf16.gmra.mxu0 %v59
  %v103 = vpop.f32.mrf.mxu0
  %v104 = vadd.f32 0.0, %v103
  %v105 = vpop.f32.mrf.mxu0
  %v106 = vpop.f32.mrf.mxu0
  %v107 = vpop.f32.mrf.mxu0
  %108 = vdwg.mxu0
  %v109 = vadd.f32 %v24, %v96
  %v110 = vadd.f32 %v25, %v99
  %v111 = vadd.f32 %v26, %v104
  %vm112 = vcmask 523264
  %113 = vst.msk [vmem:[#allocation2] sm:$0xff] %vm112, %v109
  %114 = vst.msk [vmem:[#allocation2 + $0x8] sm:$0xff] %vm112, %v110
  %vm115 = vcmask 519168
  %116 = vst.msk [vmem:[#allocation2 + $0x10] sm:$0xf] %vm115, %v111
  // Predicated region
  $region18: #{seq2seq_transformer_forward.34} parent=0 // pred_check
    %p117 = pneg %p15
  $region19: #{seq2seq_transformer_forward.34} parent=0 // pred_check_branch
    %119 = sbr.rel (%p117) target = $region21
  $region20: #{seq2seq_transformer_forward.34} parent=0 // pred_region
    %v120 = vld [vmem:[#allocation2] sm:$0xff]
    %v121 = vld [vmem:[#allocation2 + $0x8] sm:$0xff]
    %v122 = vld [vmem:[#allocation2 + $0x10] sm:$0xf]
    %v123 = vld [vmem:[%s2] sm:$0x1]
    %v125 = vlaneseq
    %v126 = vshrl.u32 %v125, 7
    %v127 = vsub.s32 0, %v126
    %v128 = vrot.slane %v123, %v127
    %v130 = vadd.f32 %v120, %v128
    %v131 = vadd.f32 %v121, %v128
    %v132 = vadd.f32 %v122, %v128
    %v133 = vmax.f32 %v130, 0.0
    %v134 = vmax.f32 %v131, 0.0
    %v135 = vmax.f32 %v132, 0.0
    %v136 = vpack.c.bf16 %v134, %v133
    %v137 = vpack.c.bf16 %v135, %v135
    %v140 = vunpack.c.l.b16 %v136
    %v141 = vunpack.c.h.b16 %v136
    %v142 = vunpack.c.l.b16 %v137
    %v143 = vpack.c.b16 %v140, %v140
    %v144 = vpack.c.b16 %v141, %v141
    %v145 = vpack.c.b16 %v142, %v142
    %149 = vst.msk [vmem:[%s3] sm:$0xf] %vm115, %v143
    %150 = vst.msk [vmem:[%s3 + $0x4] sm:$0xf] %vm115, %v144
    %vm151 = vcmask 517120
    %152 = vst.msk [vmem:[%s3 + $0x8] sm:$0x3] %vm151, %v145
  $region21: #{seq2seq_transformer_forward.34} parent=0 // pred_fallthru
    _
  // Predicated region
  $region22: #{seq2seq_transformer_forward.34} parent=0 // pred_check
    _
  $region23: #{seq2seq_transformer_forward.34} parent=0 // pred_check_branch
    %154 = sbr.rel (0) target = $region25
  $region24: #{seq2seq_transformer_forward.34} parent=0 // pred_region
    _
  $region25: #{seq2seq_transformer_forward.34} parent=0 // pred_fallthru
    _
  // Predicated region
  $region26: #{seq2seq_transformer_forward.34} parent=0 // pred_check
    _
  $region27: #{seq2seq_transformer_forward.34} parent=0 // pred_check_branch
    %156 = sbr.rel (0) target = $region29
  $region28: #{seq2seq_transformer_forward.34} parent=0 // pred_region
    _
  $region29: #{seq2seq_transformer_forward.34} parent=0 // pred_fallthru
    _

// kernel: seq2seq_transformer_forward.31
$region0: #{seq2seq_transformer_forward.31}
  #allocation0 [shape = 'u32[]', space=smem, size = 0x4, offset = 0x4, fixed_abs, tag = 'smem constant byte address 0x4 - core index']
  #allocation1 [shape = 'u32[144,128]{1,0:T(1,128)}', space=vmem, size = 0x12000, scoped, tag = 'internal scratch']
  #allocation2 [shape = 'f32[20,96]{1,0:T(8,128)}', space=vmem, size = 0x3000, scoped, tag = 'scratch operand']
  %s0 = inlined_call_operand.vmem [shape: bf16[20,32], index: 0, kind: input, shape index: {}]
  %s1 = inlined_call_operand.vmem [shape: bf16[32,96], index: 1, kind: input, shape index: {}]
  %s2 = inlined_call_operand.vmem [shape: f32[1,96], index: 2, kind: input, shape index: {}]
  %s3 = inlined_call_operand.vmem [shape: bf16[20,96], index: 3, kind: output, shape index: {}]
  %s4 = sld [smem:[#allocation0]]
  $region30: #{seq2seq_transformer_forward.31} parent=0
    _
  %s6 = ssub.s32 1, %s4
  %s7 = scalar_select 0, %s6, %s4
  // Predicated region
  $region2: #{seq2seq_transformer_forward.31} parent=0 // pred_check
    _
  $region3: #{seq2seq_transformer_forward.31} parent=0 // pred_check_branch
    %9 = sbr.rel (0) target = $region5
  $region4: #{seq2seq_transformer_forward.31} parent=0 // pred_region
    _
  $region5: #{seq2seq_transformer_forward.31} parent=0 // pred_fallthru
    _
  // Predicated region
  $region6: #{seq2seq_transformer_forward.31} parent=0 // pred_check
    _
  $region7: #{seq2seq_transformer_forward.31} parent=0 // pred_check_branch
    %11 = sbr.rel (0) target = $region9
  $region8: #{seq2seq_transformer_forward.31} parent=0 // pred_region
    _
  $region9: #{seq2seq_transformer_forward.31} parent=0 // pred_fallthru
    _
  // Predicated region
  $region10: #{seq2seq_transformer_forward.31} parent=0 // pred_check
    _
  $region11: #{seq2seq_transformer_forward.31} parent=0 // pred_check_branch
    %13 = sbr.rel (0) target = $region13
  $region12: #{seq2seq_transformer_forward.31} parent=0 // pred_region
    _
  $region13: #{seq2seq_transformer_forward.31} parent=0 // pred_fallthru
    _
  %p15 = scmp.eq.s32.totalorder 0, 0
  // Predicated region
  $region14: #{seq2seq_transformer_forward.31} parent=0 // pred_check
    %p16 = pneg %p15
  $region15: #{seq2seq_transformer_forward.31} parent=0 // pred_check_branch
    %18 = sbr.rel (%p16) target = $region17
  $region16: #{seq2seq_transformer_forward.31} parent=0 // pred_region
    %vm19 = vcmask 785408
    %20 = vst.msk [vmem:[#allocation2] sm:$0xff] %vm19, 0.0
    %21 = vst.msk [vmem:[#allocation2 + $0x8] sm:$0xff] %vm19, 0.0
    %vm22 = vcmask 781312
    %23 = vst.msk [vmem:[#allocation2 + $0x10] sm:$0xf] %vm22, 0.0
  $region17: #{seq2seq_transformer_forward.31} parent=0 // pred_fallthru
    _
  %v24 = vld [vmem:[#allocation2] sm:$0xff]
  %v25 = vld [vmem:[#allocation2 + $0x8] sm:$0xff]
  %v26 = vld [vmem:[#allocation2 + $0x10] sm:$0xf]
  %v27 = vld [vmem:[%s0] sm:$0xf]
  %v28 = vld [vmem:[%s0 + $0x4] sm:$0xf]
  %v29 = vld [vmem:[%s0 + $0x8] sm:$0x3]
  %v30 = vld [vmem:[%s1] sm:$0xf]
  %v31 = vld [vmem:[%s1 + $0x4] sm:$0xf]
  %v32 = vld [vmem:[%s1 + $0x8] sm:$0xf]
  %v33 = vld [vmem:[%s1 + $0xc] sm:$0xf]
  %v37 = vunpack.c.l.b16 %v27
  %v38 = vunpack.c.l.b16 %v28
  %v39 = vunpack.c.l.b16 %v29
  %v40 = vpack.c.b16 %v38, %v37
  %v41 = vpack.c.b16 %v39, %v39
  %v46 = vunpack.c.l.b16 %v30
  %v47 = vunpack.c.l.b16 %v31
  %v48 = vunpack.c.l.b16 %v32
  %v49 = vunpack.c.l.b16 %v33
  %v50 = vpack.c.b16 %v47, %v46
  %v51 = vpack.c.b16 %v49, %v48
  %vm54 = vcmask 261120
  %v56 = vsel %vm54, %v40, 0
  %v59 = vsel %vm54, %v41, 0
  %61 = vmatprep.subr.bf16.mxu0 0
  %62 = vmatpush1.bf16.msra.mxu0 0
  %63 = vmatprep.subr.bf16.mxu0 0
  %64 = vmatpush1.bf16.msra.mxu0 0
  %65 = vmatprep.subr.bf16.mxu0 0
  %66 = vmatpush1.bf16.msra.mxu0 0
  %67 = vmatprep.subr.bf16.mxu0 0
  %68 = vmatpush1.bf16.msra.mxu0 0
  %69 = vmatprep.subr.bf16.mxu0 0
  %70 = vmatpush1.bf16.msra.mxu0 0
  %71 = vmatprep.subr.bf16.mxu0 0
  %72 = vmatpush1.bf16.msra.mxu0 0
  %73 = vmatprep.subr.bf16.mxu0 0
  %74 = vmatpush1.bf16.msra.mxu0 %v51
  %75 = vmatprep.subr.bf16.mxu0 0
  %76 = vmatpush1.bf16.msra.mxu0 %v50
  %77 = vmatprep.subr.bf16.mxu0 0
  %78 = vmatpush2.bf16.msra.mxu0 0
  %79 = vmatprep.subr.bf16.mxu0 0
  %80 = vmatpush2.bf16.msra.mxu0 0
  %81 = vmatprep.subr.bf16.mxu0 0
  %82 = vmatpush2.bf16.msra.mxu0 0
  %83 = vmatprep.subr.bf16.mxu0 0
  %84 = vmatpush2.bf16.msra.mxu0 0
  %85 = vmatprep.subr.bf16.mxu0 0
  %86 = vmatpush2.bf16.msra.mxu0 0
  %87 = vmatprep.subr.bf16.mxu0 0
  %88 = vmatpush2.bf16.msra.mxu0 0
  %89 = vmatprep.subr.bf16.mxu0 0
  %90 = vmatpush2.bf16.msra.mxu0 0
  %91 = vmatprep.subr.bf16.mxu0 0
  %92 = vmatpush2.bf16.msra.mxu0 0
  %93 = vmatprep.mubr.bf16.mxu0 0
  %94 = vmatmul.mubr.bf16.gmra.mxu0 %v56
  %v95 = vpop.f32.mrf.mxu0
  %v96 = vadd.f32 0.0, %v95
  %v97 = vpop.f32.mrf.mxu0
  %v98 = vpop.f32.mrf.mxu0
  %v99 = vadd.f32 0.0, %v98
  %v100 = vpop.f32.mrf.mxu0
  %101 = vmatprep.mubr.bf16.mxu0 0
  %102 = vmatmul.mubr.bf16.gmra.mxu0 %v59
  %v103 = vpop.f32.mrf.mxu0
  %v104 = vadd.f32 0.0, %v103
  %v105 = vpop.f32.mrf.mxu0
  %v106 = vpop.f32.mrf.mxu0
  %v107 = vpop.f32.mrf.mxu0
  %108 = vdwg.mxu0
  %v109 = vadd.f32 %v24, %v96
  %v110 = vadd.f32 %v25, %v99
  %v111 = vadd.f32 %v26, %v104
  %vm112 = vcmask 785408
  %113 = vst.msk [vmem:[#allocation2] sm:$0xff] %vm112, %v109
  %114 = vst.msk [vmem:[#allocation2 + $0x8] sm:$0xff] %vm112, %v110
  %vm115 = vcmask 781312
  %116 = vst.msk [vmem:[#allocation2 + $0x10] sm:$0xf] %vm115, %v111
  // Predicated region
  $region18: #{seq2seq_transformer_forward.31} parent=0 // pred_check
    %p117 = pneg %p15
  $region19: #{seq2seq_transformer_forward.31} parent=0 // pred_check_branch
    %119 = sbr.rel (%p117) target = $region21
  $region20: #{seq2seq_transformer_forward.31} parent=0 // pred_region
    %v120 = vld [vmem:[#allocation2] sm:$0xff]
    %v121 = vld [vmem:[#allocation2 + $0x8] sm:$0xff]
    %v122 = vld [vmem:[#allocation2 + $0x10] sm:$0xf]
    %v123 = vld [vmem:[%s2] sm:$0x1]
    %v125 = vlaneseq
    %v126 = vshrl.u32 %v125, 7
    %v127 = vsub.s32 0, %v126
    %v128 = vrot.slane %v123, %v127
    %v130 = vadd.f32 %v120, %v128
    %v131 = vadd.f32 %v121, %v128
    %v132 = vadd.f32 %v122, %v128
    %v133 = vpack.c.bf16 %v131, %v130
    %v134 = vpack.c.bf16 %v132, %v132
    %v137 = vunpack.c.l.b16 %v133
    %v138 = vunpack.c.h.b16 %v133
    %v139 = vunpack.c.l.b16 %v134
    %v140 = vpack.c.b16 %v137, %v137
    %v141 = vpack.c.b16 %v138, %v138
    %v142 = vpack.c.b16 %v139, %v139
    %146 = vst.msk [vmem:[%s3] sm:$0xf] %vm115, %v140
    %147 = vst.msk [vmem:[%s3 + $0x4] sm:$0xf] %vm115, %v141
    %vm148 = vcmask 779264
    %149 = vst.msk [vmem:[%s3 + $0x8] sm:$0x3] %vm148, %v142
  $region21: #{seq2seq_transformer_forward.31} parent=0 // pred_fallthru
    _
  // Predicated region
  $region22: #{seq2seq_transformer_forward.31} parent=0 // pred_check
    _
  $region23: #{seq2seq_transformer_forward.31} parent=0 // pred_check_branch
    %151 = sbr.rel (0) target = $region25
  $region24: #{seq2seq_transformer_forward.31} parent=0 // pred_region
    _
  $region25: #{seq2seq_transformer_forward.31} parent=0 // pred_fallthru
    _
  // Predicated region
  $region26: #{seq2seq_transformer_forward.31} parent=0 // pred_check
    _
  $region27: #{seq2seq_transformer_forward.31} parent=0 // pred_check_branch
    %153 = sbr.rel (0) target = $region29
  $region28: #{seq2seq_transformer_forward.31} parent=0 // pred_region
    _
  $region29: #{seq2seq_transformer_forward.31} parent=0 // pred_fallthru
    _

// kernel: seq2seq_transformer_forward.33
$region0: #{seq2seq_transformer_forward.33}
  #allocation0 [shape = 'u32[]', space=smem, size = 0x4, offset = 0x4, fixed_abs, tag = 'smem constant byte address 0x4 - core index']
  #allocation1 [shape = 'u32[144,128]{1,0:T(1,128)}', space=vmem, size = 0x12000, scoped, tag = 'internal scratch']
  #allocation2 [shape = 'f32[20,32]{1,0:T(8,128)}', space=vmem, size = 0x3000, scoped, tag = 'scratch operand']
  %s0 = inlined_call_operand.vmem [shape: bf16[20,32], index: 0, kind: input, shape index: {}]
  %s1 = inlined_call_operand.vmem [shape: bf16[32,32], index: 1, kind: input, shape index: {}]
  %s2 = inlined_call_operand.vmem [shape: f32[1,32], index: 2, kind: input, shape index: {}]
  %s3 = inlined_call_operand.vmem [shape: bf16[20,32], index: 3, kind: input, shape index: {}]
  %s4 = inlined_call_operand.vmem [shape: f32[1,32], index: 4, kind: input, shape index: {}]
  %s5 = inlined_call_operand.vmem [shape: f32[1,32], index: 5, kind: input, shape index: {}]
  %s6 = inlined_call_operand.vmem [shape: bf16[20,32], index: 6, kind: output, shape index: {}]
  %s7 = sld [smem:[#allocation0]]
  $region42: #{seq2seq_transformer_forward.33} parent=0
    _
  %s9 = ssub.s32 1, %s7
  %s10 = scalar_select 0, %s9, %s7
  // Predicated region
  $region2: #{seq2seq_transformer_forward.33} parent=0 // pred_check
    _
  $region3: #{seq2seq_transformer_forward.33} parent=0 // pred_check_branch
    %12 = sbr.rel (0) target = $region5
  $region4: #{seq2seq_transformer_forward.33} parent=0 // pred_region
    _
  $region5: #{seq2seq_transformer_forward.33} parent=0 // pred_fallthru
    _
  // Predicated region
  $region6: #{seq2seq_transformer_forward.33} parent=0 // pred_check
    _
  $region7: #{seq2seq_transformer_forward.33} parent=0 // pred_check_branch
    %14 = sbr.rel (0) target = $region9
  $region8: #{seq2seq_transformer_forward.33} parent=0 // pred_region
    _
  $region9: #{seq2seq_transformer_forward.33} parent=0 // pred_fallthru
    _
  // Predicated region
  $region10: #{seq2seq_transformer_forward.33} parent=0 // pred_check
    _
  $region11: #{seq2seq_transformer_forward.33} parent=0 // pred_check_branch
    %16 = sbr.rel (0) target = $region13
  $region12: #{seq2seq_transformer_forward.33} parent=0 // pred_region
    _
  $region13: #{seq2seq_transformer_forward.33} parent=0 // pred_fallthru
    _
  // Predicated region
  $region14: #{seq2seq_transformer_forward.33} parent=0 // pred_check
    _
  $region15: #{seq2seq_transformer_forward.33} parent=0 // pred_check_branch
    %18 = sbr.rel (0) target = $region17
  $region16: #{seq2seq_transformer_forward.33} parent=0 // pred_region
    _
  $region17: #{seq2seq_transformer_forward.33} parent=0 // pred_fallthru
    _
  // Predicated region
  $region18: #{seq2seq_transformer_forward.33} parent=0 // pred_check
    _
  $region19: #{seq2seq_transformer_forward.33} parent=0 // pred_check_branch
    %20 = sbr.rel (0) target = $region21
  $region20: #{seq2seq_transformer_forward.33} parent=0 // pred_region
    _
  $region21: #{seq2seq_transformer_forward.33} parent=0 // pred_fallthru
    _
  // Predicated region
  $region22: #{seq2seq_transformer_forward.33} parent=0 // pred_check
    _
  $region23: #{seq2seq_transformer_forward.33} parent=0 // pred_check_branch
    %22 = sbr.rel (0) target = $region25
  $region24: #{seq2seq_transformer_forward.33} parent=0 // pred_region
    _
  $region25: #{seq2seq_transformer_forward.33} parent=0 // pred_fallthru
    _
  %p24 = scmp.eq.s32.totalorder 0, 0
  // Predicated region
  $region26: #{seq2seq_transformer_forward.33} parent=0 // pred_check
    %p25 = pneg %p24
  $region27: #{seq2seq_transformer_forward.33} parent=0 // pred_check_branch
    %27 = sbr.rel (%p25) target = $region29
  $region28: #{seq2seq_transformer_forward.33} parent=0 // pred_region
    %vm28 = vcmask 261120
    %29 = vst.msk [vmem:[#allocation2] sm:$0xff] %vm28, 0.0
    %30 = vst.msk [vmem:[#allocation2 + $0x8] sm:$0xff] %vm28, 0.0
    %vm31 = vcmask 257024
    %32 = vst.msk [vmem:[#allocation2 + $0x10] sm:$0xf] %vm31, 0.0
  $region29: #{seq2seq_transformer_forward.33} parent=0 // pred_fallthru
    _
  %v33 = vld [vmem:[#allocation2] sm:$0xff]
  %v34 = vld [vmem:[#allocation2 + $0x8] sm:$0xff]
  %v35 = vld [vmem:[#allocation2 + $0x10] sm:$0xf]
  %v36 = vld [vmem:[%s0] sm:$0xf]
  %v37 = vld [vmem:[%s0 + $0x4] sm:$0xf]
  %v38 = vld [vmem:[%s0 + $0x8] sm:$0x3]
  %v39 = vld [vmem:[%s1] sm:$0xf]
  %v40 = vld [vmem:[%s1 + $0x4] sm:$0xf]
  %v41 = vld [vmem:[%s1 + $0x8] sm:$0xf]
  %v42 = vld [vmem:[%s1 + $0xc] sm:$0xf]
  %v46 = vunpack.c.l.b16 %v36
  %v47 = vunpack.c.l.b16 %v37
  %v48 = vunpack.c.l.b16 %v38
  %v49 = vpack.c.b16 %v47, %v46
  %v50 = vpack.c.b16 %v48, %v48
  %v55 = vunpack.c.l.b16 %v39
  %v56 = vunpack.c.l.b16 %v40
  %v57 = vunpack.c.l.b16 %v41
  %v58 = vunpack.c.l.b16 %v42
  %v59 = vpack.c.b16 %v56, %v55
  %v60 = vpack.c.b16 %v58, %v57
  %vm63 = vcmask 261120
  %v65 = vsel %vm63, %v49, 0
  %v68 = vsel %vm63, %v50, 0
  %70 = vmatprep.subr.bf16.mxu0 0
  %71 = vmatpush1.bf16.msra.mxu0 0
  %72 = vmatprep.subr.bf16.mxu0 0
  %73 = vmatpush1.bf16.msra.mxu0 0
  %74 = vmatprep.subr.bf16.mxu0 0
  %75 = vmatpush1.bf16.msra.mxu0 0
  %76 = vmatprep.subr.bf16.mxu0 0
  %77 = vmatpush1.bf16.msra.mxu0 0
  %78 = vmatprep.subr.bf16.mxu0 0
  %79 = vmatpush1.bf16.msra.mxu0 0
  %80 = vmatprep.subr.bf16.mxu0 0
  %81 = vmatpush1.bf16.msra.mxu0 0
  %82 = vmatprep.subr.bf16.mxu0 0
  %83 = vmatpush1.bf16.msra.mxu0 %v60
  %84 = vmatprep.subr.bf16.mxu0 0
  %85 = vmatpush1.bf16.msra.mxu0 %v59
  %86 = vmatprep.subr.bf16.mxu0 0
  %87 = vmatpush2.bf16.msra.mxu0 0
  %88 = vmatprep.subr.bf16.mxu0 0
  %89 = vmatpush2.bf16.msra.mxu0 0
  %90 = vmatprep.subr.bf16.mxu0 0
  %91 = vmatpush2.bf16.msra.mxu0 0
  %92 = vmatprep.subr.bf16.mxu0 0
  %93 = vmatpush2.bf16.msra.mxu0 0
  %94 = vmatprep.subr.bf16.mxu0 0
  %95 = vmatpush2.bf16.msra.mxu0 0
  %96 = vmatprep.subr.bf16.mxu0 0
  %97 = vmatpush2.bf16.msra.mxu0 0
  %98 = vmatprep.subr.bf16.mxu0 0
  %99 = vmatpush2.bf16.msra.mxu0 0
  %100 = vmatprep.subr.bf16.mxu0 0
  %101 = vmatpush2.bf16.msra.mxu0 0
  %102 = vmatprep.mubr.bf16.mxu0 0
  %103 = vmatmul.mubr.bf16.gmra.mxu0 %v65
  %v104 = vpop.f32.mrf.mxu0
  %v105 = vadd.f32 0.0, %v104
  %v106 = vpop.f32.mrf.mxu0
  %v107 = vpop.f32.mrf.mxu0
  %v108 = vadd.f32 0.0, %v107
  %v109 = vpop.f32.mrf.mxu0
  %110 = vmatprep.mubr.bf16.mxu0 0
  %111 = vmatmul.mubr.bf16.gmra.mxu0 %v68
  %v112 = vpop.f32.mrf.mxu0
  %v113 = vadd.f32 0.0, %v112
  %v114 = vpop.f32.mrf.mxu0
  %v115 = vpop.f32.mrf.mxu0
  %v116 = vpop.f32.mrf.mxu0
  %117 = vdwg.mxu0
  %v118 = vadd.f32 %v33, %v105
  %v119 = vadd.f32 %v34, %v108
  %v120 = vadd.f32 %v35, %v113
  %121 = vst.msk [vmem:[#allocation2] sm:$0xff] %vm63, %v118
  %122 = vst.msk [vmem:[#allocation2 + $0x8] sm:$0xff] %vm63, %v119
  %vm123 = vcmask 257024
  %124 = vst.msk [vmem:[#allocation2 + $0x10] sm:$0xf] %vm123, %v120
  // Predicated region
  $region30: #{seq2seq_transformer_forward.33} parent=0 // pred_check
    %p125 = pneg %p24
  $region31: #{seq2seq_transformer_forward.33} parent=0 // pred_check_branch
    %127 = sbr.rel (%p125) target = $region33
  $region32: #{seq2seq_transformer_forward.33} parent=0 // pred_region
    %v128 = vld [vmem:[#allocation2] sm:$0xff]
    %v129 = vld [vmem:[#allocation2 + $0x8] sm:$0xff]
    %v130 = vld [vmem:[#allocation2 + $0x10] sm:$0xf]
    %v131 = vld [vmem:[%s2] sm:$0x1]
    %v133 = vlaneseq
    %v134 = vshrl.u32 %v133, 7
    %v135 = vsub.s32 0, %v134
    %v136 = vrot.slane %v131, %v135
    %v138 = vadd.f32 %v128, %v136
    %v139 = vadd.f32 %v129, %v136
    %v140 = vadd.f32 %v130, %v136
    %v141 = vld [vmem:[%s3] sm:$0xf]
    %v142 = vld [vmem:[%s3 + $0x4] sm:$0xf]
    %v143 = vld [vmem:[%s3 + $0x8] sm:$0x3]
    %v144 = vunpack.c.l.bf16 %v141
    %v145 = vunpack.c.l.bf16 %v142
    %v146 = vunpack.c.l.bf16 %v143
    %v147 = vadd.f32 %v138, %v144
    %v148 = vadd.f32 %v139, %v145
    %v149 = vadd.f32 %v140, %v146
    %v150 = vsel %vm63, %v147, 0.0
    %151 = vadd.xlane.f32.xlu0 %v150
    %v152 = vpop.xlane.xlu0 %151
    %v153 = vsel %vm63, %v148, 0.0
    %154 = vadd.xlane.f32.xlu0 %v153
    %v155 = vpop.xlane.xlu0 %154
    %v156 = vsel %vm123, %v149, 0.0
    %157 = vadd.xlane.f32.xlu0 %v156
    %v158 = vpop.xlane.xlu0 %157
    %v159 = vrcp.pop 32.0
    %v160 = vmul.f32 %v152, %v159
    %v161 = vmul.f32 %v155, %v159
    %v162 = vmul.f32 %v158, %v159
    %v163 = vsub.f32 %v147, %v160
    %v164 = vsub.f32 %v148, %v161
    %v165 = vsub.f32 %v149, %v162
    %v166 = vmul.f32 %v163, %v163
    %v167 = vmul.f32 %v164, %v164
    %v168 = vmul.f32 %v165, %v165
    %v169 = vsel %vm63, %v166, 0.0
    %170 = vadd.xlane.f32.xlu0 %v169
    %v171 = vpop.xlane.xlu0 %170
    %v172 = vsel %vm63, %v167, 0.0
    %173 = vadd.xlane.f32.xlu0 %v172
    %v174 = vpop.xlane.xlu0 %173
    %v175 = vsel %vm123, %v168, 0.0
    %176 = vadd.xlane.f32.xlu0 %v175
    %v177 = vpop.xlane.xlu0 %176
    %v178 = vmul.f32 %v171, %v159
    %v179 = vmul.f32 %v174, %v159
    %v180 = vmul.f32 %v177, %v159
    %v181 = vadd.f32 %v178, 1e-05
    %v182 = vadd.f32 %v179, 1e-05
    %v183 = vadd.f32 %v180, 1e-05
    %v184 = vrsqrt.pop %v181
    %v185 = vrsqrt.pop %v182
    %v186 = vrsqrt.pop %v183
    %v187 = vmul.f32 %v163, %v184
    %v188 = vmul.f32 %v164, %v185
    %v189 = vmul.f32 %v165, %v186
    %v190 = vld [vmem:[%s4] sm:$0x1]
    %v192 = vlaneseq
    %v193 = vshrl.u32 %v192, 7
    %v194 = vsub.s32 0, %v193
    %v195 = vrot.slane %v190, %v194
    %v197 = vmul.f32 %v187, %v195
    %v198 = vmul.f32 %v188, %v195
    %v199 = vmul.f32 %v189, %v195
    %v200 = vld [vmem:[%s5] sm:$0x1]
    %v202 = vlaneseq
    %v203 = vshrl.u32 %v202, 7
    %v204 = vsub.s32 0, %v203
    %v205 = vrot.slane %v200, %v204
    %v207 = vadd.f32 %v197, %v205
    %v208 = vadd.f32 %v198, %v205
    %v209 = vadd.f32 %v199, %v205
    %v210 = vpack.c.bf16 %v208, %v207
    %v211 = vpack.c.bf16 %v209, %v209
    %v214 = vunpack.c.l.b16 %v210
    %v215 = vunpack.c.h.b16 %v210
    %v216 = vunpack.c.l.b16 %v211
    %v217 = vpack.c.b16 %v214, %v214
    %v218 = vpack.c.b16 %v215, %v215
    %v219 = vpack.c.b16 %v216, %v216
    %223 = vst.msk [vmem:[%s6] sm:$0xf] %vm123, %v217
    %224 = vst.msk [vmem:[%s6 + $0x4] sm:$0xf] %vm123, %v218
    %vm225 = vcmask 254976
    %226 = vst.msk [vmem:[%s6 + $0x8] sm:$0x3] %vm225, %v219
  $region33: #{seq2seq_transformer_forward.33} parent=0 // pred_fallthru
    _
  // Predicated region
  $region34: #{seq2seq_transformer_forward.33} parent=0 // pred_check
    _
  $region35: #{seq2seq_transformer_forward.33} parent=0 // pred_check_branch
    %228 = sbr.rel (0) target = $region37
  $region36: #{seq2seq_transformer_forward.33} parent=0 // pred_region
    _
  $region37: #{seq2seq_transformer_forward.33} parent=0 // pred_fallthru
    _
  // Predicated region
  $region38: #{seq2seq_transformer_forward.33} parent=0 // pred_check
    _
  $region39: #{seq2seq_transformer_forward.33} parent=0 // pred_check_branch
    %230 = sbr.rel (0) target = $region41
  $region40: #{seq2seq_transformer_forward.33} parent=0 // pred_region
    _
  $region41: #{seq2seq_transformer_forward.33} parent=0 // pred_fallthru
    _

// kernel: seq2seq_transformer_forward.32
$region0: #{seq2seq_transformer_forward.32}
  #allocation0 [shape = 'u32[]', space=smem, size = 0x4, offset = 0x4, fixed_abs, tag = 'smem constant byte address 0x4 - core index']
  #allocation1 [shape = 'u32[144,128]{1,0:T(1,128)}', space=vmem, size = 0x12000, scoped, tag = 'internal scratch']
  %s0 = inlined_call_operand.vmem [shape: bf16[2,10,3,32], index: 0, kind: input, shape index: {}]
  %s1 = inlined_call_operand.vmem [shape: f32[10,10], index: 1, kind: input, shape index: {}]
  %s2 = inlined_call_operand.vmem [shape: f32[2,1,10], index: 2, kind: input, shape index: {}]
  %s3 = inlined_call_operand.vmem [shape: bf16[2,10,32], index: 3, kind: output, shape index: {}]
  %s4 = sld [smem:[#allocation0]]
  $region45: #{seq2seq_transformer_forward.32} parent=0
    _
  %s6 = ssub.s32 1, %s4
  %s7 = scalar_select 0, %s6, %s4
  loop: start=0, step=1, limit=4
  $region2: #{seq2seq_transformer_forward.32} parent=0 // loop_pre_header
    _
  $region3: #{seq2seq_transformer_forward.32} parent=0 // loop_header
    %s9 = sphi 0, %s13
    %p10 = scmp.ge.s32.totalorder %s9, 4
    %s19 = sphi 0, %s21
    %s22 = sphi 0, %s19
    %s23 = sphi 0, %s22
    %s39 = sphi 0, %s23
    %s43 = sphi 0, %s43
    %s45 = sphi 0, %s43
    %s46 = sphi 0, %s45
    %s60 = sphi 0, %s46
    %s66 = sphi 0, %s68
    %s69 = sphi 0, %s66
    %s70 = sphi 0, %s69
    %s86 = sphi 0, %s70
    %s92 = sphi 0, %s94
    %s95 = sphi 0, %s92
    %s96 = sphi 0, %s95
    %s112 = sphi 0, %s96
  $region4: #{seq2seq_transformer_forward.32} parent=0 // loop_header_branch
    %12 = sbr.rel (%p10) target = $region8
  $region5: #{seq2seq_transformer_forward.32} parent=0 // loop_body
    %s14 = ssub.s32 %s9, 1
    %s15 = ssub.s32 %s9, 2
    %s16 = sadd.s32 %s9, 1
    %s17 = ssub.s32 %s9, %s16
    %p18 = scmp.eq.s32.totalorder %s17, 0
    %s20 = sadd.s32 %s19, 1
    %s21 = scalar_select %p18, %s19, %s20
    %p24 = pneg %p18
    %p25 = scmp.eq.s32.totalorder %s9, 1
    %p26 = por %p24, %p25
    %p27 = scmp.ne.s32.totalorder %s19, %s22
    %p28 = scmp.eq.s32.totalorder %s9, 0
    %p29 = por %p27, %p28
    %p30 = scmp.ne.s32.totalorder %s19, %s22
    %p31 = scmp.eq.s32.totalorder %s14, 1
    %p32 = por %p30, %p31
    %p33 = scmp.ne.s32.totalorder %s22, %s23
    %p34 = scmp.eq.s32.totalorder %s14, 0
    %p35 = por %p33, %p34
    %p36 = scmp.ne.s32.totalorder %s22, %s23
    %p37 = scmp.eq.s32.totalorder %s15, 1
    %p38 = por %p36, %p37
    %p40 = scmp.ne.s32.totalorder %s23, %s39
    %p41 = scmp.eq.s32.totalorder %s15, 0
    %p42 = por %p40, %p41
    %s44 = sadd.s32 %s43, 1
    %p47 = scmp.eq.s32.totalorder %s9, 1
    %p48 = scmp.ne.s32.totalorder %s43, %s45
    %p49 = scmp.eq.s32.totalorder %s9, 0
    %p50 = por %p48, %p49
    %p51 = scmp.ne.s32.totalorder %s43, %s45
    %p52 = scmp.eq.s32.totalorder %s14, 1
    %p53 = por %p51, %p52
    %p54 = scmp.ne.s32.totalorder %s45, %s46
    %p55 = scmp.eq.s32.totalorder %s14, 0
    %p56 = por %p54, %p55
    %p57 = scmp.ne.s32.totalorder %s45, %s46
    %p58 = scmp.eq.s32.totalorder %s15, 1
    %p59 = por %p57, %p58
    %p61 = scmp.ne.s32.totalorder %s46, %s60
    %p62 = scmp.eq.s32.totalorder %s15, 0
    %p63 = por %p61, %p62
    %s64 = ssub.s32 %s9, %s16
    %p65 = scmp.eq.s32.totalorder %s64, 0
    %s67 = sadd.s32 %s66, 1
    %s68 = scalar_select %p65, %s66, %s67
    %p71 = pneg %p65
    %p72 = scmp.eq.s32.totalorder %s9, 1
    %p73 = por %p71, %p72
    %p74 = scmp.ne.s32.totalorder %s66, %s69
    %p75 = scmp.eq.s32.totalorder %s9, 0
    %p76 = por %p74, %p75
    %p77 = scmp.ne.s32.totalorder %s66, %s69
    %p78 = scmp.eq.s32.totalorder %s14, 1
    %p79 = por %p77, %p78
    %p80 = scmp.ne.s32.totalorder %s69, %s70
    %p81 = scmp.eq.s32.totalorder %s14, 0
    %p82 = por %p80, %p81
    %p83 = scmp.ne.s32.totalorder %s69, %s70
    %p84 = scmp.eq.s32.totalorder %s15, 1
    %p85 = por %p83, %p84
    %p87 = scmp.ne.s32.totalorder %s70, %s86
    %p88 = scmp.eq.s32.totalorder %s15, 0
    %p89 = por %p87, %p88
    %s90 = ssub.s32 %s9, %s16
    %p91 = scmp.eq.s32.totalorder %s90, 0
    %s93 = sadd.s32 %s92, 1
    %s94 = scalar_select %p91, %s92, %s93
    %p97 = pneg %p91
    %p98 = scmp.eq.s32.totalorder %s9, 1
    %p99 = por %p97, %p98
    %p100 = scmp.ne.s32.totalorder %s92, %s95
    %p101 = scmp.eq.s32.totalorder %s9, 0
    %p102 = por %p100, %p101
    %p103 = scmp.ne.s32.totalorder %s92, %s95
    %p104 = scmp.eq.s32.totalorder %s14, 1
    %p105 = por %p103, %p104
    %p106 = scmp.ne.s32.totalorder %s95, %s96
    %p107 = scmp.eq.s32.totalorder %s14, 0
    %p108 = por %p106, %p107
    %p109 = scmp.ne.s32.totalorder %s95, %s96
    %p110 = scmp.eq.s32.totalorder %s15, 1
    %p111 = por %p109, %p110
    %p113 = scmp.ne.s32.totalorder %s96, %s112
    %p114 = scmp.eq.s32.totalorder %s15, 0
    %p115 = por %p113, %p114
    %p116 = scmp.le.s32.totalorder 1, %s9
    %p117 = scmp.lt.s32.totalorder %s9, 3
    %p118 = pnand %p116, %p117
    %p119 = pneg %p118
    // Predicated region
    $region9: #{seq2seq_transformer_forward.32} parent=5 // pred_check
      _
    $region10: #{seq2seq_transformer_forward.32} parent=5 // pred_check_branch
      %121 = sbr.rel (%p118) target = $region12
    $region11: #{seq2seq_transformer_forward.32} parent=5 // pred_region
      %s122 = ssub.s32 %s9, 1
      // Predicated region
      $region13: #{seq2seq_transformer_forward.32} parent=11 // pred_check
        %p123 = pneg %p56
      $region14: #{seq2seq_transformer_forward.32} parent=11 // pred_check_branch
        %125 = sbr.rel (%p123) target = $region16
      $region15: #{seq2seq_transformer_forward.32} parent=11 // pred_region
        _
      $region16: #{seq2seq_transformer_forward.32} parent=11 // pred_fallthru
        _
    $region12: #{seq2seq_transformer_forward.32} parent=5 // pred_fallthru
      _
    %p126 = scmp.lt.s32.totalorder %s9, 2
    // Predicated region
    $region17: #{seq2seq_transformer_forward.32} parent=5 // pred_check
      %p127 = pneg %p126
    $region18: #{seq2seq_transformer_forward.32} parent=5 // pred_check_branch
      %129 = sbr.rel (%p127) target = $region20
    $region19: #{seq2seq_transformer_forward.32} parent=5 // pred_region
      // Predicated region
      $region21: #{seq2seq_transformer_forward.32} parent=19 // pred_check
        %p130 = pneg %p29
      $region22: #{seq2seq_transformer_forward.32} parent=19 // pred_check_branch
        %132 = sbr.rel (%p130) target = $region24
      $region23: #{seq2seq_transformer_forward.32} parent=19 // pred_region
        %p133 = scmp.lt.s32.totalorder %s9, 1
        %s134 = scalar_select %p133, %s9, 1
        %s135 = smul.addr %s134, 10
        %s136 = smul.addr %s135, 2
        %s137 = scalar_lea.vmem %s0, %s136
      $region24: #{seq2seq_transformer_forward.32} parent=19 // pred_fallthru
        _
      // Predicated region
      $region25: #{seq2seq_transformer_forward.32} parent=19 // pred_check
        %p138 = pneg %p76
      $region26: #{seq2seq_transformer_forward.32} parent=19 // pred_check_branch
        %140 = sbr.rel (%p138) target = $region28
      $region27: #{seq2seq_transformer_forward.32} parent=19 // pred_region
        %p141 = scmp.lt.s32.totalorder %s9, 1
        %s142 = scalar_select %p141, %s9, 1
        %s143 = scalar_lea.vmem %s2, %s142
      $region28: #{seq2seq_transformer_forward.32} parent=19 // pred_fallthru
        _
    $region20: #{seq2seq_transformer_forward.32} parent=5 // pred_fallthru
      _
    %p144 = scmp.le.s32.totalorder 1, %s9
    %p145 = scmp.lt.s32.totalorder %s9, 3
    %p146 = pnand %p144, %p145
    %p147 = pneg %p146
    // Predicated region
    $region29: #{seq2seq_transformer_forward.32} parent=5 // pred_check
      _
    $region30: #{seq2seq_transformer_forward.32} parent=5 // pred_check_branch
      %149 = sbr.rel (%p146) target = $region32
    $region31: #{seq2seq_transformer_forward.32} parent=5 // pred_region
      %s150 = ssub.s32 %s9, 1
      %p151 = scmp.lt.s32.totalorder %s14, 1
      %s152 = scalar_select %p151, %s14, 1
      %s153 = smul.addr %s152, 10
      %s154 = smul.addr %s153, 2
      %s155 = scalar_lea.vmem %s0, %s154
      %p156 = pneg %p35
      %p157 = pneg %p32
      %p158 = pneg %p56
      %p159 = pneg %p53
      %p160 = scmp.lt.s32.totalorder %s14, 1
      %s161 = scalar_select %p160, %s14, 1
      %s162 = scalar_lea.vmem %s2, %s161
      %p163 = pneg %p82
      %p164 = pneg %p79
      %p165 = pneg %p108
      %p166 = pneg %p105
      %p167 = scmp.lt.s32.totalorder %s14, 1
      %s168 = scalar_select %p167, %s14, 1
      %s169 = smul.addr %s168, 2
      %s170 = smul.addr %s169, 4
      %s171 = scalar_lea.vmem %s3, %s170
      %p172 = scmp.lt.s32.totalorder %s14, 1
      %s173 = scalar_select %p172, %s14, 1
      %s174 = smul.addr %s173, 10
      %s175 = smul.addr %s174, 2
      %s176 = scalar_lea.vmem %s0, %s175
      %p177 = scmp.lt.s32.totalorder %s14, 1
      %s178 = scalar_select %p177, %s14, 1
      %s179 = scalar_lea.vmem %s2, %s178
      %p180 = scmp.lt.s32.totalorder %s14, 1
      %s181 = scalar_select %p180, %s14, 1
      %s182 = smul.addr %s181, 2
      %s183 = smul.addr %s182, 4
      %s184 = scalar_lea.vmem %s3, %s183
      %v186 = vld [vmem:[%s176] sm:$0x3]
      %v187 = vld [vmem:[%s176 + $0x2] sm:$0x3]
      %v188 = vld [vmem:[%s176 + $0x4] sm:$0x3]
      %v189 = vld [vmem:[%s176 + $0x6] sm:$0x3]
      %v190 = vld [vmem:[%s176 + $0x8] sm:$0x3]
      %v191 = vld [vmem:[%s176 + $0xa] sm:$0x3]
      %v192 = vld [vmem:[%s176 + $0xc] sm:$0x3]
      %v193 = vld [vmem:[%s176 + $0xe] sm:$0x3]
      %v194 = vld [vmem:[%s176 + $0x10] sm:$0x3]
      %v195 = vld [vmem:[%s176 + $0x12] sm:$0x3]
      %v196 = vld [vmem:[%s1] sm:$0xff]
      %v197 = vld [vmem:[%s1 + $0x8] sm:$0x3]
      %v198 = vld [vmem:[%s179] sm:$0x1]
      %v210 = vunpack.c.l.s4 1983009808
      %v211 = vunpack.c.0.s8 %v210
      %v212 = vlaneseq
      %v213 = vshrl.u32 %v212, 7
      %v214 = vsub.s32 %v211, %v213
      %v215 = vrot.slane %v186, %v214
      %v217 = vunpack.c.l.s4 1983009808
      %v218 = vunpack.c.0.s8 %v217
      %v219 = vlaneseq
      %v220 = vshrl.u32 %v219, 7
      %v221 = vsub.s32 %v218, %v220
      %v222 = vrot.slane %v187, %v221
      %v224 = vunpack.c.l.s4 1983009808
      %v225 = vunpack.c.0.s8 %v224
      %v226 = vlaneseq
      %v227 = vshrl.u32 %v226, 7
      %v228 = vsub.s32 %v225, %v227
      %v229 = vrot.slane %v188, %v228
      %v231 = vunpack.c.l.s4 1983009808
      %v232 = vunpack.c.0.s8 %v231
      %v233 = vlaneseq
      %v234 = vshrl.u32 %v233, 7
      %v235 = vsub.s32 %v232, %v234
      %v236 = vrot.slane %v189, %v235
      %v238 = vunpack.c.l.s4 1983009808
      %v239 = vunpack.c.0.s8 %v238
      %v240 = vlaneseq
      %v241 = vshrl.u32 %v240, 7
      %v242 = vsub.s32 %v239, %v241
      %v243 = vrot.slane %v190, %v242
      %v245 = vunpack.c.l.s4 1983009808
      %v246 = vunpack.c.0.s8 %v245
      %v247 = vlaneseq
      %v248 = vshrl.u32 %v247, 7
      %v249 = vsub.s32 %v246, %v248
      %v250 = vrot.slane %v191, %v249
      %v252 = vunpack.c.l.s4 1983009808
      %v253 = vunpack.c.0.s8 %v252
      %v254 = vlaneseq
      %v255 = vshrl.u32 %v254, 7
      %v256 = vsub.s32 %v253, %v255
      %v257 = vrot.slane %v192, %v256
      %v259 = vunpack.c.l.s4 1983009808
      %v260 = vunpack.c.0.s8 %v259
      %v261 = vlaneseq
      %v262 = vshrl.u32 %v261, 7
      %v263 = vsub.s32 %v260, %v262
      %v264 = vrot.slane %v193, %v263
      %v266 = vunpack.c.l.s4 1983009808
      %v267 = vunpack.c.0.s8 %v266
      %v268 = vlaneseq
      %v269 = vshrl.u32 %v268, 7
      %v270 = vsub.s32 %v267, %v269
      %v271 = vrot.slane %v194, %v270
      %v273 = vunpack.c.l.s4 1983009808
      %v274 = vunpack.c.0.s8 %v273
      %v275 = vlaneseq
      %v276 = vshrl.u32 %v275, 7
      %v277 = vsub.s32 %v274, %v276
      %v278 = vrot.slane %v195, %v277
      %v279 = vunpack.c.l.b16 %v215
      %v280 = vunpack.c.l.b16 %v222
      %v281 = vunpack.c.l.b16 %v229
      %v282 = vunpack.c.l.b16 %v236
      %v283 = vunpack.c.l.b16 %v243
      %v284 = vunpack.c.l.b16 %v250
      %v285 = vunpack.c.l.b16 %v257
      %v286 = vunpack.c.l.b16 %v264
      %v287 = vunpack.c.l.b16 %v271
      %v288 = vunpack.c.l.b16 %v278
      %v289 = vrot.slane %v280, 7
      %vm290 = vcmask 1041409
      %v291 = vsel %vm290, %v289, %v279
      %v292 = vrot.slane %v281, 6
      %vm293 = vcmask 1042434
      %v294 = vsel %vm293, %v292, %v291
      %v295 = vrot.slane %v282, 5
      %vm296 = vcmask 1043459
      %v297 = vsel %vm296, %v295, %v294
      %v298 = vrot.slane %v283, 4
      %vm299 = vcmask 1044484
      %v300 = vsel %vm299, %v298, %v297
      %v301 = vrot.slane %v284, 3
      %vm302 = vcmask 1045509
      %v303 = vsel %vm302, %v301, %v300
      %v304 = vrot.slane %v285, 2
      %vm305 = vcmask 1046534
      %v306 = vsel %vm305, %v304, %v303
      %v307 = vrot.slane %v286, 1
      %vm308 = vcmask 1047559
      %v309 = vsel %vm308, %v307, %v306
      %v310 = vrot.slane %v288, 7
      %v311 = vsel %vm290, %v310, %v287
      %v312 = vpack.c.b16 %v311, %v309
      %v313 = vrot.slane %v279, 1
      %v314 = vsel %vm290, %v280, %v313
      %v315 = vrot.slane %v281, 7
      %v316 = vsel %vm293, %v315, %v314
      %v317 = vrot.slane %v282, 6
      %v318 = vsel %vm296, %v317, %v316
      %v319 = vrot.slane %v283, 5
      %v320 = vsel %vm299, %v319, %v318
      %v321 = vrot.slane %v284, 4
      %v322 = vsel %vm302, %v321, %v320
      %v323 = vrot.slane %v285, 3
      %v324 = vsel %vm305, %v323, %v322
      %v325 = vrot.slane %v286, 2
      %v326 = vsel %vm308, %v325, %v324
      %v327 = vrot.slane %v287, 1
      %v328 = vsel %vm290, %v288, %v327
      %v329 = vpack.c.b16 %v328, %v326
      %vm330 = vcmask 64512
      %v332 = vsel %vm330, %v312, 0
      %v335 = vsel %vm330, %v329, 0
      %337 = vmatprep.subr.bf16.mxu0 0
      %338 = vmatpush1.bf16.xpose.msra.mxu0 0
      %339 = vmatprep.subr.bf16.mxu0 0
      %340 = vmatpush1.bf16.xpose.msra.mxu0 0
      %341 = vmatprep.subr.bf16.mxu0 0
      %342 = vmatpush1.bf16.xpose.msra.mxu0 0
      %343 = vmatprep.subr.bf16.mxu0 0
      %344 = vmatpush1.bf16.xpose.msra.mxu0 0
      %345 = vmatprep.subr.bf16.mxu0 0
      %346 = vmatpush1.bf16.xpose.msra.mxu0 0
      %347 = vmatprep.subr.bf16.mxu0 0
      %348 = vmatpush1.bf16.xpose.msra.mxu0 0
      %349 = vmatprep.subr.bf16.mxu0 0
      %350 = vmatpush1.bf16.xpose.msra.mxu0 0
      %351 = vmatprep.subr.bf16.mxu0 0
      %352 = vmatpush1.bf16.xpose.msra.mxu0 %v335
      %353 = vmatprep.subr.bf16.mxu0 0
      %354 = vmatpush2.bf16.xpose.msra.mxu0 0
      %355 = vmatprep.subr.bf16.mxu0 0
      %356 = vmatpush2.bf16.xpose.msra.mxu0 0
      %357 = vmatprep.subr.bf16.mxu0 0
      %358 = vmatpush2.bf16.xpose.msra.mxu0 0
      %359 = vmatprep.subr.bf16.mxu0 0
      %360 = vmatpush2.bf16.xpose.msra.mxu0 0
      %361 = vmatprep.subr.bf16.mxu0 0
      %362 = vmatpush2.bf16.xpose.msra.mxu0 0
      %363 = vmatprep.subr.bf16.mxu0 0
      %364 = vmatpush2.bf16.xpose.msra.mxu0 0
      %365 = vmatprep.subr.bf16.mxu0 0
      %366 = vmatpush2.bf16.xpose.msra.mxu0 0
      %367 = vmatprep.subr.bf16.mxu0 0
      %368 = vmatpush2.bf16.xpose.msra.mxu0 0
      %369 = vmatprep.mubr.bf16.mxu0 0
      %370 = vmatmul.mubr.bf16.gmra.mxu0 %v332
      %v371 = vpop.f32.mrf.mxu0
      %v372 = vadd.f32 0.0, %v371
      %v373 = vpop.f32.mrf.mxu0
      %v374 = vpop.f32.mrf.mxu0
      %v375 = vadd.f32 0.0, %v374
      %v376 = vpop.f32.mrf.mxu0
      %377 = vdwg.mxu0
      %v378 = vmul.f32 %v372, 0.35355338
      %v379 = vmul.f32 %v375, 0.35355338
      %v380 = vadd.f32 %v378, %v196
      %v381 = vadd.f32 %v379, %v197
      %v383 = vlaneseq
      %v384 = vshrl.u32 %v383, 7
      %v385 = vsub.s32 0, %v384
      %v386 = vrot.slane %v198, %v385
      %v388 = vadd.f32 %v380, %v386
      %v389 = vadd.f32 %v381, %v386
      %vm390 = vcmask 80896
      %v391 = vsel %vm390, %v388, -inf
      %392 = vmax.xlane.f32.xlu0 %v391
      %v393 = vpop.xlane.xlu0 %392
      %vm394 = vcmask 74752
      %v395 = vsel %vm394, %v389, -inf
      %396 = vmax.xlane.f32.xlu0 %v395
      %v397 = vpop.xlane.xlu0 %396
      %v398 = vsub.f32 %v388, %v393
      %v399 = vsub.f32 %v389, %v397
      %v400 = vmul.f32 %v398, 1.442695
      %v401 = vpow.pop %v400
      %v402 = vmul.f32 %v399, 1.442695
      %v403 = vpow.pop %v402
      %v404 = vsel %vm390, %v401, 0.0
      %405 = vadd.xlane.f32.xlu0 %v404
      %v406 = vpop.xlane.xlu0 %405
      %v407 = vsel %vm394, %v403, 0.0
      %408 = vadd.xlane.f32.xlu0 %v407
      %v409 = vpop.xlane.xlu0 %408
      %v410 = vpack.c.bf16 %v403, %v401
      %v411 = vrot.slane %v279, 2
      %v412 = vrot.slane %v280, 1
      %v413 = vsel %vm290, %v412, %v411
      %v414 = vsel %vm293, %v281, %v413
      %v415 = vrot.slane %v282, 7
      %v416 = vsel %vm296, %v415, %v414
      %v417 = vrot.slane %v283, 6
      %v418 = vsel %vm299, %v417, %v416
      %v419 = vrot.slane %v284, 5
      %v420 = vsel %vm302, %v419, %v418
      %v421 = vrot.slane %v285, 4
      %v422 = vsel %vm305, %v421, %v420
      %v423 = vrot.slane %v286, 3
      %v424 = vsel %vm308, %v423, %v422
      %v425 = vrot.slane %v287, 2
      %v426 = vrot.slane %v288, 1
      %v427 = vsel %vm290, %v426, %v425
      %v428 = vpack.c.b16 %v427, %v424
      %v430 = vsel %vm390, %v410, 0
      %vm432 = vcmask 1044480
      %v434 = vsel %vm432, %v428, 0
      %436 = vmatprep.subr.bf16.mxu0 0
      %437 = vmatpush1.bf16.msra.mxu0 0
      %438 = vmatprep.subr.bf16.mxu0 0
      %439 = vmatpush1.bf16.msra.mxu0 0
      %440 = vmatprep.subr.bf16.mxu0 0
      %441 = vmatpush1.bf16.msra.mxu0 0
      %442 = vmatprep.subr.bf16.mxu0 0
      %443 = vmatpush1.bf16.msra.mxu0 0
      %444 = vmatprep.subr.bf16.mxu0 0
      %445 = vmatpush1.bf16.msra.mxu0 0
      %446 = vmatprep.subr.bf16.mxu0 0
      %447 = vmatpush1.bf16.msra.mxu0 0
      %448 = vmatprep.subr.bf16.mxu0 0
      %449 = vmatpush1.bf16.msra.mxu0 0
      %450 = vmatprep.subr.bf16.mxu0 0
      %451 = vmatpush1.bf16.msra.mxu0 %v434
      %452 = vmatprep.subr.bf16.mxu0 0
      %453 = vmatpush2.bf16.msra.mxu0 0
      %454 = vmatprep.subr.bf16.mxu0 0
      %455 = vmatpush2.bf16.msra.mxu0 0
      %456 = vmatprep.subr.bf16.mxu0 0
      %457 = vmatpush2.bf16.msra.mxu0 0
      %458 = vmatprep.subr.bf16.mxu0 0
      %459 = vmatpush2.bf16.msra.mxu0 0
      %460 = vmatprep.subr.bf16.mxu0 0
      %461 = vmatpush2.bf16.msra.mxu0 0
      %462 = vmatprep.subr.bf16.mxu0 0
      %463 = vmatpush2.bf16.msra.mxu0 0
      %464 = vmatprep.subr.bf16.mxu0 0
      %465 = vmatpush2.bf16.msra.mxu0 0
      %466 = vmatprep.subr.bf16.mxu0 0
      %467 = vmatpush2.bf16.msra.mxu0 0
      %468 = vmatprep.mubr.bf16.mxu0 0
      %469 = vmatmul.mubr.bf16.gmra.mxu0 %v430
      %v470 = vpop.f32.mrf.mxu0
      %v471 = vadd.f32 0.0, %v470
      %v472 = vpop.f32.mrf.mxu0
      %v473 = vpop.f32.mrf.mxu0
      %v474 = vadd.f32 0.0, %v473
      %v475 = vpop.f32.mrf.mxu0
      %476 = vdwg.mxu0
      %v477 = vrcp.pop %v406
      %v478 = vmul.f32 %v471, %v477
      %v479 = vrcp.pop %v409
      %v480 = vmul.f32 %v474, %v479
      %481 = vrot.lane.b32.xlu0 %v312, 120
      %v482 = vpop.permute.xlu0 %481
      %483 = vrot.lane.b32.xlu0 %v329, 120
      %v484 = vpop.permute.xlu0 %483
      %v486 = vsel %vm330, %v482, 0
      %v489 = vsel %vm330, %v484, 0
      %491 = vmatprep.subr.bf16.mxu0 0
      %492 = vmatpush1.bf16.xpose.msra.mxu0 0
      %493 = vmatprep.subr.bf16.mxu0 0
      %494 = vmatpush1.bf16.xpose.msra.mxu0 0
      %495 = vmatprep.subr.bf16.mxu0 0
      %496 = vmatpush1.bf16.xpose.msra.mxu0 0
      %497 = vmatprep.subr.bf16.mxu0 0
      %498 = vmatpush1.bf16.xpose.msra.mxu0 0
      %499 = vmatprep.subr.bf16.mxu0 0
      %500 = vmatpush1.bf16.xpose.msra.mxu0 0
      %501 = vmatprep.subr.bf16.mxu0 0
      %502 = vmatpush1.bf16.xpose.msra.mxu0 0
      %503 = vmatprep.subr.bf16.mxu0 0
      %504 = vmatpush1.bf16.xpose.msra.mxu0 0
      %505 = vmatprep.subr.bf16.mxu0 0
      %506 = vmatpush1.bf16.xpose.msra.mxu0 %v489
      %507 = vmatprep.subr.bf16.mxu0 0
      %508 = vmatpush2.bf16.xpose.msra.mxu0 0
      %509 = vmatprep.subr.bf16.mxu0 0
      %510 = vmatpush2.bf16.xpose.msra.mxu0 0
      %511 = vmatprep.subr.bf16.mxu0 0
      %512 = vmatpush2.bf16.xpose.msra.mxu0 0
      %513 = vmatprep.subr.bf16.mxu0 0
      %514 = vmatpush2.bf16.xpose.msra.mxu0 0
      %515 = vmatprep.subr.bf16.mxu0 0
      %516 = vmatpush2.bf16.xpose.msra.mxu0 0
      %517 = vmatprep.subr.bf16.mxu0 0
      %518 = vmatpush2.bf16.xpose.msra.mxu0 0
      %519 = vmatprep.subr.bf16.mxu0 0
      %520 = vmatpush2.bf16.xpose.msra.mxu0 0
      %521 = vmatprep.subr.bf16.mxu0 0
      %522 = vmatpush2.bf16.xpose.msra.mxu0 0
      %523 = vmatprep.mubr.bf16.mxu0 0
      %524 = vmatmul.mubr.bf16.gmra.mxu0 %v486
      %v525 = vpop.f32.mrf.mxu0
      %v526 = vadd.f32 0.0, %v525
      %v527 = vpop.f32.mrf.mxu0
      %v528 = vpop.f32.mrf.mxu0
      %v529 = vadd.f32 0.0, %v528
      %v530 = vpop.f32.mrf.mxu0
      %531 = vdwg.mxu0
      %v532 = vmul.f32 %v526, 0.35355338
      %v533 = vmul.f32 %v529, 0.35355338
      %v534 = vadd.f32 %v532, %v196
      %v535 = vadd.f32 %v533, %v197
      %v536 = vadd.f32 %v534, %v386
      %v537 = vadd.f32 %v535, %v386
      %v538 = vsel %vm390, %v536, -inf
      %539 = vmax.xlane.f32.xlu0 %v538
      %v540 = vpop.xlane.xlu0 %539
      %v541 = vsel %vm394, %v537, -inf
      %542 = vmax.xlane.f32.xlu0 %v541
      %v543 = vpop.xlane.xlu0 %542
      %v544 = vsub.f32 %v536, %v540
      %v545 = vsub.f32 %v537, %v543
      %v546 = vmul.f32 %v544, 1.442695
      %v547 = vpow.pop %v546
      %v548 = vmul.f32 %v545, 1.442695
      %v549 = vpow.pop %v548
      %v550 = vsel %vm390, %v547, 0.0
      %551 = vadd.xlane.f32.xlu0 %v550
      %v552 = vpop.xlane.xlu0 %551
      %v553 = vsel %vm394, %v549, 0.0
      %554 = vadd.xlane.f32.xlu0 %v553
      %v555 = vpop.xlane.xlu0 %554
      %v556 = vpack.c.bf16 %v549, %v547
      %557 = vrot.lane.b32.xlu0 %v428, 120
      %v558 = vpop.permute.xlu0 %557
      %v560 = vsel %vm390, %v556, 0
      %v563 = vsel %vm432, %v558, 0
      %565 = vmatprep.subr.bf16.mxu0 0
      %566 = vmatpush1.bf16.msra.mxu0 0
      %567 = vmatprep.subr.bf16.mxu0 0
      %568 = vmatpush1.bf16.msra.mxu0 0
      %569 = vmatprep.subr.bf16.mxu0 0
      %570 = vmatpush1.bf16.msra.mxu0 0
      %571 = vmatprep.subr.bf16.mxu0 0
      %572 = vmatpush1.bf16.msra.mxu0 0
      %573 = vmatprep.subr.bf16.mxu0 0
      %574 = vmatpush1.bf16.msra.mxu0 0
      %575 = vmatprep.subr.bf16.mxu0 0
      %576 = vmatpush1.bf16.msra.mxu0 0
      %577 = vmatprep.subr.bf16.mxu0 0
      %578 = vmatpush1.bf16.msra.mxu0 0
      %579 = vmatprep.subr.bf16.mxu0 0
      %580 = vmatpush1.bf16.msra.mxu0 %v563
      %581 = vmatprep.subr.bf16.mxu0 0
      %582 = vmatpush2.bf16.msra.mxu0 0
      %583 = vmatprep.subr.bf16.mxu0 0
      %584 = vmatpush2.bf16.msra.mxu0 0
      %585 = vmatprep.subr.bf16.mxu0 0
      %586 = vmatpush2.bf16.msra.mxu0 0
      %587 = vmatprep.subr.bf16.mxu0 0
      %588 = vmatpush2.bf16.msra.mxu0 0
      %589 = vmatprep.subr.bf16.mxu0 0
      %590 = vmatpush2.bf16.msra.mxu0 0
      %591 = vmatprep.subr.bf16.mxu0 0
      %592 = vmatpush2.bf16.msra.mxu0 0
      %593 = vmatprep.subr.bf16.mxu0 0
      %594 = vmatpush2.bf16.msra.mxu0 0
      %595 = vmatprep.subr.bf16.mxu0 0
      %596 = vmatpush2.bf16.msra.mxu0 0
      %597 = vmatprep.mubr.bf16.mxu0 0
      %598 = vmatmul.mubr.bf16.gmra.mxu0 %v560
      %v599 = vpop.f32.mrf.mxu0
      %v600 = vadd.f32 0.0, %v599
      %v601 = vpop.f32.mrf.mxu0
      %v602 = vpop.f32.mrf.mxu0
      %v603 = vadd.f32 0.0, %v602
      %v604 = vpop.f32.mrf.mxu0
      %605 = vdwg.mxu0
      %v606 = vrcp.pop %v552
      %v607 = vmul.f32 %v600, %v606
      %v608 = vrcp.pop %v555
      %v609 = vmul.f32 %v603, %v608
      %610 = vrot.lane.b32.xlu0 %v312, 112
      %v611 = vpop.permute.xlu0 %610
      %612 = vrot.lane.b32.xlu0 %v329, 112
      %v613 = vpop.permute.xlu0 %612
      %v615 = vsel %vm330, %v611, 0
      %v618 = vsel %vm330, %v613, 0
      %620 = vmatprep.subr.bf16.mxu0 0
      %621 = vmatpush1.bf16.xpose.msra.mxu0 0
      %622 = vmatprep.subr.bf16.mxu0 0
      %623 = vmatpush1.bf16.xpose.msra.mxu0 0
      %624 = vmatprep.subr.bf16.mxu0 0
      %625 = vmatpush1.bf16.xpose.msra.mxu0 0
      %626 = vmatprep.subr.bf16.mxu0 0
      %627 = vmatpush1.bf16.xpose.msra.mxu0 0
      %628 = vmatprep.subr.bf16.mxu0 0
      %629 = vmatpush1.bf16.xpose.msra.mxu0 0
      %630 = vmatprep.subr.bf16.mxu0 0
      %631 = vmatpush1.bf16.xpose.msra.mxu0 0
      %632 = vmatprep.subr.bf16.mxu0 0
      %633 = vmatpush1.bf16.xpose.msra.mxu0 0
      %634 = vmatprep.subr.bf16.mxu0 0
      %635 = vmatpush1.bf16.xpose.msra.mxu0 %v618
      %636 = vmatprep.subr.bf16.mxu0 0
      %637 = vmatpush2.bf16.xpose.msra.mxu0 0
      %638 = vmatprep.subr.bf16.mxu0 0
      %639 = vmatpush2.bf16.xpose.msra.mxu0 0
      %640 = vmatprep.subr.bf16.mxu0 0
      %641 = vmatpush2.bf16.xpose.msra.mxu0 0
      %642 = vmatprep.subr.bf16.mxu0 0
      %643 = vmatpush2.bf16.xpose.msra.mxu0 0
      %644 = vmatprep.subr.bf16.mxu0 0
      %645 = vmatpush2.bf16.xpose.msra.mxu0 0
      %646 = vmatprep.subr.bf16.mxu0 0
      %647 = vmatpush2.bf16.xpose.msra.mxu0 0
      %648 = vmatprep.subr.bf16.mxu0 0
      %649 = vmatpush2.bf16.xpose.msra.mxu0 0
      %650 = vmatprep.subr.bf16.mxu0 0
      %651 = vmatpush2.bf16.xpose.msra.mxu0 0
      %652 = vmatprep.mubr.bf16.mxu0 0
      %653 = vmatmul.mubr.bf16.gmra.mxu0 %v615
      %v654 = vpop.f32.mrf.mxu0
      %v655 = vadd.f32 0.0, %v654
      %v656 = vpop.f32.mrf.mxu0
      %v657 = vpop.f32.mrf.mxu0
      %v658 = vadd.f32 0.0, %v657
      %v659 = vpop.f32.mrf.mxu0
      %660 = vdwg.mxu0
      %v661 = vmul.f32 %v655, 0.35355338
      %v662 = vmul.f32 %v658, 0.35355338
      %v663 = vadd.f32 %v661, %v196
      %v664 = vadd.f32 %v662, %v197
      %v665 = vadd.f32 %v663, %v386
      %v666 = vadd.f32 %v664, %v386
      %v667 = vsel %vm390, %v665, -inf
      %668 = vmax.xlane.f32.xlu0 %v667
      %v669 = vpop.xlane.xlu0 %668
      %v670 = vsel %vm394, %v666, -inf
      %671 = vmax.xlane.f32.xlu0 %v670
      %v672 = vpop.xlane.xlu0 %671
      %v673 = vsub.f32 %v665, %v669
      %v674 = vsub.f32 %v666, %v672
      %v675 = vmul.f32 %v673, 1.442695
      %v676 = vpow.pop %v675
      %v677 = vmul.f32 %v674, 1.442695
      %v678 = vpow.pop %v677
      %v679 = vsel %vm390, %v676, 0.0
      %680 = vadd.xlane.f32.xlu0 %v679
      %v681 = vpop.xlane.xlu0 %680
      %v682 = vsel %vm394, %v678, 0.0
      %683 = vadd.xlane.f32.xlu0 %v682
      %v684 = vpop.xlane.xlu0 %683
      %v685 = vpack.c.bf16 %v678, %v676
      %686 = vrot.lane.b32.xlu0 %v428, 112
      %v687 = vpop.permute.xlu0 %686
      %v689 = vsel %vm390, %v685, 0
      %v692 = vsel %vm432, %v687, 0
      %694 = vmatprep.subr.bf16.mxu0 0
      %695 = vmatpush1.bf16.msra.mxu0 0
      %696 = vmatprep.subr.bf16.mxu0 0
      %697 = vmatpush1.bf16.msra.mxu0 0
      %698 = vmatprep.subr.bf16.mxu0 0
      %699 = vmatpush1.bf16.msra.mxu0 0
      %700 = vmatprep.subr.bf16.mxu0 0
      %701 = vmatpush1.bf16.msra.mxu0 0
      %702 = vmatprep.subr.bf16.mxu0 0
      %703 = vmatpush1.bf16.msra.mxu0 0
      %704 = vmatprep.subr.bf16.mxu0 0
      %705 = vmatpush1.bf16.msra.mxu0 0
      %706 = vmatprep.subr.bf16.mxu0 0
      %707 = vmatpush1.bf16.msra.mxu0 0
      %708 = vmatprep.subr.bf16.mxu0 0
      %709 = vmatpush1.bf16.msra.mxu0 %v692
      %710 = vmatprep.subr.bf16.mxu0 0
      %711 = vmatpush2.bf16.msra.mxu0 0
      %712 = vmatprep.subr.bf16.mxu0 0
      %713 = vmatpush2.bf16.msra.mxu0 0
      %714 = vmatprep.subr.bf16.mxu0 0
      %715 = vmatpush2.bf16.msra.mxu0 0
      %716 = vmatprep.subr.bf16.mxu0 0
      %717 = vmatpush2.bf16.msra.mxu0 0
      %718 = vmatprep.subr.bf16.mxu0 0
      %719 = vmatpush2.bf16.msra.mxu0 0
      %720 = vmatprep.subr.bf16.mxu0 0
      %721 = vmatpush2.bf16.msra.mxu0 0
      %722 = vmatprep.subr.bf16.mxu0 0
      %723 = vmatpush2.bf16.msra.mxu0 0
      %724 = vmatprep.subr.bf16.mxu0 0
      %725 = vmatpush2.bf16.msra.mxu0 0
      %726 = vmatprep.mubr.bf16.mxu0 0
      %727 = vmatmul.mubr.bf16.gmra.mxu0 %v689
      %v728 = vpop.f32.mrf.mxu0
      %v729 = vadd.f32 0.0, %v728
      %v730 = vpop.f32.mrf.mxu0
      %v731 = vpop.f32.mrf.mxu0
      %v732 = vadd.f32 0.0, %v731
      %v733 = vpop.f32.mrf.mxu0
      %734 = vdwg.mxu0
      %v735 = vrcp.pop %v681
      %v736 = vmul.f32 %v729, %v735
      %v737 = vrcp.pop %v684
      %v738 = vmul.f32 %v732, %v737
      %739 = vrot.lane.b32.xlu0 %v312, 104
      %v740 = vpop.permute.xlu0 %739
      %741 = vrot.lane.b32.xlu0 %v329, 104
      %v742 = vpop.permute.xlu0 %741
      %v744 = vsel %vm330, %v740, 0
      %v747 = vsel %vm330, %v742, 0
      %749 = vmatprep.subr.bf16.mxu0 0
      %750 = vmatpush1.bf16.xpose.msra.mxu0 0
      %751 = vmatprep.subr.bf16.mxu0 0
      %752 = vmatpush1.bf16.xpose.msra.mxu0 0
      %753 = vmatprep.subr.bf16.mxu0 0
      %754 = vmatpush1.bf16.xpose.msra.mxu0 0
      %755 = vmatprep.subr.bf16.mxu0 0
      %756 = vmatpush1.bf16.xpose.msra.mxu0 0
      %757 = vmatprep.subr.bf16.mxu0 0
      %758 = vmatpush1.bf16.xpose.msra.mxu0 0
      %759 = vmatprep.subr.bf16.mxu0 0
      %760 = vmatpush1.bf16.xpose.msra.mxu0 0
      %761 = vmatprep.subr.bf16.mxu0 0
      %762 = vmatpush1.bf16.xpose.msra.mxu0 0
      %763 = vmatprep.subr.bf16.mxu0 0
      %764 = vmatpush1.bf16.xpose.msra.mxu0 %v747
      %765 = vmatprep.subr.bf16.mxu0 0
      %766 = vmatpush2.bf16.xpose.msra.mxu0 0
      %767 = vmatprep.subr.bf16.mxu0 0
      %768 = vmatpush2.bf16.xpose.msra.mxu0 0
      %769 = vmatprep.subr.bf16.mxu0 0
      %770 = vmatpush2.bf16.xpose.msra.mxu0 0
      %771 = vmatprep.subr.bf16.mxu0 0
      %772 = vmatpush2.bf16.xpose.msra.mxu0 0
      %773 = vmatprep.subr.bf16.mxu0 0
      %774 = vmatpush2.bf16.xpose.msra.mxu0 0
      %775 = vmatprep.subr.bf16.mxu0 0
      %776 = vmatpush2.bf16.xpose.msra.mxu0 0
      %777 = vmatprep.subr.bf16.mxu0 0
      %778 = vmatpush2.bf16.xpose.msra.mxu0 0
      %779 = vmatprep.subr.bf16.mxu0 0
      %780 = vmatpush2.bf16.xpose.msra.mxu0 0
      %781 = vmatprep.mubr.bf16.mxu0 0
      %782 = vmatmul.mubr.bf16.gmra.mxu0 %v744
      %v783 = vpop.f32.mrf.mxu0
      %v784 = vadd.f32 0.0, %v783
      %v785 = vpop.f32.mrf.mxu0
      %v786 = vpop.f32.mrf.mxu0
      %v787 = vadd.f32 0.0, %v786
      %v788 = vpop.f32.mrf.mxu0
      %789 = vdwg.mxu0
      %v790 = vmul.f32 %v784, 0.35355338
      %v791 = vmul.f32 %v787, 0.35355338
      %v792 = vadd.f32 %v790, %v196
      %v793 = vadd.f32 %v791, %v197
      %v794 = vadd.f32 %v792, %v386
      %v795 = vadd.f32 %v793, %v386
      %v796 = vsel %vm390, %v794, -inf
      %797 = vmax.xlane.f32.xlu0 %v796
      %v798 = vpop.xlane.xlu0 %797
      %v799 = vsel %vm394, %v795, -inf
      %800 = vmax.xlane.f32.xlu0 %v799
      %v801 = vpop.xlane.xlu0 %800
      %v802 = vsub.f32 %v794, %v798
      %v803 = vsub.f32 %v795, %v801
      %v804 = vmul.f32 %v802, 1.442695
      %v805 = vpow.pop %v804
      %v806 = vmul.f32 %v803, 1.442695
      %v807 = vpow.pop %v806
      %v808 = vsel %vm390, %v805, 0.0
      %809 = vadd.xlane.f32.xlu0 %v808
      %v810 = vpop.xlane.xlu0 %809
      %v811 = vsel %vm394, %v807, 0.0
      %812 = vadd.xlane.f32.xlu0 %v811
      %v813 = vpop.xlane.xlu0 %812
      %v814 = vpack.c.bf16 %v807, %v805
      %815 = vrot.lane.b32.xlu0 %v428, 104
      %v816 = vpop.permute.xlu0 %815
      %v818 = vsel %vm390, %v814, 0
      %v821 = vsel %vm432, %v816, 0
      %823 = vmatprep.subr.bf16.mxu0 0
      %824 = vmatpush1.bf16.msra.mxu0 0
      %825 = vmatprep.subr.bf16.mxu0 0
      %826 = vmatpush1.bf16.msra.mxu0 0
      %827 = vmatprep.subr.bf16.mxu0 0
      %828 = vmatpush1.bf16.msra.mxu0 0
      %829 = vmatprep.subr.bf16.mxu0 0
      %830 = vmatpush1.bf16.msra.mxu0 0
      %831 = vmatprep.subr.bf16.mxu0 0
      %832 = vmatpush1.bf16.msra.mxu0 0
      %833 = vmatprep.subr.bf16.mxu0 0
      %834 = vmatpush1.bf16.msra.mxu0 0
      %835 = vmatprep.subr.bf16.mxu0 0
      %836 = vmatpush1.bf16.msra.mxu0 0
      %837 = vmatprep.subr.bf16.mxu0 0
      %838 = vmatpush1.bf16.msra.mxu0 %v821
      %839 = vmatprep.subr.bf16.mxu0 0
      %840 = vmatpush2.bf16.msra.mxu0 0
      %841 = vmatprep.subr.bf16.mxu0 0
      %842 = vmatpush2.bf16.msra.mxu0 0
      %843 = vmatprep.subr.bf16.mxu0 0
      %844 = vmatpush2.bf16.msra.mxu0 0
      %845 = vmatprep.subr.bf16.mxu0 0
      %846 = vmatpush2.bf16.msra.mxu0 0
      %847 = vmatprep.subr.bf16.mxu0 0
      %848 = vmatpush2.bf16.msra.mxu0 0
      %849 = vmatprep.subr.bf16.mxu0 0
      %850 = vmatpush2.bf16.msra.mxu0 0
      %851 = vmatprep.subr.bf16.mxu0 0
      %852 = vmatpush2.bf16.msra.mxu0 0
      %853 = vmatprep.subr.bf16.mxu0 0
      %854 = vmatpush2.bf16.msra.mxu0 0
      %855 = vmatprep.mubr.bf16.mxu0 0
      %856 = vmatmul.mubr.bf16.gmra.mxu0 %v818
      %v857 = vpop.f32.mrf.mxu0
      %v858 = vadd.f32 0.0, %v857
      %v859 = vpop.f32.mrf.mxu0
      %v860 = vpop.f32.mrf.mxu0
      %v861 = vadd.f32 0.0, %v860
      %v862 = vpop.f32.mrf.mxu0
      %863 = vdwg.mxu0
      %v864 = vrcp.pop %v810
      %v865 = vmul.f32 %v858, %v864
      %v866 = vrcp.pop %v813
      %v867 = vmul.f32 %v861, %v866
      %870 = vrot.lane.b32.xlu0 %v607, 8
      %v871 = vpop.permute.xlu0 %870
      %872 = vrot.lane.b32.xlu0 %v609, 8
      %v873 = vpop.permute.xlu0 %872
      %878 = vrot.lane.b32.xlu0 %v736, 16
      %v879 = vpop.permute.xlu0 %878
      %880 = vrot.lane.b32.xlu0 %v738, 16
      %v881 = vpop.permute.xlu0 %880
      %886 = vrot.lane.b32.xlu0 %v865, 24
      %v887 = vpop.permute.xlu0 %886
      %888 = vrot.lane.b32.xlu0 %v867, 24
      %v889 = vpop.permute.xlu0 %888
      %v892 = vsel %vm330, %v478, %v871
      %v893 = vsel %vm330, %v480, %v873
      %vm894 = vcmask 130048
      %v895 = vsel %vm894, %v892, %v879
      %v896 = vsel %vm894, %v893, %v881
      %vm897 = vcmask 195584
      %v898 = vsel %vm897, %v895, %v887
      %v899 = vsel %vm897, %v896, %v889
      %v900 = vpack.c.bf16 %v899, %v898
      %v902 = vunpack.c.l.b16 %v900
      %v903 = vunpack.c.h.b16 %v900
      %v904 = vpack.c.b16 %v902, %v902
      %v905 = vpack.c.b16 %v903, %v903
      %vm908 = vcmask 257024
      %909 = vst.msk [vmem:[%s184] sm:$0xf] %vm908, %v904
      %vm910 = vcmask 253952
      %911 = vst.msk [vmem:[%s184 + $0x4] sm:$0x1] %vm910, %v905
      %p912 = scmp.lt.s32.totalorder %s14, 1
      %s913 = scalar_select %p912, %s14, 1
      %s914 = smul.addr %s913, 2
      %s915 = smul.addr %s914, 4
      %s916 = scalar_lea.vmem %s3, %s915
      // Predicated region
      $region33: #{seq2seq_transformer_forward.32} parent=31 // pred_check
        %p917 = pneg %p105
      $region34: #{seq2seq_transformer_forward.32} parent=31 // pred_check_branch
        %919 = sbr.rel (%p917) target = $region36
      $region35: #{seq2seq_transformer_forward.32} parent=31 // pred_region
        _
      $region36: #{seq2seq_transformer_forward.32} parent=31 // pred_fallthru
        _
    $region32: #{seq2seq_transformer_forward.32} parent=5 // pred_fallthru
      _
    %p920 = scmp.le.s32.totalorder 2, %s9
    // Predicated region
    $region37: #{seq2seq_transformer_forward.32} parent=5 // pred_check
      %p921 = pneg %p920
    $region38: #{seq2seq_transformer_forward.32} parent=5 // pred_check_branch
      %923 = sbr.rel (%p921) target = $region40
    $region39: #{seq2seq_transformer_forward.32} parent=5 // pred_region
      %s924 = ssub.s32 %s9, 2
      // Predicated region
      $region41: #{seq2seq_transformer_forward.32} parent=39 // pred_check
        %p925 = pneg %p111
      $region42: #{seq2seq_transformer_forward.32} parent=39 // pred_check_branch
        %927 = sbr.rel (%p925) target = $region44
      $region43: #{seq2seq_transformer_forward.32} parent=39 // pred_region
        %p928 = scmp.lt.s32.totalorder %s15, 1
        %s929 = scalar_select %p928, %s15, 1
        %s930 = smul.addr %s929, 2
        %s931 = smul.addr %s930, 4
        %s932 = scalar_lea.vmem %s3, %s931
      $region44: #{seq2seq_transformer_forward.32} parent=39 // pred_fallthru
        _
    $region40: #{seq2seq_transformer_forward.32} parent=5 // pred_fallthru
      _
  $region6: #{seq2seq_transformer_forward.32} parent=0 // loop_footer
    %s13 = sadd.s32 1, %s9
  $region7: #{seq2seq_transformer_forward.32} parent=0 // loop_footer_branch
    %8 = sbr.rel target = $region3
  $region8: #{seq2seq_transformer_forward.32} parent=0 // loop_exit
    _

// kernel: seq2seq_transformer_forward.41
$region0: #{seq2seq_transformer_forward.41}
  #allocation0 [shape = 'u32[]', space=smem, size = 0x4, offset = 0x4, fixed_abs, tag = 'smem constant byte address 0x4 - core index']
  #allocation1 [shape = 'u32[144,128]{1,0:T(1,128)}', space=vmem, size = 0x12000, scoped, tag = 'internal scratch']
  %s0 = inlined_call_operand.vmem [shape: bf16[20,32], index: 0, kind: input, shape index: {}]
  %s1 = inlined_call_operand.vmem [shape: f32[1,32], index: 1, kind: input, shape index: {}]
  %s2 = inlined_call_operand.vmem [shape: f32[1,32], index: 2, kind: input, shape index: {}]
  %s3 = inlined_call_operand.vmem [shape: bf16[20,32], index: 3, kind: output, shape index: {}]
  %s4 = sld [smem:[#allocation0]]
  $region22: #{seq2seq_transformer_forward.41} parent=0
    _
  %s6 = ssub.s32 1, %s4
  %s7 = scalar_select 0, %s6, %s4
  // Predicated region
  $region2: #{seq2seq_transformer_forward.41} parent=0 // pred_check
    _
  $region3: #{seq2seq_transformer_forward.41} parent=0 // pred_check_branch
    %9 = sbr.rel (0) target = $region5
  $region4: #{seq2seq_transformer_forward.41} parent=0 // pred_region
    _
  $region5: #{seq2seq_transformer_forward.41} parent=0 // pred_fallthru
    _
  // Predicated region
  $region6: #{seq2seq_transformer_forward.41} parent=0 // pred_check
    _
  $region7: #{seq2seq_transformer_forward.41} parent=0 // pred_check_branch
    %11 = sbr.rel (0) target = $region9
  $region8: #{seq2seq_transformer_forward.41} parent=0 // pred_region
    _
  $region9: #{seq2seq_transformer_forward.41} parent=0 // pred_fallthru
    _
  // Predicated region
  $region10: #{seq2seq_transformer_forward.41} parent=0 // pred_check
    _
  $region11: #{seq2seq_transformer_forward.41} parent=0 // pred_check_branch
    %13 = sbr.rel (0) target = $region13
  $region12: #{seq2seq_transformer_forward.41} parent=0 // pred_region
    _
  $region13: #{seq2seq_transformer_forward.41} parent=0 // pred_fallthru
    _
  %v14 = vld [vmem:[%s0] sm:$0xf]
  %v15 = vld [vmem:[%s0 + $0x4] sm:$0xf]
  %v16 = vld [vmem:[%s0 + $0x8] sm:$0x3]
  %v17 = vunpack.c.l.bf16 %v14
  %v18 = vunpack.c.l.bf16 %v15
  %v19 = vunpack.c.l.bf16 %v16
  %vm20 = vcmask 261120
  %v21 = vsel %vm20, %v17, 0.0
  %22 = vadd.xlane.f32.xlu0 %v21
  %v23 = vpop.xlane.xlu0 %22
  %v24 = vsel %vm20, %v18, 0.0
  %25 = vadd.xlane.f32.xlu0 %v24
  %v26 = vpop.xlane.xlu0 %25
  %vm27 = vcmask 257024
  %v28 = vsel %vm27, %v19, 0.0
  %29 = vadd.xlane.f32.xlu0 %v28
  %v30 = vpop.xlane.xlu0 %29
  %v31 = vrcp.pop 32.0
  %v32 = vmul.f32 %v23, %v31
  %v33 = vmul.f32 %v26, %v31
  %v34 = vmul.f32 %v30, %v31
  %v35 = vsub.f32 %v17, %v32
  %v36 = vsub.f32 %v18, %v33
  %v37 = vsub.f32 %v19, %v34
  %v38 = vmul.f32 %v35, %v35
  %v39 = vmul.f32 %v36, %v36
  %v40 = vmul.f32 %v37, %v37
  %v41 = vsel %vm20, %v38, 0.0
  %42 = vadd.xlane.f32.xlu0 %v41
  %v43 = vpop.xlane.xlu0 %42
  %v44 = vsel %vm20, %v39, 0.0
  %45 = vadd.xlane.f32.xlu0 %v44
  %v46 = vpop.xlane.xlu0 %45
  %v47 = vsel %vm27, %v40, 0.0
  %48 = vadd.xlane.f32.xlu0 %v47
  %v49 = vpop.xlane.xlu0 %48
  %v50 = vmul.f32 %v43, %v31
  %v51 = vmul.f32 %v46, %v31
  %v52 = vmul.f32 %v49, %v31
  %v53 = vadd.f32 %v50, 1e-05
  %v54 = vadd.f32 %v51, 1e-05
  %v55 = vadd.f32 %v52, 1e-05
  %v56 = vrsqrt.pop %v53
  %v57 = vrsqrt.pop %v54
  %v58 = vrsqrt.pop %v55
  %v59 = vmul.f32 %v35, %v56
  %v60 = vmul.f32 %v36, %v57
  %v61 = vmul.f32 %v37, %v58
  %v62 = vld [vmem:[%s1] sm:$0x1]
  %v64 = vlaneseq
  %v65 = vshrl.u32 %v64, 7
  %v66 = vsub.s32 0, %v65
  %v67 = vrot.slane %v62, %v66
  %v69 = vmul.f32 %v59, %v67
  %v70 = vmul.f32 %v60, %v67
  %v71 = vmul.f32 %v61, %v67
  %v72 = vld [vmem:[%s2] sm:$0x1]
  %v74 = vlaneseq
  %v75 = vshrl.u32 %v74, 7
  %v76 = vsub.s32 0, %v75
  %v77 = vrot.slane %v72, %v76
  %v79 = vadd.f32 %v69, %v77
  %v80 = vadd.f32 %v70, %v77
  %v81 = vadd.f32 %v71, %v77
  %v82 = vpack.c.bf16 %v80, %v79
  %v83 = vpack.c.bf16 %v81, %v81
  %v86 = vunpack.c.l.b16 %v82
  %v87 = vunpack.c.h.b16 %v82
  %v88 = vunpack.c.l.b16 %v83
  %v89 = vpack.c.b16 %v86, %v86
  %v90 = vpack.c.b16 %v87, %v87
  %v91 = vpack.c.b16 %v88, %v88
  %95 = vst.msk [vmem:[%s3] sm:$0xf] %vm27, %v89
  %96 = vst.msk [vmem:[%s3 + $0x4] sm:$0xf] %vm27, %v90
  %vm97 = vcmask 254976
  %98 = vst.msk [vmem:[%s3 + $0x8] sm:$0x3] %vm97, %v91
  // Predicated region
  $region14: #{seq2seq_transformer_forward.41} parent=0 // pred_check
    _
  $region15: #{seq2seq_transformer_forward.41} parent=0 // pred_check_branch
    %100 = sbr.rel (0) target = $region17
  $region16: #{seq2seq_transformer_forward.41} parent=0 // pred_region
    _
  $region17: #{seq2seq_transformer_forward.41} parent=0 // pred_fallthru
    _
  // Predicated region
  $region18: #{seq2seq_transformer_forward.41} parent=0 // pred_check
    _
  $region19: #{seq2seq_transformer_forward.41} parent=0 // pred_check_branch
    %102 = sbr.rel (0) target = $region21
  $region20: #{seq2seq_transformer_forward.41} parent=0 // pred_region
    _
  $region21: #{seq2seq_transformer_forward.41} parent=0 // pred_fallthru
    _

// kernel: seq2seq_transformer_forward.46
$region0: #{seq2seq_transformer_forward.46}
  #allocation0 [shape = 'u32[]', space=smem, size = 0x4, offset = 0x4, fixed_abs, tag = 'smem constant byte address 0x4 - core index']
  #allocation1 [shape = 'u32[144,128]{1,0:T(1,128)}', space=vmem, size = 0x12000, scoped, tag = 'internal scratch']
  #allocation2 [shape = 'f32[20,64]{1,0:T(8,128)}', space=vmem, size = 0x3000, scoped, tag = 'scratch operand']
  %s0 = inlined_call_operand.vmem [shape: bf16[20,32], index: 0, kind: input, shape index: {}]
  %s1 = inlined_call_operand.vmem [shape: bf16[32,64], index: 1, kind: input, shape index: {}]
  %s2 = inlined_call_operand.vmem [shape: f32[1,64], index: 2, kind: input, shape index: {}]
  %s3 = inlined_call_operand.vmem [shape: bf16[20,64], index: 3, kind: output, shape index: {}]
  %s4 = sld [smem:[#allocation0]]
  $region30: #{seq2seq_transformer_forward.46} parent=0
    _
  %s6 = ssub.s32 1, %s4
  %s7 = scalar_select 0, %s6, %s4
  // Predicated region
  $region2: #{seq2seq_transformer_forward.46} parent=0 // pred_check
    _
  $region3: #{seq2seq_transformer_forward.46} parent=0 // pred_check_branch
    %9 = sbr.rel (0) target = $region5
  $region4: #{seq2seq_transformer_forward.46} parent=0 // pred_region
    _
  $region5: #{seq2seq_transformer_forward.46} parent=0 // pred_fallthru
    _
  // Predicated region
  $region6: #{seq2seq_transformer_forward.46} parent=0 // pred_check
    _
  $region7: #{seq2seq_transformer_forward.46} parent=0 // pred_check_branch
    %11 = sbr.rel (0) target = $region9
  $region8: #{seq2seq_transformer_forward.46} parent=0 // pred_region
    _
  $region9: #{seq2seq_transformer_forward.46} parent=0 // pred_fallthru
    _
  // Predicated region
  $region10: #{seq2seq_transformer_forward.46} parent=0 // pred_check
    _
  $region11: #{seq2seq_transformer_forward.46} parent=0 // pred_check_branch
    %13 = sbr.rel (0) target = $region13
  $region12: #{seq2seq_transformer_forward.46} parent=0 // pred_region
    _
  $region13: #{seq2seq_transformer_forward.46} parent=0 // pred_fallthru
    _
  %p15 = scmp.eq.s32.totalorder 0, 0
  // Predicated region
  $region14: #{seq2seq_transformer_forward.46} parent=0 // pred_check
    %p16 = pneg %p15
  $region15: #{seq2seq_transformer_forward.46} parent=0 // pred_check_branch
    %18 = sbr.rel (%p16) target = $region17
  $region16: #{seq2seq_transformer_forward.46} parent=0 // pred_region
    %vm19 = vcmask 523264
    %20 = vst.msk [vmem:[#allocation2] sm:$0xff] %vm19, 0.0
    %21 = vst.msk [vmem:[#allocation2 + $0x8] sm:$0xff] %vm19, 0.0
    %vm22 = vcmask 519168
    %23 = vst.msk [vmem:[#allocation2 + $0x10] sm:$0xf] %vm22, 0.0
  $region17: #{seq2seq_transformer_forward.46} parent=0 // pred_fallthru
    _
  %v24 = vld [vmem:[#allocation2] sm:$0xff]
  %v25 = vld [vmem:[#allocation2 + $0x8] sm:$0xff]
  %v26 = vld [vmem:[#allocation2 + $0x10] sm:$0xf]
  %v27 = vld [vmem:[%s0] sm:$0xf]
  %v28 = vld [vmem:[%s0 + $0x4] sm:$0xf]
  %v29 = vld [vmem:[%s0 + $0x8] sm:$0x3]
  %v30 = vld [vmem:[%s1] sm:$0xf]
  %v31 = vld [vmem:[%s1 + $0x4] sm:$0xf]
  %v32 = vld [vmem:[%s1 + $0x8] sm:$0xf]
  %v33 = vld [vmem:[%s1 + $0xc] sm:$0xf]
  %v37 = vunpack.c.l.b16 %v27
  %v38 = vunpack.c.l.b16 %v28
  %v39 = vunpack.c.l.b16 %v29
  %v40 = vpack.c.b16 %v38, %v37
  %v41 = vpack.c.b16 %v39, %v39
  %v46 = vunpack.c.l.b16 %v30
  %v47 = vunpack.c.l.b16 %v31
  %v48 = vunpack.c.l.b16 %v32
  %v49 = vunpack.c.l.b16 %v33
  %v50 = vpack.c.b16 %v47, %v46
  %v51 = vpack.c.b16 %v49, %v48
  %vm54 = vcmask 261120
  %v56 = vsel %vm54, %v40, 0
  %v59 = vsel %vm54, %v41, 0
  %61 = vmatprep.subr.bf16.mxu0 0
  %62 = vmatpush1.bf16.msra.mxu0 0
  %63 = vmatprep.subr.bf16.mxu0 0
  %64 = vmatpush1.bf16.msra.mxu0 0
  %65 = vmatprep.subr.bf16.mxu0 0
  %66 = vmatpush1.bf16.msra.mxu0 0
  %67 = vmatprep.subr.bf16.mxu0 0
  %68 = vmatpush1.bf16.msra.mxu0 0
  %69 = vmatprep.subr.bf16.mxu0 0
  %70 = vmatpush1.bf16.msra.mxu0 0
  %71 = vmatprep.subr.bf16.mxu0 0
  %72 = vmatpush1.bf16.msra.mxu0 0
  %73 = vmatprep.subr.bf16.mxu0 0
  %74 = vmatpush1.bf16.msra.mxu0 %v51
  %75 = vmatprep.subr.bf16.mxu0 0
  %76 = vmatpush1.bf16.msra.mxu0 %v50
  %77 = vmatprep.subr.bf16.mxu0 0
  %78 = vmatpush2.bf16.msra.mxu0 0
  %79 = vmatprep.subr.bf16.mxu0 0
  %80 = vmatpush2.bf16.msra.mxu0 0
  %81 = vmatprep.subr.bf16.mxu0 0
  %82 = vmatpush2.bf16.msra.mxu0 0
  %83 = vmatprep.subr.bf16.mxu0 0
  %84 = vmatpush2.bf16.msra.mxu0 0
  %85 = vmatprep.subr.bf16.mxu0 0
  %86 = vmatpush2.bf16.msra.mxu0 0
  %87 = vmatprep.subr.bf16.mxu0 0
  %88 = vmatpush2.bf16.msra.mxu0 0
  %89 = vmatprep.subr.bf16.mxu0 0
  %90 = vmatpush2.bf16.msra.mxu0 0
  %91 = vmatprep.subr.bf16.mxu0 0
  %92 = vmatpush2.bf16.msra.mxu0 0
  %93 = vmatprep.mubr.bf16.mxu0 0
  %94 = vmatmul.mubr.bf16.gmra.mxu0 %v56
  %v95 = vpop.f32.mrf.mxu0
  %v96 = vadd.f32 0.0, %v95
  %v97 = vpop.f32.mrf.mxu0
  %v98 = vpop.f32.mrf.mxu0
  %v99 = vadd.f32 0.0, %v98
  %v100 = vpop.f32.mrf.mxu0
  %101 = vmatprep.mubr.bf16.mxu0 0
  %102 = vmatmul.mubr.bf16.gmra.mxu0 %v59
  %v103 = vpop.f32.mrf.mxu0
  %v104 = vadd.f32 0.0, %v103
  %v105 = vpop.f32.mrf.mxu0
  %v106 = vpop.f32.mrf.mxu0
  %v107 = vpop.f32.mrf.mxu0
  %108 = vdwg.mxu0
  %v109 = vadd.f32 %v24, %v96
  %v110 = vadd.f32 %v25, %v99
  %v111 = vadd.f32 %v26, %v104
  %vm112 = vcmask 523264
  %113 = vst.msk [vmem:[#allocation2] sm:$0xff] %vm112, %v109
  %114 = vst.msk [vmem:[#allocation2 + $0x8] sm:$0xff] %vm112, %v110
  %vm115 = vcmask 519168
  %116 = vst.msk [vmem:[#allocation2 + $0x10] sm:$0xf] %vm115, %v111
  // Predicated region
  $region18: #{seq2seq_transformer_forward.46} parent=0 // pred_check
    %p117 = pneg %p15
  $region19: #{seq2seq_transformer_forward.46} parent=0 // pred_check_branch
    %119 = sbr.rel (%p117) target = $region21
  $region20: #{seq2seq_transformer_forward.46} parent=0 // pred_region
    %v120 = vld [vmem:[#allocation2] sm:$0xff]
    %v121 = vld [vmem:[#allocation2 + $0x8] sm:$0xff]
    %v122 = vld [vmem:[#allocation2 + $0x10] sm:$0xf]
    %v123 = vld [vmem:[%s2] sm:$0x1]
    %v125 = vlaneseq
    %v126 = vshrl.u32 %v125, 7
    %v127 = vsub.s32 0, %v126
    %v128 = vrot.slane %v123, %v127
    %v130 = vadd.f32 %v120, %v128
    %v131 = vadd.f32 %v121, %v128
    %v132 = vadd.f32 %v122, %v128
    %v133 = vpack.c.bf16 %v131, %v130
    %v134 = vpack.c.bf16 %v132, %v132
    %v137 = vunpack.c.l.b16 %v133
    %v138 = vunpack.c.h.b16 %v133
    %v139 = vunpack.c.l.b16 %v134
    %v140 = vpack.c.b16 %v137, %v137
    %v141 = vpack.c.b16 %v138, %v138
    %v142 = vpack.c.b16 %v139, %v139
    %146 = vst.msk [vmem:[%s3] sm:$0xf] %vm115, %v140
    %147 = vst.msk [vmem:[%s3 + $0x4] sm:$0xf] %vm115, %v141
    %vm148 = vcmask 517120
    %149 = vst.msk [vmem:[%s3 + $0x8] sm:$0x3] %vm148, %v142
  $region21: #{seq2seq_transformer_forward.46} parent=0 // pred_fallthru
    _
  // Predicated region
  $region22: #{seq2seq_transformer_forward.46} parent=0 // pred_check
    _
  $region23: #{seq2seq_transformer_forward.46} parent=0 // pred_check_branch
    %151 = sbr.rel (0) target = $region25
  $region24: #{seq2seq_transformer_forward.46} parent=0 // pred_region
    _
  $region25: #{seq2seq_transformer_forward.46} parent=0 // pred_fallthru
    _
  // Predicated region
  $region26: #{seq2seq_transformer_forward.46} parent=0 // pred_check
    _
  $region27: #{seq2seq_transformer_forward.46} parent=0 // pred_check_branch
    %153 = sbr.rel (0) target = $region29
  $region28: #{seq2seq_transformer_forward.46} parent=0 // pred_region
    _
  $region29: #{seq2seq_transformer_forward.46} parent=0 // pred_fallthru
    _

// kernel: seq2seq_transformer_forward.35
$region0: #{seq2seq_transformer_forward.35}
  #allocation0 [shape = 'u32[]', space=smem, size = 0x4, offset = 0x4, fixed_abs, tag = 'smem constant byte address 0x4 - core index']
  #allocation1 [shape = 'u32[144,128]{1,0:T(1,128)}', space=vmem, size = 0x12000, scoped, tag = 'internal scratch']
  #allocation2 [shape = 'f32[20,32]{1,0:T(8,128)}', space=vmem, size = 0x3000, scoped, tag = 'scratch operand']
  %s0 = inlined_call_operand.vmem [shape: bf16[20,64], index: 0, kind: input, shape index: {}]
  %s1 = inlined_call_operand.vmem [shape: bf16[64,32], index: 1, kind: input, shape index: {}]
  %s2 = inlined_call_operand.vmem [shape: f32[1,32], index: 2, kind: input, shape index: {}]
  %s3 = inlined_call_operand.vmem [shape: bf16[20,32], index: 3, kind: input, shape index: {}]
  %s4 = inlined_call_operand.vmem [shape: f32[1,32], index: 4, kind: input, shape index: {}]
  %s5 = inlined_call_operand.vmem [shape: f32[1,32], index: 5, kind: input, shape index: {}]
  %s6 = inlined_call_operand.vmem [shape: bf16[20,32], index: 6, kind: output, shape index: {}]
  %s7 = sld [smem:[#allocation0]]
  $region42: #{seq2seq_transformer_forward.35} parent=0
    _
  %s9 = ssub.s32 1, %s7
  %s10 = scalar_select 0, %s9, %s7
  // Predicated region
  $region2: #{seq2seq_transformer_forward.35} parent=0 // pred_check
    _
  $region3: #{seq2seq_transformer_forward.35} parent=0 // pred_check_branch
    %12 = sbr.rel (0) target = $region5
  $region4: #{seq2seq_transformer_forward.35} parent=0 // pred_region
    _
  $region5: #{seq2seq_transformer_forward.35} parent=0 // pred_fallthru
    _
  // Predicated region
  $region6: #{seq2seq_transformer_forward.35} parent=0 // pred_check
    _
  $region7: #{seq2seq_transformer_forward.35} parent=0 // pred_check_branch
    %14 = sbr.rel (0) target = $region9
  $region8: #{seq2seq_transformer_forward.35} parent=0 // pred_region
    _
  $region9: #{seq2seq_transformer_forward.35} parent=0 // pred_fallthru
    _
  // Predicated region
  $region10: #{seq2seq_transformer_forward.35} parent=0 // pred_check
    _
  $region11: #{seq2seq_transformer_forward.35} parent=0 // pred_check_branch
    %16 = sbr.rel (0) target = $region13
  $region12: #{seq2seq_transformer_forward.35} parent=0 // pred_region
    _
  $region13: #{seq2seq_transformer_forward.35} parent=0 // pred_fallthru
    _
  // Predicated region
  $region14: #{seq2seq_transformer_forward.35} parent=0 // pred_check
    _
  $region15: #{seq2seq_transformer_forward.35} parent=0 // pred_check_branch
    %18 = sbr.rel (0) target = $region17
  $region16: #{seq2seq_transformer_forward.35} parent=0 // pred_region
    _
  $region17: #{seq2seq_transformer_forward.35} parent=0 // pred_fallthru
    _
  // Predicated region
  $region18: #{seq2seq_transformer_forward.35} parent=0 // pred_check
    _
  $region19: #{seq2seq_transformer_forward.35} parent=0 // pred_check_branch
    %20 = sbr.rel (0) target = $region21
  $region20: #{seq2seq_transformer_forward.35} parent=0 // pred_region
    _
  $region21: #{seq2seq_transformer_forward.35} parent=0 // pred_fallthru
    _
  // Predicated region
  $region22: #{seq2seq_transformer_forward.35} parent=0 // pred_check
    _
  $region23: #{seq2seq_transformer_forward.35} parent=0 // pred_check_branch
    %22 = sbr.rel (0) target = $region25
  $region24: #{seq2seq_transformer_forward.35} parent=0 // pred_region
    _
  $region25: #{seq2seq_transformer_forward.35} parent=0 // pred_fallthru
    _
  %p24 = scmp.eq.s32.totalorder 0, 0
  // Predicated region
  $region26: #{seq2seq_transformer_forward.35} parent=0 // pred_check
    %p25 = pneg %p24
  $region27: #{seq2seq_transformer_forward.35} parent=0 // pred_check_branch
    %27 = sbr.rel (%p25) target = $region29
  $region28: #{seq2seq_transformer_forward.35} parent=0 // pred_region
    %vm28 = vcmask 261120
    %29 = vst.msk [vmem:[#allocation2] sm:$0xff] %vm28, 0.0
    %30 = vst.msk [vmem:[#allocation2 + $0x8] sm:$0xff] %vm28, 0.0
    %vm31 = vcmask 257024
    %32 = vst.msk [vmem:[#allocation2 + $0x10] sm:$0xf] %vm31, 0.0
  $region29: #{seq2seq_transformer_forward.35} parent=0 // pred_fallthru
    _
  %v33 = vld [vmem:[#allocation2] sm:$0xff]
  %v34 = vld [vmem:[#allocation2 + $0x8] sm:$0xff]
  %v35 = vld [vmem:[#allocation2 + $0x10] sm:$0xf]
  %v36 = vld [vmem:[%s0] sm:$0xf]
  %v37 = vld [vmem:[%s0 + $0x4] sm:$0xf]
  %v38 = vld [vmem:[%s0 + $0x8] sm:$0x3]
  %v39 = vld [vmem:[%s1] sm:$0xf]
  %v40 = vld [vmem:[%s1 + $0x4] sm:$0xf]
  %v41 = vld [vmem:[%s1 + $0x8] sm:$0xf]
  %v42 = vld [vmem:[%s1 + $0xc] sm:$0xf]
  %v43 = vld [vmem:[%s1 + $0x10] sm:$0xf]
  %v44 = vld [vmem:[%s1 + $0x14] sm:$0xf]
  %v45 = vld [vmem:[%s1 + $0x18] sm:$0xf]
  %v46 = vld [vmem:[%s1 + $0x1c] sm:$0xf]
  %v50 = vunpack.c.l.b16 %v36
  %v51 = vunpack.c.l.b16 %v37
  %v52 = vunpack.c.l.b16 %v38
  %v53 = vpack.c.b16 %v51, %v50
  %v54 = vpack.c.b16 %v52, %v52
  %v63 = vunpack.c.l.b16 %v39
  %v64 = vunpack.c.l.b16 %v40
  %v65 = vunpack.c.l.b16 %v41
  %v66 = vunpack.c.l.b16 %v42
  %v67 = vunpack.c.l.b16 %v43
  %v68 = vunpack.c.l.b16 %v44
  %v69 = vunpack.c.l.b16 %v45
  %v70 = vunpack.c.l.b16 %v46
  %v71 = vpack.c.b16 %v64, %v63
  %v72 = vpack.c.b16 %v66, %v65
  %v73 = vpack.c.b16 %v68, %v67
  %v74 = vpack.c.b16 %v70, %v69
  %vm79 = vcmask 523264
  %v81 = vsel %vm79, %v53, 0
  %v84 = vsel %vm79, %v54, 0
  %86 = vmatprep.subr.bf16.mxu0 0
  %87 = vmatpush1.bf16.msra.mxu0 0
  %88 = vmatprep.subr.bf16.mxu0 0
  %89 = vmatpush1.bf16.msra.mxu0 0
  %90 = vmatprep.subr.bf16.mxu0 0
  %91 = vmatpush1.bf16.msra.mxu0 0
  %92 = vmatprep.subr.bf16.mxu0 0
  %93 = vmatpush1.bf16.msra.mxu0 0
  %94 = vmatprep.subr.bf16.mxu0 0
  %95 = vmatpush1.bf16.msra.mxu0 %v74
  %96 = vmatprep.subr.bf16.mxu0 0
  %97 = vmatpush1.bf16.msra.mxu0 %v73
  %98 = vmatprep.subr.bf16.mxu0 0
  %99 = vmatpush1.bf16.msra.mxu0 %v72
  %100 = vmatprep.subr.bf16.mxu0 0
  %101 = vmatpush1.bf16.msra.mxu0 %v71
  %102 = vmatprep.subr.bf16.mxu0 0
  %103 = vmatpush2.bf16.msra.mxu0 0
  %104 = vmatprep.subr.bf16.mxu0 0
  %105 = vmatpush2.bf16.msra.mxu0 0
  %106 = vmatprep.subr.bf16.mxu0 0
  %107 = vmatpush2.bf16.msra.mxu0 0
  %108 = vmatprep.subr.bf16.mxu0 0
  %109 = vmatpush2.bf16.msra.mxu0 0
  %110 = vmatprep.subr.bf16.mxu0 0
  %111 = vmatpush2.bf16.msra.mxu0 0
  %112 = vmatprep.subr.bf16.mxu0 0
  %113 = vmatpush2.bf16.msra.mxu0 0
  %114 = vmatprep.subr.bf16.mxu0 0
  %115 = vmatpush2.bf16.msra.mxu0 0
  %116 = vmatprep.subr.bf16.mxu0 0
  %117 = vmatpush2.bf16.msra.mxu0 0
  %118 = vmatprep.mubr.bf16.mxu0 0
  %119 = vmatmul.mubr.bf16.gmra.mxu0 %v81
  %v120 = vpop.f32.mrf.mxu0
  %v121 = vadd.f32 0.0, %v120
  %v122 = vpop.f32.mrf.mxu0
  %v123 = vpop.f32.mrf.mxu0
  %v124 = vadd.f32 0.0, %v123
  %v125 = vpop.f32.mrf.mxu0
  %126 = vmatprep.mubr.bf16.mxu0 0
  %127 = vmatmul.mubr.bf16.gmra.mxu0 %v84
  %v128 = vpop.f32.mrf.mxu0
  %v129 = vadd.f32 0.0, %v128
  %v130 = vpop.f32.mrf.mxu0
  %v131 = vpop.f32.mrf.mxu0
  %v132 = vpop.f32.mrf.mxu0
  %133 = vdwg.mxu0
  %v134 = vadd.f32 %v33, %v121
  %v135 = vadd.f32 %v34, %v124
  %v136 = vadd.f32 %v35, %v129
  %vm137 = vcmask 261120
  %138 = vst.msk [vmem:[#allocation2] sm:$0xff] %vm137, %v134
  %139 = vst.msk [vmem:[#allocation2 + $0x8] sm:$0xff] %vm137, %v135
  %vm140 = vcmask 257024
  %141 = vst.msk [vmem:[#allocation2 + $0x10] sm:$0xf] %vm140, %v136
  // Predicated region
  $region30: #{seq2seq_transformer_forward.35} parent=0 // pred_check
    %p142 = pneg %p24
  $region31: #{seq2seq_transformer_forward.35} parent=0 // pred_check_branch
    %144 = sbr.rel (%p142) target = $region33
  $region32: #{seq2seq_transformer_forward.35} parent=0 // pred_region
    %v145 = vld [vmem:[#allocation2] sm:$0xff]
    %v146 = vld [vmem:[#allocation2 + $0x8] sm:$0xff]
    %v147 = vld [vmem:[#allocation2 + $0x10] sm:$0xf]
    %v148 = vld [vmem:[%s2] sm:$0x1]
    %v150 = vlaneseq
    %v151 = vshrl.u32 %v150, 7
    %v152 = vsub.s32 0, %v151
    %v153 = vrot.slane %v148, %v152
    %v155 = vadd.f32 %v145, %v153
    %v156 = vadd.f32 %v146, %v153
    %v157 = vadd.f32 %v147, %v153
    %v158 = vld [vmem:[%s3] sm:$0xf]
    %v159 = vld [vmem:[%s3 + $0x4] sm:$0xf]
    %v160 = vld [vmem:[%s3 + $0x8] sm:$0x3]
    %v161 = vunpack.c.l.bf16 %v158
    %v162 = vunpack.c.l.bf16 %v159
    %v163 = vunpack.c.l.bf16 %v160
    %v164 = vadd.f32 %v155, %v161
    %v165 = vadd.f32 %v156, %v162
    %v166 = vadd.f32 %v157, %v163
    %v167 = vsel %vm137, %v164, 0.0
    %168 = vadd.xlane.f32.xlu0 %v167
    %v169 = vpop.xlane.xlu0 %168
    %v170 = vsel %vm137, %v165, 0.0
    %171 = vadd.xlane.f32.xlu0 %v170
    %v172 = vpop.xlane.xlu0 %171
    %v173 = vsel %vm140, %v166, 0.0
    %174 = vadd.xlane.f32.xlu0 %v173
    %v175 = vpop.xlane.xlu0 %174
    %v176 = vrcp.pop 32.0
    %v177 = vmul.f32 %v169, %v176
    %v178 = vmul.f32 %v172, %v176
    %v179 = vmul.f32 %v175, %v176
    %v180 = vsub.f32 %v164, %v177
    %v181 = vsub.f32 %v165, %v178
    %v182 = vsub.f32 %v166, %v179
    %v183 = vmul.f32 %v180, %v180
    %v184 = vmul.f32 %v181, %v181
    %v185 = vmul.f32 %v182, %v182
    %v186 = vsel %vm137, %v183, 0.0
    %187 = vadd.xlane.f32.xlu0 %v186
    %v188 = vpop.xlane.xlu0 %187
    %v189 = vsel %vm137, %v184, 0.0
    %190 = vadd.xlane.f32.xlu0 %v189
    %v191 = vpop.xlane.xlu0 %190
    %v192 = vsel %vm140, %v185, 0.0
    %193 = vadd.xlane.f32.xlu0 %v192
    %v194 = vpop.xlane.xlu0 %193
    %v195 = vmul.f32 %v188, %v176
    %v196 = vmul.f32 %v191, %v176
    %v197 = vmul.f32 %v194, %v176
    %v198 = vadd.f32 %v195, 1e-05
    %v199 = vadd.f32 %v196, 1e-05
    %v200 = vadd.f32 %v197, 1e-05
    %v201 = vrsqrt.pop %v198
    %v202 = vrsqrt.pop %v199
    %v203 = vrsqrt.pop %v200
    %v204 = vmul.f32 %v180, %v201
    %v205 = vmul.f32 %v181, %v202
    %v206 = vmul.f32 %v182, %v203
    %v207 = vld [vmem:[%s4] sm:$0x1]
    %v209 = vlaneseq
    %v210 = vshrl.u32 %v209, 7
    %v211 = vsub.s32 0, %v210
    %v212 = vrot.slane %v207, %v211
    %v214 = vmul.f32 %v204, %v212
    %v215 = vmul.f32 %v205, %v212
    %v216 = vmul.f32 %v206, %v212
    %v217 = vld [vmem:[%s5] sm:$0x1]
    %v219 = vlaneseq
    %v220 = vshrl.u32 %v219, 7
    %v221 = vsub.s32 0, %v220
    %v222 = vrot.slane %v217, %v221
    %v224 = vadd.f32 %v214, %v222
    %v225 = vadd.f32 %v215, %v222
    %v226 = vadd.f32 %v216, %v222
    %v227 = vpack.c.bf16 %v225, %v224
    %v228 = vpack.c.bf16 %v226, %v226
    %v231 = vunpack.c.l.b16 %v227
    %v232 = vunpack.c.h.b16 %v227
    %v233 = vunpack.c.l.b16 %v228
    %v234 = vpack.c.b16 %v231, %v231
    %v235 = vpack.c.b16 %v232, %v232
    %v236 = vpack.c.b16 %v233, %v233
    %240 = vst.msk [vmem:[%s6] sm:$0xf] %vm140, %v234
    %241 = vst.msk [vmem:[%s6 + $0x4] sm:$0xf] %vm140, %v235
    %vm242 = vcmask 254976
    %243 = vst.msk [vmem:[%s6 + $0x8] sm:$0x3] %vm242, %v236
  $region33: #{seq2seq_transformer_forward.35} parent=0 // pred_fallthru
    _
  // Predicated region
  $region34: #{seq2seq_transformer_forward.35} parent=0 // pred_check
    _
  $region35: #{seq2seq_transformer_forward.35} parent=0 // pred_check_branch
    %245 = sbr.rel (0) target = $region37
  $region36: #{seq2seq_transformer_forward.35} parent=0 // pred_region
    _
  $region37: #{seq2seq_transformer_forward.35} parent=0 // pred_fallthru
    _
  // Predicated region
  $region38: #{seq2seq_transformer_forward.35} parent=0 // pred_check
    _
  $region39: #{seq2seq_transformer_forward.35} parent=0 // pred_check_branch
    %247 = sbr.rel (0) target = $region41
  $region40: #{seq2seq_transformer_forward.35} parent=0 // pred_region
    _
  $region41: #{seq2seq_transformer_forward.35} parent=0 // pred_fallthru
    _

// kernel: seq2seq_transformer_forward.42
$region0: #{seq2seq_transformer_forward.42}
  #allocation0 [shape = 'u32[]', space=smem, size = 0x4, offset = 0x4, fixed_abs, tag = 'smem constant byte address 0x4 - core index']
  #allocation1 [shape = 'u32[144,128]{1,0:T(1,128)}', space=vmem, size = 0x12000, scoped, tag = 'internal scratch']
  #allocation2 [shape = 'f32[16,96]{1,0:T(8,128)}', space=vmem, size = 0x2000, scoped, tag = 'scratch operand']
  %s0 = inlined_call_operand.vmem [shape: bf16[16,32], index: 0, kind: input, shape index: {}]
  %s1 = inlined_call_operand.vmem [shape: bf16[32,96], index: 1, kind: input, shape index: {}]
  %s2 = inlined_call_operand.vmem [shape: f32[1,96], index: 2, kind: input, shape index: {}]
  %s3 = inlined_call_operand.vmem [shape: bf16[16,96], index: 3, kind: output, shape index: {}]
  %s4 = sld [smem:[#allocation0]]
  $region30: #{seq2seq_transformer_forward.42} parent=0
    _
  %s6 = ssub.s32 1, %s4
  %s7 = scalar_select 0, %s6, %s4
  // Predicated region
  $region2: #{seq2seq_transformer_forward.42} parent=0 // pred_check
    _
  $region3: #{seq2seq_transformer_forward.42} parent=0 // pred_check_branch
    %9 = sbr.rel (0) target = $region5
  $region4: #{seq2seq_transformer_forward.42} parent=0 // pred_region
    _
  $region5: #{seq2seq_transformer_forward.42} parent=0 // pred_fallthru
    _
  // Predicated region
  $region6: #{seq2seq_transformer_forward.42} parent=0 // pred_check
    _
  $region7: #{seq2seq_transformer_forward.42} parent=0 // pred_check_branch
    %11 = sbr.rel (0) target = $region9
  $region8: #{seq2seq_transformer_forward.42} parent=0 // pred_region
    _
  $region9: #{seq2seq_transformer_forward.42} parent=0 // pred_fallthru
    _
  // Predicated region
  $region10: #{seq2seq_transformer_forward.42} parent=0 // pred_check
    _
  $region11: #{seq2seq_transformer_forward.42} parent=0 // pred_check_branch
    %13 = sbr.rel (0) target = $region13
  $region12: #{seq2seq_transformer_forward.42} parent=0 // pred_region
    _
  $region13: #{seq2seq_transformer_forward.42} parent=0 // pred_fallthru
    _
  %p15 = scmp.eq.s32.totalorder 0, 0
  // Predicated region
  $region14: #{seq2seq_transformer_forward.42} parent=0 // pred_check
    %p16 = pneg %p15
  $region15: #{seq2seq_transformer_forward.42} parent=0 // pred_check_branch
    %18 = sbr.rel (%p16) target = $region17
  $region16: #{seq2seq_transformer_forward.42} parent=0 // pred_region
    %vm19 = vcmask 785408
    %20 = vst.msk [vmem:[#allocation2] sm:$0xff] %vm19, 0.0
    %21 = vst.msk [vmem:[#allocation2 + $0x8] sm:$0xff] %vm19, 0.0
  $region17: #{seq2seq_transformer_forward.42} parent=0 // pred_fallthru
    _
  %v22 = vld [vmem:[#allocation2] sm:$0xff]
  %v23 = vld [vmem:[#allocation2 + $0x8] sm:$0xff]
  %v24 = vld [vmem:[%s0] sm:$0xf]
  %v25 = vld [vmem:[%s0 + $0x4] sm:$0xf]
  %v26 = vld [vmem:[%s1] sm:$0xf]
  %v27 = vld [vmem:[%s1 + $0x4] sm:$0xf]
  %v28 = vld [vmem:[%s1 + $0x8] sm:$0xf]
  %v29 = vld [vmem:[%s1 + $0xc] sm:$0xf]
  %v32 = vunpack.c.l.b16 %v24
  %v33 = vunpack.c.l.b16 %v25
  %v34 = vpack.c.b16 %v33, %v32
  %v39 = vunpack.c.l.b16 %v26
  %v40 = vunpack.c.l.b16 %v27
  %v41 = vunpack.c.l.b16 %v28
  %v42 = vunpack.c.l.b16 %v29
  %v43 = vpack.c.b16 %v40, %v39
  %v44 = vpack.c.b16 %v42, %v41
  %vm47 = vcmask 261120
  %v49 = vsel %vm47, %v34, 0
  %51 = vmatprep.subr.bf16.mxu0 0
  %52 = vmatpush1.bf16.msra.mxu0 0
  %53 = vmatprep.subr.bf16.mxu0 0
  %54 = vmatpush1.bf16.msra.mxu0 0
  %55 = vmatprep.subr.bf16.mxu0 0
  %56 = vmatpush1.bf16.msra.mxu0 0
  %57 = vmatprep.subr.bf16.mxu0 0
  %58 = vmatpush1.bf16.msra.mxu0 0
  %59 = vmatprep.subr.bf16.mxu0 0
  %60 = vmatpush1.bf16.msra.mxu0 0
  %61 = vmatprep.subr.bf16.mxu0 0
  %62 = vmatpush1.bf16.msra.mxu0 0
  %63 = vmatprep.subr.bf16.mxu0 0
  %64 = vmatpush1.bf16.msra.mxu0 %v44
  %65 = vmatprep.subr.bf16.mxu0 0
  %66 = vmatpush1.bf16.msra.mxu0 %v43
  %67 = vmatprep.subr.bf16.mxu0 0
  %68 = vmatpush2.bf16.msra.mxu0 0
  %69 = vmatprep.subr.bf16.mxu0 0
  %70 = vmatpush2.bf16.msra.mxu0 0
  %71 = vmatprep.subr.bf16.mxu0 0
  %72 = vmatpush2.bf16.msra.mxu0 0
  %73 = vmatprep.subr.bf16.mxu0 0
  %74 = vmatpush2.bf16.msra.mxu0 0
  %75 = vmatprep.subr.bf16.mxu0 0
  %76 = vmatpush2.bf16.msra.mxu0 0
  %77 = vmatprep.subr.bf16.mxu0 0
  %78 = vmatpush2.bf16.msra.mxu0 0
  %79 = vmatprep.subr.bf16.mxu0 0
  %80 = vmatpush2.bf16.msra.mxu0 0
  %81 = vmatprep.subr.bf16.mxu0 0
  %82 = vmatpush2.bf16.msra.mxu0 0
  %83 = vmatprep.mubr.bf16.mxu0 0
  %84 = vmatmul.mubr.bf16.gmra.mxu0 %v49
  %v85 = vpop.f32.mrf.mxu0
  %v86 = vadd.f32 0.0, %v85
  %v87 = vpop.f32.mrf.mxu0
  %v88 = vpop.f32.mrf.mxu0
  %v89 = vadd.f32 0.0, %v88
  %v90 = vpop.f32.mrf.mxu0
  %91 = vdwg.mxu0
  %v92 = vadd.f32 %v22, %v86
  %v93 = vadd.f32 %v23, %v89
  %vm94 = vcmask 785408
  %95 = vst.msk [vmem:[#allocation2] sm:$0xff] %vm94, %v92
  %96 = vst.msk [vmem:[#allocation2 + $0x8] sm:$0xff] %vm94, %v93
  // Predicated region
  $region18: #{seq2seq_transformer_forward.42} parent=0 // pred_check
    %p97 = pneg %p15
  $region19: #{seq2seq_transformer_forward.42} parent=0 // pred_check_branch
    %99 = sbr.rel (%p97) target = $region21
  $region20: #{seq2seq_transformer_forward.42} parent=0 // pred_region
    %v100 = vld [vmem:[#allocation2] sm:$0xff]
    %v101 = vld [vmem:[#allocation2 + $0x8] sm:$0xff]
    %v102 = vld [vmem:[%s2] sm:$0x1]
    %v104 = vlaneseq
    %v105 = vshrl.u32 %v104, 7
    %v106 = vsub.s32 0, %v105
    %v107 = vrot.slane %v102, %v106
    %v109 = vadd.f32 %v100, %v107
    %v110 = vadd.f32 %v101, %v107
    %v111 = vpack.c.bf16 %v110, %v109
    %v113 = vunpack.c.l.b16 %v111
    %v114 = vunpack.c.h.b16 %v111
    %v115 = vpack.c.b16 %v113, %v113
    %v116 = vpack.c.b16 %v114, %v114
    %vm119 = vcmask 781312
    %120 = vst.msk [vmem:[%s3] sm:$0xf] %vm119, %v115
    %121 = vst.msk [vmem:[%s3 + $0x4] sm:$0xf] %vm119, %v116
  $region21: #{seq2seq_transformer_forward.42} parent=0 // pred_fallthru
    _
  // Predicated region
  $region22: #{seq2seq_transformer_forward.42} parent=0 // pred_check
    _
  $region23: #{seq2seq_transformer_forward.42} parent=0 // pred_check_branch
    %123 = sbr.rel (0) target = $region25
  $region24: #{seq2seq_transformer_forward.42} parent=0 // pred_region
    _
  $region25: #{seq2seq_transformer_forward.42} parent=0 // pred_fallthru
    _
  // Predicated region
  $region26: #{seq2seq_transformer_forward.42} parent=0 // pred_check
    _
  $region27: #{seq2seq_transformer_forward.42} parent=0 // pred_check_branch
    %125 = sbr.rel (0) target = $region29
  $region28: #{seq2seq_transformer_forward.42} parent=0 // pred_region
    _
  $region29: #{seq2seq_transformer_forward.42} parent=0 // pred_fallthru
    _

// kernel: seq2seq_transformer_forward.45
$region0: #{seq2seq_transformer_forward.45}
  #allocation0 [shape = 'u32[]', space=smem, size = 0x4, offset = 0x4, fixed_abs, tag = 'smem constant byte address 0x4 - core index']
  #allocation1 [shape = 'u32[144,128]{1,0:T(1,128)}', space=vmem, size = 0x12000, scoped, tag = 'internal scratch']
  #allocation2 [shape = 'f32[16,32]{1,0:T(8,128)}', space=vmem, size = 0x2000, scoped, tag = 'scratch operand']
  %s0 = inlined_call_operand.vmem [shape: bf16[16,32], index: 0, kind: input, shape index: {}]
  %s1 = inlined_call_operand.vmem [shape: bf16[32,32], index: 1, kind: input, shape index: {}]
  %s2 = inlined_call_operand.vmem [shape: f32[1,32], index: 2, kind: input, shape index: {}]
  %s3 = inlined_call_operand.vmem [shape: bf16[16,32], index: 3, kind: output, shape index: {}]
  %s4 = sld [smem:[#allocation0]]
  $region30: #{seq2seq_transformer_forward.45} parent=0
    _
  %s6 = ssub.s32 1, %s4
  %s7 = scalar_select 0, %s6, %s4
  // Predicated region
  $region2: #{seq2seq_transformer_forward.45} parent=0 // pred_check
    _
  $region3: #{seq2seq_transformer_forward.45} parent=0 // pred_check_branch
    %9 = sbr.rel (0) target = $region5
  $region4: #{seq2seq_transformer_forward.45} parent=0 // pred_region
    _
  $region5: #{seq2seq_transformer_forward.45} parent=0 // pred_fallthru
    _
  // Predicated region
  $region6: #{seq2seq_transformer_forward.45} parent=0 // pred_check
    _
  $region7: #{seq2seq_transformer_forward.45} parent=0 // pred_check_branch
    %11 = sbr.rel (0) target = $region9
  $region8: #{seq2seq_transformer_forward.45} parent=0 // pred_region
    _
  $region9: #{seq2seq_transformer_forward.45} parent=0 // pred_fallthru
    _
  // Predicated region
  $region10: #{seq2seq_transformer_forward.45} parent=0 // pred_check
    _
  $region11: #{seq2seq_transformer_forward.45} parent=0 // pred_check_branch
    %13 = sbr.rel (0) target = $region13
  $region12: #{seq2seq_transformer_forward.45} parent=0 // pred_region
    _
  $region13: #{seq2seq_transformer_forward.45} parent=0 // pred_fallthru
    _
  %p15 = scmp.eq.s32.totalorder 0, 0
  // Predicated region
  $region14: #{seq2seq_transformer_forward.45} parent=0 // pred_check
    %p16 = pneg %p15
  $region15: #{seq2seq_transformer_forward.45} parent=0 // pred_check_branch
    %18 = sbr.rel (%p16) target = $region17
  $region16: #{seq2seq_transformer_forward.45} parent=0 // pred_region
    %vm19 = vcmask 261120
    %20 = vst.msk [vmem:[#allocation2] sm:$0xff] %vm19, 0.0
    %21 = vst.msk [vmem:[#allocation2 + $0x8] sm:$0xff] %vm19, 0.0
  $region17: #{seq2seq_transformer_forward.45} parent=0 // pred_fallthru
    _
  %v22 = vld [vmem:[#allocation2] sm:$0xff]
  %v23 = vld [vmem:[#allocation2 + $0x8] sm:$0xff]
  %v24 = vld [vmem:[%s0] sm:$0xf]
  %v25 = vld [vmem:[%s0 + $0x4] sm:$0xf]
  %v26 = vld [vmem:[%s1] sm:$0xf]
  %v27 = vld [vmem:[%s1 + $0x4] sm:$0xf]
  %v28 = vld [vmem:[%s1 + $0x8] sm:$0xf]
  %v29 = vld [vmem:[%s1 + $0xc] sm:$0xf]
  %v32 = vunpack.c.l.b16 %v24
  %v33 = vunpack.c.l.b16 %v25
  %v34 = vpack.c.b16 %v33, %v32
  %v39 = vunpack.c.l.b16 %v26
  %v40 = vunpack.c.l.b16 %v27
  %v41 = vunpack.c.l.b16 %v28
  %v42 = vunpack.c.l.b16 %v29
  %v43 = vpack.c.b16 %v40, %v39
  %v44 = vpack.c.b16 %v42, %v41
  %vm47 = vcmask 261120
  %v49 = vsel %vm47, %v34, 0
  %51 = vmatprep.subr.bf16.mxu0 0
  %52 = vmatpush1.bf16.msra.mxu0 0
  %53 = vmatprep.subr.bf16.mxu0 0
  %54 = vmatpush1.bf16.msra.mxu0 0
  %55 = vmatprep.subr.bf16.mxu0 0
  %56 = vmatpush1.bf16.msra.mxu0 0
  %57 = vmatprep.subr.bf16.mxu0 0
  %58 = vmatpush1.bf16.msra.mxu0 0
  %59 = vmatprep.subr.bf16.mxu0 0
  %60 = vmatpush1.bf16.msra.mxu0 0
  %61 = vmatprep.subr.bf16.mxu0 0
  %62 = vmatpush1.bf16.msra.mxu0 0
  %63 = vmatprep.subr.bf16.mxu0 0
  %64 = vmatpush1.bf16.msra.mxu0 %v44
  %65 = vmatprep.subr.bf16.mxu0 0
  %66 = vmatpush1.bf16.msra.mxu0 %v43
  %67 = vmatprep.subr.bf16.mxu0 0
  %68 = vmatpush2.bf16.msra.mxu0 0
  %69 = vmatprep.subr.bf16.mxu0 0
  %70 = vmatpush2.bf16.msra.mxu0 0
  %71 = vmatprep.subr.bf16.mxu0 0
  %72 = vmatpush2.bf16.msra.mxu0 0
  %73 = vmatprep.subr.bf16.mxu0 0
  %74 = vmatpush2.bf16.msra.mxu0 0
  %75 = vmatprep.subr.bf16.mxu0 0
  %76 = vmatpush2.bf16.msra.mxu0 0
  %77 = vmatprep.subr.bf16.mxu0 0
  %78 = vmatpush2.bf16.msra.mxu0 0
  %79 = vmatprep.subr.bf16.mxu0 0
  %80 = vmatpush2.bf16.msra.mxu0 0
  %81 = vmatprep.subr.bf16.mxu0 0
  %82 = vmatpush2.bf16.msra.mxu0 0
  %83 = vmatprep.mubr.bf16.mxu0 0
  %84 = vmatmul.mubr.bf16.gmra.mxu0 %v49
  %v85 = vpop.f32.mrf.mxu0
  %v86 = vadd.f32 0.0, %v85
  %v87 = vpop.f32.mrf.mxu0
  %v88 = vpop.f32.mrf.mxu0
  %v89 = vadd.f32 0.0, %v88
  %v90 = vpop.f32.mrf.mxu0
  %91 = vdwg.mxu0
  %v92 = vadd.f32 %v22, %v86
  %v93 = vadd.f32 %v23, %v89
  %94 = vst.msk [vmem:[#allocation2] sm:$0xff] %vm47, %v92
  %95 = vst.msk [vmem:[#allocation2 + $0x8] sm:$0xff] %vm47, %v93
  // Predicated region
  $region18: #{seq2seq_transformer_forward.45} parent=0 // pred_check
    %p96 = pneg %p15
  $region19: #{seq2seq_transformer_forward.45} parent=0 // pred_check_branch
    %98 = sbr.rel (%p96) target = $region21
  $region20: #{seq2seq_transformer_forward.45} parent=0 // pred_region
    %v99 = vld [vmem:[#allocation2] sm:$0xff]
    %v100 = vld [vmem:[#allocation2 + $0x8] sm:$0xff]
    %v101 = vld [vmem:[%s2] sm:$0x1]
    %v103 = vlaneseq
    %v104 = vshrl.u32 %v103, 7
    %v105 = vsub.s32 0, %v104
    %v106 = vrot.slane %v101, %v105
    %v108 = vadd.f32 %v99, %v106
    %v109 = vadd.f32 %v100, %v106
    %v110 = vpack.c.bf16 %v109, %v108
    %v112 = vunpack.c.l.b16 %v110
    %v113 = vunpack.c.h.b16 %v110
    %v114 = vpack.c.b16 %v112, %v112
    %v115 = vpack.c.b16 %v113, %v113
    %vm118 = vcmask 257024
    %119 = vst.msk [vmem:[%s3] sm:$0xf] %vm118, %v114
    %120 = vst.msk [vmem:[%s3 + $0x4] sm:$0xf] %vm118, %v115
  $region21: #{seq2seq_transformer_forward.45} parent=0 // pred_fallthru
    _
  // Predicated region
  $region22: #{seq2seq_transformer_forward.45} parent=0 // pred_check
    _
  $region23: #{seq2seq_transformer_forward.45} parent=0 // pred_check_branch
    %122 = sbr.rel (0) target = $region25
  $region24: #{seq2seq_transformer_forward.45} parent=0 // pred_region
    _
  $region25: #{seq2seq_transformer_forward.45} parent=0 // pred_fallthru
    _
  // Predicated region
  $region26: #{seq2seq_transformer_forward.45} parent=0 // pred_check
    _
  $region27: #{seq2seq_transformer_forward.45} parent=0 // pred_check_branch
    %124 = sbr.rel (0) target = $region29
  $region28: #{seq2seq_transformer_forward.45} parent=0 // pred_region
    _
  $region29: #{seq2seq_transformer_forward.45} parent=0 // pred_fallthru
    _

// kernel: seq2seq_transformer_forward.44
$region0: #{seq2seq_transformer_forward.44}
  #allocation0 [shape = 'u32[]', space=smem, size = 0x4, offset = 0x4, fixed_abs, tag = 'smem constant byte address 0x4 - core index']
  #allocation1 [shape = 'u32[144,128]{1,0:T(1,128)}', space=vmem, size = 0x12000, scoped, tag = 'internal scratch']
  #allocation2 [shape = 'f32[16,32]{1,0:T(8,128)}', space=vmem, size = 0x2000, scoped, tag = 'scratch operand']
  %s0 = inlined_call_operand.vmem [shape: bf16[16,32], index: 0, kind: input, shape index: {}]
  %s1 = inlined_call_operand.vmem [shape: bf16[32,32], index: 1, kind: input, shape index: {}]
  %s2 = inlined_call_operand.vmem [shape: f32[1,32], index: 2, kind: input, shape index: {}]
  %s3 = inlined_call_operand.vmem [shape: bf16[16,32], index: 3, kind: input, shape index: {}]
  %s4 = inlined_call_operand.vmem [shape: f32[1,32], index: 4, kind: input, shape index: {}]
  %s5 = inlined_call_operand.vmem [shape: f32[1,32], index: 5, kind: input, shape index: {}]
  %s6 = inlined_call_operand.vmem [shape: bf16[16,32], index: 6, kind: output, shape index: {}]
  %s7 = sld [smem:[#allocation0]]
  $region42: #{seq2seq_transformer_forward.44} parent=0
    _
  %s9 = ssub.s32 1, %s7
  %s10 = scalar_select 0, %s9, %s7
  // Predicated region
  $region2: #{seq2seq_transformer_forward.44} parent=0 // pred_check
    _
  $region3: #{seq2seq_transformer_forward.44} parent=0 // pred_check_branch
    %12 = sbr.rel (0) target = $region5
  $region4: #{seq2seq_transformer_forward.44} parent=0 // pred_region
    _
  $region5: #{seq2seq_transformer_forward.44} parent=0 // pred_fallthru
    _
  // Predicated region
  $region6: #{seq2seq_transformer_forward.44} parent=0 // pred_check
    _
  $region7: #{seq2seq_transformer_forward.44} parent=0 // pred_check_branch
    %14 = sbr.rel (0) target = $region9
  $region8: #{seq2seq_transformer_forward.44} parent=0 // pred_region
    _
  $region9: #{seq2seq_transformer_forward.44} parent=0 // pred_fallthru
    _
  // Predicated region
  $region10: #{seq2seq_transformer_forward.44} parent=0 // pred_check
    _
  $region11: #{seq2seq_transformer_forward.44} parent=0 // pred_check_branch
    %16 = sbr.rel (0) target = $region13
  $region12: #{seq2seq_transformer_forward.44} parent=0 // pred_region
    _
  $region13: #{seq2seq_transformer_forward.44} parent=0 // pred_fallthru
    _
  // Predicated region
  $region14: #{seq2seq_transformer_forward.44} parent=0 // pred_check
    _
  $region15: #{seq2seq_transformer_forward.44} parent=0 // pred_check_branch
    %18 = sbr.rel (0) target = $region17
  $region16: #{seq2seq_transformer_forward.44} parent=0 // pred_region
    _
  $region17: #{seq2seq_transformer_forward.44} parent=0 // pred_fallthru
    _
  // Predicated region
  $region18: #{seq2seq_transformer_forward.44} parent=0 // pred_check
    _
  $region19: #{seq2seq_transformer_forward.44} parent=0 // pred_check_branch
    %20 = sbr.rel (0) target = $region21
  $region20: #{seq2seq_transformer_forward.44} parent=0 // pred_region
    _
  $region21: #{seq2seq_transformer_forward.44} parent=0 // pred_fallthru
    _
  // Predicated region
  $region22: #{seq2seq_transformer_forward.44} parent=0 // pred_check
    _
  $region23: #{seq2seq_transformer_forward.44} parent=0 // pred_check_branch
    %22 = sbr.rel (0) target = $region25
  $region24: #{seq2seq_transformer_forward.44} parent=0 // pred_region
    _
  $region25: #{seq2seq_transformer_forward.44} parent=0 // pred_fallthru
    _
  %p24 = scmp.eq.s32.totalorder 0, 0
  // Predicated region
  $region26: #{seq2seq_transformer_forward.44} parent=0 // pred_check
    %p25 = pneg %p24
  $region27: #{seq2seq_transformer_forward.44} parent=0 // pred_check_branch
    %27 = sbr.rel (%p25) target = $region29
  $region28: #{seq2seq_transformer_forward.44} parent=0 // pred_region
    %vm28 = vcmask 261120
    %29 = vst.msk [vmem:[#allocation2] sm:$0xff] %vm28, 0.0
    %30 = vst.msk [vmem:[#allocation2 + $0x8] sm:$0xff] %vm28, 0.0
  $region29: #{seq2seq_transformer_forward.44} parent=0 // pred_fallthru
    _
  %v31 = vld [vmem:[#allocation2] sm:$0xff]
  %v32 = vld [vmem:[#allocation2 + $0x8] sm:$0xff]
  %v33 = vld [vmem:[%s0] sm:$0xf]
  %v34 = vld [vmem:[%s0 + $0x4] sm:$0xf]
  %v35 = vld [vmem:[%s1] sm:$0xf]
  %v36 = vld [vmem:[%s1 + $0x4] sm:$0xf]
  %v37 = vld [vmem:[%s1 + $0x8] sm:$0xf]
  %v38 = vld [vmem:[%s1 + $0xc] sm:$0xf]
  %v41 = vunpack.c.l.b16 %v33
  %v42 = vunpack.c.l.b16 %v34
  %v43 = vpack.c.b16 %v42, %v41
  %v48 = vunpack.c.l.b16 %v35
  %v49 = vunpack.c.l.b16 %v36
  %v50 = vunpack.c.l.b16 %v37
  %v51 = vunpack.c.l.b16 %v38
  %v52 = vpack.c.b16 %v49, %v48
  %v53 = vpack.c.b16 %v51, %v50
  %vm56 = vcmask 261120
  %v58 = vsel %vm56, %v43, 0
  %60 = vmatprep.subr.bf16.mxu0 0
  %61 = vmatpush1.bf16.msra.mxu0 0
  %62 = vmatprep.subr.bf16.mxu0 0
  %63 = vmatpush1.bf16.msra.mxu0 0
  %64 = vmatprep.subr.bf16.mxu0 0
  %65 = vmatpush1.bf16.msra.mxu0 0
  %66 = vmatprep.subr.bf16.mxu0 0
  %67 = vmatpush1.bf16.msra.mxu0 0
  %68 = vmatprep.subr.bf16.mxu0 0
  %69 = vmatpush1.bf16.msra.mxu0 0
  %70 = vmatprep.subr.bf16.mxu0 0
  %71 = vmatpush1.bf16.msra.mxu0 0
  %72 = vmatprep.subr.bf16.mxu0 0
  %73 = vmatpush1.bf16.msra.mxu0 %v53
  %74 = vmatprep.subr.bf16.mxu0 0
  %75 = vmatpush1.bf16.msra.mxu0 %v52
  %76 = vmatprep.subr.bf16.mxu0 0
  %77 = vmatpush2.bf16.msra.mxu0 0
  %78 = vmatprep.subr.bf16.mxu0 0
  %79 = vmatpush2.bf16.msra.mxu0 0
  %80 = vmatprep.subr.bf16.mxu0 0
  %81 = vmatpush2.bf16.msra.mxu0 0
  %82 = vmatprep.subr.bf16.mxu0 0
  %83 = vmatpush2.bf16.msra.mxu0 0
  %84 = vmatprep.subr.bf16.mxu0 0
  %85 = vmatpush2.bf16.msra.mxu0 0
  %86 = vmatprep.subr.bf16.mxu0 0
  %87 = vmatpush2.bf16.msra.mxu0 0
  %88 = vmatprep.subr.bf16.mxu0 0
  %89 = vmatpush2.bf16.msra.mxu0 0
  %90 = vmatprep.subr.bf16.mxu0 0
  %91 = vmatpush2.bf16.msra.mxu0 0
  %92 = vmatprep.mubr.bf16.mxu0 0
  %93 = vmatmul.mubr.bf16.gmra.mxu0 %v58
  %v94 = vpop.f32.mrf.mxu0
  %v95 = vadd.f32 0.0, %v94
  %v96 = vpop.f32.mrf.mxu0
  %v97 = vpop.f32.mrf.mxu0
  %v98 = vadd.f32 0.0, %v97
  %v99 = vpop.f32.mrf.mxu0
  %100 = vdwg.mxu0
  %v101 = vadd.f32 %v31, %v95
  %v102 = vadd.f32 %v32, %v98
  %103 = vst.msk [vmem:[#allocation2] sm:$0xff] %vm56, %v101
  %104 = vst.msk [vmem:[#allocation2 + $0x8] sm:$0xff] %vm56, %v102
  // Predicated region
  $region30: #{seq2seq_transformer_forward.44} parent=0 // pred_check
    %p105 = pneg %p24
  $region31: #{seq2seq_transformer_forward.44} parent=0 // pred_check_branch
    %107 = sbr.rel (%p105) target = $region33
  $region32: #{seq2seq_transformer_forward.44} parent=0 // pred_region
    %v108 = vld [vmem:[#allocation2] sm:$0xff]
    %v109 = vld [vmem:[#allocation2 + $0x8] sm:$0xff]
    %v110 = vld [vmem:[%s2] sm:$0x1]
    %v112 = vlaneseq
    %v113 = vshrl.u32 %v112, 7
    %v114 = vsub.s32 0, %v113
    %v115 = vrot.slane %v110, %v114
    %v117 = vadd.f32 %v108, %v115
    %v118 = vadd.f32 %v109, %v115
    %v119 = vld [vmem:[%s3] sm:$0xf]
    %v120 = vld [vmem:[%s3 + $0x4] sm:$0xf]
    %v121 = vunpack.c.l.bf16 %v119
    %v122 = vunpack.c.l.bf16 %v120
    %v123 = vadd.f32 %v117, %v121
    %v124 = vadd.f32 %v118, %v122
    %v125 = vsel %vm56, %v123, 0.0
    %126 = vadd.xlane.f32.xlu0 %v125
    %v127 = vpop.xlane.xlu0 %126
    %v128 = vsel %vm56, %v124, 0.0
    %129 = vadd.xlane.f32.xlu0 %v128
    %v130 = vpop.xlane.xlu0 %129
    %v131 = vrcp.pop 32.0
    %v132 = vmul.f32 %v127, %v131
    %v133 = vmul.f32 %v130, %v131
    %v134 = vsub.f32 %v123, %v132
    %v135 = vsub.f32 %v124, %v133
    %v136 = vmul.f32 %v134, %v134
    %v137 = vmul.f32 %v135, %v135
    %v138 = vsel %vm56, %v136, 0.0
    %139 = vadd.xlane.f32.xlu0 %v138
    %v140 = vpop.xlane.xlu0 %139
    %v141 = vsel %vm56, %v137, 0.0
    %142 = vadd.xlane.f32.xlu0 %v141
    %v143 = vpop.xlane.xlu0 %142
    %v144 = vmul.f32 %v140, %v131
    %v145 = vmul.f32 %v143, %v131
    %v146 = vadd.f32 %v144, 1e-05
    %v147 = vadd.f32 %v145, 1e-05
    %v148 = vrsqrt.pop %v146
    %v149 = vrsqrt.pop %v147
    %v150 = vmul.f32 %v134, %v148
    %v151 = vmul.f32 %v135, %v149
    %v152 = vld [vmem:[%s4] sm:$0x1]
    %v154 = vlaneseq
    %v155 = vshrl.u32 %v154, 7
    %v156 = vsub.s32 0, %v155
    %v157 = vrot.slane %v152, %v156
    %v159 = vmul.f32 %v150, %v157
    %v160 = vmul.f32 %v151, %v157
    %v161 = vld [vmem:[%s5] sm:$0x1]
    %v163 = vlaneseq
    %v164 = vshrl.u32 %v163, 7
    %v165 = vsub.s32 0, %v164
    %v166 = vrot.slane %v161, %v165
    %v168 = vadd.f32 %v159, %v166
    %v169 = vadd.f32 %v160, %v166
    %v170 = vpack.c.bf16 %v169, %v168
    %v172 = vunpack.c.l.b16 %v170
    %v173 = vunpack.c.h.b16 %v170
    %v174 = vpack.c.b16 %v172, %v172
    %v175 = vpack.c.b16 %v173, %v173
    %vm178 = vcmask 257024
    %179 = vst.msk [vmem:[%s6] sm:$0xf] %vm178, %v174
    %180 = vst.msk [vmem:[%s6 + $0x4] sm:$0xf] %vm178, %v175
  $region33: #{seq2seq_transformer_forward.44} parent=0 // pred_fallthru
    _
  // Predicated region
  $region34: #{seq2seq_transformer_forward.44} parent=0 // pred_check
    _
  $region35: #{seq2seq_transformer_forward.44} parent=0 // pred_check_branch
    %182 = sbr.rel (0) target = $region37
  $region36: #{seq2seq_transformer_forward.44} parent=0 // pred_region
    _
  $region37: #{seq2seq_transformer_forward.44} parent=0 // pred_fallthru
    _
  // Predicated region
  $region38: #{seq2seq_transformer_forward.44} parent=0 // pred_check
    _
  $region39: #{seq2seq_transformer_forward.44} parent=0 // pred_check_branch
    %184 = sbr.rel (0) target = $region41
  $region40: #{seq2seq_transformer_forward.44} parent=0 // pred_region
    _
  $region41: #{seq2seq_transformer_forward.44} parent=0 // pred_fallthru
    _

// kernel: seq2seq_transformer_forward.43
$region0: #{seq2seq_transformer_forward.43}
  #allocation0 [shape = 'u32[]', space=smem, size = 0x4, offset = 0x4, fixed_abs, tag = 'smem constant byte address 0x4 - core index']
  #allocation1 [shape = 'u32[144,128]{1,0:T(1,128)}', space=vmem, size = 0x12000, scoped, tag = 'internal scratch']
  %s0 = inlined_call_operand.vmem [shape: bf16[2,8,3,32], index: 0, kind: input, shape index: {}]
  %s1 = inlined_call_operand.vmem [shape: f32[8,8], index: 1, kind: input, shape index: {}]
  %s2 = inlined_call_operand.vmem [shape: f32[2,1,8], index: 2, kind: input, shape index: {}]
  %s3 = inlined_call_operand.vmem [shape: bf16[2,8,32], index: 3, kind: output, shape index: {}]
  %s4 = sld [smem:[#allocation0]]
  $region45: #{seq2seq_transformer_forward.43} parent=0
    _
  %s6 = ssub.s32 1, %s4
  %s7 = scalar_select 0, %s6, %s4
  loop: start=0, step=1, limit=4
  $region2: #{seq2seq_transformer_forward.43} parent=0 // loop_pre_header
    _
  $region3: #{seq2seq_transformer_forward.43} parent=0 // loop_header
    %s9 = sphi 0, %s13
    %p10 = scmp.ge.s32.totalorder %s9, 4
    %s19 = sphi 0, %s21
    %s22 = sphi 0, %s19
    %s23 = sphi 0, %s22
    %s39 = sphi 0, %s23
    %s43 = sphi 0, %s43
    %s45 = sphi 0, %s43
    %s46 = sphi 0, %s45
    %s60 = sphi 0, %s46
    %s66 = sphi 0, %s68
    %s69 = sphi 0, %s66
    %s70 = sphi 0, %s69
    %s86 = sphi 0, %s70
    %s92 = sphi 0, %s94
    %s95 = sphi 0, %s92
    %s96 = sphi 0, %s95
    %s112 = sphi 0, %s96
  $region4: #{seq2seq_transformer_forward.43} parent=0 // loop_header_branch
    %12 = sbr.rel (%p10) target = $region8
  $region5: #{seq2seq_transformer_forward.43} parent=0 // loop_body
    %s14 = ssub.s32 %s9, 1
    %s15 = ssub.s32 %s9, 2
    %s16 = sadd.s32 %s9, 1
    %s17 = ssub.s32 %s9, %s16
    %p18 = scmp.eq.s32.totalorder %s17, 0
    %s20 = sadd.s32 %s19, 1
    %s21 = scalar_select %p18, %s19, %s20
    %p24 = pneg %p18
    %p25 = scmp.eq.s32.totalorder %s9, 1
    %p26 = por %p24, %p25
    %p27 = scmp.ne.s32.totalorder %s19, %s22
    %p28 = scmp.eq.s32.totalorder %s9, 0
    %p29 = por %p27, %p28
    %p30 = scmp.ne.s32.totalorder %s19, %s22
    %p31 = scmp.eq.s32.totalorder %s14, 1
    %p32 = por %p30, %p31
    %p33 = scmp.ne.s32.totalorder %s22, %s23
    %p34 = scmp.eq.s32.totalorder %s14, 0
    %p35 = por %p33, %p34
    %p36 = scmp.ne.s32.totalorder %s22, %s23
    %p37 = scmp.eq.s32.totalorder %s15, 1
    %p38 = por %p36, %p37
    %p40 = scmp.ne.s32.totalorder %s23, %s39
    %p41 = scmp.eq.s32.totalorder %s15, 0
    %p42 = por %p40, %p41
    %s44 = sadd.s32 %s43, 1
    %p47 = scmp.eq.s32.totalorder %s9, 1
    %p48 = scmp.ne.s32.totalorder %s43, %s45
    %p49 = scmp.eq.s32.totalorder %s9, 0
    %p50 = por %p48, %p49
    %p51 = scmp.ne.s32.totalorder %s43, %s45
    %p52 = scmp.eq.s32.totalorder %s14, 1
    %p53 = por %p51, %p52
    %p54 = scmp.ne.s32.totalorder %s45, %s46
    %p55 = scmp.eq.s32.totalorder %s14, 0
    %p56 = por %p54, %p55
    %p57 = scmp.ne.s32.totalorder %s45, %s46
    %p58 = scmp.eq.s32.totalorder %s15, 1
    %p59 = por %p57, %p58
    %p61 = scmp.ne.s32.totalorder %s46, %s60
    %p62 = scmp.eq.s32.totalorder %s15, 0
    %p63 = por %p61, %p62
    %s64 = ssub.s32 %s9, %s16
    %p65 = scmp.eq.s32.totalorder %s64, 0
    %s67 = sadd.s32 %s66, 1
    %s68 = scalar_select %p65, %s66, %s67
    %p71 = pneg %p65
    %p72 = scmp.eq.s32.totalorder %s9, 1
    %p73 = por %p71, %p72
    %p74 = scmp.ne.s32.totalorder %s66, %s69
    %p75 = scmp.eq.s32.totalorder %s9, 0
    %p76 = por %p74, %p75
    %p77 = scmp.ne.s32.totalorder %s66, %s69
    %p78 = scmp.eq.s32.totalorder %s14, 1
    %p79 = por %p77, %p78
    %p80 = scmp.ne.s32.totalorder %s69, %s70
    %p81 = scmp.eq.s32.totalorder %s14, 0
    %p82 = por %p80, %p81
    %p83 = scmp.ne.s32.totalorder %s69, %s70
    %p84 = scmp.eq.s32.totalorder %s15, 1
    %p85 = por %p83, %p84
    %p87 = scmp.ne.s32.totalorder %s70, %s86
    %p88 = scmp.eq.s32.totalorder %s15, 0
    %p89 = por %p87, %p88
    %s90 = ssub.s32 %s9, %s16
    %p91 = scmp.eq.s32.totalorder %s90, 0
    %s93 = sadd.s32 %s92, 1
    %s94 = scalar_select %p91, %s92, %s93
    %p97 = pneg %p91
    %p98 = scmp.eq.s32.totalorder %s9, 1
    %p99 = por %p97, %p98
    %p100 = scmp.ne.s32.totalorder %s92, %s95
    %p101 = scmp.eq.s32.totalorder %s9, 0
    %p102 = por %p100, %p101
    %p103 = scmp.ne.s32.totalorder %s92, %s95
    %p104 = scmp.eq.s32.totalorder %s14, 1
    %p105 = por %p103, %p104
    %p106 = scmp.ne.s32.totalorder %s95, %s96
    %p107 = scmp.eq.s32.totalorder %s14, 0
    %p108 = por %p106, %p107
    %p109 = scmp.ne.s32.totalorder %s95, %s96
    %p110 = scmp.eq.s32.totalorder %s15, 1
    %p111 = por %p109, %p110
    %p113 = scmp.ne.s32.totalorder %s96, %s112
    %p114 = scmp.eq.s32.totalorder %s15, 0
    %p115 = por %p113, %p114
    %p116 = scmp.le.s32.totalorder 1, %s9
    %p117 = scmp.lt.s32.totalorder %s9, 3
    %p118 = pnand %p116, %p117
    %p119 = pneg %p118
    // Predicated region
    $region9: #{seq2seq_transformer_forward.43} parent=5 // pred_check
      _
    $region10: #{seq2seq_transformer_forward.43} parent=5 // pred_check_branch
      %121 = sbr.rel (%p118) target = $region12
    $region11: #{seq2seq_transformer_forward.43} parent=5 // pred_region
      %s122 = ssub.s32 %s9, 1
      // Predicated region
      $region13: #{seq2seq_transformer_forward.43} parent=11 // pred_check
        %p123 = pneg %p56
      $region14: #{seq2seq_transformer_forward.43} parent=11 // pred_check_branch
        %125 = sbr.rel (%p123) target = $region16
      $region15: #{seq2seq_transformer_forward.43} parent=11 // pred_region
        _
      $region16: #{seq2seq_transformer_forward.43} parent=11 // pred_fallthru
        _
    $region12: #{seq2seq_transformer_forward.43} parent=5 // pred_fallthru
      _
    %p126 = scmp.lt.s32.totalorder %s9, 2
    // Predicated region
    $region17: #{seq2seq_transformer_forward.43} parent=5 // pred_check
      %p127 = pneg %p126
    $region18: #{seq2seq_transformer_forward.43} parent=5 // pred_check_branch
      %129 = sbr.rel (%p127) target = $region20
    $region19: #{seq2seq_transformer_forward.43} parent=5 // pred_region
      // Predicated region
      $region21: #{seq2seq_transformer_forward.43} parent=19 // pred_check
        %p130 = pneg %p29
      $region22: #{seq2seq_transformer_forward.43} parent=19 // pred_check_branch
        %132 = sbr.rel (%p130) target = $region24
      $region23: #{seq2seq_transformer_forward.43} parent=19 // pred_region
        %p133 = scmp.lt.s32.totalorder %s9, 1
        %s134 = scalar_select %p133, %s9, 1
        %s135 = smul.addr %s134, 8
        %s136 = smul.addr %s135, 2
        %s137 = scalar_lea.vmem %s0, %s136
      $region24: #{seq2seq_transformer_forward.43} parent=19 // pred_fallthru
        _
      // Predicated region
      $region25: #{seq2seq_transformer_forward.43} parent=19 // pred_check
        %p138 = pneg %p76
      $region26: #{seq2seq_transformer_forward.43} parent=19 // pred_check_branch
        %140 = sbr.rel (%p138) target = $region28
      $region27: #{seq2seq_transformer_forward.43} parent=19 // pred_region
        %p141 = scmp.lt.s32.totalorder %s9, 1
        %s142 = scalar_select %p141, %s9, 1
        %s143 = scalar_lea.vmem %s2, %s142
      $region28: #{seq2seq_transformer_forward.43} parent=19 // pred_fallthru
        _
    $region20: #{seq2seq_transformer_forward.43} parent=5 // pred_fallthru
      _
    %p144 = scmp.le.s32.totalorder 1, %s9
    %p145 = scmp.lt.s32.totalorder %s9, 3
    %p146 = pnand %p144, %p145
    %p147 = pneg %p146
    // Predicated region
    $region29: #{seq2seq_transformer_forward.43} parent=5 // pred_check
      _
    $region30: #{seq2seq_transformer_forward.43} parent=5 // pred_check_branch
      %149 = sbr.rel (%p146) target = $region32
    $region31: #{seq2seq_transformer_forward.43} parent=5 // pred_region
      %s150 = ssub.s32 %s9, 1
      %p151 = scmp.lt.s32.totalorder %s14, 1
      %s152 = scalar_select %p151, %s14, 1
      %s153 = smul.addr %s152, 8
      %s154 = smul.addr %s153, 2
      %s155 = scalar_lea.vmem %s0, %s154
      %p156 = pneg %p35
      %p157 = pneg %p32
      %p158 = pneg %p56
      %p159 = pneg %p53
      %p160 = scmp.lt.s32.totalorder %s14, 1
      %s161 = scalar_select %p160, %s14, 1
      %s162 = scalar_lea.vmem %s2, %s161
      %p163 = pneg %p82
      %p164 = pneg %p79
      %p165 = pneg %p108
      %p166 = pneg %p105
      %p167 = scmp.lt.s32.totalorder %s14, 1
      %s168 = scalar_select %p167, %s14, 1
      %s169 = smul.addr %s168, 4
      %s170 = scalar_lea.vmem %s3, %s169
      %p171 = scmp.lt.s32.totalorder %s14, 1
      %s172 = scalar_select %p171, %s14, 1
      %s173 = smul.addr %s172, 8
      %s174 = smul.addr %s173, 2
      %s175 = scalar_lea.vmem %s0, %s174
      %p176 = scmp.lt.s32.totalorder %s14, 1
      %s177 = scalar_select %p176, %s14, 1
      %s178 = scalar_lea.vmem %s2, %s177
      %p179 = scmp.lt.s32.totalorder %s14, 1
      %s180 = scalar_select %p179, %s14, 1
      %s181 = smul.addr %s180, 4
      %s182 = scalar_lea.vmem %s3, %s181
      %v184 = vld [vmem:[%s175] sm:$0x3]
      %v185 = vld [vmem:[%s175 + $0x2] sm:$0x3]
      %v186 = vld [vmem:[%s175 + $0x4] sm:$0x3]
      %v187 = vld [vmem:[%s175 + $0x6] sm:$0x3]
      %v188 = vld [vmem:[%s175 + $0x8] sm:$0x3]
      %v189 = vld [vmem:[%s175 + $0xa] sm:$0x3]
      %v190 = vld [vmem:[%s175 + $0xc] sm:$0x3]
      %v191 = vld [vmem:[%s175 + $0xe] sm:$0x3]
      %v192 = vld [vmem:[%s1] sm:$0xff]
      %v193 = vld [vmem:[%s178] sm:$0x1]
      %v203 = vunpack.c.l.s4 1983009808
      %v204 = vunpack.c.0.s8 %v203
      %v205 = vlaneseq
      %v206 = vshrl.u32 %v205, 7
      %v207 = vsub.s32 %v204, %v206
      %v208 = vrot.slane %v184, %v207
      %v210 = vunpack.c.l.s4 1983009808
      %v211 = vunpack.c.0.s8 %v210
      %v212 = vlaneseq
      %v213 = vshrl.u32 %v212, 7
      %v214 = vsub.s32 %v211, %v213
      %v215 = vrot.slane %v185, %v214
      %v217 = vunpack.c.l.s4 1983009808
      %v218 = vunpack.c.0.s8 %v217
      %v219 = vlaneseq
      %v220 = vshrl.u32 %v219, 7
      %v221 = vsub.s32 %v218, %v220
      %v222 = vrot.slane %v186, %v221
      %v224 = vunpack.c.l.s4 1983009808
      %v225 = vunpack.c.0.s8 %v224
      %v226 = vlaneseq
      %v227 = vshrl.u32 %v226, 7
      %v228 = vsub.s32 %v225, %v227
      %v229 = vrot.slane %v187, %v228
      %v231 = vunpack.c.l.s4 1983009808
      %v232 = vunpack.c.0.s8 %v231
      %v233 = vlaneseq
      %v234 = vshrl.u32 %v233, 7
      %v235 = vsub.s32 %v232, %v234
      %v236 = vrot.slane %v188, %v235
      %v238 = vunpack.c.l.s4 1983009808
      %v239 = vunpack.c.0.s8 %v238
      %v240 = vlaneseq
      %v241 = vshrl.u32 %v240, 7
      %v242 = vsub.s32 %v239, %v241
      %v243 = vrot.slane %v189, %v242
      %v245 = vunpack.c.l.s4 1983009808
      %v246 = vunpack.c.0.s8 %v245
      %v247 = vlaneseq
      %v248 = vshrl.u32 %v247, 7
      %v249 = vsub.s32 %v246, %v248
      %v250 = vrot.slane %v190, %v249
      %v252 = vunpack.c.l.s4 1983009808
      %v253 = vunpack.c.0.s8 %v252
      %v254 = vlaneseq
      %v255 = vshrl.u32 %v254, 7
      %v256 = vsub.s32 %v253, %v255
      %v257 = vrot.slane %v191, %v256
      %v258 = vunpack.c.l.b16 %v208
      %v259 = vunpack.c.l.b16 %v215
      %v260 = vunpack.c.l.b16 %v222
      %v261 = vunpack.c.l.b16 %v229
      %v262 = vunpack.c.l.b16 %v236
      %v263 = vunpack.c.l.b16 %v243
      %v264 = vunpack.c.l.b16 %v250
      %v265 = vunpack.c.l.b16 %v257
      %v266 = vrot.slane %v259, 7
      %vm267 = vcmask 1041409
      %v268 = vsel %vm267, %v266, %v258
      %v269 = vrot.slane %v260, 6
      %vm270 = vcmask 1042434
      %v271 = vsel %vm270, %v269, %v268
      %v272 = vrot.slane %v261, 5
      %vm273 = vcmask 1043459
      %v274 = vsel %vm273, %v272, %v271
      %v275 = vrot.slane %v262, 4
      %vm276 = vcmask 1044484
      %v277 = vsel %vm276, %v275, %v274
      %v278 = vrot.slane %v263, 3
      %vm279 = vcmask 1045509
      %v280 = vsel %vm279, %v278, %v277
      %v281 = vrot.slane %v264, 2
      %vm282 = vcmask 1046534
      %v283 = vsel %vm282, %v281, %v280
      %v284 = vrot.slane %v265, 1
      %vm285 = vcmask 1047559
      %v286 = vsel %vm285, %v284, %v283
      %v287 = vpack.c.b16 %v286, %v286
      %v288 = vrot.slane %v258, 1
      %v289 = vsel %vm267, %v259, %v288
      %v290 = vrot.slane %v260, 7
      %v291 = vsel %vm270, %v290, %v289
      %v292 = vrot.slane %v261, 6
      %v293 = vsel %vm273, %v292, %v291
      %v294 = vrot.slane %v262, 5
      %v295 = vsel %vm276, %v294, %v293
      %v296 = vrot.slane %v263, 4
      %v297 = vsel %vm279, %v296, %v295
      %v298 = vrot.slane %v264, 3
      %v299 = vsel %vm282, %v298, %v297
      %v300 = vrot.slane %v265, 2
      %v301 = vsel %vm285, %v300, %v299
      %v302 = vpack.c.b16 %v301, %v301
      %vm303 = vcmask 64512
      %v305 = vsel %vm303, %v287, 0
      %v308 = vsel %vm303, %v302, 0
      %310 = vmatprep.subr.bf16.mxu0 0
      %311 = vmatpush1.bf16.xpose.msra.mxu0 0
      %312 = vmatprep.subr.bf16.mxu0 0
      %313 = vmatpush1.bf16.xpose.msra.mxu0 0
      %314 = vmatprep.subr.bf16.mxu0 0
      %315 = vmatpush1.bf16.xpose.msra.mxu0 0
      %316 = vmatprep.subr.bf16.mxu0 0
      %317 = vmatpush1.bf16.xpose.msra.mxu0 0
      %318 = vmatprep.subr.bf16.mxu0 0
      %319 = vmatpush1.bf16.xpose.msra.mxu0 0
      %320 = vmatprep.subr.bf16.mxu0 0
      %321 = vmatpush1.bf16.xpose.msra.mxu0 0
      %322 = vmatprep.subr.bf16.mxu0 0
      %323 = vmatpush1.bf16.xpose.msra.mxu0 0
      %324 = vmatprep.subr.bf16.mxu0 0
      %325 = vmatpush1.bf16.xpose.msra.mxu0 %v308
      %326 = vmatprep.subr.bf16.mxu0 0
      %327 = vmatpush2.bf16.xpose.msra.mxu0 0
      %328 = vmatprep.subr.bf16.mxu0 0
      %329 = vmatpush2.bf16.xpose.msra.mxu0 0
      %330 = vmatprep.subr.bf16.mxu0 0
      %331 = vmatpush2.bf16.xpose.msra.mxu0 0
      %332 = vmatprep.subr.bf16.mxu0 0
      %333 = vmatpush2.bf16.xpose.msra.mxu0 0
      %334 = vmatprep.subr.bf16.mxu0 0
      %335 = vmatpush2.bf16.xpose.msra.mxu0 0
      %336 = vmatprep.subr.bf16.mxu0 0
      %337 = vmatpush2.bf16.xpose.msra.mxu0 0
      %338 = vmatprep.subr.bf16.mxu0 0
      %339 = vmatpush2.bf16.xpose.msra.mxu0 0
      %340 = vmatprep.subr.bf16.mxu0 0
      %341 = vmatpush2.bf16.xpose.msra.mxu0 0
      %342 = vmatprep.mubr.bf16.mxu0 0
      %343 = vmatmul.mubr.bf16.gmra.mxu0 %v305
      %v344 = vpop.f32.mrf.mxu0
      %v345 = vadd.f32 0.0, %v344
      %v346 = vpop.f32.mrf.mxu0
      %v347 = vpop.f32.mrf.mxu0
      %v348 = vpop.f32.mrf.mxu0
      %349 = vdwg.mxu0
      %v350 = vmul.f32 %v345, 0.35355338
      %v351 = vadd.f32 %v350, %v192
      %v353 = vlaneseq
      %v354 = vshrl.u32 %v353, 7
      %v355 = vsub.s32 0, %v354
      %v356 = vrot.slane %v193, %v355
      %v358 = vadd.f32 %v351, %v356
      %v359 = vsel %vm303, %v358, -inf
      %360 = vmax.xlane.f32.xlu0 %v359
      %v361 = vpop.xlane.xlu0 %360
      %v362 = vsub.f32 %v358, %v361
      %v363 = vmul.f32 %v362, 1.442695
      %v364 = vpow.pop %v363
      %v365 = vsel %vm303, %v364, 0.0
      %366 = vadd.xlane.f32.xlu0 %v365
      %v367 = vpop.xlane.xlu0 %366
      %v368 = vpack.c.bf16 %v364, %v364
      %v369 = vrot.slane %v258, 2
      %v370 = vrot.slane %v259, 1
      %v371 = vsel %vm267, %v370, %v369
      %v372 = vsel %vm270, %v260, %v371
      %v373 = vrot.slane %v261, 7
      %v374 = vsel %vm273, %v373, %v372
      %v375 = vrot.slane %v262, 6
      %v376 = vsel %vm276, %v375, %v374
      %v377 = vrot.slane %v263, 5
      %v378 = vsel %vm279, %v377, %v376
      %v379 = vrot.slane %v264, 4
      %v380 = vsel %vm282, %v379, %v378
      %v381 = vrot.slane %v265, 3
      %v382 = vsel %vm285, %v381, %v380
      %v383 = vpack.c.b16 %v382, %v382
      %v385 = vsel %vm303, %v368, 0
      %vm387 = vcmask 1043456
      %v389 = vsel %vm387, %v383, 0
      %391 = vmatprep.subr.bf16.mxu0 0
      %392 = vmatpush1.bf16.msra.mxu0 0
      %393 = vmatprep.subr.bf16.mxu0 0
      %394 = vmatpush1.bf16.msra.mxu0 0
      %395 = vmatprep.subr.bf16.mxu0 0
      %396 = vmatpush1.bf16.msra.mxu0 0
      %397 = vmatprep.subr.bf16.mxu0 0
      %398 = vmatpush1.bf16.msra.mxu0 0
      %399 = vmatprep.subr.bf16.mxu0 0
      %400 = vmatpush1.bf16.msra.mxu0 0
      %401 = vmatprep.subr.bf16.mxu0 0
      %402 = vmatpush1.bf16.msra.mxu0 0
      %403 = vmatprep.subr.bf16.mxu0 0
      %404 = vmatpush1.bf16.msra.mxu0 0
      %405 = vmatprep.subr.bf16.mxu0 0
      %406 = vmatpush1.bf16.msra.mxu0 %v389
      %407 = vmatprep.subr.bf16.mxu0 0
      %408 = vmatpush2.bf16.msra.mxu0 0
      %409 = vmatprep.subr.bf16.mxu0 0
      %410 = vmatpush2.bf16.msra.mxu0 0
      %411 = vmatprep.subr.bf16.mxu0 0
      %412 = vmatpush2.bf16.msra.mxu0 0
      %413 = vmatprep.subr.bf16.mxu0 0
      %414 = vmatpush2.bf16.msra.mxu0 0
      %415 = vmatprep.subr.bf16.mxu0 0
      %416 = vmatpush2.bf16.msra.mxu0 0
      %417 = vmatprep.subr.bf16.mxu0 0
      %418 = vmatpush2.bf16.msra.mxu0 0
      %419 = vmatprep.subr.bf16.mxu0 0
      %420 = vmatpush2.bf16.msra.mxu0 0
      %421 = vmatprep.subr.bf16.mxu0 0
      %422 = vmatpush2.bf16.msra.mxu0 0
      %423 = vmatprep.mubr.bf16.mxu0 0
      %424 = vmatmul.mubr.bf16.gmra.mxu0 %v385
      %v425 = vpop.f32.mrf.mxu0
      %v426 = vadd.f32 0.0, %v425
      %v427 = vpop.f32.mrf.mxu0
      %v428 = vpop.f32.mrf.mxu0
      %v429 = vpop.f32.mrf.mxu0
      %430 = vdwg.mxu0
      %v431 = vrcp.pop %v367
      %v432 = vmul.f32 %v426, %v431
      %433 = vrot.lane.b32.xlu0 %v287, 120
      %v434 = vpop.permute.xlu0 %433
      %435 = vrot.lane.b32.xlu0 %v302, 120
      %v436 = vpop.permute.xlu0 %435
      %v438 = vsel %vm303, %v434, 0
      %v441 = vsel %vm303, %v436, 0
      %443 = vmatprep.subr.bf16.mxu0 0
      %444 = vmatpush1.bf16.xpose.msra.mxu0 0
      %445 = vmatprep.subr.bf16.mxu0 0
      %446 = vmatpush1.bf16.xpose.msra.mxu0 0
      %447 = vmatprep.subr.bf16.mxu0 0
      %448 = vmatpush1.bf16.xpose.msra.mxu0 0
      %449 = vmatprep.subr.bf16.mxu0 0
      %450 = vmatpush1.bf16.xpose.msra.mxu0 0
      %451 = vmatprep.subr.bf16.mxu0 0
      %452 = vmatpush1.bf16.xpose.msra.mxu0 0
      %453 = vmatprep.subr.bf16.mxu0 0
      %454 = vmatpush1.bf16.xpose.msra.mxu0 0
      %455 = vmatprep.subr.bf16.mxu0 0
      %456 = vmatpush1.bf16.xpose.msra.mxu0 0
      %457 = vmatprep.subr.bf16.mxu0 0
      %458 = vmatpush1.bf16.xpose.msra.mxu0 %v441
      %459 = vmatprep.subr.bf16.mxu0 0
      %460 = vmatpush2.bf16.xpose.msra.mxu0 0
      %461 = vmatprep.subr.bf16.mxu0 0
      %462 = vmatpush2.bf16.xpose.msra.mxu0 0
      %463 = vmatprep.subr.bf16.mxu0 0
      %464 = vmatpush2.bf16.xpose.msra.mxu0 0
      %465 = vmatprep.subr.bf16.mxu0 0
      %466 = vmatpush2.bf16.xpose.msra.mxu0 0
      %467 = vmatprep.subr.bf16.mxu0 0
      %468 = vmatpush2.bf16.xpose.msra.mxu0 0
      %469 = vmatprep.subr.bf16.mxu0 0
      %470 = vmatpush2.bf16.xpose.msra.mxu0 0
      %471 = vmatprep.subr.bf16.mxu0 0
      %472 = vmatpush2.bf16.xpose.msra.mxu0 0
      %473 = vmatprep.subr.bf16.mxu0 0
      %474 = vmatpush2.bf16.xpose.msra.mxu0 0
      %475 = vmatprep.mubr.bf16.mxu0 0
      %476 = vmatmul.mubr.bf16.gmra.mxu0 %v438
      %v477 = vpop.f32.mrf.mxu0
      %v478 = vadd.f32 0.0, %v477
      %v479 = vpop.f32.mrf.mxu0
      %v480 = vpop.f32.mrf.mxu0
      %v481 = vpop.f32.mrf.mxu0
      %482 = vdwg.mxu0
      %v483 = vmul.f32 %v478, 0.35355338
      %v484 = vadd.f32 %v483, %v192
      %v485 = vadd.f32 %v484, %v356
      %v486 = vsel %vm303, %v485, -inf
      %487 = vmax.xlane.f32.xlu0 %v486
      %v488 = vpop.xlane.xlu0 %487
      %v489 = vsub.f32 %v485, %v488
      %v490 = vmul.f32 %v489, 1.442695
      %v491 = vpow.pop %v490
      %v492 = vsel %vm303, %v491, 0.0
      %493 = vadd.xlane.f32.xlu0 %v492
      %v494 = vpop.xlane.xlu0 %493
      %v495 = vpack.c.bf16 %v491, %v491
      %496 = vrot.lane.b32.xlu0 %v383, 120
      %v497 = vpop.permute.xlu0 %496
      %v499 = vsel %vm303, %v495, 0
      %v502 = vsel %vm387, %v497, 0
      %504 = vmatprep.subr.bf16.mxu0 0
      %505 = vmatpush1.bf16.msra.mxu0 0
      %506 = vmatprep.subr.bf16.mxu0 0
      %507 = vmatpush1.bf16.msra.mxu0 0
      %508 = vmatprep.subr.bf16.mxu0 0
      %509 = vmatpush1.bf16.msra.mxu0 0
      %510 = vmatprep.subr.bf16.mxu0 0
      %511 = vmatpush1.bf16.msra.mxu0 0
      %512 = vmatprep.subr.bf16.mxu0 0
      %513 = vmatpush1.bf16.msra.mxu0 0
      %514 = vmatprep.subr.bf16.mxu0 0
      %515 = vmatpush1.bf16.msra.mxu0 0
      %516 = vmatprep.subr.bf16.mxu0 0
      %517 = vmatpush1.bf16.msra.mxu0 0
      %518 = vmatprep.subr.bf16.mxu0 0
      %519 = vmatpush1.bf16.msra.mxu0 %v502
      %520 = vmatprep.subr.bf16.mxu0 0
      %521 = vmatpush2.bf16.msra.mxu0 0
      %522 = vmatprep.subr.bf16.mxu0 0
      %523 = vmatpush2.bf16.msra.mxu0 0
      %524 = vmatprep.subr.bf16.mxu0 0
      %525 = vmatpush2.bf16.msra.mxu0 0
      %526 = vmatprep.subr.bf16.mxu0 0
      %527 = vmatpush2.bf16.msra.mxu0 0
      %528 = vmatprep.subr.bf16.mxu0 0
      %529 = vmatpush2.bf16.msra.mxu0 0
      %530 = vmatprep.subr.bf16.mxu0 0
      %531 = vmatpush2.bf16.msra.mxu0 0
      %532 = vmatprep.subr.bf16.mxu0 0
      %533 = vmatpush2.bf16.msra.mxu0 0
      %534 = vmatprep.subr.bf16.mxu0 0
      %535 = vmatpush2.bf16.msra.mxu0 0
      %536 = vmatprep.mubr.bf16.mxu0 0
      %537 = vmatmul.mubr.bf16.gmra.mxu0 %v499
      %v538 = vpop.f32.mrf.mxu0
      %v539 = vadd.f32 0.0, %v538
      %v540 = vpop.f32.mrf.mxu0
      %v541 = vpop.f32.mrf.mxu0
      %v542 = vpop.f32.mrf.mxu0
      %543 = vdwg.mxu0
      %v544 = vrcp.pop %v494
      %v545 = vmul.f32 %v539, %v544
      %546 = vrot.lane.b32.xlu0 %v287, 112
      %v547 = vpop.permute.xlu0 %546
      %548 = vrot.lane.b32.xlu0 %v302, 112
      %v549 = vpop.permute.xlu0 %548
      %v551 = vsel %vm303, %v547, 0
      %v554 = vsel %vm303, %v549, 0
      %556 = vmatprep.subr.bf16.mxu0 0
      %557 = vmatpush1.bf16.xpose.msra.mxu0 0
      %558 = vmatprep.subr.bf16.mxu0 0
      %559 = vmatpush1.bf16.xpose.msra.mxu0 0
      %560 = vmatprep.subr.bf16.mxu0 0
      %561 = vmatpush1.bf16.xpose.msra.mxu0 0
      %562 = vmatprep.subr.bf16.mxu0 0
      %563 = vmatpush1.bf16.xpose.msra.mxu0 0
      %564 = vmatprep.subr.bf16.mxu0 0
      %565 = vmatpush1.bf16.xpose.msra.mxu0 0
      %566 = vmatprep.subr.bf16.mxu0 0
      %567 = vmatpush1.bf16.xpose.msra.mxu0 0
      %568 = vmatprep.subr.bf16.mxu0 0
      %569 = vmatpush1.bf16.xpose.msra.mxu0 0
      %570 = vmatprep.subr.bf16.mxu0 0
      %571 = vmatpush1.bf16.xpose.msra.mxu0 %v554
      %572 = vmatprep.subr.bf16.mxu0 0
      %573 = vmatpush2.bf16.xpose.msra.mxu0 0
      %574 = vmatprep.subr.bf16.mxu0 0
      %575 = vmatpush2.bf16.xpose.msra.mxu0 0
      %576 = vmatprep.subr.bf16.mxu0 0
      %577 = vmatpush2.bf16.xpose.msra.mxu0 0
      %578 = vmatprep.subr.bf16.mxu0 0
      %579 = vmatpush2.bf16.xpose.msra.mxu0 0
      %580 = vmatprep.subr.bf16.mxu0 0
      %581 = vmatpush2.bf16.xpose.msra.mxu0 0
      %582 = vmatprep.subr.bf16.mxu0 0
      %583 = vmatpush2.bf16.xpose.msra.mxu0 0
      %584 = vmatprep.subr.bf16.mxu0 0
      %585 = vmatpush2.bf16.xpose.msra.mxu0 0
      %586 = vmatprep.subr.bf16.mxu0 0
      %587 = vmatpush2.bf16.xpose.msra.mxu0 0
      %588 = vmatprep.mubr.bf16.mxu0 0
      %589 = vmatmul.mubr.bf16.gmra.mxu0 %v551
      %v590 = vpop.f32.mrf.mxu0
      %v591 = vadd.f32 0.0, %v590
      %v592 = vpop.f32.mrf.mxu0
      %v593 = vpop.f32.mrf.mxu0
      %v594 = vpop.f32.mrf.mxu0
      %595 = vdwg.mxu0
      %v596 = vmul.f32 %v591, 0.35355338
      %v597 = vadd.f32 %v596, %v192
      %v598 = vadd.f32 %v597, %v356
      %v599 = vsel %vm303, %v598, -inf
      %600 = vmax.xlane.f32.xlu0 %v599
      %v601 = vpop.xlane.xlu0 %600
      %v602 = vsub.f32 %v598, %v601
      %v603 = vmul.f32 %v602, 1.442695
      %v604 = vpow.pop %v603
      %v605 = vsel %vm303, %v604, 0.0
      %606 = vadd.xlane.f32.xlu0 %v605
      %v607 = vpop.xlane.xlu0 %606
      %v608 = vpack.c.bf16 %v604, %v604
      %609 = vrot.lane.b32.xlu0 %v383, 112
      %v610 = vpop.permute.xlu0 %609
      %v612 = vsel %vm303, %v608, 0
      %v615 = vsel %vm387, %v610, 0
      %617 = vmatprep.subr.bf16.mxu0 0
      %618 = vmatpush1.bf16.msra.mxu0 0
      %619 = vmatprep.subr.bf16.mxu0 0
      %620 = vmatpush1.bf16.msra.mxu0 0
      %621 = vmatprep.subr.bf16.mxu0 0
      %622 = vmatpush1.bf16.msra.mxu0 0
      %623 = vmatprep.subr.bf16.mxu0 0
      %624 = vmatpush1.bf16.msra.mxu0 0
      %625 = vmatprep.subr.bf16.mxu0 0
      %626 = vmatpush1.bf16.msra.mxu0 0
      %627 = vmatprep.subr.bf16.mxu0 0
      %628 = vmatpush1.bf16.msra.mxu0 0
      %629 = vmatprep.subr.bf16.mxu0 0
      %630 = vmatpush1.bf16.msra.mxu0 0
      %631 = vmatprep.subr.bf16.mxu0 0
      %632 = vmatpush1.bf16.msra.mxu0 %v615
      %633 = vmatprep.subr.bf16.mxu0 0
      %634 = vmatpush2.bf16.msra.mxu0 0
      %635 = vmatprep.subr.bf16.mxu0 0
      %636 = vmatpush2.bf16.msra.mxu0 0
      %637 = vmatprep.subr.bf16.mxu0 0
      %638 = vmatpush2.bf16.msra.mxu0 0
      %639 = vmatprep.subr.bf16.mxu0 0
      %640 = vmatpush2.bf16.msra.mxu0 0
      %641 = vmatprep.subr.bf16.mxu0 0
      %642 = vmatpush2.bf16.msra.mxu0 0
      %643 = vmatprep.subr.bf16.mxu0 0
      %644 = vmatpush2.bf16.msra.mxu0 0
      %645 = vmatprep.subr.bf16.mxu0 0
      %646 = vmatpush2.bf16.msra.mxu0 0
      %647 = vmatprep.subr.bf16.mxu0 0
      %648 = vmatpush2.bf16.msra.mxu0 0
      %649 = vmatprep.mubr.bf16.mxu0 0
      %650 = vmatmul.mubr.bf16.gmra.mxu0 %v612
      %v651 = vpop.f32.mrf.mxu0
      %v652 = vadd.f32 0.0, %v651
      %v653 = vpop.f32.mrf.mxu0
      %v654 = vpop.f32.mrf.mxu0
      %v655 = vpop.f32.mrf.mxu0
      %656 = vdwg.mxu0
      %v657 = vrcp.pop %v607
      %v658 = vmul.f32 %v652, %v657
      %659 = vrot.lane.b32.xlu0 %v287, 104
      %v660 = vpop.permute.xlu0 %659
      %661 = vrot.lane.b32.xlu0 %v302, 104
      %v662 = vpop.permute.xlu0 %661
      %v664 = vsel %vm303, %v660, 0
      %v667 = vsel %vm303, %v662, 0
      %669 = vmatprep.subr.bf16.mxu0 0
      %670 = vmatpush1.bf16.xpose.msra.mxu0 0
      %671 = vmatprep.subr.bf16.mxu0 0
      %672 = vmatpush1.bf16.xpose.msra.mxu0 0
      %673 = vmatprep.subr.bf16.mxu0 0
      %674 = vmatpush1.bf16.xpose.msra.mxu0 0
      %675 = vmatprep.subr.bf16.mxu0 0
      %676 = vmatpush1.bf16.xpose.msra.mxu0 0
      %677 = vmatprep.subr.bf16.mxu0 0
      %678 = vmatpush1.bf16.xpose.msra.mxu0 0
      %679 = vmatprep.subr.bf16.mxu0 0
      %680 = vmatpush1.bf16.xpose.msra.mxu0 0
      %681 = vmatprep.subr.bf16.mxu0 0
      %682 = vmatpush1.bf16.xpose.msra.mxu0 0
      %683 = vmatprep.subr.bf16.mxu0 0
      %684 = vmatpush1.bf16.xpose.msra.mxu0 %v667
      %685 = vmatprep.subr.bf16.mxu0 0
      %686 = vmatpush2.bf16.xpose.msra.mxu0 0
      %687 = vmatprep.subr.bf16.mxu0 0
      %688 = vmatpush2.bf16.xpose.msra.mxu0 0
      %689 = vmatprep.subr.bf16.mxu0 0
      %690 = vmatpush2.bf16.xpose.msra.mxu0 0
      %691 = vmatprep.subr.bf16.mxu0 0
      %692 = vmatpush2.bf16.xpose.msra.mxu0 0
      %693 = vmatprep.subr.bf16.mxu0 0
      %694 = vmatpush2.bf16.xpose.msra.mxu0 0
      %695 = vmatprep.subr.bf16.mxu0 0
      %696 = vmatpush2.bf16.xpose.msra.mxu0 0
      %697 = vmatprep.subr.bf16.mxu0 0
      %698 = vmatpush2.bf16.xpose.msra.mxu0 0
      %699 = vmatprep.subr.bf16.mxu0 0
      %700 = vmatpush2.bf16.xpose.msra.mxu0 0
      %701 = vmatprep.mubr.bf16.mxu0 0
      %702 = vmatmul.mubr.bf16.gmra.mxu0 %v664
      %v703 = vpop.f32.mrf.mxu0
      %v704 = vadd.f32 0.0, %v703
      %v705 = vpop.f32.mrf.mxu0
      %v706 = vpop.f32.mrf.mxu0
      %v707 = vpop.f32.mrf.mxu0
      %708 = vdwg.mxu0
      %v709 = vmul.f32 %v704, 0.35355338
      %v710 = vadd.f32 %v709, %v192
      %v711 = vadd.f32 %v710, %v356
      %v712 = vsel %vm303, %v711, -inf
      %713 = vmax.xlane.f32.xlu0 %v712
      %v714 = vpop.xlane.xlu0 %713
      %v715 = vsub.f32 %v711, %v714
      %v716 = vmul.f32 %v715, 1.442695
      %v717 = vpow.pop %v716
      %v718 = vsel %vm303, %v717, 0.0
      %719 = vadd.xlane.f32.xlu0 %v718
      %v720 = vpop.xlane.xlu0 %719
      %v721 = vpack.c.bf16 %v717, %v717
      %722 = vrot.lane.b32.xlu0 %v383, 104
      %v723 = vpop.permute.xlu0 %722
      %v725 = vsel %vm303, %v721, 0
      %v728 = vsel %vm387, %v723, 0
      %730 = vmatprep.subr.bf16.mxu0 0
      %731 = vmatpush1.bf16.msra.mxu0 0
      %732 = vmatprep.subr.bf16.mxu0 0
      %733 = vmatpush1.bf16.msra.mxu0 0
      %734 = vmatprep.subr.bf16.mxu0 0
      %735 = vmatpush1.bf16.msra.mxu0 0
      %736 = vmatprep.subr.bf16.mxu0 0
      %737 = vmatpush1.bf16.msra.mxu0 0
      %738 = vmatprep.subr.bf16.mxu0 0
      %739 = vmatpush1.bf16.msra.mxu0 0
      %740 = vmatprep.subr.bf16.mxu0 0
      %741 = vmatpush1.bf16.msra.mxu0 0
      %742 = vmatprep.subr.bf16.mxu0 0
      %743 = vmatpush1.bf16.msra.mxu0 0
      %744 = vmatprep.subr.bf16.mxu0 0
      %745 = vmatpush1.bf16.msra.mxu0 %v728
      %746 = vmatprep.subr.bf16.mxu0 0
      %747 = vmatpush2.bf16.msra.mxu0 0
      %748 = vmatprep.subr.bf16.mxu0 0
      %749 = vmatpush2.bf16.msra.mxu0 0
      %750 = vmatprep.subr.bf16.mxu0 0
      %751 = vmatpush2.bf16.msra.mxu0 0
      %752 = vmatprep.subr.bf16.mxu0 0
      %753 = vmatpush2.bf16.msra.mxu0 0
      %754 = vmatprep.subr.bf16.mxu0 0
      %755 = vmatpush2.bf16.msra.mxu0 0
      %756 = vmatprep.subr.bf16.mxu0 0
      %757 = vmatpush2.bf16.msra.mxu0 0
      %758 = vmatprep.subr.bf16.mxu0 0
      %759 = vmatpush2.bf16.msra.mxu0 0
      %760 = vmatprep.subr.bf16.mxu0 0
      %761 = vmatpush2.bf16.msra.mxu0 0
      %762 = vmatprep.mubr.bf16.mxu0 0
      %763 = vmatmul.mubr.bf16.gmra.mxu0 %v725
      %v764 = vpop.f32.mrf.mxu0
      %v765 = vadd.f32 0.0, %v764
      %v766 = vpop.f32.mrf.mxu0
      %v767 = vpop.f32.mrf.mxu0
      %v768 = vpop.f32.mrf.mxu0
      %769 = vdwg.mxu0
      %v770 = vrcp.pop %v720
      %v771 = vmul.f32 %v765, %v770
      %773 = vrot.lane.b32.xlu0 %v545, 8
      %v774 = vpop.permute.xlu0 %773
      %777 = vrot.lane.b32.xlu0 %v658, 16
      %v778 = vpop.permute.xlu0 %777
      %781 = vrot.lane.b32.xlu0 %v771, 24
      %v782 = vpop.permute.xlu0 %781
      %v784 = vsel %vm303, %v432, %v774
      %vm785 = vcmask 130048
      %v786 = vsel %vm785, %v784, %v778
      %vm787 = vcmask 195584
      %v788 = vsel %vm787, %v786, %v782
      %v789 = vpack.c.bf16 %v788, %v788
      %vm790 = vcmask 257024
      %791 = vst.msk [vmem:[%s182] sm:$0xf] %vm790, %v789
      %p792 = scmp.lt.s32.totalorder %s14, 1
      %s793 = scalar_select %p792, %s14, 1
      %s794 = smul.addr %s793, 4
      %s795 = scalar_lea.vmem %s3, %s794
      // Predicated region
      $region33: #{seq2seq_transformer_forward.43} parent=31 // pred_check
        %p796 = pneg %p105
      $region34: #{seq2seq_transformer_forward.43} parent=31 // pred_check_branch
        %798 = sbr.rel (%p796) target = $region36
      $region35: #{seq2seq_transformer_forward.43} parent=31 // pred_region
        _
      $region36: #{seq2seq_transformer_forward.43} parent=31 // pred_fallthru
        _
    $region32: #{seq2seq_transformer_forward.43} parent=5 // pred_fallthru
      _
    %p799 = scmp.le.s32.totalorder 2, %s9
    // Predicated region
    $region37: #{seq2seq_transformer_forward.43} parent=5 // pred_check
      %p800 = pneg %p799
    $region38: #{seq2seq_transformer_forward.43} parent=5 // pred_check_branch
      %802 = sbr.rel (%p800) target = $region40
    $region39: #{seq2seq_transformer_forward.43} parent=5 // pred_region
      %s803 = ssub.s32 %s9, 2
      // Predicated region
      $region41: #{seq2seq_transformer_forward.43} parent=39 // pred_check
        %p804 = pneg %p111
      $region42: #{seq2seq_transformer_forward.43} parent=39 // pred_check_branch
        %806 = sbr.rel (%p804) target = $region44
      $region43: #{seq2seq_transformer_forward.43} parent=39 // pred_region
        %p807 = scmp.lt.s32.totalorder %s15, 1
        %s808 = scalar_select %p807, %s15, 1
        %s809 = smul.addr %s808, 4
        %s810 = scalar_lea.vmem %s3, %s809
      $region44: #{seq2seq_transformer_forward.43} parent=39 // pred_fallthru
        _
    $region40: #{seq2seq_transformer_forward.43} parent=5 // pred_fallthru
      _
  $region6: #{seq2seq_transformer_forward.43} parent=0 // loop_footer
    %s13 = sadd.s32 1, %s9
  $region7: #{seq2seq_transformer_forward.43} parent=0 // loop_footer_branch
    %8 = sbr.rel target = $region3
  $region8: #{seq2seq_transformer_forward.43} parent=0 // loop_exit
    _

// kernel: seq2seq_transformer_forward.49
$region0: #{seq2seq_transformer_forward.49}
  #allocation0 [shape = 'u32[]', space=smem, size = 0x4, offset = 0x4, fixed_abs, tag = 'smem constant byte address 0x4 - core index']
  #allocation1 [shape = 'u32[144,128]{1,0:T(1,128)}', space=vmem, size = 0x12000, scoped, tag = 'internal scratch']
  #allocation2 [shape = 'f32[16,64]{1,0:T(8,128)}', space=vmem, size = 0x2000, scoped, tag = 'scratch operand']
  %s0 = inlined_call_operand.vmem [shape: bf16[16,32], index: 0, kind: input, shape index: {}]
  %s1 = inlined_call_operand.vmem [shape: bf16[32,64], index: 1, kind: input, shape index: {}]
  %s2 = inlined_call_operand.vmem [shape: f32[1,64], index: 2, kind: input, shape index: {}]
  %s3 = inlined_call_operand.vmem [shape: bf16[16,64], index: 3, kind: output, shape index: {}]
  %s4 = sld [smem:[#allocation0]]
  $region30: #{seq2seq_transformer_forward.49} parent=0
    _
  %s6 = ssub.s32 1, %s4
  %s7 = scalar_select 0, %s6, %s4
  // Predicated region
  $region2: #{seq2seq_transformer_forward.49} parent=0 // pred_check
    _
  $region3: #{seq2seq_transformer_forward.49} parent=0 // pred_check_branch
    %9 = sbr.rel (0) target = $region5
  $region4: #{seq2seq_transformer_forward.49} parent=0 // pred_region
    _
  $region5: #{seq2seq_transformer_forward.49} parent=0 // pred_fallthru
    _
  // Predicated region
  $region6: #{seq2seq_transformer_forward.49} parent=0 // pred_check
    _
  $region7: #{seq2seq_transformer_forward.49} parent=0 // pred_check_branch
    %11 = sbr.rel (0) target = $region9
  $region8: #{seq2seq_transformer_forward.49} parent=0 // pred_region
    _
  $region9: #{seq2seq_transformer_forward.49} parent=0 // pred_fallthru
    _
  // Predicated region
  $region10: #{seq2seq_transformer_forward.49} parent=0 // pred_check
    _
  $region11: #{seq2seq_transformer_forward.49} parent=0 // pred_check_branch
    %13 = sbr.rel (0) target = $region13
  $region12: #{seq2seq_transformer_forward.49} parent=0 // pred_region
    _
  $region13: #{seq2seq_transformer_forward.49} parent=0 // pred_fallthru
    _
  %p15 = scmp.eq.s32.totalorder 0, 0
  // Predicated region
  $region14: #{seq2seq_transformer_forward.49} parent=0 // pred_check
    %p16 = pneg %p15
  $region15: #{seq2seq_transformer_forward.49} parent=0 // pred_check_branch
    %18 = sbr.rel (%p16) target = $region17
  $region16: #{seq2seq_transformer_forward.49} parent=0 // pred_region
    %vm19 = vcmask 523264
    %20 = vst.msk [vmem:[#allocation2] sm:$0xff] %vm19, 0.0
    %21 = vst.msk [vmem:[#allocation2 + $0x8] sm:$0xff] %vm19, 0.0
  $region17: #{seq2seq_transformer_forward.49} parent=0 // pred_fallthru
    _
  %v22 = vld [vmem:[#allocation2] sm:$0xff]
  %v23 = vld [vmem:[#allocation2 + $0x8] sm:$0xff]
  %v24 = vld [vmem:[%s0] sm:$0xf]
  %v25 = vld [vmem:[%s0 + $0x4] sm:$0xf]
  %v26 = vld [vmem:[%s1] sm:$0xf]
  %v27 = vld [vmem:[%s1 + $0x4] sm:$0xf]
  %v28 = vld [vmem:[%s1 + $0x8] sm:$0xf]
  %v29 = vld [vmem:[%s1 + $0xc] sm:$0xf]
  %v32 = vunpack.c.l.b16 %v24
  %v33 = vunpack.c.l.b16 %v25
  %v34 = vpack.c.b16 %v33, %v32
  %v39 = vunpack.c.l.b16 %v26
  %v40 = vunpack.c.l.b16 %v27
  %v41 = vunpack.c.l.b16 %v28
  %v42 = vunpack.c.l.b16 %v29
  %v43 = vpack.c.b16 %v40, %v39
  %v44 = vpack.c.b16 %v42, %v41
  %vm47 = vcmask 261120
  %v49 = vsel %vm47, %v34, 0
  %51 = vmatprep.subr.bf16.mxu0 0
  %52 = vmatpush1.bf16.msra.mxu0 0
  %53 = vmatprep.subr.bf16.mxu0 0
  %54 = vmatpush1.bf16.msra.mxu0 0
  %55 = vmatprep.subr.bf16.mxu0 0
  %56 = vmatpush1.bf16.msra.mxu0 0
  %57 = vmatprep.subr.bf16.mxu0 0
  %58 = vmatpush1.bf16.msra.mxu0 0
  %59 = vmatprep.subr.bf16.mxu0 0
  %60 = vmatpush1.bf16.msra.mxu0 0
  %61 = vmatprep.subr.bf16.mxu0 0
  %62 = vmatpush1.bf16.msra.mxu0 0
  %63 = vmatprep.subr.bf16.mxu0 0
  %64 = vmatpush1.bf16.msra.mxu0 %v44
  %65 = vmatprep.subr.bf16.mxu0 0
  %66 = vmatpush1.bf16.msra.mxu0 %v43
  %67 = vmatprep.subr.bf16.mxu0 0
  %68 = vmatpush2.bf16.msra.mxu0 0
  %69 = vmatprep.subr.bf16.mxu0 0
  %70 = vmatpush2.bf16.msra.mxu0 0
  %71 = vmatprep.subr.bf16.mxu0 0
  %72 = vmatpush2.bf16.msra.mxu0 0
  %73 = vmatprep.subr.bf16.mxu0 0
  %74 = vmatpush2.bf16.msra.mxu0 0
  %75 = vmatprep.subr.bf16.mxu0 0
  %76 = vmatpush2.bf16.msra.mxu0 0
  %77 = vmatprep.subr.bf16.mxu0 0
  %78 = vmatpush2.bf16.msra.mxu0 0
  %79 = vmatprep.subr.bf16.mxu0 0
  %80 = vmatpush2.bf16.msra.mxu0 0
  %81 = vmatprep.subr.bf16.mxu0 0
  %82 = vmatpush2.bf16.msra.mxu0 0
  %83 = vmatprep.mubr.bf16.mxu0 0
  %84 = vmatmul.mubr.bf16.gmra.mxu0 %v49
  %v85 = vpop.f32.mrf.mxu0
  %v86 = vadd.f32 0.0, %v85
  %v87 = vpop.f32.mrf.mxu0
  %v88 = vpop.f32.mrf.mxu0
  %v89 = vadd.f32 0.0, %v88
  %v90 = vpop.f32.mrf.mxu0
  %91 = vdwg.mxu0
  %v92 = vadd.f32 %v22, %v86
  %v93 = vadd.f32 %v23, %v89
  %vm94 = vcmask 523264
  %95 = vst.msk [vmem:[#allocation2] sm:$0xff] %vm94, %v92
  %96 = vst.msk [vmem:[#allocation2 + $0x8] sm:$0xff] %vm94, %v93
  // Predicated region
  $region18: #{seq2seq_transformer_forward.49} parent=0 // pred_check
    %p97 = pneg %p15
  $region19: #{seq2seq_transformer_forward.49} parent=0 // pred_check_branch
    %99 = sbr.rel (%p97) target = $region21
  $region20: #{seq2seq_transformer_forward.49} parent=0 // pred_region
    %v100 = vld [vmem:[#allocation2] sm:$0xff]
    %v101 = vld [vmem:[#allocation2 + $0x8] sm:$0xff]
    %v102 = vld [vmem:[%s2] sm:$0x1]
    %v104 = vlaneseq
    %v105 = vshrl.u32 %v104, 7
    %v106 = vsub.s32 0, %v105
    %v107 = vrot.slane %v102, %v106
    %v109 = vadd.f32 %v100, %v107
    %v110 = vadd.f32 %v101, %v107
    %v111 = vmax.f32 %v109, 0.0
    %v112 = vmax.f32 %v110, 0.0
    %v113 = vpack.c.bf16 %v112, %v111
    %v115 = vunpack.c.l.b16 %v113
    %v116 = vunpack.c.h.b16 %v113
    %v117 = vpack.c.b16 %v115, %v115
    %v118 = vpack.c.b16 %v116, %v116
    %vm121 = vcmask 519168
    %122 = vst.msk [vmem:[%s3] sm:$0xf] %vm121, %v117
    %123 = vst.msk [vmem:[%s3 + $0x4] sm:$0xf] %vm121, %v118
  $region21: #{seq2seq_transformer_forward.49} parent=0 // pred_fallthru
    _
  // Predicated region
  $region22: #{seq2seq_transformer_forward.49} parent=0 // pred_check
    _
  $region23: #{seq2seq_transformer_forward.49} parent=0 // pred_check_branch
    %125 = sbr.rel (0) target = $region25
  $region24: #{seq2seq_transformer_forward.49} parent=0 // pred_region
    _
  $region25: #{seq2seq_transformer_forward.49} parent=0 // pred_fallthru
    _
  // Predicated region
  $region26: #{seq2seq_transformer_forward.49} parent=0 // pred_check
    _
  $region27: #{seq2seq_transformer_forward.49} parent=0 // pred_check_branch
    %127 = sbr.rel (0) target = $region29
  $region28: #{seq2seq_transformer_forward.49} parent=0 // pred_region
    _
  $region29: #{seq2seq_transformer_forward.49} parent=0 // pred_fallthru
    _

// kernel: seq2seq_transformer_forward.50
$region0: #{seq2seq_transformer_forward.50}
  #allocation0 [shape = 'u32[]', space=smem, size = 0x4, offset = 0x4, fixed_abs, tag = 'smem constant byte address 0x4 - core index']
  #allocation1 [shape = 'u32[144,128]{1,0:T(1,128)}', space=vmem, size = 0x12000, scoped, tag = 'internal scratch']
  #allocation2 [shape = 'f32[16,32]{1,0:T(8,128)}', space=vmem, size = 0x2000, scoped, tag = 'scratch operand']
  %s0 = inlined_call_operand.vmem [shape: bf16[16,64], index: 0, kind: input, shape index: {}]
  %s1 = inlined_call_operand.vmem [shape: bf16[64,32], index: 1, kind: input, shape index: {}]
  %s2 = inlined_call_operand.vmem [shape: f32[1,32], index: 2, kind: input, shape index: {}]
  %s3 = inlined_call_operand.vmem [shape: bf16[16,32], index: 3, kind: input, shape index: {}]
  %s4 = inlined_call_operand.vmem [shape: f32[1,32], index: 4, kind: input, shape index: {}]
  %s5 = inlined_call_operand.vmem [shape: f32[1,32], index: 5, kind: input, shape index: {}]
  %s6 = inlined_call_operand.vmem [shape: bf16[16,32], index: 6, kind: output, shape index: {}]
  %s7 = sld [smem:[#allocation0]]
  $region42: #{seq2seq_transformer_forward.50} parent=0
    _
  %s9 = ssub.s32 1, %s7
  %s10 = scalar_select 0, %s9, %s7
  // Predicated region
  $region2: #{seq2seq_transformer_forward.50} parent=0 // pred_check
    _
  $region3: #{seq2seq_transformer_forward.50} parent=0 // pred_check_branch
    %12 = sbr.rel (0) target = $region5
  $region4: #{seq2seq_transformer_forward.50} parent=0 // pred_region
    _
  $region5: #{seq2seq_transformer_forward.50} parent=0 // pred_fallthru
    _
  // Predicated region
  $region6: #{seq2seq_transformer_forward.50} parent=0 // pred_check
    _
  $region7: #{seq2seq_transformer_forward.50} parent=0 // pred_check_branch
    %14 = sbr.rel (0) target = $region9
  $region8: #{seq2seq_transformer_forward.50} parent=0 // pred_region
    _
  $region9: #{seq2seq_transformer_forward.50} parent=0 // pred_fallthru
    _
  // Predicated region
  $region10: #{seq2seq_transformer_forward.50} parent=0 // pred_check
    _
  $region11: #{seq2seq_transformer_forward.50} parent=0 // pred_check_branch
    %16 = sbr.rel (0) target = $region13
  $region12: #{seq2seq_transformer_forward.50} parent=0 // pred_region
    _
  $region13: #{seq2seq_transformer_forward.50} parent=0 // pred_fallthru
    _
  // Predicated region
  $region14: #{seq2seq_transformer_forward.50} parent=0 // pred_check
    _
  $region15: #{seq2seq_transformer_forward.50} parent=0 // pred_check_branch
    %18 = sbr.rel (0) target = $region17
  $region16: #{seq2seq_transformer_forward.50} parent=0 // pred_region
    _
  $region17: #{seq2seq_transformer_forward.50} parent=0 // pred_fallthru
    _
  // Predicated region
  $region18: #{seq2seq_transformer_forward.50} parent=0 // pred_check
    _
  $region19: #{seq2seq_transformer_forward.50} parent=0 // pred_check_branch
    %20 = sbr.rel (0) target = $region21
  $region20: #{seq2seq_transformer_forward.50} parent=0 // pred_region
    _
  $region21: #{seq2seq_transformer_forward.50} parent=0 // pred_fallthru
    _
  // Predicated region
  $region22: #{seq2seq_transformer_forward.50} parent=0 // pred_check
    _
  $region23: #{seq2seq_transformer_forward.50} parent=0 // pred_check_branch
    %22 = sbr.rel (0) target = $region25
  $region24: #{seq2seq_transformer_forward.50} parent=0 // pred_region
    _
  $region25: #{seq2seq_transformer_forward.50} parent=0 // pred_fallthru
    _
  %p24 = scmp.eq.s32.totalorder 0, 0
  // Predicated region
  $region26: #{seq2seq_transformer_forward.50} parent=0 // pred_check
    %p25 = pneg %p24
  $region27: #{seq2seq_transformer_forward.50} parent=0 // pred_check_branch
    %27 = sbr.rel (%p25) target = $region29
  $region28: #{seq2seq_transformer_forward.50} parent=0 // pred_region
    %vm28 = vcmask 261120
    %29 = vst.msk [vmem:[#allocation2] sm:$0xff] %vm28, 0.0
    %30 = vst.msk [vmem:[#allocation2 + $0x8] sm:$0xff] %vm28, 0.0
  $region29: #{seq2seq_transformer_forward.50} parent=0 // pred_fallthru
    _
  %v31 = vld [vmem:[#allocation2] sm:$0xff]
  %v32 = vld [vmem:[#allocation2 + $0x8] sm:$0xff]
  %v33 = vld [vmem:[%s0] sm:$0xf]
  %v34 = vld [vmem:[%s0 + $0x4] sm:$0xf]
  %v35 = vld [vmem:[%s1] sm:$0xf]
  %v36 = vld [vmem:[%s1 + $0x4] sm:$0xf]
  %v37 = vld [vmem:[%s1 + $0x8] sm:$0xf]
  %v38 = vld [vmem:[%s1 + $0xc] sm:$0xf]
  %v39 = vld [vmem:[%s1 + $0x10] sm:$0xf]
  %v40 = vld [vmem:[%s1 + $0x14] sm:$0xf]
  %v41 = vld [vmem:[%s1 + $0x18] sm:$0xf]
  %v42 = vld [vmem:[%s1 + $0x1c] sm:$0xf]
  %v45 = vunpack.c.l.b16 %v33
  %v46 = vunpack.c.l.b16 %v34
  %v47 = vpack.c.b16 %v46, %v45
  %v56 = vunpack.c.l.b16 %v35
  %v57 = vunpack.c.l.b16 %v36
  %v58 = vunpack.c.l.b16 %v37
  %v59 = vunpack.c.l.b16 %v38
  %v60 = vunpack.c.l.b16 %v39
  %v61 = vunpack.c.l.b16 %v40
  %v62 = vunpack.c.l.b16 %v41
  %v63 = vunpack.c.l.b16 %v42
  %v64 = vpack.c.b16 %v57, %v56
  %v65 = vpack.c.b16 %v59, %v58
  %v66 = vpack.c.b16 %v61, %v60
  %v67 = vpack.c.b16 %v63, %v62
  %vm72 = vcmask 523264
  %v74 = vsel %vm72, %v47, 0
  %76 = vmatprep.subr.bf16.mxu0 0
  %77 = vmatpush1.bf16.msra.mxu0 0
  %78 = vmatprep.subr.bf16.mxu0 0
  %79 = vmatpush1.bf16.msra.mxu0 0
  %80 = vmatprep.subr.bf16.mxu0 0
  %81 = vmatpush1.bf16.msra.mxu0 0
  %82 = vmatprep.subr.bf16.mxu0 0
  %83 = vmatpush1.bf16.msra.mxu0 0
  %84 = vmatprep.subr.bf16.mxu0 0
  %85 = vmatpush1.bf16.msra.mxu0 %v67
  %86 = vmatprep.subr.bf16.mxu0 0
  %87 = vmatpush1.bf16.msra.mxu0 %v66
  %88 = vmatprep.subr.bf16.mxu0 0
  %89 = vmatpush1.bf16.msra.mxu0 %v65
  %90 = vmatprep.subr.bf16.mxu0 0
  %91 = vmatpush1.bf16.msra.mxu0 %v64
  %92 = vmatprep.subr.bf16.mxu0 0
  %93 = vmatpush2.bf16.msra.mxu0 0
  %94 = vmatprep.subr.bf16.mxu0 0
  %95 = vmatpush2.bf16.msra.mxu0 0
  %96 = vmatprep.subr.bf16.mxu0 0
  %97 = vmatpush2.bf16.msra.mxu0 0
  %98 = vmatprep.subr.bf16.mxu0 0
  %99 = vmatpush2.bf16.msra.mxu0 0
  %100 = vmatprep.subr.bf16.mxu0 0
  %101 = vmatpush2.bf16.msra.mxu0 0
  %102 = vmatprep.subr.bf16.mxu0 0
  %103 = vmatpush2.bf16.msra.mxu0 0
  %104 = vmatprep.subr.bf16.mxu0 0
  %105 = vmatpush2.bf16.msra.mxu0 0
  %106 = vmatprep.subr.bf16.mxu0 0
  %107 = vmatpush2.bf16.msra.mxu0 0
  %108 = vmatprep.mubr.bf16.mxu0 0
  %109 = vmatmul.mubr.bf16.gmra.mxu0 %v74
  %v110 = vpop.f32.mrf.mxu0
  %v111 = vadd.f32 0.0, %v110
  %v112 = vpop.f32.mrf.mxu0
  %v113 = vpop.f32.mrf.mxu0
  %v114 = vadd.f32 0.0, %v113
  %v115 = vpop.f32.mrf.mxu0
  %116 = vdwg.mxu0
  %v117 = vadd.f32 %v31, %v111
  %v118 = vadd.f32 %v32, %v114
  %vm119 = vcmask 261120
  %120 = vst.msk [vmem:[#allocation2] sm:$0xff] %vm119, %v117
  %121 = vst.msk [vmem:[#allocation2 + $0x8] sm:$0xff] %vm119, %v118
  // Predicated region
  $region30: #{seq2seq_transformer_forward.50} parent=0 // pred_check
    %p122 = pneg %p24
  $region31: #{seq2seq_transformer_forward.50} parent=0 // pred_check_branch
    %124 = sbr.rel (%p122) target = $region33
  $region32: #{seq2seq_transformer_forward.50} parent=0 // pred_region
    %v125 = vld [vmem:[#allocation2] sm:$0xff]
    %v126 = vld [vmem:[#allocation2 + $0x8] sm:$0xff]
    %v127 = vld [vmem:[%s2] sm:$0x1]
    %v129 = vlaneseq
    %v130 = vshrl.u32 %v129, 7
    %v131 = vsub.s32 0, %v130
    %v132 = vrot.slane %v127, %v131
    %v134 = vadd.f32 %v125, %v132
    %v135 = vadd.f32 %v126, %v132
    %v136 = vld [vmem:[%s3] sm:$0xf]
    %v137 = vld [vmem:[%s3 + $0x4] sm:$0xf]
    %v138 = vunpack.c.l.bf16 %v136
    %v139 = vunpack.c.l.bf16 %v137
    %v140 = vadd.f32 %v134, %v138
    %v141 = vadd.f32 %v135, %v139
    %v142 = vsel %vm119, %v140, 0.0
    %143 = vadd.xlane.f32.xlu0 %v142
    %v144 = vpop.xlane.xlu0 %143
    %v145 = vsel %vm119, %v141, 0.0
    %146 = vadd.xlane.f32.xlu0 %v145
    %v147 = vpop.xlane.xlu0 %146
    %v148 = vrcp.pop 32.0
    %v149 = vmul.f32 %v144, %v148
    %v150 = vmul.f32 %v147, %v148
    %v151 = vsub.f32 %v140, %v149
    %v152 = vsub.f32 %v141, %v150
    %v153 = vmul.f32 %v151, %v151
    %v154 = vmul.f32 %v152, %v152
    %v155 = vsel %vm119, %v153, 0.0
    %156 = vadd.xlane.f32.xlu0 %v155
    %v157 = vpop.xlane.xlu0 %156
    %v158 = vsel %vm119, %v154, 0.0
    %159 = vadd.xlane.f32.xlu0 %v158
    %v160 = vpop.xlane.xlu0 %159
    %v161 = vmul.f32 %v157, %v148
    %v162 = vmul.f32 %v160, %v148
    %v163 = vadd.f32 %v161, 1e-05
    %v164 = vadd.f32 %v162, 1e-05
    %v165 = vrsqrt.pop %v163
    %v166 = vrsqrt.pop %v164
    %v167 = vmul.f32 %v151, %v165
    %v168 = vmul.f32 %v152, %v166
    %v169 = vld [vmem:[%s4] sm:$0x1]
    %v171 = vlaneseq
    %v172 = vshrl.u32 %v171, 7
    %v173 = vsub.s32 0, %v172
    %v174 = vrot.slane %v169, %v173
    %v176 = vmul.f32 %v167, %v174
    %v177 = vmul.f32 %v168, %v174
    %v178 = vld [vmem:[%s5] sm:$0x1]
    %v180 = vlaneseq
    %v181 = vshrl.u32 %v180, 7
    %v182 = vsub.s32 0, %v181
    %v183 = vrot.slane %v178, %v182
    %v185 = vadd.f32 %v176, %v183
    %v186 = vadd.f32 %v177, %v183
    %v187 = vpack.c.bf16 %v186, %v185
    %v189 = vunpack.c.l.b16 %v187
    %v190 = vunpack.c.h.b16 %v187
    %v191 = vpack.c.b16 %v189, %v189
    %v192 = vpack.c.b16 %v190, %v190
    %vm195 = vcmask 257024
    %196 = vst.msk [vmem:[%s6] sm:$0xf] %vm195, %v191
    %197 = vst.msk [vmem:[%s6 + $0x4] sm:$0xf] %vm195, %v192
  $region33: #{seq2seq_transformer_forward.50} parent=0 // pred_fallthru
    _
  // Predicated region
  $region34: #{seq2seq_transformer_forward.50} parent=0 // pred_check
    _
  $region35: #{seq2seq_transformer_forward.50} parent=0 // pred_check_branch
    %199 = sbr.rel (0) target = $region37
  $region36: #{seq2seq_transformer_forward.50} parent=0 // pred_region
    _
  $region37: #{seq2seq_transformer_forward.50} parent=0 // pred_fallthru
    _
  // Predicated region
  $region38: #{seq2seq_transformer_forward.50} parent=0 // pred_check
    _
  $region39: #{seq2seq_transformer_forward.50} parent=0 // pred_check_branch
    %201 = sbr.rel (0) target = $region41
  $region40: #{seq2seq_transformer_forward.50} parent=0 // pred_region
    _
  $region41: #{seq2seq_transformer_forward.50} parent=0 // pred_fallthru
    _

// kernel: seq2seq_transformer_forward.60
$region0: #{seq2seq_transformer_forward.60}
  #allocation0 [shape = 'u32[]', space=smem, size = 0x4, offset = 0x4, fixed_abs, tag = 'smem constant byte address 0x4 - core index']
  #allocation1 [shape = 'u32[144,128]{1,0:T(1,128)}', space=vmem, size = 0x12000, scoped, tag = 'internal scratch']
  %s0 = inlined_call_operand.vmem [shape: bf16[16,32], index: 0, kind: input, shape index: {}]
  %s1 = inlined_call_operand.vmem [shape: f32[1,32], index: 1, kind: input, shape index: {}]
  %s2 = inlined_call_operand.vmem [shape: f32[1,32], index: 2, kind: input, shape index: {}]
  %s3 = inlined_call_operand.vmem [shape: bf16[16,32], index: 3, kind: output, shape index: {}]
  %s4 = sld [smem:[#allocation0]]
  $region22: #{seq2seq_transformer_forward.60} parent=0
    _
  %s6 = ssub.s32 1, %s4
  %s7 = scalar_select 0, %s6, %s4
  // Predicated region
  $region2: #{seq2seq_transformer_forward.60} parent=0 // pred_check
    _
  $region3: #{seq2seq_transformer_forward.60} parent=0 // pred_check_branch
    %9 = sbr.rel (0) target = $region5
  $region4: #{seq2seq_transformer_forward.60} parent=0 // pred_region
    _
  $region5: #{seq2seq_transformer_forward.60} parent=0 // pred_fallthru
    _
  // Predicated region
  $region6: #{seq2seq_transformer_forward.60} parent=0 // pred_check
    _
  $region7: #{seq2seq_transformer_forward.60} parent=0 // pred_check_branch
    %11 = sbr.rel (0) target = $region9
  $region8: #{seq2seq_transformer_forward.60} parent=0 // pred_region
    _
  $region9: #{seq2seq_transformer_forward.60} parent=0 // pred_fallthru
    _
  // Predicated region
  $region10: #{seq2seq_transformer_forward.60} parent=0 // pred_check
    _
  $region11: #{seq2seq_transformer_forward.60} parent=0 // pred_check_branch
    %13 = sbr.rel (0) target = $region13
  $region12: #{seq2seq_transformer_forward.60} parent=0 // pred_region
    _
  $region13: #{seq2seq_transformer_forward.60} parent=0 // pred_fallthru
    _
  %v14 = vld [vmem:[%s0] sm:$0xf]
  %v15 = vld [vmem:[%s0 + $0x4] sm:$0xf]
  %v16 = vunpack.c.l.bf16 %v14
  %v17 = vunpack.c.l.bf16 %v15
  %vm18 = vcmask 261120
  %v19 = vsel %vm18, %v16, 0.0
  %20 = vadd.xlane.f32.xlu0 %v19
  %v21 = vpop.xlane.xlu0 %20
  %v22 = vsel %vm18, %v17, 0.0
  %23 = vadd.xlane.f32.xlu0 %v22
  %v24 = vpop.xlane.xlu0 %23
  %v25 = vrcp.pop 32.0
  %v26 = vmul.f32 %v21, %v25
  %v27 = vmul.f32 %v24, %v25
  %v28 = vsub.f32 %v16, %v26
  %v29 = vsub.f32 %v17, %v27
  %v30 = vmul.f32 %v28, %v28
  %v31 = vmul.f32 %v29, %v29
  %v32 = vsel %vm18, %v30, 0.0
  %33 = vadd.xlane.f32.xlu0 %v32
  %v34 = vpop.xlane.xlu0 %33
  %v35 = vsel %vm18, %v31, 0.0
  %36 = vadd.xlane.f32.xlu0 %v35
  %v37 = vpop.xlane.xlu0 %36
  %v38 = vmul.f32 %v34, %v25
  %v39 = vmul.f32 %v37, %v25
  %v40 = vadd.f32 %v38, 1e-05
  %v41 = vadd.f32 %v39, 1e-05
  %v42 = vrsqrt.pop %v40
  %v43 = vrsqrt.pop %v41
  %v44 = vmul.f32 %v28, %v42
  %v45 = vmul.f32 %v29, %v43
  %v46 = vld [vmem:[%s1] sm:$0x1]
  %v48 = vlaneseq
  %v49 = vshrl.u32 %v48, 7
  %v50 = vsub.s32 0, %v49
  %v51 = vrot.slane %v46, %v50
  %v53 = vmul.f32 %v44, %v51
  %v54 = vmul.f32 %v45, %v51
  %v55 = vld [vmem:[%s2] sm:$0x1]
  %v57 = vlaneseq
  %v58 = vshrl.u32 %v57, 7
  %v59 = vsub.s32 0, %v58
  %v60 = vrot.slane %v55, %v59
  %v62 = vadd.f32 %v53, %v60
  %v63 = vadd.f32 %v54, %v60
  %v64 = vpack.c.bf16 %v63, %v62
  %v66 = vunpack.c.l.b16 %v64
  %v67 = vunpack.c.h.b16 %v64
  %v68 = vpack.c.b16 %v66, %v66
  %v69 = vpack.c.b16 %v67, %v67
  %vm72 = vcmask 257024
  %73 = vst.msk [vmem:[%s3] sm:$0xf] %vm72, %v68
  %74 = vst.msk [vmem:[%s3 + $0x4] sm:$0xf] %vm72, %v69
  // Predicated region
  $region14: #{seq2seq_transformer_forward.60} parent=0 // pred_check
    _
  $region15: #{seq2seq_transformer_forward.60} parent=0 // pred_check_branch
    %76 = sbr.rel (0) target = $region17
  $region16: #{seq2seq_transformer_forward.60} parent=0 // pred_region
    _
  $region17: #{seq2seq_transformer_forward.60} parent=0 // pred_fallthru
    _
  // Predicated region
  $region18: #{seq2seq_transformer_forward.60} parent=0 // pred_check
    _
  $region19: #{seq2seq_transformer_forward.60} parent=0 // pred_check_branch
    %78 = sbr.rel (0) target = $region21
  $region20: #{seq2seq_transformer_forward.60} parent=0 // pred_region
    _
  $region21: #{seq2seq_transformer_forward.60} parent=0 // pred_fallthru
    _

// kernel: seq2seq_transformer_forward.47
$region0: #{seq2seq_transformer_forward.47}
  #allocation0 [shape = 'u32[]', space=smem, size = 0x4, offset = 0x4, fixed_abs, tag = 'smem constant byte address 0x4 - core index']
  #allocation1 [shape = 'u32[144,128]{1,0:T(1,128)}', space=vmem, size = 0x12000, scoped, tag = 'internal scratch']
  %s0 = inlined_call_operand.vmem [shape: bf16[2,8,32], index: 0, kind: input, shape index: {}]
  %s1 = inlined_call_operand.vmem [shape: bf16[2,10,2,32], index: 1, kind: input, shape index: {}]
  %s2 = inlined_call_operand.vmem [shape: f32[8,10], index: 2, kind: input, shape index: {}]
  %s3 = inlined_call_operand.vmem [shape: f32[2,1,10], index: 3, kind: input, shape index: {}]
  %s4 = inlined_call_operand.vmem [shape: bf16[2,8,32], index: 4, kind: output, shape index: {}]
  %s5 = sld [smem:[#allocation0]]
  $region49: #{seq2seq_transformer_forward.47} parent=0
    _
  %s7 = ssub.s32 1, %s5
  %s8 = scalar_select 0, %s7, %s5
  loop: start=0, step=1, limit=4
  $region2: #{seq2seq_transformer_forward.47} parent=0 // loop_pre_header
    _
  $region3: #{seq2seq_transformer_forward.47} parent=0 // loop_header
    %s10 = sphi 0, %s14
    %p11 = scmp.ge.s32.totalorder %s10, 4
    %s20 = sphi 0, %s22
    %s23 = sphi 0, %s20
    %s24 = sphi 0, %s23
    %s40 = sphi 0, %s24
    %s46 = sphi 0, %s48
    %s49 = sphi 0, %s46
    %s50 = sphi 0, %s49
    %s66 = sphi 0, %s50
    %s70 = sphi 0, %s70
    %s72 = sphi 0, %s70
    %s73 = sphi 0, %s72
    %s87 = sphi 0, %s73
    %s93 = sphi 0, %s95
    %s96 = sphi 0, %s93
    %s97 = sphi 0, %s96
    %s113 = sphi 0, %s97
    %s119 = sphi 0, %s121
    %s122 = sphi 0, %s119
    %s123 = sphi 0, %s122
    %s139 = sphi 0, %s123
  $region4: #{seq2seq_transformer_forward.47} parent=0 // loop_header_branch
    %13 = sbr.rel (%p11) target = $region8
  $region5: #{seq2seq_transformer_forward.47} parent=0 // loop_body
    %s15 = ssub.s32 %s10, 1
    %s16 = ssub.s32 %s10, 2
    %s17 = sadd.s32 %s10, 1
    %s18 = ssub.s32 %s10, %s17
    %p19 = scmp.eq.s32.totalorder %s18, 0
    %s21 = sadd.s32 %s20, 1
    %s22 = scalar_select %p19, %s20, %s21
    %p25 = pneg %p19
    %p26 = scmp.eq.s32.totalorder %s10, 1
    %p27 = por %p25, %p26
    %p28 = scmp.ne.s32.totalorder %s20, %s23
    %p29 = scmp.eq.s32.totalorder %s10, 0
    %p30 = por %p28, %p29
    %p31 = scmp.ne.s32.totalorder %s20, %s23
    %p32 = scmp.eq.s32.totalorder %s15, 1
    %p33 = por %p31, %p32
    %p34 = scmp.ne.s32.totalorder %s23, %s24
    %p35 = scmp.eq.s32.totalorder %s15, 0
    %p36 = por %p34, %p35
    %p37 = scmp.ne.s32.totalorder %s23, %s24
    %p38 = scmp.eq.s32.totalorder %s16, 1
    %p39 = por %p37, %p38
    %p41 = scmp.ne.s32.totalorder %s24, %s40
    %p42 = scmp.eq.s32.totalorder %s16, 0
    %p43 = por %p41, %p42
    %s44 = ssub.s32 %s10, %s17
    %p45 = scmp.eq.s32.totalorder %s44, 0
    %s47 = sadd.s32 %s46, 1
    %s48 = scalar_select %p45, %s46, %s47
    %p51 = pneg %p45
    %p52 = scmp.eq.s32.totalorder %s10, 1
    %p53 = por %p51, %p52
    %p54 = scmp.ne.s32.totalorder %s46, %s49
    %p55 = scmp.eq.s32.totalorder %s10, 0
    %p56 = por %p54, %p55
    %p57 = scmp.ne.s32.totalorder %s46, %s49
    %p58 = scmp.eq.s32.totalorder %s15, 1
    %p59 = por %p57, %p58
    %p60 = scmp.ne.s32.totalorder %s49, %s50
    %p61 = scmp.eq.s32.totalorder %s15, 0
    %p62 = por %p60, %p61
    %p63 = scmp.ne.s32.totalorder %s49, %s50
    %p64 = scmp.eq.s32.totalorder %s16, 1
    %p65 = por %p63, %p64
    %p67 = scmp.ne.s32.totalorder %s50, %s66
    %p68 = scmp.eq.s32.totalorder %s16, 0
    %p69 = por %p67, %p68
    %s71 = sadd.s32 %s70, 1
    %p74 = scmp.eq.s32.totalorder %s10, 1
    %p75 = scmp.ne.s32.totalorder %s70, %s72
    %p76 = scmp.eq.s32.totalorder %s10, 0
    %p77 = por %p75, %p76
    %p78 = scmp.ne.s32.totalorder %s70, %s72
    %p79 = scmp.eq.s32.totalorder %s15, 1
    %p80 = por %p78, %p79
    %p81 = scmp.ne.s32.totalorder %s72, %s73
    %p82 = scmp.eq.s32.totalorder %s15, 0
    %p83 = por %p81, %p82
    %p84 = scmp.ne.s32.totalorder %s72, %s73
    %p85 = scmp.eq.s32.totalorder %s16, 1
    %p86 = por %p84, %p85
    %p88 = scmp.ne.s32.totalorder %s73, %s87
    %p89 = scmp.eq.s32.totalorder %s16, 0
    %p90 = por %p88, %p89
    %s91 = ssub.s32 %s10, %s17
    %p92 = scmp.eq.s32.totalorder %s91, 0
    %s94 = sadd.s32 %s93, 1
    %s95 = scalar_select %p92, %s93, %s94
    %p98 = pneg %p92
    %p99 = scmp.eq.s32.totalorder %s10, 1
    %p100 = por %p98, %p99
    %p101 = scmp.ne.s32.totalorder %s93, %s96
    %p102 = scmp.eq.s32.totalorder %s10, 0
    %p103 = por %p101, %p102
    %p104 = scmp.ne.s32.totalorder %s93, %s96
    %p105 = scmp.eq.s32.totalorder %s15, 1
    %p106 = por %p104, %p105
    %p107 = scmp.ne.s32.totalorder %s96, %s97
    %p108 = scmp.eq.s32.totalorder %s15, 0
    %p109 = por %p107, %p108
    %p110 = scmp.ne.s32.totalorder %s96, %s97
    %p111 = scmp.eq.s32.totalorder %s16, 1
    %p112 = por %p110, %p111
    %p114 = scmp.ne.s32.totalorder %s97, %s113
    %p115 = scmp.eq.s32.totalorder %s16, 0
    %p116 = por %p114, %p115
    %s117 = ssub.s32 %s10, %s17
    %p118 = scmp.eq.s32.totalorder %s117, 0
    %s120 = sadd.s32 %s119, 1
    %s121 = scalar_select %p118, %s119, %s120
    %p124 = pneg %p118
    %p125 = scmp.eq.s32.totalorder %s10, 1
    %p126 = por %p124, %p125
    %p127 = scmp.ne.s32.totalorder %s119, %s122
    %p128 = scmp.eq.s32.totalorder %s10, 0
    %p129 = por %p127, %p128
    %p130 = scmp.ne.s32.totalorder %s119, %s122
    %p131 = scmp.eq.s32.totalorder %s15, 1
    %p132 = por %p130, %p131
    %p133 = scmp.ne.s32.totalorder %s122, %s123
    %p134 = scmp.eq.s32.totalorder %s15, 0
    %p135 = por %p133, %p134
    %p136 = scmp.ne.s32.totalorder %s122, %s123
    %p137 = scmp.eq.s32.totalorder %s16, 1
    %p138 = por %p136, %p137
    %p140 = scmp.ne.s32.totalorder %s123, %s139
    %p141 = scmp.eq.s32.totalorder %s16, 0
    %p142 = por %p140, %p141
    %p143 = scmp.le.s32.totalorder 1, %s10
    %p144 = scmp.lt.s32.totalorder %s10, 3
    %p145 = pnand %p143, %p144
    %p146 = pneg %p145
    // Predicated region
    $region9: #{seq2seq_transformer_forward.47} parent=5 // pred_check
      _
    $region10: #{seq2seq_transformer_forward.47} parent=5 // pred_check_branch
      %148 = sbr.rel (%p145) target = $region12
    $region11: #{seq2seq_transformer_forward.47} parent=5 // pred_region
      %s149 = ssub.s32 %s10, 1
      // Predicated region
      $region13: #{seq2seq_transformer_forward.47} parent=11 // pred_check
        %p150 = pneg %p83
      $region14: #{seq2seq_transformer_forward.47} parent=11 // pred_check_branch
        %152 = sbr.rel (%p150) target = $region16
      $region15: #{seq2seq_transformer_forward.47} parent=11 // pred_region
        _
      $region16: #{seq2seq_transformer_forward.47} parent=11 // pred_fallthru
        _
    $region12: #{seq2seq_transformer_forward.47} parent=5 // pred_fallthru
      _
    %p153 = scmp.lt.s32.totalorder %s10, 2
    // Predicated region
    $region17: #{seq2seq_transformer_forward.47} parent=5 // pred_check
      %p154 = pneg %p153
    $region18: #{seq2seq_transformer_forward.47} parent=5 // pred_check_branch
      %156 = sbr.rel (%p154) target = $region20
    $region19: #{seq2seq_transformer_forward.47} parent=5 // pred_region
      // Predicated region
      $region21: #{seq2seq_transformer_forward.47} parent=19 // pred_check
        %p157 = pneg %p30
      $region22: #{seq2seq_transformer_forward.47} parent=19 // pred_check_branch
        %159 = sbr.rel (%p157) target = $region24
      $region23: #{seq2seq_transformer_forward.47} parent=19 // pred_region
        %p160 = scmp.lt.s32.totalorder %s10, 1
        %s161 = scalar_select %p160, %s10, 1
        %s162 = smul.addr %s161, 4
        %s163 = scalar_lea.vmem %s0, %s162
      $region24: #{seq2seq_transformer_forward.47} parent=19 // pred_fallthru
        _
      // Predicated region
      $region25: #{seq2seq_transformer_forward.47} parent=19 // pred_check
        %p164 = pneg %p56
      $region26: #{seq2seq_transformer_forward.47} parent=19 // pred_check_branch
        %166 = sbr.rel (%p164) target = $region28
      $region27: #{seq2seq_transformer_forward.47} parent=19 // pred_region
        %p167 = scmp.lt.s32.totalorder %s10, 1
        %s168 = scalar_select %p167, %s10, 1
        %s169 = smul.addr %s168, 10
        %s170 = scalar_lea.vmem %s1, %s169
      $region28: #{seq2seq_transformer_forward.47} parent=19 // pred_fallthru
        _
      // Predicated region
      $region29: #{seq2seq_transformer_forward.47} parent=19 // pred_check
        %p171 = pneg %p103
      $region30: #{seq2seq_transformer_forward.47} parent=19 // pred_check_branch
        %173 = sbr.rel (%p171) target = $region32
      $region31: #{seq2seq_transformer_forward.47} parent=19 // pred_region
        %p174 = scmp.lt.s32.totalorder %s10, 1
        %s175 = scalar_select %p174, %s10, 1
        %s176 = scalar_lea.vmem %s3, %s175
      $region32: #{seq2seq_transformer_forward.47} parent=19 // pred_fallthru
        _
    $region20: #{seq2seq_transformer_forward.47} parent=5 // pred_fallthru
      _
    %p177 = scmp.le.s32.totalorder 1, %s10
    %p178 = scmp.lt.s32.totalorder %s10, 3
    %p179 = pnand %p177, %p178
    %p180 = pneg %p179
    // Predicated region
    $region33: #{seq2seq_transformer_forward.47} parent=5 // pred_check
      _
    $region34: #{seq2seq_transformer_forward.47} parent=5 // pred_check_branch
      %182 = sbr.rel (%p179) target = $region36
    $region35: #{seq2seq_transformer_forward.47} parent=5 // pred_region
      %s183 = ssub.s32 %s10, 1
      %p184 = scmp.lt.s32.totalorder %s15, 1
      %s185 = scalar_select %p184, %s15, 1
      %s186 = smul.addr %s185, 4
      %s187 = scalar_lea.vmem %s0, %s186
      %p188 = pneg %p36
      %p189 = pneg %p33
      %p190 = scmp.lt.s32.totalorder %s15, 1
      %s191 = scalar_select %p190, %s15, 1
      %s192 = smul.addr %s191, 10
      %s193 = scalar_lea.vmem %s1, %s192
      %p194 = pneg %p62
      %p195 = pneg %p59
      %p196 = pneg %p83
      %p197 = pneg %p80
      %p198 = scmp.lt.s32.totalorder %s15, 1
      %s199 = scalar_select %p198, %s15, 1
      %s200 = scalar_lea.vmem %s3, %s199
      %p201 = pneg %p109
      %p202 = pneg %p106
      %p203 = pneg %p135
      %p204 = pneg %p132
      %p205 = scmp.lt.s32.totalorder %s15, 1
      %s206 = scalar_select %p205, %s15, 1
      %s207 = smul.addr %s206, 4
      %s208 = scalar_lea.vmem %s4, %s207
      %p209 = scmp.lt.s32.totalorder %s15, 1
      %s210 = scalar_select %p209, %s15, 1
      %s211 = smul.addr %s210, 4
      %s212 = scalar_lea.vmem %s0, %s211
      %p213 = scmp.lt.s32.totalorder %s15, 1
      %s214 = scalar_select %p213, %s15, 1
      %s215 = smul.addr %s214, 10
      %s216 = scalar_lea.vmem %s1, %s215
      %p217 = scmp.lt.s32.totalorder %s15, 1
      %s218 = scalar_select %p217, %s15, 1
      %s219 = scalar_lea.vmem %s3, %s218
      %p220 = scmp.lt.s32.totalorder %s15, 1
      %s221 = scalar_select %p220, %s15, 1
      %s222 = smul.addr %s221, 4
      %s223 = scalar_lea.vmem %s4, %s222
      %v225 = vld [vmem:[%s212] sm:$0xf]
      %v226 = vld [vmem:[%s216] sm:$0x1]
      %v227 = vld [vmem:[%s216 + $0x1] sm:$0x1]
      %v228 = vld [vmem:[%s216 + $0x2] sm:$0x1]
      %v229 = vld [vmem:[%s216 + $0x3] sm:$0x1]
      %v230 = vld [vmem:[%s216 + $0x4] sm:$0x1]
      %v231 = vld [vmem:[%s216 + $0x5] sm:$0x1]
      %v232 = vld [vmem:[%s216 + $0x6] sm:$0x1]
      %v233 = vld [vmem:[%s216 + $0x7] sm:$0x1]
      %v234 = vld [vmem:[%s216 + $0x8] sm:$0x1]
      %v235 = vld [vmem:[%s216 + $0x9] sm:$0x1]
      %v236 = vld [vmem:[%s2] sm:$0xff]
      %v237 = vld [vmem:[%s219] sm:$0x1]
      %v249 = vunpack.c.l.s4 1966171168
      %v250 = vunpack.c.0.s8 %v249
      %v251 = vlaneseq
      %v252 = vshrl.u32 %v251, 7
      %v253 = vsub.s32 %v250, %v252
      %v254 = vrot.slane %v226, %v253
      %v256 = vunpack.c.l.s4 1966171168
      %v257 = vunpack.c.0.s8 %v256
      %v258 = vlaneseq
      %v259 = vshrl.u32 %v258, 7
      %v260 = vsub.s32 %v257, %v259
      %v261 = vrot.slane %v254, %v260
      %v263 = vunpack.c.l.s4 1966171168
      %v264 = vunpack.c.0.s8 %v263
      %v265 = vlaneseq
      %v266 = vshrl.u32 %v265, 7
      %v267 = vsub.s32 %v264, %v266
      %v268 = vrot.slane %v227, %v267
      %v270 = vunpack.c.l.s4 1966171168
      %v271 = vunpack.c.0.s8 %v270
      %v272 = vlaneseq
      %v273 = vshrl.u32 %v272, 7
      %v274 = vsub.s32 %v271, %v273
      %v275 = vrot.slane %v268, %v274
      %v277 = vunpack.c.l.s4 1966171168
      %v278 = vunpack.c.0.s8 %v277
      %v279 = vlaneseq
      %v280 = vshrl.u32 %v279, 7
      %v281 = vsub.s32 %v278, %v280
      %v282 = vrot.slane %v228, %v281
      %v284 = vunpack.c.l.s4 1966171168
      %v285 = vunpack.c.0.s8 %v284
      %v286 = vlaneseq
      %v287 = vshrl.u32 %v286, 7
      %v288 = vsub.s32 %v285, %v287
      %v289 = vrot.slane %v282, %v288
      %v291 = vunpack.c.l.s4 1966171168
      %v292 = vunpack.c.0.s8 %v291
      %v293 = vlaneseq
      %v294 = vshrl.u32 %v293, 7
      %v295 = vsub.s32 %v292, %v294
      %v296 = vrot.slane %v229, %v295
      %v298 = vunpack.c.l.s4 1966171168
      %v299 = vunpack.c.0.s8 %v298
      %v300 = vlaneseq
      %v301 = vshrl.u32 %v300, 7
      %v302 = vsub.s32 %v299, %v301
      %v303 = vrot.slane %v296, %v302
      %v305 = vunpack.c.l.s4 1966171168
      %v306 = vunpack.c.0.s8 %v305
      %v307 = vlaneseq
      %v308 = vshrl.u32 %v307, 7
      %v309 = vsub.s32 %v306, %v308
      %v310 = vrot.slane %v230, %v309
      %v312 = vunpack.c.l.s4 1966171168
      %v313 = vunpack.c.0.s8 %v312
      %v314 = vlaneseq
      %v315 = vshrl.u32 %v314, 7
      %v316 = vsub.s32 %v313, %v315
      %v317 = vrot.slane %v310, %v316
      %v319 = vunpack.c.l.s4 1966171168
      %v320 = vunpack.c.0.s8 %v319
      %v321 = vlaneseq
      %v322 = vshrl.u32 %v321, 7
      %v323 = vsub.s32 %v320, %v322
      %v324 = vrot.slane %v231, %v323
      %v326 = vunpack.c.l.s4 1966171168
      %v327 = vunpack.c.0.s8 %v326
      %v328 = vlaneseq
      %v329 = vshrl.u32 %v328, 7
      %v330 = vsub.s32 %v327, %v329
      %v331 = vrot.slane %v324, %v330
      %v333 = vunpack.c.l.s4 1966171168
      %v334 = vunpack.c.0.s8 %v333
      %v335 = vlaneseq
      %v336 = vshrl.u32 %v335, 7
      %v337 = vsub.s32 %v334, %v336
      %v338 = vrot.slane %v232, %v337
      %v340 = vunpack.c.l.s4 1966171168
      %v341 = vunpack.c.0.s8 %v340
      %v342 = vlaneseq
      %v343 = vshrl.u32 %v342, 7
      %v344 = vsub.s32 %v341, %v343
      %v345 = vrot.slane %v338, %v344
      %v347 = vunpack.c.l.s4 1966171168
      %v348 = vunpack.c.0.s8 %v347
      %v349 = vlaneseq
      %v350 = vshrl.u32 %v349, 7
      %v351 = vsub.s32 %v348, %v350
      %v352 = vrot.slane %v233, %v351
      %v354 = vunpack.c.l.s4 1966171168
      %v355 = vunpack.c.0.s8 %v354
      %v356 = vlaneseq
      %v357 = vshrl.u32 %v356, 7
      %v358 = vsub.s32 %v355, %v357
      %v359 = vrot.slane %v352, %v358
      %v361 = vunpack.c.l.s4 1966171168
      %v362 = vunpack.c.0.s8 %v361
      %v363 = vlaneseq
      %v364 = vshrl.u32 %v363, 7
      %v365 = vsub.s32 %v362, %v364
      %v366 = vrot.slane %v234, %v365
      %v368 = vunpack.c.l.s4 1966171168
      %v369 = vunpack.c.0.s8 %v368
      %v370 = vlaneseq
      %v371 = vshrl.u32 %v370, 7
      %v372 = vsub.s32 %v369, %v371
      %v373 = vrot.slane %v366, %v372
      %v375 = vunpack.c.l.s4 1966171168
      %v376 = vunpack.c.0.s8 %v375
      %v377 = vlaneseq
      %v378 = vshrl.u32 %v377, 7
      %v379 = vsub.s32 %v376, %v378
      %v380 = vrot.slane %v235, %v379
      %v382 = vunpack.c.l.s4 1966171168
      %v383 = vunpack.c.0.s8 %v382
      %v384 = vlaneseq
      %v385 = vshrl.u32 %v384, 7
      %v386 = vsub.s32 %v383, %v385
      %v387 = vrot.slane %v380, %v386
      %v388 = vunpack.c.l.b16 %v261
      %v389 = vunpack.c.l.b16 %v275
      %v390 = vunpack.c.l.b16 %v289
      %v391 = vunpack.c.l.b16 %v303
      %v392 = vunpack.c.l.b16 %v317
      %v393 = vunpack.c.l.b16 %v331
      %v394 = vunpack.c.l.b16 %v345
      %v395 = vunpack.c.l.b16 %v359
      %v396 = vunpack.c.l.b16 %v373
      %v397 = vunpack.c.l.b16 %v387
      %v398 = vrot.slane %v389, 7
      %vm399 = vcmask 1041409
      %v400 = vsel %vm399, %v398, %v388
      %v401 = vrot.slane %v390, 6
      %vm402 = vcmask 1042434
      %v403 = vsel %vm402, %v401, %v400
      %v404 = vrot.slane %v391, 5
      %vm405 = vcmask 1043459
      %v406 = vsel %vm405, %v404, %v403
      %v407 = vrot.slane %v392, 4
      %vm408 = vcmask 1044484
      %v409 = vsel %vm408, %v407, %v406
      %v410 = vrot.slane %v393, 3
      %vm411 = vcmask 1045509
      %v412 = vsel %vm411, %v410, %v409
      %v413 = vrot.slane %v394, 2
      %vm414 = vcmask 1046534
      %v415 = vsel %vm414, %v413, %v412
      %v416 = vrot.slane %v395, 1
      %vm417 = vcmask 1047559
      %v418 = vsel %vm417, %v416, %v415
      %v419 = vrot.slane %v397, 7
      %v420 = vsel %vm399, %v419, %v396
      %v421 = vpack.c.b16 %v420, %v418
      %vm422 = vcmask 64512
      %v424 = vsel %vm422, %v225, 0
      %v427 = vsel %vm422, %v421, 0
      %429 = vmatprep.subr.bf16.mxu0 0
      %430 = vmatpush1.bf16.xpose.msra.mxu0 0
      %431 = vmatprep.subr.bf16.mxu0 0
      %432 = vmatpush1.bf16.xpose.msra.mxu0 0
      %433 = vmatprep.subr.bf16.mxu0 0
      %434 = vmatpush1.bf16.xpose.msra.mxu0 0
      %435 = vmatprep.subr.bf16.mxu0 0
      %436 = vmatpush1.bf16.xpose.msra.mxu0 0
      %437 = vmatprep.subr.bf16.mxu0 0
      %438 = vmatpush1.bf16.xpose.msra.mxu0 0
      %439 = vmatprep.subr.bf16.mxu0 0
      %440 = vmatpush1.bf16.xpose.msra.mxu0 0
      %441 = vmatprep.subr.bf16.mxu0 0
      %442 = vmatpush1.bf16.xpose.msra.mxu0 0
      %443 = vmatprep.subr.bf16.mxu0 0
      %444 = vmatpush1.bf16.xpose.msra.mxu0 %v427
      %445 = vmatprep.subr.bf16.mxu0 0
      %446 = vmatpush2.bf16.xpose.msra.mxu0 0
      %447 = vmatprep.subr.bf16.mxu0 0
      %448 = vmatpush2.bf16.xpose.msra.mxu0 0
      %449 = vmatprep.subr.bf16.mxu0 0
      %450 = vmatpush2.bf16.xpose.msra.mxu0 0
      %451 = vmatprep.subr.bf16.mxu0 0
      %452 = vmatpush2.bf16.xpose.msra.mxu0 0
      %453 = vmatprep.subr.bf16.mxu0 0
      %454 = vmatpush2.bf16.xpose.msra.mxu0 0
      %455 = vmatprep.subr.bf16.mxu0 0
      %456 = vmatpush2.bf16.xpose.msra.mxu0 0
      %457 = vmatprep.subr.bf16.mxu0 0
      %458 = vmatpush2.bf16.xpose.msra.mxu0 0
      %459 = vmatprep.subr.bf16.mxu0 0
      %460 = vmatpush2.bf16.xpose.msra.mxu0 0
      %461 = vmatprep.mubr.bf16.mxu0 0
      %462 = vmatmul.mubr.bf16.gmra.mxu0 %v424
      %v463 = vpop.f32.mrf.mxu0
      %v464 = vadd.f32 0.0, %v463
      %v465 = vpop.f32.mrf.mxu0
      %v466 = vpop.f32.mrf.mxu0
      %v467 = vpop.f32.mrf.mxu0
      %468 = vdwg.mxu0
      %v469 = vmul.f32 %v464, 0.35355338
      %v470 = vadd.f32 %v469, %v236
      %v472 = vlaneseq
      %v473 = vshrl.u32 %v472, 7
      %v474 = vsub.s32 0, %v473
      %v475 = vrot.slane %v237, %v474
      %v477 = vadd.f32 %v470, %v475
      %vm478 = vcmask 80896
      %v479 = vsel %vm478, %v477, -inf
      %480 = vmax.xlane.f32.xlu0 %v479
      %v481 = vpop.xlane.xlu0 %480
      %v482 = vsub.f32 %v477, %v481
      %v483 = vmul.f32 %v482, 1.442695
      %v484 = vpow.pop %v483
      %v485 = vsel %vm478, %v484, 0.0
      %486 = vadd.xlane.f32.xlu0 %v485
      %v487 = vpop.xlane.xlu0 %486
      %v488 = vpack.c.bf16 %v484, %v484
      %v489 = vrot.slane %v388, 1
      %v490 = vsel %vm399, %v389, %v489
      %v491 = vrot.slane %v390, 7
      %v492 = vsel %vm402, %v491, %v490
      %v493 = vrot.slane %v391, 6
      %v494 = vsel %vm405, %v493, %v492
      %v495 = vrot.slane %v392, 5
      %v496 = vsel %vm408, %v495, %v494
      %v497 = vrot.slane %v393, 4
      %v498 = vsel %vm411, %v497, %v496
      %v499 = vrot.slane %v394, 3
      %v500 = vsel %vm414, %v499, %v498
      %v501 = vrot.slane %v395, 2
      %v502 = vsel %vm417, %v501, %v500
      %v503 = vrot.slane %v396, 1
      %v504 = vsel %vm399, %v397, %v503
      %v505 = vpack.c.b16 %v504, %v502
      %v507 = vsel %vm478, %v488, 0
      %vm509 = vcmask 1044480
      %v511 = vsel %vm509, %v505, 0
      %513 = vmatprep.subr.bf16.mxu0 0
      %514 = vmatpush1.bf16.msra.mxu0 0
      %515 = vmatprep.subr.bf16.mxu0 0
      %516 = vmatpush1.bf16.msra.mxu0 0
      %517 = vmatprep.subr.bf16.mxu0 0
      %518 = vmatpush1.bf16.msra.mxu0 0
      %519 = vmatprep.subr.bf16.mxu0 0
      %520 = vmatpush1.bf16.msra.mxu0 0
      %521 = vmatprep.subr.bf16.mxu0 0
      %522 = vmatpush1.bf16.msra.mxu0 0
      %523 = vmatprep.subr.bf16.mxu0 0
      %524 = vmatpush1.bf16.msra.mxu0 0
      %525 = vmatprep.subr.bf16.mxu0 0
      %526 = vmatpush1.bf16.msra.mxu0 0
      %527 = vmatprep.subr.bf16.mxu0 0
      %528 = vmatpush1.bf16.msra.mxu0 %v511
      %529 = vmatprep.subr.bf16.mxu0 0
      %530 = vmatpush2.bf16.msra.mxu0 0
      %531 = vmatprep.subr.bf16.mxu0 0
      %532 = vmatpush2.bf16.msra.mxu0 0
      %533 = vmatprep.subr.bf16.mxu0 0
      %534 = vmatpush2.bf16.msra.mxu0 0
      %535 = vmatprep.subr.bf16.mxu0 0
      %536 = vmatpush2.bf16.msra.mxu0 0
      %537 = vmatprep.subr.bf16.mxu0 0
      %538 = vmatpush2.bf16.msra.mxu0 0
      %539 = vmatprep.subr.bf16.mxu0 0
      %540 = vmatpush2.bf16.msra.mxu0 0
      %541 = vmatprep.subr.bf16.mxu0 0
      %542 = vmatpush2.bf16.msra.mxu0 0
      %543 = vmatprep.subr.bf16.mxu0 0
      %544 = vmatpush2.bf16.msra.mxu0 0
      %545 = vmatprep.mubr.bf16.mxu0 0
      %546 = vmatmul.mubr.bf16.gmra.mxu0 %v507
      %v547 = vpop.f32.mrf.mxu0
      %v548 = vadd.f32 0.0, %v547
      %v549 = vpop.f32.mrf.mxu0
      %v550 = vpop.f32.mrf.mxu0
      %v551 = vpop.f32.mrf.mxu0
      %552 = vdwg.mxu0
      %v553 = vrcp.pop %v487
      %v554 = vmul.f32 %v548, %v553
      %v556 = vunpack.c.l.b16 %v225
      %v557 = vpack.c.b16 %v556, %v556
      %558 = vrot.lane.b32.xlu0 %v557, 120
      %v559 = vpop.permute.xlu0 %558
      %560 = vrot.lane.b32.xlu0 %v421, 120
      %v561 = vpop.permute.xlu0 %560
      %v563 = vsel %vm422, %v559, 0
      %v566 = vsel %vm422, %v561, 0
      %568 = vmatprep.subr.bf16.mxu0 0
      %569 = vmatpush1.bf16.xpose.msra.mxu0 0
      %570 = vmatprep.subr.bf16.mxu0 0
      %571 = vmatpush1.bf16.xpose.msra.mxu0 0
      %572 = vmatprep.subr.bf16.mxu0 0
      %573 = vmatpush1.bf16.xpose.msra.mxu0 0
      %574 = vmatprep.subr.bf16.mxu0 0
      %575 = vmatpush1.bf16.xpose.msra.mxu0 0
      %576 = vmatprep.subr.bf16.mxu0 0
      %577 = vmatpush1.bf16.xpose.msra.mxu0 0
      %578 = vmatprep.subr.bf16.mxu0 0
      %579 = vmatpush1.bf16.xpose.msra.mxu0 0
      %580 = vmatprep.subr.bf16.mxu0 0
      %581 = vmatpush1.bf16.xpose.msra.mxu0 0
      %582 = vmatprep.subr.bf16.mxu0 0
      %583 = vmatpush1.bf16.xpose.msra.mxu0 %v566
      %584 = vmatprep.subr.bf16.mxu0 0
      %585 = vmatpush2.bf16.xpose.msra.mxu0 0
      %586 = vmatprep.subr.bf16.mxu0 0
      %587 = vmatpush2.bf16.xpose.msra.mxu0 0
      %588 = vmatprep.subr.bf16.mxu0 0
      %589 = vmatpush2.bf16.xpose.msra.mxu0 0
      %590 = vmatprep.subr.bf16.mxu0 0
      %591 = vmatpush2.bf16.xpose.msra.mxu0 0
      %592 = vmatprep.subr.bf16.mxu0 0
      %593 = vmatpush2.bf16.xpose.msra.mxu0 0
      %594 = vmatprep.subr.bf16.mxu0 0
      %595 = vmatpush2.bf16.xpose.msra.mxu0 0
      %596 = vmatprep.subr.bf16.mxu0 0
      %597 = vmatpush2.bf16.xpose.msra.mxu0 0
      %598 = vmatprep.subr.bf16.mxu0 0
      %599 = vmatpush2.bf16.xpose.msra.mxu0 0
      %600 = vmatprep.mubr.bf16.mxu0 0
      %601 = vmatmul.mubr.bf16.gmra.mxu0 %v563
      %v602 = vpop.f32.mrf.mxu0
      %v603 = vadd.f32 0.0, %v602
      %v604 = vpop.f32.mrf.mxu0
      %v605 = vpop.f32.mrf.mxu0
      %v606 = vpop.f32.mrf.mxu0
      %607 = vdwg.mxu0
      %v608 = vmul.f32 %v603, 0.35355338
      %v609 = vadd.f32 %v608, %v236
      %v610 = vadd.f32 %v609, %v475
      %v611 = vsel %vm478, %v610, -inf
      %612 = vmax.xlane.f32.xlu0 %v611
      %v613 = vpop.xlane.xlu0 %612
      %v614 = vsub.f32 %v610, %v613
      %v615 = vmul.f32 %v614, 1.442695
      %v616 = vpow.pop %v615
      %v617 = vsel %vm478, %v616, 0.0
      %618 = vadd.xlane.f32.xlu0 %v617
      %v619 = vpop.xlane.xlu0 %618
      %v620 = vpack.c.bf16 %v616, %v616
      %621 = vrot.lane.b32.xlu0 %v505, 120
      %v622 = vpop.permute.xlu0 %621
      %v624 = vsel %vm478, %v620, 0
      %v627 = vsel %vm509, %v622, 0
      %629 = vmatprep.subr.bf16.mxu0 0
      %630 = vmatpush1.bf16.msra.mxu0 0
      %631 = vmatprep.subr.bf16.mxu0 0
      %632 = vmatpush1.bf16.msra.mxu0 0
      %633 = vmatprep.subr.bf16.mxu0 0
      %634 = vmatpush1.bf16.msra.mxu0 0
      %635 = vmatprep.subr.bf16.mxu0 0
      %636 = vmatpush1.bf16.msra.mxu0 0
      %637 = vmatprep.subr.bf16.mxu0 0
      %638 = vmatpush1.bf16.msra.mxu0 0
      %639 = vmatprep.subr.bf16.mxu0 0
      %640 = vmatpush1.bf16.msra.mxu0 0
      %641 = vmatprep.subr.bf16.mxu0 0
      %642 = vmatpush1.bf16.msra.mxu0 0
      %643 = vmatprep.subr.bf16.mxu0 0
      %644 = vmatpush1.bf16.msra.mxu0 %v627
      %645 = vmatprep.subr.bf16.mxu0 0
      %646 = vmatpush2.bf16.msra.mxu0 0
      %647 = vmatprep.subr.bf16.mxu0 0
      %648 = vmatpush2.bf16.msra.mxu0 0
      %649 = vmatprep.subr.bf16.mxu0 0
      %650 = vmatpush2.bf16.msra.mxu0 0
      %651 = vmatprep.subr.bf16.mxu0 0
      %652 = vmatpush2.bf16.msra.mxu0 0
      %653 = vmatprep.subr.bf16.mxu0 0
      %654 = vmatpush2.bf16.msra.mxu0 0
      %655 = vmatprep.subr.bf16.mxu0 0
      %656 = vmatpush2.bf16.msra.mxu0 0
      %657 = vmatprep.subr.bf16.mxu0 0
      %658 = vmatpush2.bf16.msra.mxu0 0
      %659 = vmatprep.subr.bf16.mxu0 0
      %660 = vmatpush2.bf16.msra.mxu0 0
      %661 = vmatprep.mubr.bf16.mxu0 0
      %662 = vmatmul.mubr.bf16.gmra.mxu0 %v624
      %v663 = vpop.f32.mrf.mxu0
      %v664 = vadd.f32 0.0, %v663
      %v665 = vpop.f32.mrf.mxu0
      %v666 = vpop.f32.mrf.mxu0
      %v667 = vpop.f32.mrf.mxu0
      %668 = vdwg.mxu0
      %v669 = vrcp.pop %v619
      %v670 = vmul.f32 %v664, %v669
      %671 = vrot.lane.b32.xlu0 %v557, 112
      %v672 = vpop.permute.xlu0 %671
      %673 = vrot.lane.b32.xlu0 %v421, 112
      %v674 = vpop.permute.xlu0 %673
      %v676 = vsel %vm422, %v672, 0
      %v679 = vsel %vm422, %v674, 0
      %681 = vmatprep.subr.bf16.mxu0 0
      %682 = vmatpush1.bf16.xpose.msra.mxu0 0
      %683 = vmatprep.subr.bf16.mxu0 0
      %684 = vmatpush1.bf16.xpose.msra.mxu0 0
      %685 = vmatprep.subr.bf16.mxu0 0
      %686 = vmatpush1.bf16.xpose.msra.mxu0 0
      %687 = vmatprep.subr.bf16.mxu0 0
      %688 = vmatpush1.bf16.xpose.msra.mxu0 0
      %689 = vmatprep.subr.bf16.mxu0 0
      %690 = vmatpush1.bf16.xpose.msra.mxu0 0
      %691 = vmatprep.subr.bf16.mxu0 0
      %692 = vmatpush1.bf16.xpose.msra.mxu0 0
      %693 = vmatprep.subr.bf16.mxu0 0
      %694 = vmatpush1.bf16.xpose.msra.mxu0 0
      %695 = vmatprep.subr.bf16.mxu0 0
      %696 = vmatpush1.bf16.xpose.msra.mxu0 %v679
      %697 = vmatprep.subr.bf16.mxu0 0
      %698 = vmatpush2.bf16.xpose.msra.mxu0 0
      %699 = vmatprep.subr.bf16.mxu0 0
      %700 = vmatpush2.bf16.xpose.msra.mxu0 0
      %701 = vmatprep.subr.bf16.mxu0 0
      %702 = vmatpush2.bf16.xpose.msra.mxu0 0
      %703 = vmatprep.subr.bf16.mxu0 0
      %704 = vmatpush2.bf16.xpose.msra.mxu0 0
      %705 = vmatprep.subr.bf16.mxu0 0
      %706 = vmatpush2.bf16.xpose.msra.mxu0 0
      %707 = vmatprep.subr.bf16.mxu0 0
      %708 = vmatpush2.bf16.xpose.msra.mxu0 0
      %709 = vmatprep.subr.bf16.mxu0 0
      %710 = vmatpush2.bf16.xpose.msra.mxu0 0
      %711 = vmatprep.subr.bf16.mxu0 0
      %712 = vmatpush2.bf16.xpose.msra.mxu0 0
      %713 = vmatprep.mubr.bf16.mxu0 0
      %714 = vmatmul.mubr.bf16.gmra.mxu0 %v676
      %v715 = vpop.f32.mrf.mxu0
      %v716 = vadd.f32 0.0, %v715
      %v717 = vpop.f32.mrf.mxu0
      %v718 = vpop.f32.mrf.mxu0
      %v719 = vpop.f32.mrf.mxu0
      %720 = vdwg.mxu0
      %v721 = vmul.f32 %v716, 0.35355338
      %v722 = vadd.f32 %v721, %v236
      %v723 = vadd.f32 %v722, %v475
      %v724 = vsel %vm478, %v723, -inf
      %725 = vmax.xlane.f32.xlu0 %v724
      %v726 = vpop.xlane.xlu0 %725
      %v727 = vsub.f32 %v723, %v726
      %v728 = vmul.f32 %v727, 1.442695
      %v729 = vpow.pop %v728
      %v730 = vsel %vm478, %v729, 0.0
      %731 = vadd.xlane.f32.xlu0 %v730
      %v732 = vpop.xlane.xlu0 %731
      %v733 = vpack.c.bf16 %v729, %v729
      %734 = vrot.lane.b32.xlu0 %v505, 112
      %v735 = vpop.permute.xlu0 %734
      %v737 = vsel %vm478, %v733, 0
      %v740 = vsel %vm509, %v735, 0
      %742 = vmatprep.subr.bf16.mxu0 0
      %743 = vmatpush1.bf16.msra.mxu0 0
      %744 = vmatprep.subr.bf16.mxu0 0
      %745 = vmatpush1.bf16.msra.mxu0 0
      %746 = vmatprep.subr.bf16.mxu0 0
      %747 = vmatpush1.bf16.msra.mxu0 0
      %748 = vmatprep.subr.bf16.mxu0 0
      %749 = vmatpush1.bf16.msra.mxu0 0
      %750 = vmatprep.subr.bf16.mxu0 0
      %751 = vmatpush1.bf16.msra.mxu0 0
      %752 = vmatprep.subr.bf16.mxu0 0
      %753 = vmatpush1.bf16.msra.mxu0 0
      %754 = vmatprep.subr.bf16.mxu0 0
      %755 = vmatpush1.bf16.msra.mxu0 0
      %756 = vmatprep.subr.bf16.mxu0 0
      %757 = vmatpush1.bf16.msra.mxu0 %v740
      %758 = vmatprep.subr.bf16.mxu0 0
      %759 = vmatpush2.bf16.msra.mxu0 0
      %760 = vmatprep.subr.bf16.mxu0 0
      %761 = vmatpush2.bf16.msra.mxu0 0
      %762 = vmatprep.subr.bf16.mxu0 0
      %763 = vmatpush2.bf16.msra.mxu0 0
      %764 = vmatprep.subr.bf16.mxu0 0
      %765 = vmatpush2.bf16.msra.mxu0 0
      %766 = vmatprep.subr.bf16.mxu0 0
      %767 = vmatpush2.bf16.msra.mxu0 0
      %768 = vmatprep.subr.bf16.mxu0 0
      %769 = vmatpush2.bf16.msra.mxu0 0
      %770 = vmatprep.subr.bf16.mxu0 0
      %771 = vmatpush2.bf16.msra.mxu0 0
      %772 = vmatprep.subr.bf16.mxu0 0
      %773 = vmatpush2.bf16.msra.mxu0 0
      %774 = vmatprep.mubr.bf16.mxu0 0
      %775 = vmatmul.mubr.bf16.gmra.mxu0 %v737
      %v776 = vpop.f32.mrf.mxu0
      %v777 = vadd.f32 0.0, %v776
      %v778 = vpop.f32.mrf.mxu0
      %v779 = vpop.f32.mrf.mxu0
      %v780 = vpop.f32.mrf.mxu0
      %781 = vdwg.mxu0
      %v782 = vrcp.pop %v732
      %v783 = vmul.f32 %v777, %v782
      %784 = vrot.lane.b32.xlu0 %v557, 104
      %v785 = vpop.permute.xlu0 %784
      %786 = vrot.lane.b32.xlu0 %v421, 104
      %v787 = vpop.permute.xlu0 %786
      %v789 = vsel %vm422, %v785, 0
      %v792 = vsel %vm422, %v787, 0
      %794 = vmatprep.subr.bf16.mxu0 0
      %795 = vmatpush1.bf16.xpose.msra.mxu0 0
      %796 = vmatprep.subr.bf16.mxu0 0
      %797 = vmatpush1.bf16.xpose.msra.mxu0 0
      %798 = vmatprep.subr.bf16.mxu0 0
      %799 = vmatpush1.bf16.xpose.msra.mxu0 0
      %800 = vmatprep.subr.bf16.mxu0 0
      %801 = vmatpush1.bf16.xpose.msra.mxu0 0
      %802 = vmatprep.subr.bf16.mxu0 0
      %803 = vmatpush1.bf16.xpose.msra.mxu0 0
      %804 = vmatprep.subr.bf16.mxu0 0
      %805 = vmatpush1.bf16.xpose.msra.mxu0 0
      %806 = vmatprep.subr.bf16.mxu0 0
      %807 = vmatpush1.bf16.xpose.msra.mxu0 0
      %808 = vmatprep.subr.bf16.mxu0 0
      %809 = vmatpush1.bf16.xpose.msra.mxu0 %v792
      %810 = vmatprep.subr.bf16.mxu0 0
      %811 = vmatpush2.bf16.xpose.msra.mxu0 0
      %812 = vmatprep.subr.bf16.mxu0 0
      %813 = vmatpush2.bf16.xpose.msra.mxu0 0
      %814 = vmatprep.subr.bf16.mxu0 0
      %815 = vmatpush2.bf16.xpose.msra.mxu0 0
      %816 = vmatprep.subr.bf16.mxu0 0
      %817 = vmatpush2.bf16.xpose.msra.mxu0 0
      %818 = vmatprep.subr.bf16.mxu0 0
      %819 = vmatpush2.bf16.xpose.msra.mxu0 0
      %820 = vmatprep.subr.bf16.mxu0 0
      %821 = vmatpush2.bf16.xpose.msra.mxu0 0
      %822 = vmatprep.subr.bf16.mxu0 0
      %823 = vmatpush2.bf16.xpose.msra.mxu0 0
      %824 = vmatprep.subr.bf16.mxu0 0
      %825 = vmatpush2.bf16.xpose.msra.mxu0 0
      %826 = vmatprep.mubr.bf16.mxu0 0
      %827 = vmatmul.mubr.bf16.gmra.mxu0 %v789
      %v828 = vpop.f32.mrf.mxu0
      %v829 = vadd.f32 0.0, %v828
      %v830 = vpop.f32.mrf.mxu0
      %v831 = vpop.f32.mrf.mxu0
      %v832 = vpop.f32.mrf.mxu0
      %833 = vdwg.mxu0
      %v834 = vmul.f32 %v829, 0.35355338
      %v835 = vadd.f32 %v834, %v236
      %v836 = vadd.f32 %v835, %v475
      %v837 = vsel %vm478, %v836, -inf
      %838 = vmax.xlane.f32.xlu0 %v837
      %v839 = vpop.xlane.xlu0 %838
      %v840 = vsub.f32 %v836, %v839
      %v841 = vmul.f32 %v840, 1.442695
      %v842 = vpow.pop %v841
      %v843 = vsel %vm478, %v842, 0.0
      %844 = vadd.xlane.f32.xlu0 %v843
      %v845 = vpop.xlane.xlu0 %844
      %v846 = vpack.c.bf16 %v842, %v842
      %847 = vrot.lane.b32.xlu0 %v505, 104
      %v848 = vpop.permute.xlu0 %847
      %v850 = vsel %vm478, %v846, 0
      %v853 = vsel %vm509, %v848, 0
      %855 = vmatprep.subr.bf16.mxu0 0
      %856 = vmatpush1.bf16.msra.mxu0 0
      %857 = vmatprep.subr.bf16.mxu0 0
      %858 = vmatpush1.bf16.msra.mxu0 0
      %859 = vmatprep.subr.bf16.mxu0 0
      %860 = vmatpush1.bf16.msra.mxu0 0
      %861 = vmatprep.subr.bf16.mxu0 0
      %862 = vmatpush1.bf16.msra.mxu0 0
      %863 = vmatprep.subr.bf16.mxu0 0
      %864 = vmatpush1.bf16.msra.mxu0 0
      %865 = vmatprep.subr.bf16.mxu0 0
      %866 = vmatpush1.bf16.msra.mxu0 0
      %867 = vmatprep.subr.bf16.mxu0 0
      %868 = vmatpush1.bf16.msra.mxu0 0
      %869 = vmatprep.subr.bf16.mxu0 0
      %870 = vmatpush1.bf16.msra.mxu0 %v853
      %871 = vmatprep.subr.bf16.mxu0 0
      %872 = vmatpush2.bf16.msra.mxu0 0
      %873 = vmatprep.subr.bf16.mxu0 0
      %874 = vmatpush2.bf16.msra.mxu0 0
      %875 = vmatprep.subr.bf16.mxu0 0
      %876 = vmatpush2.bf16.msra.mxu0 0
      %877 = vmatprep.subr.bf16.mxu0 0
      %878 = vmatpush2.bf16.msra.mxu0 0
      %879 = vmatprep.subr.bf16.mxu0 0
      %880 = vmatpush2.bf16.msra.mxu0 0
      %881 = vmatprep.subr.bf16.mxu0 0
      %882 = vmatpush2.bf16.msra.mxu0 0
      %883 = vmatprep.subr.bf16.mxu0 0
      %884 = vmatpush2.bf16.msra.mxu0 0
      %885 = vmatprep.subr.bf16.mxu0 0
      %886 = vmatpush2.bf16.msra.mxu0 0
      %887 = vmatprep.mubr.bf16.mxu0 0
      %888 = vmatmul.mubr.bf16.gmra.mxu0 %v850
      %v889 = vpop.f32.mrf.mxu0
      %v890 = vadd.f32 0.0, %v889
      %v891 = vpop.f32.mrf.mxu0
      %v892 = vpop.f32.mrf.mxu0
      %v893 = vpop.f32.mrf.mxu0
      %894 = vdwg.mxu0
      %v895 = vrcp.pop %v845
      %v896 = vmul.f32 %v890, %v895
      %898 = vrot.lane.b32.xlu0 %v670, 8
      %v899 = vpop.permute.xlu0 %898
      %902 = vrot.lane.b32.xlu0 %v783, 16
      %v903 = vpop.permute.xlu0 %902
      %906 = vrot.lane.b32.xlu0 %v896, 24
      %v907 = vpop.permute.xlu0 %906
      %v909 = vsel %vm422, %v554, %v899
      %vm910 = vcmask 130048
      %v911 = vsel %vm910, %v909, %v903
      %vm912 = vcmask 195584
      %v913 = vsel %vm912, %v911, %v907
      %v914 = vpack.c.bf16 %v913, %v913
      %vm915 = vcmask 257024
      %916 = vst.msk [vmem:[%s223] sm:$0xf] %vm915, %v914
      %p917 = scmp.lt.s32.totalorder %s15, 1
      %s918 = scalar_select %p917, %s15, 1
      %s919 = smul.addr %s918, 4
      %s920 = scalar_lea.vmem %s4, %s919
      // Predicated region
      $region37: #{seq2seq_transformer_forward.47} parent=35 // pred_check
        %p921 = pneg %p132
      $region38: #{seq2seq_transformer_forward.47} parent=35 // pred_check_branch
        %923 = sbr.rel (%p921) target = $region40
      $region39: #{seq2seq_transformer_forward.47} parent=35 // pred_region
        _
      $region40: #{seq2seq_transformer_forward.47} parent=35 // pred_fallthru
        _
    $region36: #{seq2seq_transformer_forward.47} parent=5 // pred_fallthru
      _
    %p924 = scmp.le.s32.totalorder 2, %s10
    // Predicated region
    $region41: #{seq2seq_transformer_forward.47} parent=5 // pred_check
      %p925 = pneg %p924
    $region42: #{seq2seq_transformer_forward.47} parent=5 // pred_check_branch
      %927 = sbr.rel (%p925) target = $region44
    $region43: #{seq2seq_transformer_forward.47} parent=5 // pred_region
      %s928 = ssub.s32 %s10, 2
      // Predicated region
      $region45: #{seq2seq_transformer_forward.47} parent=43 // pred_check
        %p929 = pneg %p138
      $region46: #{seq2seq_transformer_forward.47} parent=43 // pred_check_branch
        %931 = sbr.rel (%p929) target = $region48
      $region47: #{seq2seq_transformer_forward.47} parent=43 // pred_region
        %p932 = scmp.lt.s32.totalorder %s16, 1
        %s933 = scalar_select %p932, %s16, 1
        %s934 = smul.addr %s933, 4
        %s935 = scalar_lea.vmem %s4, %s934
      $region48: #{seq2seq_transformer_forward.47} parent=43 // pred_fallthru
        _
    $region44: #{seq2seq_transformer_forward.47} parent=5 // pred_fallthru
      _
  $region6: #{seq2seq_transformer_forward.47} parent=0 // loop_footer
    %s14 = sadd.s32 1, %s10
  $region7: #{seq2seq_transformer_forward.47} parent=0 // loop_footer_branch
    %9 = sbr.rel target = $region3
  $region8: #{seq2seq_transformer_forward.47} parent=0 // loop_exit
    _

// kernel: seq2seq_transformer_forward.61
$region0: #{seq2seq_transformer_forward.61}
  #allocation0 [shape = 'u32[]', space=smem, size = 0x4, offset = 0x4, fixed_abs, tag = 'smem constant byte address 0x4 - core index']
  #allocation1 [shape = 'u32[144,128]{1,0:T(1,128)}', space=vmem, size = 0x12000, scoped, tag = 'internal scratch']
  #allocation2 [shape = 'f32[16,48]{1,0:T(8,128)}', space=vmem, size = 0x2000, scoped, tag = 'scratch operand']
  %s0 = inlined_call_operand.vmem [shape: bf16[16,32], index: 0, kind: input, shape index: {}]
  %s1 = inlined_call_operand.vmem [shape: bf16[32,48], index: 1, kind: input, shape index: {}]
  %s2 = inlined_call_operand.vmem [shape: f32[1,48], index: 2, kind: input, shape index: {}]
  %s3 = inlined_call_operand.vmem [shape: f32[16,48], index: 3, kind: output, shape index: {}]
  %s4 = sld [smem:[#allocation0]]
  $region30: #{seq2seq_transformer_forward.61} parent=0
    _
  %s6 = ssub.s32 1, %s4
  %s7 = scalar_select 0, %s6, %s4
  // Predicated region
  $region2: #{seq2seq_transformer_forward.61} parent=0 // pred_check
    _
  $region3: #{seq2seq_transformer_forward.61} parent=0 // pred_check_branch
    %9 = sbr.rel (0) target = $region5
  $region4: #{seq2seq_transformer_forward.61} parent=0 // pred_region
    _
  $region5: #{seq2seq_transformer_forward.61} parent=0 // pred_fallthru
    _
  // Predicated region
  $region6: #{seq2seq_transformer_forward.61} parent=0 // pred_check
    _
  $region7: #{seq2seq_transformer_forward.61} parent=0 // pred_check_branch
    %11 = sbr.rel (0) target = $region9
  $region8: #{seq2seq_transformer_forward.61} parent=0 // pred_region
    _
  $region9: #{seq2seq_transformer_forward.61} parent=0 // pred_fallthru
    _
  // Predicated region
  $region10: #{seq2seq_transformer_forward.61} parent=0 // pred_check
    _
  $region11: #{seq2seq_transformer_forward.61} parent=0 // pred_check_branch
    %13 = sbr.rel (0) target = $region13
  $region12: #{seq2seq_transformer_forward.61} parent=0 // pred_region
    _
  $region13: #{seq2seq_transformer_forward.61} parent=0 // pred_fallthru
    _
  %p15 = scmp.eq.s32.totalorder 0, 0
  // Predicated region
  $region14: #{seq2seq_transformer_forward.61} parent=0 // pred_check
    %p16 = pneg %p15
  $region15: #{seq2seq_transformer_forward.61} parent=0 // pred_check_branch
    %18 = sbr.rel (%p16) target = $region17
  $region16: #{seq2seq_transformer_forward.61} parent=0 // pred_region
    %vm19 = vcmask 392192
    %20 = vst.msk [vmem:[#allocation2] sm:$0xff] %vm19, 0.0
    %21 = vst.msk [vmem:[#allocation2 + $0x8] sm:$0xff] %vm19, 0.0
  $region17: #{seq2seq_transformer_forward.61} parent=0 // pred_fallthru
    _
  %v22 = vld [vmem:[#allocation2] sm:$0xff]
  %v23 = vld [vmem:[#allocation2 + $0x8] sm:$0xff]
  %v24 = vld [vmem:[%s0] sm:$0xf]
  %v25 = vld [vmem:[%s0 + $0x4] sm:$0xf]
  %v26 = vld [vmem:[%s1] sm:$0xf]
  %v27 = vld [vmem:[%s1 + $0x4] sm:$0xf]
  %v28 = vld [vmem:[%s1 + $0x8] sm:$0xf]
  %v29 = vld [vmem:[%s1 + $0xc] sm:$0xf]
  %v32 = vunpack.c.l.b16 %v24
  %v33 = vunpack.c.l.b16 %v25
  %v34 = vpack.c.b16 %v33, %v32
  %v39 = vunpack.c.l.b16 %v26
  %v40 = vunpack.c.l.b16 %v27
  %v41 = vunpack.c.l.b16 %v28
  %v42 = vunpack.c.l.b16 %v29
  %v43 = vpack.c.b16 %v40, %v39
  %v44 = vpack.c.b16 %v42, %v41
  %vm47 = vcmask 261120
  %v49 = vsel %vm47, %v34, 0
  %51 = vmatprep.subr.bf16.mxu0 0
  %52 = vmatpush1.bf16.msra.mxu0 0
  %53 = vmatprep.subr.bf16.mxu0 0
  %54 = vmatpush1.bf16.msra.mxu0 0
  %55 = vmatprep.subr.bf16.mxu0 0
  %56 = vmatpush1.bf16.msra.mxu0 0
  %57 = vmatprep.subr.bf16.mxu0 0
  %58 = vmatpush1.bf16.msra.mxu0 0
  %59 = vmatprep.subr.bf16.mxu0 0
  %60 = vmatpush1.bf16.msra.mxu0 0
  %61 = vmatprep.subr.bf16.mxu0 0
  %62 = vmatpush1.bf16.msra.mxu0 0
  %63 = vmatprep.subr.bf16.mxu0 0
  %64 = vmatpush1.bf16.msra.mxu0 %v44
  %65 = vmatprep.subr.bf16.mxu0 0
  %66 = vmatpush1.bf16.msra.mxu0 %v43
  %67 = vmatprep.subr.bf16.mxu0 0
  %68 = vmatpush2.bf16.msra.mxu0 0
  %69 = vmatprep.subr.bf16.mxu0 0
  %70 = vmatpush2.bf16.msra.mxu0 0
  %71 = vmatprep.subr.bf16.mxu0 0
  %72 = vmatpush2.bf16.msra.mxu0 0
  %73 = vmatprep.subr.bf16.mxu0 0
  %74 = vmatpush2.bf16.msra.mxu0 0
  %75 = vmatprep.subr.bf16.mxu0 0
  %76 = vmatpush2.bf16.msra.mxu0 0
  %77 = vmatprep.subr.bf16.mxu0 0
  %78 = vmatpush2.bf16.msra.mxu0 0
  %79 = vmatprep.subr.bf16.mxu0 0
  %80 = vmatpush2.bf16.msra.mxu0 0
  %81 = vmatprep.subr.bf16.mxu0 0
  %82 = vmatpush2.bf16.msra.mxu0 0
  %83 = vmatprep.mubr.bf16.mxu0 0
  %84 = vmatmul.mubr.bf16.gmra.mxu0 %v49
  %v85 = vpop.f32.mrf.mxu0
  %v86 = vadd.f32 0.0, %v85
  %v87 = vpop.f32.mrf.mxu0
  %v88 = vpop.f32.mrf.mxu0
  %v89 = vadd.f32 0.0, %v88
  %v90 = vpop.f32.mrf.mxu0
  %91 = vdwg.mxu0
  %v92 = vadd.f32 %v22, %v86
  %v93 = vadd.f32 %v23, %v89
  %vm94 = vcmask 392192
  %95 = vst.msk [vmem:[#allocation2] sm:$0xff] %vm94, %v92
  %96 = vst.msk [vmem:[#allocation2 + $0x8] sm:$0xff] %vm94, %v93
  // Predicated region
  $region18: #{seq2seq_transformer_forward.61} parent=0 // pred_check
    %p97 = pneg %p15
  $region19: #{seq2seq_transformer_forward.61} parent=0 // pred_check_branch
    %99 = sbr.rel (%p97) target = $region21
  $region20: #{seq2seq_transformer_forward.61} parent=0 // pred_region
    %v100 = vld [vmem:[#allocation2] sm:$0xff]
    %v101 = vld [vmem:[#allocation2 + $0x8] sm:$0xff]
    %v102 = vld [vmem:[%s2] sm:$0x1]
    %v104 = vlaneseq
    %v105 = vshrl.u32 %v104, 7
    %v106 = vsub.s32 0, %v105
    %v107 = vrot.slane %v102, %v106
    %v109 = vadd.f32 %v100, %v107
    %v110 = vadd.f32 %v101, %v107
    %111 = vst.msk [vmem:[%s3] sm:$0xff] %vm94, %v109
    %112 = vst.msk [vmem:[%s3 + $0x8] sm:$0xff] %vm94, %v110
  $region21: #{seq2seq_transformer_forward.61} parent=0 // pred_fallthru
    _
  // Predicated region
  $region22: #{seq2seq_transformer_forward.61} parent=0 // pred_check
    _
  $region23: #{seq2seq_transformer_forward.61} parent=0 // pred_check_branch
    %114 = sbr.rel (0) target = $region25
  $region24: #{seq2seq_transformer_forward.61} parent=0 // pred_region
    _
  $region25: #{seq2seq_transformer_forward.61} parent=0 // pred_fallthru
    _
  // Predicated region
  $region26: #{seq2seq_transformer_forward.61} parent=0 // pred_check
    _
  $region27: #{seq2seq_transformer_forward.61} parent=0 // pred_check_branch
    %116 = sbr.rel (0) target = $region29
  $region28: #{seq2seq_transformer_forward.61} parent=0 // pred_region
    _
  $region29: #{seq2seq_transformer_forward.61} parent=0 // pred_fallthru
    _

</llo_original>
